<compile_context>
chip_gen: v5e
topology: v5e:2x2
jax: 0.10.0
libtpu: 0.0.40
codegen_flags: <defaults>
</compile_context>

<pallas_src>
import jax
import jax.numpy as jnp
import numpy as np
from jax.experimental import pallas as pl
from jax.experimental.pallas import tpu as pltpu


def siamese_head_kernel(x1_ref, x2_ref, w1_ref, b1_ref, w2_ref, b2_ref,
                        out_ref, acc_ref):
    """Fused:  h = |x1 - x2| @ W1 + b1 ;  out = sum(h * w2_row) + b2.

    Grid axis 0 tiles the flattened feature (reduction) dimension.
    acc_ref: (B, 512) f32 accumulator for the fc1 output, resident across
    the reduction axis (output BlockSpec returns the same block each step).
    """
    k = pl.program_id(0)

    @pl.when(k == 0)
    def _():
        acc_ref[...] = jnp.zeros_like(acc_ref)

    # elementwise abs-diff on the current feature tile, then MXU matmul
    d = jnp.abs(x1_ref[...] - x2_ref[...])
    acc_ref[...] += jnp.dot(d, w1_ref[...], preferred_element_type=jnp.float32)

    @pl.when(k == pl.num_programs(0) - 1)
    def _():
        h = acc_ref[...] + b1_ref[...]          # fc1 bias (no activation in torch forward)
        # fc2 as VPU mul + lane reduce: avoids a lane-padded (512,1) VMEM block
        # and an N=1 MXU matmul (pure drain overhead).
        y = jnp.sum(h * w2_ref[...], axis=-1, keepdims=True)
        out_ref[...] = (y + b2_ref[...]).astype(out_ref.dtype)


def _pick_tk(K, tk_max):
    """Largest lane-aligned (mult of 128) divisor of K that is <= tk_max."""
    if K <= tk_max:
        return K
    start = tk_max - (tk_max % 128)
    for cand in range(start, 0, -128):
        if K % cand == 0:
            return cand
    return K  # fall back to a single (untiled) step


def siamese_head(x1_feat, x2_feat, w1, b1, w2, b2, *, tk=4608):
    """x1_feat, x2_feat: [B, C, H, W] backbone features.
    w1: [flat, 512], b1: [512], w2: [512, 1], b2: [1].
    Returns: [B, 1]."""
    B = x1_feat.shape[0]
    x1 = x1_feat.reshape(B, -1)          # torch.flatten(x, 1)
    x2 = x2_feat.reshape(B, -1)
    K = x1.shape[1]
    H = w1.shape[1]                      # 512

    tk = _pick_tk(K, tk)
    assert K % tk == 0, "flat feature dim must be divisible by the K tile"

    b1_2d = b1.reshape(1, H)
    w2_row = w2.reshape(1, H)            # (H,1) -> (1,H): lane-friendly row
    b2_2d = b2.reshape(1, 1)

    grid_spec = pltpu.PrefetchScalarGridSpec(
        num_scalar_prefetch=0,
        grid=(K // tk,),
        in_specs=[
            pl.BlockSpec((B, tk), lambda k: (0, k)),        # x1 tile
            pl.BlockSpec((B, tk), lambda k: (0, k)),        # x2 tile
            pl.BlockSpec((tk, H), lambda k: (k, 0)),        # W1 tile
            pl.BlockSpec((1, H), lambda k: (0, 0)),         # b1 (full)
            pl.BlockSpec((1, H), lambda k: (0, 0)),         # W2 row (full)
            pl.BlockSpec((1, 1), lambda k: (0, 0)),         # b2 (full)
        ],
        out_specs=pl.BlockSpec((B, 1), lambda k: (0, 0)),
        scratch_shapes=[pltpu.VMEM((B, H), jnp.float32)],
    )

    itemsize = 4  # f32 everywhere
    cost = pl.CostEstimate(
        flops=2 * B * K * H + 3 * B * K + 3 * B * H,
        transcendentals=0,
        bytes_accessed=itemsize * (w1.size + x1.size + x2.size
                                   + b1.size + w2.size + b2.size + B),
    )

    return pl.pallas_call(
        siamese_head_kernel,
        out_shape=jax.ShapeDtypeStruct((B, 1), jnp.float32),
        grid_spec=grid_spec,
        compiler_params=pltpu.CompilerParams(
            dimension_semantics=("arbitrary",),
            vmem_limit_bytes=32 * 1024 * 1024,   # fits 2x(4608,512) f32 W1 buffers
        ),
        cost_estimate=cost,
    )(x1, x2, w1, b1_2d, w2_row, b2_2d)


def siamese_head_ref(x1_feat, x2_feat, w1, b1, w2, b2):
    B = x1_feat.shape[0]
    d = jnp.abs(x1_feat.reshape(B, -1) - x2_feat.reshape(B, -1))
    h = d @ w1 + b1
    return h @ w2 + b2


if __name__ == "__main__":
    # ResNet50 backbone output: [B, 2048, 3, 3]  ->  flat_shape = 2048*3*3 = 18432
    B, C, Hs, Ws = 2, 2048, 3, 3
    FLAT = C * Hs * Ws
    HID = 512

    key = jax.random.PRNGKey(0)
    k1, k2, k3, k4, k5, k6 = jax.random.split(key, 6)

    # Stand-in backbone features for the two siamese branches.
    x1_feat = jax.random.normal(k1, (B, C, Hs, Ws), dtype=jnp.float32)
    x2_feat = jax.random.normal(k2, (B, C, Hs, Ws), dtype=jnp.float32)

    # Deterministic parameter init (uniform, PyTorch-Linear-style bounds),
    # stored as [in, out] so the kernel does x @ W + b.
    bound1 = 1.0 / np.sqrt(FLAT)
    w1 = jax.random.uniform(k3, (FLAT, HID), jnp.float32, -bound1, bound1)
    b1 = jax.random.uniform(k4, (HID,), jnp.float32, -bound1, bound1)
    bound2 = 1.0 / np.sqrt(HID)
    w2 = jax.random.uniform(k5, (HID, 1), jnp.float32, -bound2, bound2)
    b2 = jax.random.uniform(k6, (1,), jnp.float32, -bound2, bound2)

    out = siamese_head(x1_feat, x2_feat, w1, b1, w2, b2)
    out = jax.block_until_ready(out)

    ref = siamese_head_ref(x1_feat, x2_feat, w1, b1, w2, b2)
    np.testing.assert_allclose(np.asarray(out), np.asarray(ref),
                               rtol=1e-4, atol=1e-4)
    print("KERNEL_OK")
</pallas_src>

<mosaic_0001>
module attributes {stable_mosaic.version = 11 : i64} {
  func.func @siamese_head_kernel(%arg0: i32, %arg1: memref<2x4608xf32, #tpu.memory_space<vmem>>, %arg2: memref<2x4608xf32, #tpu.memory_space<vmem>>, %arg3: memref<4608x512xf32, #tpu.memory_space<vmem>>, %arg4: memref<1x512xf32, #tpu.memory_space<vmem>>, %arg5: memref<1x512xf32, #tpu.memory_space<vmem>>, %arg6: memref<1x1xf32, #tpu.memory_space<vmem>>, %arg7: memref<2x1xf32, #tpu.memory_space<vmem>>, %arg8: memref<2x512xf32, #tpu.memory_space<vmem>>) attributes {dimension_semantics = [#tpu.dimension_semantics<arbitrary>], iteration_bounds = array<i64: 4>, scalar_prefetch = 0 : i64, scratch_operands = 1 : i64, tpu.core_type = #tpu.core_type<tc>, window_params = [{transform_indices = @transform_0, window_bounds = array<i64: 2, 4608>}, {transform_indices = @transform_1, window_bounds = array<i64: 2, 4608>}, {transform_indices = @transform_2, window_bounds = array<i64: 4608, 512>}, {pipeline_mode = #tpu.pipeline_mode<synchronous>, transform_indices = @transform_3, window_bounds = array<i64: 1, 512>}, {pipeline_mode = #tpu.pipeline_mode<synchronous>, transform_indices = @transform_4, window_bounds = array<i64: 1, 512>}, {pipeline_mode = #tpu.pipeline_mode<synchronous>, transform_indices = @transform_5, window_bounds = array<i64: 1, 1>}, {pipeline_mode = #tpu.pipeline_mode<synchronous>, transform_indices = @transform_6, window_bounds = array<i64: 2, 1>}]} {
    %c0_i32 = arith.constant 0 : i32
    %0 = arith.cmpi eq, %arg0, %c0_i32 : i32
    %1 = arith.extui %0 : i1 to i32
    %c0_i32_0 = arith.constant 0 : i32
    %2 = arith.cmpi ne, %1, %c0_i32_0 : i32
    scf.if %2 {
      %cst_11 = arith.constant 0.000000e+00 : f32
      %15 = vector.broadcast %cst_11 : f32 to vector<2x512xf32>
      %c0_12 = arith.constant 0 : index
      %c0_13 = arith.constant 0 : index
      %16 = vector.load %arg8[%c0_12, %c0_13] : memref<2x512xf32, #tpu.memory_space<vmem>>, vector<2x512xf32>
      tpu.vector_store %arg8[%c0_12, %c0_13], %15 {strides = array<i32>} : memref<2x512xf32, #tpu.memory_space<vmem>>, vector<2x512xf32>,
    } else {
    }
    %c0 = arith.constant 0 : index
    %c0_1 = arith.constant 0 : index
    %3 = vector.load %arg1[%c0, %c0_1] : memref<2x4608xf32, #tpu.memory_space<vmem>>, vector<2x4608xf32>
    %c0_2 = arith.constant 0 : index
    %c0_3 = arith.constant 0 : index
    %4 = vector.load %arg2[%c0_2, %c0_3] : memref<2x4608xf32, #tpu.memory_space<vmem>>, vector<2x4608xf32>
    %5 = arith.subf %3, %4 : vector<2x4608xf32>
    %6 = math.absf %5 : vector<2x4608xf32>
    %c0_4 = arith.constant 0 : index
    %c0_5 = arith.constant 0 : index
    %7 = vector.load %arg8[%c0_4, %c0_5] : memref<2x512xf32, #tpu.memory_space<vmem>>, vector<2x512xf32>
    %c0_6 = arith.constant 0 : index
    %c0_7 = arith.constant 0 : index
    %8 = vector.load %arg3[%c0_6, %c0_7] : memref<4608x512xf32, #tpu.memory_space<vmem>>, vector<4608x512xf32>
    %cst = arith.constant dense<0.000000e+00> : vector<2x512xf32>
    %9 = tpu.matmul %6, %8, %cst {dimension_numbers = #tpu.dot_dimension_numbers<[1], [0], [0], [1], [0, 0, 1, 1], [], []>} : vector<2x4608xf32>, vector<4608x512xf32>, vector<2x512xf32> -> vector<2x512xf32>
    %10 = arith.addf %7, %9 : vector<2x512xf32>
    %c0_8 = arith.constant 0 : index
    %c0_9 = arith.constant 0 : index
    %11 = vector.load %arg8[%c0_8, %c0_9] : memref<2x512xf32, #tpu.memory_space<vmem>>, vector<2x512xf32>
    tpu.vector_store %arg8[%c0_8, %c0_9], %10 {strides = array<i32>} : memref<2x512xf32, #tpu.memory_space<vmem>>, vector<2x512xf32>,
    %c3_i32 = arith.constant 3 : i32
    %12 = arith.cmpi eq, %arg0, %c3_i32 : i32
    %13 = arith.extui %12 : i1 to i32
    %c0_i32_10 = arith.constant 0 : i32
    %14 = arith.cmpi ne, %13, %c0_i32_10 : i32
    scf.if %14 {
      %c0_11 = arith.constant 0 : index
      %c0_12 = arith.constant 0 : index
      %15 = vector.load %arg8[%c0_11, %c0_12] : memref<2x512xf32, #tpu.memory_space<vmem>>, vector<2x512xf32>
      %c0_13 = arith.constant 0 : index
      %c0_14 = arith.constant 0 : index
      %16 = vector.load %arg4[%c0_13, %c0_14] : memref<1x512xf32, #tpu.memory_space<vmem>>, vector<1x512xf32>
      %17 = vector.broadcast %16 : vector<1x512xf32> to vector<2x512xf32>
      %18 = arith.addf %15, %17 : vector<2x512xf32>
      %c0_15 = arith.constant 0 : index
      %c0_16 = arith.constant 0 : index
      %19 = vector.load %arg5[%c0_15, %c0_16] : memref<1x512xf32, #tpu.memory_space<vmem>>, vector<1x512xf32>
      %20 = vector.broadcast %19 : vector<1x512xf32> to vector<2x512xf32>
      %21 = arith.mulf %18, %20 : vector<2x512xf32>
      %cst_17 = arith.constant dense<0.000000e+00> : vector<2xf32>
      %22 = vector.multi_reduction <add>, %21, %cst_17 [1] : vector<2x512xf32> to vector<2xf32>
      %23 = vector.shape_cast %22 : vector<2xf32> to vector<2x1xf32>
      %c0_18 = arith.constant 0 : index
      %c0_19 = arith.constant 0 : index
      %24 = vector.load %arg6[%c0_18, %c0_19] : memref<1x1xf32, #tpu.memory_space<vmem>>, vector<1x1xf32>
      %25 = vector.broadcast %24 : vector<1x1xf32> to vector<2x1xf32>
      %26 = arith.addf %23, %25 : vector<2x1xf32>
      %c0_20 = arith.constant 0 : index
      %c0_21 = arith.constant 0 : index
      %27 = vector.load %arg7[%c0_20, %c0_21] : memref<2x1xf32, #tpu.memory_space<vmem>>, vector<2x1xf32>
      tpu.vector_store %arg7[%c0_20, %c0_21], %26 {strides = array<i32>} : memref<2x1xf32, #tpu.memory_space<vmem>>, vector<2x1xf32>,
    } else {
    }
    return
  }
  func.func @transform_0(%arg0: i32) -> (i32, i32) {
    %c0_i32 = arith.constant 0 : i32
    %c0_i32_0 = arith.constant 0 : i32
    return %c0_i32, %arg0 : i32, i32
  }
  func.func @transform_1(%arg0: i32) -> (i32, i32) {
    %c0_i32 = arith.constant 0 : i32
    %c0_i32_0 = arith.constant 0 : i32
    return %c0_i32, %arg0 : i32, i32
  }
  func.func @transform_2(%arg0: i32) -> (i32, i32) {
    %c0_i32 = arith.constant 0 : i32
    %c0_i32_0 = arith.constant 0 : i32
    return %arg0, %c0_i32 : i32, i32
  }
  func.func @transform_3(%arg0: i32) -> (i32, i32) {
    %c0_i32 = arith.constant 0 : i32
    %c0_i32_0 = arith.constant 0 : i32
    %c0_i32_1 = arith.constant 0 : i32
    return %c0_i32, %c0_i32_0 : i32, i32
  }
  func.func @transform_4(%arg0: i32) -> (i32, i32) {
    %c0_i32 = arith.constant 0 : i32
    %c0_i32_0 = arith.constant 0 : i32
    %c0_i32_1 = arith.constant 0 : i32
    return %c0_i32, %c0_i32_0 : i32, i32
  }
  func.func @transform_5(%arg0: i32) -> (i32, i32) {
    %c0_i32 = arith.constant 0 : i32
    %c0_i32_0 = arith.constant 0 : i32
    %c0_i32_1 = arith.constant 0 : i32
    return %c0_i32, %c0_i32_0 : i32, i32
  }
  func.func @transform_6(%arg0: i32) -> (i32, i32) {
    %c0_i32 = arith.constant 0 : i32
    %c0_i32_0 = arith.constant 0 : i32
    %c0_i32_1 = arith.constant 0 : i32
    return %c0_i32, %c0_i32_0 : i32, i32
  }
}

</mosaic_0001>

<llo_original>
// kernel: tpu_custom_call.1
$region0: #{tpu_custom_call.1}
  #allocation0 [shape = 'u32[]', space=smem, size = 0x4, offset = 0x4, fixed_abs, tag = 'smem constant byte address 0x4 - core index']
  #allocation1 [shape = 'u32[72,128]{1,0:T(1,128)}', space=vmem, size = 0x9000, scoped, tag = 'internal scratch']
  #allocation2 [shape = 'f32[2,512]{1,0:T(2,128)}', space=vmem, size = 0x1000, scoped, tag = 'scratch operand']
  #allocation3 [shape = 'f32[1,1]{1,0:T(1,128)S(1)}', space=vmem, size = 0x200, scoped, tag = 'scoped memory for tpu_custom_call.1']
  %s0 = inlined_call_operand.hbm [shape: f32[2,18432], index: 0, kind: input, shape index: {}]
  %s1 = inlined_call_operand.hbm [shape: f32[2,18432], index: 1, kind: input, shape index: {}]
  %s2 = inlined_call_operand.hbm [shape: f32[18432,512], index: 2, kind: input, shape index: {}]
  %s3 = inlined_call_operand.hbm [shape: f32[1,512], index: 3, kind: input, shape index: {}]
  %s4 = inlined_call_operand.hbm [shape: f32[1,512], index: 4, kind: input, shape index: {}]
  %s5 = inlined_call_operand.<no memory space> [shape: f32[1,1], index: 5, kind: input, shape index: {}]
  %s6 = inlined_call_operand.vmem [shape: f32[2,1], index: 6, kind: output, shape index: {}]
  %s7 = sld [smem:[#allocation0]]
  $region85: #{tpu_custom_call.1} parent=0
    _
  %s9 = ssub.s32 1, %s7
  %s10 = scalar_select 0, %s9, %s7
  %v11 = vstv %s5
  %12 = vst [vmem:[#allocation3] sm:$0x1] %v11
  $region1: #{tpu_custom_call.1} parent=0
    #allocation4 [shape = 'u8[73728]{0}', space=vmem, size = 0x12000, scoped, tag = 'input window, operand 0']
    #allocation5 [shape = 's32[2]{0}', space=sflag, size = 0x8, scoped, tag = 'scoped memory for tpu_custom_call.1']
    #allocation6 [shape = 'u8[73728]{0}', space=vmem, size = 0x12000, scoped, tag = 'input window, operand 1']
    #allocation7 [shape = 's32[2]{0}', space=sflag, size = 0x8, scoped, tag = 'scoped memory for tpu_custom_call.1']
    #allocation8 [shape = 'u8[18874368]{0}', space=vmem, size = 0x1200000, scoped, tag = 'input window, operand 2']
    #allocation9 [shape = 'u8[2048]{0}', space=vmem, size = 0x800, scoped, tag = 'input window, operand 3, single buffered']
    #allocation10 [shape = 's32[1]{0}', space=sflag, size = 0x4, scoped, tag = 'scoped memory for tpu_custom_call.1']
    #allocation11 [shape = 'u8[2048]{0}', space=vmem, size = 0x800, scoped, tag = 'input window, operand 4, single buffered']
    %13 = vsyncpa [#allocation5], 0
    %s14 = scalar_lea.sflag [#allocation5], 1
    %15 = vsyncpa %s14, 0
    %16 = vsyncpa [#allocation7], 0
    %s17 = scalar_lea.sflag [#allocation7], 1
    %18 = vsyncpa %s17, 0
    %19 = vsyncpa [#allocation10], 0
    loop: start=0, step=1, limit=6
    $region2: #{tpu_custom_call.1} parent=1 // loop_pre_header
      _
    $region3: #{tpu_custom_call.1} parent=1 // loop_header
      %s21 = sphi 0, %s25
      %p22 = scmp.ge.s32.totalorder %s21, 6
      %s31 = sphi 0, %s33
      %s34 = sphi 0, %s31
      %s35 = sphi 0, %s34
      %s51 = sphi 0, %s35
      %s57 = sphi 0, %s59
      %s60 = sphi 0, %s57
      %s61 = sphi 0, %s60
      %s77 = sphi 0, %s61
      %s83 = sphi 0, %s85
      %s86 = sphi 0, %s83
      %s87 = sphi 0, %s86
      %s103 = sphi 0, %s87
      %s107 = sphi 0, %s107
      %s109 = sphi 0, %s107
      %s110 = sphi 0, %s109
      %s124 = sphi 0, %s110
      %s128 = sphi 0, %s128
      %s130 = sphi 0, %s128
      %s131 = sphi 0, %s130
      %s145 = sphi 0, %s131
      %s149 = sphi 0, %s149
      %s151 = sphi 0, %s149
      %s152 = sphi 0, %s151
      %s166 = sphi 0, %s152
      %s170 = sphi 0, %s170
      %s172 = sphi 0, %s170
      %s173 = sphi 0, %s172
      %s187 = sphi 0, %s173
    $region4: #{tpu_custom_call.1} parent=1 // loop_header_branch
      %24 = sbr.rel (%p22) target = $region8
    $region5: #{tpu_custom_call.1} parent=1 // loop_body
      %s26 = ssub.s32 %s21, 1
      %s27 = ssub.s32 %s21, 2
      %s28 = sadd.s32 %s21, 1
      %s29 = ssub.s32 %s21, %s28
      %p30 = scmp.eq.s32.totalorder %s29, 0
      %s32 = sadd.s32 %s31, 1
      %s33 = scalar_select %p30, %s31, %s32
      %p36 = pneg %p30
      %p37 = scmp.eq.s32.totalorder %s21, 3
      %p38 = por %p36, %p37
      %p39 = scmp.ne.s32.totalorder %s31, %s34
      %p40 = scmp.eq.s32.totalorder %s21, 0
      %p41 = por %p39, %p40
      %p42 = scmp.ne.s32.totalorder %s31, %s34
      %p43 = scmp.eq.s32.totalorder %s26, 3
      %p44 = por %p42, %p43
      %p45 = scmp.ne.s32.totalorder %s34, %s35
      %p46 = scmp.eq.s32.totalorder %s26, 0
      %p47 = por %p45, %p46
      %p48 = scmp.ne.s32.totalorder %s34, %s35
      %p49 = scmp.eq.s32.totalorder %s27, 3
      %p50 = por %p48, %p49
      %p52 = scmp.ne.s32.totalorder %s35, %s51
      %p53 = scmp.eq.s32.totalorder %s27, 0
      %p54 = por %p52, %p53
      %s55 = ssub.s32 %s21, %s28
      %p56 = scmp.eq.s32.totalorder %s55, 0
      %s58 = sadd.s32 %s57, 1
      %s59 = scalar_select %p56, %s57, %s58
      %p62 = pneg %p56
      %p63 = scmp.eq.s32.totalorder %s21, 3
      %p64 = por %p62, %p63
      %p65 = scmp.ne.s32.totalorder %s57, %s60
      %p66 = scmp.eq.s32.totalorder %s21, 0
      %p67 = por %p65, %p66
      %p68 = scmp.ne.s32.totalorder %s57, %s60
      %p69 = scmp.eq.s32.totalorder %s26, 3
      %p70 = por %p68, %p69
      %p71 = scmp.ne.s32.totalorder %s60, %s61
      %p72 = scmp.eq.s32.totalorder %s26, 0
      %p73 = por %p71, %p72
      %p74 = scmp.ne.s32.totalorder %s60, %s61
      %p75 = scmp.eq.s32.totalorder %s27, 3
      %p76 = por %p74, %p75
      %p78 = scmp.ne.s32.totalorder %s61, %s77
      %p79 = scmp.eq.s32.totalorder %s27, 0
      %p80 = por %p78, %p79
      %s81 = ssub.s32 %s21, %s28
      %p82 = scmp.eq.s32.totalorder %s81, 0
      %s84 = sadd.s32 %s83, 1
      %s85 = scalar_select %p82, %s83, %s84
      %p88 = pneg %p82
      %p89 = scmp.eq.s32.totalorder %s21, 3
      %p90 = por %p88, %p89
      %p91 = scmp.ne.s32.totalorder %s83, %s86
      %p92 = scmp.eq.s32.totalorder %s21, 0
      %p93 = por %p91, %p92
      %p94 = scmp.ne.s32.totalorder %s83, %s86
      %p95 = scmp.eq.s32.totalorder %s26, 3
      %p96 = por %p94, %p95
      %p97 = scmp.ne.s32.totalorder %s86, %s87
      %p98 = scmp.eq.s32.totalorder %s26, 0
      %p99 = por %p97, %p98
      %p100 = scmp.ne.s32.totalorder %s86, %s87
      %p101 = scmp.eq.s32.totalorder %s27, 3
      %p102 = por %p100, %p101
      %p104 = scmp.ne.s32.totalorder %s87, %s103
      %p105 = scmp.eq.s32.totalorder %s27, 0
      %p106 = por %p104, %p105
      %s108 = sadd.s32 %s107, 1
      %p111 = scmp.eq.s32.totalorder %s21, 3
      %p112 = scmp.ne.s32.totalorder %s107, %s109
      %p113 = scmp.eq.s32.totalorder %s21, 0
      %p114 = por %p112, %p113
      %p115 = scmp.ne.s32.totalorder %s107, %s109
      %p116 = scmp.eq.s32.totalorder %s26, 3
      %p117 = por %p115, %p116
      %p118 = scmp.ne.s32.totalorder %s109, %s110
      %p119 = scmp.eq.s32.totalorder %s26, 0
      %p120 = por %p118, %p119
      %p121 = scmp.ne.s32.totalorder %s109, %s110
      %p122 = scmp.eq.s32.totalorder %s27, 3
      %p123 = por %p121, %p122
      %p125 = scmp.ne.s32.totalorder %s110, %s124
      %p126 = scmp.eq.s32.totalorder %s27, 0
      %p127 = por %p125, %p126
      %s129 = sadd.s32 %s128, 1
      %p132 = scmp.eq.s32.totalorder %s21, 3
      %p133 = scmp.ne.s32.totalorder %s128, %s130
      %p134 = scmp.eq.s32.totalorder %s21, 0
      %p135 = por %p133, %p134
      %p136 = scmp.ne.s32.totalorder %s128, %s130
      %p137 = scmp.eq.s32.totalorder %s26, 3
      %p138 = por %p136, %p137
      %p139 = scmp.ne.s32.totalorder %s130, %s131
      %p140 = scmp.eq.s32.totalorder %s26, 0
      %p141 = por %p139, %p140
      %p142 = scmp.ne.s32.totalorder %s130, %s131
      %p143 = scmp.eq.s32.totalorder %s27, 3
      %p144 = por %p142, %p143
      %p146 = scmp.ne.s32.totalorder %s131, %s145
      %p147 = scmp.eq.s32.totalorder %s27, 0
      %p148 = por %p146, %p147
      %s150 = sadd.s32 %s149, 1
      %p153 = scmp.eq.s32.totalorder %s21, 3
      %p154 = scmp.ne.s32.totalorder %s149, %s151
      %p155 = scmp.eq.s32.totalorder %s21, 0
      %p156 = por %p154, %p155
      %p157 = scmp.ne.s32.totalorder %s149, %s151
      %p158 = scmp.eq.s32.totalorder %s26, 3
      %p159 = por %p157, %p158
      %p160 = scmp.ne.s32.totalorder %s151, %s152
      %p161 = scmp.eq.s32.totalorder %s26, 0
      %p162 = por %p160, %p161
      %p163 = scmp.ne.s32.totalorder %s151, %s152
      %p164 = scmp.eq.s32.totalorder %s27, 3
      %p165 = por %p163, %p164
      %p167 = scmp.ne.s32.totalorder %s152, %s166
      %p168 = scmp.eq.s32.totalorder %s27, 0
      %p169 = por %p167, %p168
      %s171 = sadd.s32 %s170, 1
      %p174 = scmp.eq.s32.totalorder %s21, 3
      %p175 = scmp.ne.s32.totalorder %s170, %s172
      %p176 = scmp.eq.s32.totalorder %s21, 0
      %p177 = por %p175, %p176
      %p178 = scmp.ne.s32.totalorder %s170, %s172
      %p179 = scmp.eq.s32.totalorder %s26, 3
      %p180 = por %p178, %p179
      %p181 = scmp.ne.s32.totalorder %s172, %s173
      %p182 = scmp.eq.s32.totalorder %s26, 0
      %p183 = por %p181, %p182
      %p184 = scmp.ne.s32.totalorder %s172, %s173
      %p185 = scmp.eq.s32.totalorder %s27, 3
      %p186 = por %p184, %p185
      %p188 = scmp.ne.s32.totalorder %s173, %s187
      %p189 = scmp.eq.s32.totalorder %s27, 0
      %p190 = por %p188, %p189
      %p191 = scmp.le.s32.totalorder 1, %s21
      %p192 = scmp.lt.s32.totalorder %s21, 5
      %p193 = pnand %p191, %p192
      %p194 = pneg %p193
      // Predicated region
      $region9: #{tpu_custom_call.1} parent=5 // pred_check
        _
      $region10: #{tpu_custom_call.1} parent=5 // pred_check_branch
        %196 = sbr.rel (%p193) target = $region12
      $region11: #{tpu_custom_call.1} parent=5 // pred_region
        %s197 = ssub.s32 %s21, 1
        // Predicated region
        $region13: #{tpu_custom_call.1} parent=11 // pred_check
          %p198 = pneg %p120
        $region14: #{tpu_custom_call.1} parent=11 // pred_check_branch
          %200 = sbr.rel (%p198) target = $region16
        $region15: #{tpu_custom_call.1} parent=11 // pred_region
          %202 = vsyncadd [#allocation10], 0
          %s204 = sshll.u32 %s3, 4
          %s205 = int_to_ptr.hbm [resolvable:$true] %s204
          %s206 = sshll.u32 [#allocation9], 4
          %s207 = int_to_ptr.vmem [resolvable:$true] %s206
          %209 = dma.hbm_to_vmem [thread:$0]  %s205, 64, %s207, [#allocation10]
        $region16: #{tpu_custom_call.1} parent=11 // pred_fallthru
          _
        // Predicated region
        $region17: #{tpu_custom_call.1} parent=11 // pred_check
          %p210 = pneg %p141
        $region18: #{tpu_custom_call.1} parent=11 // pred_check_branch
          %212 = sbr.rel (%p210) target = $region20
        $region19: #{tpu_custom_call.1} parent=11 // pred_region
          %214 = vsyncadd [#allocation10], 0
          %s216 = sshll.u32 %s4, 4
          %s217 = int_to_ptr.hbm [resolvable:$true] %s216
          %s218 = sshll.u32 [#allocation11], 4
          %s219 = int_to_ptr.vmem [resolvable:$true] %s218
          %221 = dma.hbm_to_vmem [thread:$0]  %s217, 64, %s219, [#allocation10]
        $region20: #{tpu_custom_call.1} parent=11 // pred_fallthru
          _
        // Predicated region
        $region21: #{tpu_custom_call.1} parent=11 // pred_check
          %p222 = pneg %p162
        $region22: #{tpu_custom_call.1} parent=11 // pred_check_branch
          %224 = sbr.rel (%p222) target = $region24
        $region23: #{tpu_custom_call.1} parent=11 // pred_region
          _
        $region24: #{tpu_custom_call.1} parent=11 // pred_fallthru
          _
      $region12: #{tpu_custom_call.1} parent=5 // pred_fallthru
        _
      %p225 = scmp.lt.s32.totalorder %s21, 4
      // Predicated region
      $region25: #{tpu_custom_call.1} parent=5 // pred_check
        %p226 = pneg %p225
      $region26: #{tpu_custom_call.1} parent=5 // pred_check_branch
        %228 = sbr.rel (%p226) target = $region28
      $region27: #{tpu_custom_call.1} parent=5 // pred_region
        // Predicated region
        $region29: #{tpu_custom_call.1} parent=27 // pred_check
          %p229 = pneg %p41
        $region30: #{tpu_custom_call.1} parent=27 // pred_check_branch
          %231 = sbr.rel (%p229) target = $region32
        $region31: #{tpu_custom_call.1} parent=27 // pred_region
          %s232 = sand.u32 %s31, 1
          %s233 = scalar_lea.sflag [#allocation5], %s232
          %s234 = sand.u32 %s31, 1
          %s235 = smul.addr %s234, 72
          %s236 = scalar_lea.vmem [#allocation4], %s235
          %s237 = smul.u32 36, %s21
          %239 = vsyncadd %s233, 0
          %s240 = smul.addr %s237, 2
          %s241 = scalar_lea.hbm %s0, %s240
          %s243 = sshll.u32 %s241, 4
          %s244 = int_to_ptr.hbm [resolvable:$true] %s243
          %s245 = sshll.u32 %s236, 4
          %s246 = int_to_ptr.vmem [resolvable:$true] %s245
          %248 = dma.hbm_to_vmem [thread:$0]  %s244, 1152, %s246, %s233
        $region32: #{tpu_custom_call.1} parent=27 // pred_fallthru
          _
        // Predicated region
        $region33: #{tpu_custom_call.1} parent=27 // pred_check
          %p249 = pneg %p67
        $region34: #{tpu_custom_call.1} parent=27 // pred_check_branch
          %251 = sbr.rel (%p249) target = $region36
        $region35: #{tpu_custom_call.1} parent=27 // pred_region
          %s252 = sand.u32 %s21, 1
          %s253 = scalar_lea.sflag [#allocation7], %s252
          %s254 = sand.u32 %s57, 1
          %s255 = smul.addr %s254, 72
          %s256 = scalar_lea.vmem [#allocation6], %s255
          %s257 = smul.u32 36, %s21
          %259 = vsyncadd %s253, 0
          %s260 = smul.addr %s257, 2
          %s261 = scalar_lea.hbm %s1, %s260
          %s263 = sshll.u32 %s261, 4
          %s264 = int_to_ptr.hbm [resolvable:$true] %s263
          %s265 = sshll.u32 %s256, 4
          %s266 = int_to_ptr.vmem [resolvable:$true] %s265
          %268 = dma.hbm_to_vmem [thread:$0]  %s264, 1152, %s266, %s253
        $region36: #{tpu_custom_call.1} parent=27 // pred_fallthru
          _
        // Predicated region
        $region37: #{tpu_custom_call.1} parent=27 // pred_check
          %p269 = pneg %p93
        $region38: #{tpu_custom_call.1} parent=27 // pred_check_branch
          %271 = sbr.rel (%p269) target = $region40
        $region39: #{tpu_custom_call.1} parent=27 // pred_region
          %s272 = sand.u32 %s21, 1
          %s273 = scalar_lea.sflag [#allocation7], %s272
          %s274 = sand.u32 %s83, 1
          %s275 = smul.addr %s274, 18432
          %s276 = scalar_lea.vmem [#allocation8], %s275
          %s277 = smul.u32 576, %s21
          %279 = vsyncadd %s273, 0
          %s280 = smul.addr %s277, 4
          %s281 = smul.addr %s280, 8
          %s282 = scalar_lea.hbm %s2, %s281
          %s283 = sshll.u32 %s282, 4
          %s284 = int_to_ptr.hbm [resolvable:$true] %s283
          %s285 = sshll.u32 %s276, 4
          %s286 = int_to_ptr.vmem [resolvable:$true] %s285
          %291 = dma.hbm_to_vmem [thread:$0]  %s284, 294912, %s286, %s273, 512, 512, 32
        $region40: #{tpu_custom_call.1} parent=27 // pred_fallthru
          _
      $region28: #{tpu_custom_call.1} parent=5 // pred_fallthru
        _
      %p292 = scmp.le.s32.totalorder 1, %s21
      %p293 = scmp.lt.s32.totalorder %s21, 5
      %p294 = pnand %p292, %p293
      %p295 = pneg %p294
      // Predicated region
      $region41: #{tpu_custom_call.1} parent=5 // pred_check
        _
      $region42: #{tpu_custom_call.1} parent=5 // pred_check_branch
        %297 = sbr.rel (%p294) target = $region44
      $region43: #{tpu_custom_call.1} parent=5 // pred_region
        %s298 = ssub.s32 %s21, 1
        %s299 = sand.u32 %s34, 1
        %s300 = scalar_lea.sflag [#allocation5], %s299
        %s301 = sand.u32 %s34, 1
        %s302 = smul.addr %s301, 72
        %s303 = scalar_lea.vmem [#allocation4], %s302
        // Predicated region
        $region45: #{tpu_custom_call.1} parent=43 // pred_check
          %p304 = pneg %p47
        $region46: #{tpu_custom_call.1} parent=43 // pred_check_branch
          %306 = sbr.rel (%p304) target = $region48
        $region47: #{tpu_custom_call.1} parent=43 // pred_region
          %308 = dma.done %s300, 1152
        $region48: #{tpu_custom_call.1} parent=43 // pred_fallthru
          _
        %s309 = sand.u32 %s26, 1
        %s310 = scalar_lea.sflag [#allocation7], %s309
        %s311 = sand.u32 %s60, 1
        %s312 = smul.addr %s311, 72
        %s313 = scalar_lea.vmem [#allocation6], %s312
        // Predicated region
        $region49: #{tpu_custom_call.1} parent=43 // pred_check
          %p314 = pneg %p73
        $region50: #{tpu_custom_call.1} parent=43 // pred_check_branch
          %316 = sbr.rel (%p314) target = $region52
        $region51: #{tpu_custom_call.1} parent=43 // pred_region
          %318 = dma.done %s310, 1152
        $region52: #{tpu_custom_call.1} parent=43 // pred_fallthru
          _
        %s319 = sand.u32 %s26, 1
        %s320 = scalar_lea.sflag [#allocation7], %s319
        %s321 = sand.u32 %s86, 1
        %s322 = smul.addr %s321, 18432
        %s323 = scalar_lea.vmem [#allocation8], %s322
        // Predicated region
        $region53: #{tpu_custom_call.1} parent=43 // pred_check
          %p324 = pneg %p99
        $region54: #{tpu_custom_call.1} parent=43 // pred_check_branch
          %326 = sbr.rel (%p324) target = $region56
        $region55: #{tpu_custom_call.1} parent=43 // pred_region
          %328 = dma.done %s320, 294912
        $region56: #{tpu_custom_call.1} parent=43 // pred_fallthru
          _
        // Predicated region
        $region57: #{tpu_custom_call.1} parent=43 // pred_check
          %p329 = pneg %p120
        $region58: #{tpu_custom_call.1} parent=43 // pred_check_branch
          %331 = sbr.rel (%p329) target = $region60
        $region59: #{tpu_custom_call.1} parent=43 // pred_region
          %333 = dma.done [#allocation10], 64
        $region60: #{tpu_custom_call.1} parent=43 // pred_fallthru
          _
        // Predicated region
        $region61: #{tpu_custom_call.1} parent=43 // pred_check
          %p334 = pneg %p141
        $region62: #{tpu_custom_call.1} parent=43 // pred_check_branch
          %336 = sbr.rel (%p334) target = $region64
        $region63: #{tpu_custom_call.1} parent=43 // pred_region
          %338 = dma.done [#allocation10], 64
        $region64: #{tpu_custom_call.1} parent=43 // pred_fallthru
          _
        %s339 = sand.u32 %s34, 1
        %s340 = scalar_lea.sflag [#allocation5], %s339
        %s341 = sand.u32 %s34, 1
        %s342 = smul.addr %s341, 72
        %s343 = scalar_lea.vmem [#allocation4], %s342
        %p344 = pneg %p47
        %p345 = pneg %p44
        %s346 = sand.u32 %s26, 1
        %s347 = scalar_lea.sflag [#allocation7], %s346
        %s348 = sand.u32 %s60, 1
        %s349 = smul.addr %s348, 72
        %s350 = scalar_lea.vmem [#allocation6], %s349
        %p351 = pneg %p73
        %p352 = pneg %p70
        %s353 = sand.u32 %s26, 1
        %s354 = scalar_lea.sflag [#allocation7], %s353
        %s355 = sand.u32 %s86, 1
        %s356 = smul.addr %s355, 18432
        %s357 = scalar_lea.vmem [#allocation8], %s356
        %p358 = pneg %p99
        %p359 = pneg %p96
        %p360 = pneg %p120
        %p361 = pneg %p117
        %p362 = pneg %p141
        %p363 = pneg %p138
        %p364 = pneg %p162
        %p365 = pneg %p159
        %p366 = pneg %p183
        %p367 = pneg %p180
        %s368 = smul.u32 36, %s26
        %s369 = smul.u32 36, %s26
        %s370 = smul.u32 576, %s26
        %p371 = scmp.eq.s32.totalorder %s26, 0
        // Predicated region
        $region65: #{tpu_custom_call.1} parent=43 // pred_check
          %p372 = pneg %p371
        $region66: #{tpu_custom_call.1} parent=43 // pred_check_branch
          %374 = sbr.rel (%p372) target = $region68
        $region67: #{tpu_custom_call.1} parent=43 // pred_region
          %375 = vst [vmem:[#allocation2] sm:$0xff] 0.0
        $region68: #{tpu_custom_call.1} parent=43 // pred_fallthru
          _
        %v376 = vld [vmem:[%s303] sm:$0xff]
        %v377 = vld [vmem:[%s303 + $0x8] sm:$0xff]
        %v378 = vld [vmem:[%s303 + $0x10] sm:$0xff]
        %v379 = vld [vmem:[%s303 + $0x18] sm:$0xff]
        %v380 = vld [vmem:[%s303 + $0x20] sm:$0xff]
        %v381 = vld [vmem:[%s303 + $0x28] sm:$0xff]
        %v382 = vld [vmem:[%s303 + $0x30] sm:$0xff]
        %v383 = vld [vmem:[%s303 + $0x38] sm:$0xff]
        %v384 = vld [vmem:[%s303 + $0x40] sm:$0xff]
        %v385 = vld [vmem:[%s313] sm:$0xff]
        %v386 = vld [vmem:[%s313 + $0x8] sm:$0xff]
        %v387 = vld [vmem:[%s313 + $0x10] sm:$0xff]
        %v388 = vld [vmem:[%s313 + $0x18] sm:$0xff]
        %v389 = vld [vmem:[%s313 + $0x20] sm:$0xff]
        %v390 = vld [vmem:[%s313 + $0x28] sm:$0xff]
        %v391 = vld [vmem:[%s313 + $0x30] sm:$0xff]
        %v392 = vld [vmem:[%s313 + $0x38] sm:$0xff]
        %v393 = vld [vmem:[%s313 + $0x40] sm:$0xff]
        %v394 = vsub.f32 %v376, %v385
        %v395 = vsub.f32 %v377, %v386
        %v396 = vsub.f32 %v378, %v387
        %v397 = vsub.f32 %v379, %v388
        %v398 = vsub.f32 %v380, %v389
        %v399 = vsub.f32 %v381, %v390
        %v400 = vsub.f32 %v382, %v391
        %v401 = vsub.f32 %v383, %v392
        %v402 = vsub.f32 %v384, %v393
        %v403 = vand.u32 2147483647, %v394
        %v404 = vand.u32 2147483647, %v395
        %v405 = vand.u32 2147483647, %v396
        %v406 = vand.u32 2147483647, %v397
        %v407 = vand.u32 2147483647, %v398
        %v408 = vand.u32 2147483647, %v399
        %v409 = vand.u32 2147483647, %v400
        %v410 = vand.u32 2147483647, %v401
        %v411 = vand.u32 2147483647, %v402
        %v412 = vld [vmem:[#allocation2] sm:$0xff]
        %v413 = vld [vmem:[%s323] sm:$0xff]
        %v414 = vld [vmem:[%s323 + $0x8] sm:$0xff]
        %v415 = vld [vmem:[%s323 + $0x10] sm:$0xff]
        %v416 = vld [vmem:[%s323 + $0x18] sm:$0xff]
        %v417 = vld [vmem:[%s323 + $0x20] sm:$0xff]
        %v418 = vld [vmem:[%s323 + $0x28] sm:$0xff]
        %v419 = vld [vmem:[%s323 + $0x30] sm:$0xff]
        %v420 = vld [vmem:[%s323 + $0x38] sm:$0xff]
        %v421 = vld [vmem:[%s323 + $0x40] sm:$0xff]
        %v422 = vld [vmem:[%s323 + $0x48] sm:$0xff]
        %v423 = vld [vmem:[%s323 + $0x50] sm:$0xff]
        %v424 = vld [vmem:[%s323 + $0x58] sm:$0xff]
        %v425 = vld [vmem:[%s323 + $0x60] sm:$0xff]
        %v426 = vld [vmem:[%s323 + $0x68] sm:$0xff]
        %v427 = vld [vmem:[%s323 + $0x70] sm:$0xff]
        %v428 = vld [vmem:[%s323 + $0x78] sm:$0xff]
        %v429 = vld [vmem:[%s323 + $0x80] sm:$0xff]
        %v430 = vld [vmem:[%s323 + $0x88] sm:$0xff]
        %v431 = vld [vmem:[%s323 + $0x90] sm:$0xff]
        %v432 = vld [vmem:[%s323 + $0x98] sm:$0xff]
        %v433 = vld [vmem:[%s323 + $0xa0] sm:$0xff]
        %v434 = vld [vmem:[%s323 + $0xa8] sm:$0xff]
        %v435 = vld [vmem:[%s323 + $0xb0] sm:$0xff]
        %v436 = vld [vmem:[%s323 + $0xb8] sm:$0xff]
        %v437 = vld [vmem:[%s323 + $0xc0] sm:$0xff]
        %v438 = vld [vmem:[%s323 + $0xc8] sm:$0xff]
        %v439 = vld [vmem:[%s323 + $0xd0] sm:$0xff]
        %v440 = vld [vmem:[%s323 + $0xd8] sm:$0xff]
        %v441 = vld [vmem:[%s323 + $0xe0] sm:$0xff]
        %v442 = vld [vmem:[%s323 + $0xe8] sm:$0xff]
        %v443 = vld [vmem:[%s323 + $0xf0] sm:$0xff]
        %v444 = vld [vmem:[%s323 + $0xf8] sm:$0xff]
        %v445 = vld [vmem:[%s323 + $0x100] sm:$0xff]
        %v446 = vld [vmem:[%s323 + $0x108] sm:$0xff]
        %v447 = vld [vmem:[%s323 + $0x110] sm:$0xff]
        %v448 = vld [vmem:[%s323 + $0x118] sm:$0xff]
        %v449 = vld [vmem:[%s323 + $0x120] sm:$0xff]
        %v450 = vld [vmem:[%s323 + $0x128] sm:$0xff]
        %v451 = vld [vmem:[%s323 + $0x130] sm:$0xff]
        %v452 = vld [vmem:[%s323 + $0x138] sm:$0xff]
        %v453 = vld [vmem:[%s323 + $0x140] sm:$0xff]
        %v454 = vld [vmem:[%s323 + $0x148] sm:$0xff]
        %v455 = vld [vmem:[%s323 + $0x150] sm:$0xff]
        %v456 = vld [vmem:[%s323 + $0x158] sm:$0xff]
        %v457 = vld [vmem:[%s323 + $0x160] sm:$0xff]
        %v458 = vld [vmem:[%s323 + $0x168] sm:$0xff]
        %v459 = vld [vmem:[%s323 + $0x170] sm:$0xff]
        %v460 = vld [vmem:[%s323 + $0x178] sm:$0xff]
        %v461 = vld [vmem:[%s323 + $0x180] sm:$0xff]
        %v462 = vld [vmem:[%s323 + $0x188] sm:$0xff]
        %v463 = vld [vmem:[%s323 + $0x190] sm:$0xff]
        %v464 = vld [vmem:[%s323 + $0x198] sm:$0xff]
        %v465 = vld [vmem:[%s323 + $0x1a0] sm:$0xff]
        %v466 = vld [vmem:[%s323 + $0x1a8] sm:$0xff]
        %v467 = vld [vmem:[%s323 + $0x1b0] sm:$0xff]
        %v468 = vld [vmem:[%s323 + $0x1b8] sm:$0xff]
        %v469 = vld [vmem:[%s323 + $0x1c0] sm:$0xff]
        %v470 = vld [vmem:[%s323 + $0x1c8] sm:$0xff]
        %v471 = vld [vmem:[%s323 + $0x1d0] sm:$0xff]
        %v472 = vld [vmem:[%s323 + $0x1d8] sm:$0xff]
        %v473 = vld [vmem:[%s323 + $0x1e0] sm:$0xff]
        %v474 = vld [vmem:[%s323 + $0x1e8] sm:$0xff]
        %v475 = vld [vmem:[%s323 + $0x1f0] sm:$0xff]
        %v476 = vld [vmem:[%s323 + $0x1f8] sm:$0xff]
        %v477 = vld [vmem:[%s323 + $0x200] sm:$0xff]
        %v478 = vld [vmem:[%s323 + $0x208] sm:$0xff]
        %v479 = vld [vmem:[%s323 + $0x210] sm:$0xff]
        %v480 = vld [vmem:[%s323 + $0x218] sm:$0xff]
        %v481 = vld [vmem:[%s323 + $0x220] sm:$0xff]
        %v482 = vld [vmem:[%s323 + $0x228] sm:$0xff]
        %v483 = vld [vmem:[%s323 + $0x230] sm:$0xff]
        %v484 = vld [vmem:[%s323 + $0x238] sm:$0xff]
        %v485 = vld [vmem:[%s323 + $0x240] sm:$0xff]
        %v486 = vld [vmem:[%s323 + $0x248] sm:$0xff]
        %v487 = vld [vmem:[%s323 + $0x250] sm:$0xff]
        %v488 = vld [vmem:[%s323 + $0x258] sm:$0xff]
        %v489 = vld [vmem:[%s323 + $0x260] sm:$0xff]
        %v490 = vld [vmem:[%s323 + $0x268] sm:$0xff]
        %v491 = vld [vmem:[%s323 + $0x270] sm:$0xff]
        %v492 = vld [vmem:[%s323 + $0x278] sm:$0xff]
        %v493 = vld [vmem:[%s323 + $0x280] sm:$0xff]
        %v494 = vld [vmem:[%s323 + $0x288] sm:$0xff]
        %v495 = vld [vmem:[%s323 + $0x290] sm:$0xff]
        %v496 = vld [vmem:[%s323 + $0x298] sm:$0xff]
        %v497 = vld [vmem:[%s323 + $0x2a0] sm:$0xff]
        %v498 = vld [vmem:[%s323 + $0x2a8] sm:$0xff]
        %v499 = vld [vmem:[%s323 + $0x2b0] sm:$0xff]
        %v500 = vld [vmem:[%s323 + $0x2b8] sm:$0xff]
        %v501 = vld [vmem:[%s323 + $0x2c0] sm:$0xff]
        %v502 = vld [vmem:[%s323 + $0x2c8] sm:$0xff]
        %v503 = vld [vmem:[%s323 + $0x2d0] sm:$0xff]
        %v504 = vld [vmem:[%s323 + $0x2d8] sm:$0xff]
        %v505 = vld [vmem:[%s323 + $0x2e0] sm:$0xff]
        %v506 = vld [vmem:[%s323 + $0x2e8] sm:$0xff]
        %v507 = vld [vmem:[%s323 + $0x2f0] sm:$0xff]
        %v508 = vld [vmem:[%s323 + $0x2f8] sm:$0xff]
        %v509 = vld [vmem:[%s323 + $0x300] sm:$0xff]
        %v510 = vld [vmem:[%s323 + $0x308] sm:$0xff]
        %v511 = vld [vmem:[%s323 + $0x310] sm:$0xff]
        %v512 = vld [vmem:[%s323 + $0x318] sm:$0xff]
        %v513 = vld [vmem:[%s323 + $0x320] sm:$0xff]
        %v514 = vld [vmem:[%s323 + $0x328] sm:$0xff]
        %v515 = vld [vmem:[%s323 + $0x330] sm:$0xff]
        %v516 = vld [vmem:[%s323 + $0x338] sm:$0xff]
        %v517 = vld [vmem:[%s323 + $0x340] sm:$0xff]
        %v518 = vld [vmem:[%s323 + $0x348] sm:$0xff]
        %v519 = vld [vmem:[%s323 + $0x350] sm:$0xff]
        %v520 = vld [vmem:[%s323 + $0x358] sm:$0xff]
        %v521 = vld [vmem:[%s323 + $0x360] sm:$0xff]
        %v522 = vld [vmem:[%s323 + $0x368] sm:$0xff]
        %v523 = vld [vmem:[%s323 + $0x370] sm:$0xff]
        %v524 = vld [vmem:[%s323 + $0x378] sm:$0xff]
        %v525 = vld [vmem:[%s323 + $0x380] sm:$0xff]
        %v526 = vld [vmem:[%s323 + $0x388] sm:$0xff]
        %v527 = vld [vmem:[%s323 + $0x390] sm:$0xff]
        %v528 = vld [vmem:[%s323 + $0x398] sm:$0xff]
        %v529 = vld [vmem:[%s323 + $0x3a0] sm:$0xff]
        %v530 = vld [vmem:[%s323 + $0x3a8] sm:$0xff]
        %v531 = vld [vmem:[%s323 + $0x3b0] sm:$0xff]
        %v532 = vld [vmem:[%s323 + $0x3b8] sm:$0xff]
        %v533 = vld [vmem:[%s323 + $0x3c0] sm:$0xff]
        %v534 = vld [vmem:[%s323 + $0x3c8] sm:$0xff]
        %v535 = vld [vmem:[%s323 + $0x3d0] sm:$0xff]
        %v536 = vld [vmem:[%s323 + $0x3d8] sm:$0xff]
        %v537 = vld [vmem:[%s323 + $0x3e0] sm:$0xff]
        %v538 = vld [vmem:[%s323 + $0x3e8] sm:$0xff]
        %v539 = vld [vmem:[%s323 + $0x3f0] sm:$0xff]
        %v540 = vld [vmem:[%s323 + $0x3f8] sm:$0xff]
        %v541 = vld [vmem:[%s323 + $0x400] sm:$0xff]
        %v542 = vld [vmem:[%s323 + $0x408] sm:$0xff]
        %v543 = vld [vmem:[%s323 + $0x410] sm:$0xff]
        %v544 = vld [vmem:[%s323 + $0x418] sm:$0xff]
        %v545 = vld [vmem:[%s323 + $0x420] sm:$0xff]
        %v546 = vld [vmem:[%s323 + $0x428] sm:$0xff]
        %v547 = vld [vmem:[%s323 + $0x430] sm:$0xff]
        %v548 = vld [vmem:[%s323 + $0x438] sm:$0xff]
        %v549 = vld [vmem:[%s323 + $0x440] sm:$0xff]
        %v550 = vld [vmem:[%s323 + $0x448] sm:$0xff]
        %v551 = vld [vmem:[%s323 + $0x450] sm:$0xff]
        %v552 = vld [vmem:[%s323 + $0x458] sm:$0xff]
        %v553 = vld [vmem:[%s323 + $0x460] sm:$0xff]
        %v554 = vld [vmem:[%s323 + $0x468] sm:$0xff]
        %v555 = vld [vmem:[%s323 + $0x470] sm:$0xff]
        %v556 = vld [vmem:[%s323 + $0x478] sm:$0xff]
        %v557 = vld [vmem:[%s323 + $0x480] sm:$0xff]
        %v558 = vld [vmem:[%s323 + $0x488] sm:$0xff]
        %v559 = vld [vmem:[%s323 + $0x490] sm:$0xff]
        %v560 = vld [vmem:[%s323 + $0x498] sm:$0xff]
        %v561 = vld [vmem:[%s323 + $0x4a0] sm:$0xff]
        %v562 = vld [vmem:[%s323 + $0x4a8] sm:$0xff]
        %v563 = vld [vmem:[%s323 + $0x4b0] sm:$0xff]
        %v564 = vld [vmem:[%s323 + $0x4b8] sm:$0xff]
        %v565 = vld [vmem:[%s323 + $0x4c0] sm:$0xff]
        %v566 = vld [vmem:[%s323 + $0x4c8] sm:$0xff]
        %v567 = vld [vmem:[%s323 + $0x4d0] sm:$0xff]
        %v568 = vld [vmem:[%s323 + $0x4d8] sm:$0xff]
        %v569 = vld [vmem:[%s323 + $0x4e0] sm:$0xff]
        %v570 = vld [vmem:[%s323 + $0x4e8] sm:$0xff]
        %v571 = vld [vmem:[%s323 + $0x4f0] sm:$0xff]
        %v572 = vld [vmem:[%s323 + $0x4f8] sm:$0xff]
        %v573 = vld [vmem:[%s323 + $0x500] sm:$0xff]
        %v574 = vld [vmem:[%s323 + $0x508] sm:$0xff]
        %v575 = vld [vmem:[%s323 + $0x510] sm:$0xff]
        %v576 = vld [vmem:[%s323 + $0x518] sm:$0xff]
        %v577 = vld [vmem:[%s323 + $0x520] sm:$0xff]
        %v578 = vld [vmem:[%s323 + $0x528] sm:$0xff]
        %v579 = vld [vmem:[%s323 + $0x530] sm:$0xff]
        %v580 = vld [vmem:[%s323 + $0x538] sm:$0xff]
        %v581 = vld [vmem:[%s323 + $0x540] sm:$0xff]
        %v582 = vld [vmem:[%s323 + $0x548] sm:$0xff]
        %v583 = vld [vmem:[%s323 + $0x550] sm:$0xff]
        %v584 = vld [vmem:[%s323 + $0x558] sm:$0xff]
        %v585 = vld [vmem:[%s323 + $0x560] sm:$0xff]
        %v586 = vld [vmem:[%s323 + $0x568] sm:$0xff]
        %v587 = vld [vmem:[%s323 + $0x570] sm:$0xff]
        %v588 = vld [vmem:[%s323 + $0x578] sm:$0xff]
        %v589 = vld [vmem:[%s323 + $0x580] sm:$0xff]
        %v590 = vld [vmem:[%s323 + $0x588] sm:$0xff]
        %v591 = vld [vmem:[%s323 + $0x590] sm:$0xff]
        %v592 = vld [vmem:[%s323 + $0x598] sm:$0xff]
        %v593 = vld [vmem:[%s323 + $0x5a0] sm:$0xff]
        %v594 = vld [vmem:[%s323 + $0x5a8] sm:$0xff]
        %v595 = vld [vmem:[%s323 + $0x5b0] sm:$0xff]
        %v596 = vld [vmem:[%s323 + $0x5b8] sm:$0xff]
        %v597 = vld [vmem:[%s323 + $0x5c0] sm:$0xff]
        %v598 = vld [vmem:[%s323 + $0x5c8] sm:$0xff]
        %v599 = vld [vmem:[%s323 + $0x5d0] sm:$0xff]
        %v600 = vld [vmem:[%s323 + $0x5d8] sm:$0xff]
        %v601 = vld [vmem:[%s323 + $0x5e0] sm:$0xff]
        %v602 = vld [vmem:[%s323 + $0x5e8] sm:$0xff]
        %v603 = vld [vmem:[%s323 + $0x5f0] sm:$0xff]
        %v604 = vld [vmem:[%s323 + $0x5f8] sm:$0xff]
        %v605 = vld [vmem:[%s323 + $0x600] sm:$0xff]
        %v606 = vld [vmem:[%s323 + $0x608] sm:$0xff]
        %v607 = vld [vmem:[%s323 + $0x610] sm:$0xff]
        %v608 = vld [vmem:[%s323 + $0x618] sm:$0xff]
        %v609 = vld [vmem:[%s323 + $0x620] sm:$0xff]
        %v610 = vld [vmem:[%s323 + $0x628] sm:$0xff]
        %v611 = vld [vmem:[%s323 + $0x630] sm:$0xff]
        %v612 = vld [vmem:[%s323 + $0x638] sm:$0xff]
        %v613 = vld [vmem:[%s323 + $0x640] sm:$0xff]
        %v614 = vld [vmem:[%s323 + $0x648] sm:$0xff]
        %v615 = vld [vmem:[%s323 + $0x650] sm:$0xff]
        %v616 = vld [vmem:[%s323 + $0x658] sm:$0xff]
        %v617 = vld [vmem:[%s323 + $0x660] sm:$0xff]
        %v618 = vld [vmem:[%s323 + $0x668] sm:$0xff]
        %v619 = vld [vmem:[%s323 + $0x670] sm:$0xff]
        %v620 = vld [vmem:[%s323 + $0x678] sm:$0xff]
        %v621 = vld [vmem:[%s323 + $0x680] sm:$0xff]
        %v622 = vld [vmem:[%s323 + $0x688] sm:$0xff]
        %v623 = vld [vmem:[%s323 + $0x690] sm:$0xff]
        %v624 = vld [vmem:[%s323 + $0x698] sm:$0xff]
        %v625 = vld [vmem:[%s323 + $0x6a0] sm:$0xff]
        %v626 = vld [vmem:[%s323 + $0x6a8] sm:$0xff]
        %v627 = vld [vmem:[%s323 + $0x6b0] sm:$0xff]
        %v628 = vld [vmem:[%s323 + $0x6b8] sm:$0xff]
        %v629 = vld [vmem:[%s323 + $0x6c0] sm:$0xff]
        %v630 = vld [vmem:[%s323 + $0x6c8] sm:$0xff]
        %v631 = vld [vmem:[%s323 + $0x6d0] sm:$0xff]
        %v632 = vld [vmem:[%s323 + $0x6d8] sm:$0xff]
        %v633 = vld [vmem:[%s323 + $0x6e0] sm:$0xff]
        %v634 = vld [vmem:[%s323 + $0x6e8] sm:$0xff]
        %v635 = vld [vmem:[%s323 + $0x6f0] sm:$0xff]
        %v636 = vld [vmem:[%s323 + $0x6f8] sm:$0xff]
        %v637 = vld [vmem:[%s323 + $0x700] sm:$0xff]
        %v638 = vld [vmem:[%s323 + $0x708] sm:$0xff]
        %v639 = vld [vmem:[%s323 + $0x710] sm:$0xff]
        %v640 = vld [vmem:[%s323 + $0x718] sm:$0xff]
        %v641 = vld [vmem:[%s323 + $0x720] sm:$0xff]
        %v642 = vld [vmem:[%s323 + $0x728] sm:$0xff]
        %v643 = vld [vmem:[%s323 + $0x730] sm:$0xff]
        %v644 = vld [vmem:[%s323 + $0x738] sm:$0xff]
        %v645 = vld [vmem:[%s323 + $0x740] sm:$0xff]
        %v646 = vld [vmem:[%s323 + $0x748] sm:$0xff]
        %v647 = vld [vmem:[%s323 + $0x750] sm:$0xff]
        %v648 = vld [vmem:[%s323 + $0x758] sm:$0xff]
        %v649 = vld [vmem:[%s323 + $0x760] sm:$0xff]
        %v650 = vld [vmem:[%s323 + $0x768] sm:$0xff]
        %v651 = vld [vmem:[%s323 + $0x770] sm:$0xff]
        %v652 = vld [vmem:[%s323 + $0x778] sm:$0xff]
        %v653 = vld [vmem:[%s323 + $0x780] sm:$0xff]
        %v654 = vld [vmem:[%s323 + $0x788] sm:$0xff]
        %v655 = vld [vmem:[%s323 + $0x790] sm:$0xff]
        %v656 = vld [vmem:[%s323 + $0x798] sm:$0xff]
        %v657 = vld [vmem:[%s323 + $0x7a0] sm:$0xff]
        %v658 = vld [vmem:[%s323 + $0x7a8] sm:$0xff]
        %v659 = vld [vmem:[%s323 + $0x7b0] sm:$0xff]
        %v660 = vld [vmem:[%s323 + $0x7b8] sm:$0xff]
        %v661 = vld [vmem:[%s323 + $0x7c0] sm:$0xff]
        %v662 = vld [vmem:[%s323 + $0x7c8] sm:$0xff]
        %v663 = vld [vmem:[%s323 + $0x7d0] sm:$0xff]
        %v664 = vld [vmem:[%s323 + $0x7d8] sm:$0xff]
        %v665 = vld [vmem:[%s323 + $0x7e0] sm:$0xff]
        %v666 = vld [vmem:[%s323 + $0x7e8] sm:$0xff]
        %v667 = vld [vmem:[%s323 + $0x7f0] sm:$0xff]
        %v668 = vld [vmem:[%s323 + $0x7f8] sm:$0xff]
        %v669 = vld [vmem:[%s323 + $0x800] sm:$0xff]
        %v670 = vld [vmem:[%s323 + $0x808] sm:$0xff]
        %v671 = vld [vmem:[%s323 + $0x810] sm:$0xff]
        %v672 = vld [vmem:[%s323 + $0x818] sm:$0xff]
        %v673 = vld [vmem:[%s323 + $0x820] sm:$0xff]
        %v674 = vld [vmem:[%s323 + $0x828] sm:$0xff]
        %v675 = vld [vmem:[%s323 + $0x830] sm:$0xff]
        %v676 = vld [vmem:[%s323 + $0x838] sm:$0xff]
        %v677 = vld [vmem:[%s323 + $0x840] sm:$0xff]
        %v678 = vld [vmem:[%s323 + $0x848] sm:$0xff]
        %v679 = vld [vmem:[%s323 + $0x850] sm:$0xff]
        %v680 = vld [vmem:[%s323 + $0x858] sm:$0xff]
        %v681 = vld [vmem:[%s323 + $0x860] sm:$0xff]
        %v682 = vld [vmem:[%s323 + $0x868] sm:$0xff]
        %v683 = vld [vmem:[%s323 + $0x870] sm:$0xff]
        %v684 = vld [vmem:[%s323 + $0x878] sm:$0xff]
        %v685 = vld [vmem:[%s323 + $0x880] sm:$0xff]
        %v686 = vld [vmem:[%s323 + $0x888] sm:$0xff]
        %v687 = vld [vmem:[%s323 + $0x890] sm:$0xff]
        %v688 = vld [vmem:[%s323 + $0x898] sm:$0xff]
        %v689 = vld [vmem:[%s323 + $0x8a0] sm:$0xff]
        %v690 = vld [vmem:[%s323 + $0x8a8] sm:$0xff]
        %v691 = vld [vmem:[%s323 + $0x8b0] sm:$0xff]
        %v692 = vld [vmem:[%s323 + $0x8b8] sm:$0xff]
        %v693 = vld [vmem:[%s323 + $0x8c0] sm:$0xff]
        %v694 = vld [vmem:[%s323 + $0x8c8] sm:$0xff]
        %v695 = vld [vmem:[%s323 + $0x8d0] sm:$0xff]
        %v696 = vld [vmem:[%s323 + $0x8d8] sm:$0xff]
        %v697 = vld [vmem:[%s323 + $0x8e0] sm:$0xff]
        %v698 = vld [vmem:[%s323 + $0x8e8] sm:$0xff]
        %v699 = vld [vmem:[%s323 + $0x8f0] sm:$0xff]
        %v700 = vld [vmem:[%s323 + $0x8f8] sm:$0xff]
        %v701 = vld [vmem:[%s323 + $0x900] sm:$0xff]
        %v702 = vld [vmem:[%s323 + $0x908] sm:$0xff]
        %v703 = vld [vmem:[%s323 + $0x910] sm:$0xff]
        %v704 = vld [vmem:[%s323 + $0x918] sm:$0xff]
        %v705 = vld [vmem:[%s323 + $0x920] sm:$0xff]
        %v706 = vld [vmem:[%s323 + $0x928] sm:$0xff]
        %v707 = vld [vmem:[%s323 + $0x930] sm:$0xff]
        %v708 = vld [vmem:[%s323 + $0x938] sm:$0xff]
        %v709 = vld [vmem:[%s323 + $0x940] sm:$0xff]
        %v710 = vld [vmem:[%s323 + $0x948] sm:$0xff]
        %v711 = vld [vmem:[%s323 + $0x950] sm:$0xff]
        %v712 = vld [vmem:[%s323 + $0x958] sm:$0xff]
        %v713 = vld [vmem:[%s323 + $0x960] sm:$0xff]
        %v714 = vld [vmem:[%s323 + $0x968] sm:$0xff]
        %v715 = vld [vmem:[%s323 + $0x970] sm:$0xff]
        %v716 = vld [vmem:[%s323 + $0x978] sm:$0xff]
        %v717 = vld [vmem:[%s323 + $0x980] sm:$0xff]
        %v718 = vld [vmem:[%s323 + $0x988] sm:$0xff]
        %v719 = vld [vmem:[%s323 + $0x990] sm:$0xff]
        %v720 = vld [vmem:[%s323 + $0x998] sm:$0xff]
        %v721 = vld [vmem:[%s323 + $0x9a0] sm:$0xff]
        %v722 = vld [vmem:[%s323 + $0x9a8] sm:$0xff]
        %v723 = vld [vmem:[%s323 + $0x9b0] sm:$0xff]
        %v724 = vld [vmem:[%s323 + $0x9b8] sm:$0xff]
        %v725 = vld [vmem:[%s323 + $0x9c0] sm:$0xff]
        %v726 = vld [vmem:[%s323 + $0x9c8] sm:$0xff]
        %v727 = vld [vmem:[%s323 + $0x9d0] sm:$0xff]
        %v728 = vld [vmem:[%s323 + $0x9d8] sm:$0xff]
        %v729 = vld [vmem:[%s323 + $0x9e0] sm:$0xff]
        %v730 = vld [vmem:[%s323 + $0x9e8] sm:$0xff]
        %v731 = vld [vmem:[%s323 + $0x9f0] sm:$0xff]
        %v732 = vld [vmem:[%s323 + $0x9f8] sm:$0xff]
        %v733 = vld [vmem:[%s323 + $0xa00] sm:$0xff]
        %v734 = vld [vmem:[%s323 + $0xa08] sm:$0xff]
        %v735 = vld [vmem:[%s323 + $0xa10] sm:$0xff]
        %v736 = vld [vmem:[%s323 + $0xa18] sm:$0xff]
        %v737 = vld [vmem:[%s323 + $0xa20] sm:$0xff]
        %v738 = vld [vmem:[%s323 + $0xa28] sm:$0xff]
        %v739 = vld [vmem:[%s323 + $0xa30] sm:$0xff]
        %v740 = vld [vmem:[%s323 + $0xa38] sm:$0xff]
        %v741 = vld [vmem:[%s323 + $0xa40] sm:$0xff]
        %v742 = vld [vmem:[%s323 + $0xa48] sm:$0xff]
        %v743 = vld [vmem:[%s323 + $0xa50] sm:$0xff]
        %v744 = vld [vmem:[%s323 + $0xa58] sm:$0xff]
        %v745 = vld [vmem:[%s323 + $0xa60] sm:$0xff]
        %v746 = vld [vmem:[%s323 + $0xa68] sm:$0xff]
        %v747 = vld [vmem:[%s323 + $0xa70] sm:$0xff]
        %v748 = vld [vmem:[%s323 + $0xa78] sm:$0xff]
        %v749 = vld [vmem:[%s323 + $0xa80] sm:$0xff]
        %v750 = vld [vmem:[%s323 + $0xa88] sm:$0xff]
        %v751 = vld [vmem:[%s323 + $0xa90] sm:$0xff]
        %v752 = vld [vmem:[%s323 + $0xa98] sm:$0xff]
        %v753 = vld [vmem:[%s323 + $0xaa0] sm:$0xff]
        %v754 = vld [vmem:[%s323 + $0xaa8] sm:$0xff]
        %v755 = vld [vmem:[%s323 + $0xab0] sm:$0xff]
        %v756 = vld [vmem:[%s323 + $0xab8] sm:$0xff]
        %v757 = vld [vmem:[%s323 + $0xac0] sm:$0xff]
        %v758 = vld [vmem:[%s323 + $0xac8] sm:$0xff]
        %v759 = vld [vmem:[%s323 + $0xad0] sm:$0xff]
        %v760 = vld [vmem:[%s323 + $0xad8] sm:$0xff]
        %v761 = vld [vmem:[%s323 + $0xae0] sm:$0xff]
        %v762 = vld [vmem:[%s323 + $0xae8] sm:$0xff]
        %v763 = vld [vmem:[%s323 + $0xaf0] sm:$0xff]
        %v764 = vld [vmem:[%s323 + $0xaf8] sm:$0xff]
        %v765 = vld [vmem:[%s323 + $0xb00] sm:$0xff]
        %v766 = vld [vmem:[%s323 + $0xb08] sm:$0xff]
        %v767 = vld [vmem:[%s323 + $0xb10] sm:$0xff]
        %v768 = vld [vmem:[%s323 + $0xb18] sm:$0xff]
        %v769 = vld [vmem:[%s323 + $0xb20] sm:$0xff]
        %v770 = vld [vmem:[%s323 + $0xb28] sm:$0xff]
        %v771 = vld [vmem:[%s323 + $0xb30] sm:$0xff]
        %v772 = vld [vmem:[%s323 + $0xb38] sm:$0xff]
        %v773 = vld [vmem:[%s323 + $0xb40] sm:$0xff]
        %v774 = vld [vmem:[%s323 + $0xb48] sm:$0xff]
        %v775 = vld [vmem:[%s323 + $0xb50] sm:$0xff]
        %v776 = vld [vmem:[%s323 + $0xb58] sm:$0xff]
        %v777 = vld [vmem:[%s323 + $0xb60] sm:$0xff]
        %v778 = vld [vmem:[%s323 + $0xb68] sm:$0xff]
        %v779 = vld [vmem:[%s323 + $0xb70] sm:$0xff]
        %v780 = vld [vmem:[%s323 + $0xb78] sm:$0xff]
        %v781 = vld [vmem:[%s323 + $0xb80] sm:$0xff]
        %v782 = vld [vmem:[%s323 + $0xb88] sm:$0xff]
        %v783 = vld [vmem:[%s323 + $0xb90] sm:$0xff]
        %v784 = vld [vmem:[%s323 + $0xb98] sm:$0xff]
        %v785 = vld [vmem:[%s323 + $0xba0] sm:$0xff]
        %v786 = vld [vmem:[%s323 + $0xba8] sm:$0xff]
        %v787 = vld [vmem:[%s323 + $0xbb0] sm:$0xff]
        %v788 = vld [vmem:[%s323 + $0xbb8] sm:$0xff]
        %v789 = vld [vmem:[%s323 + $0xbc0] sm:$0xff]
        %v790 = vld [vmem:[%s323 + $0xbc8] sm:$0xff]
        %v791 = vld [vmem:[%s323 + $0xbd0] sm:$0xff]
        %v792 = vld [vmem:[%s323 + $0xbd8] sm:$0xff]
        %v793 = vld [vmem:[%s323 + $0xbe0] sm:$0xff]
        %v794 = vld [vmem:[%s323 + $0xbe8] sm:$0xff]
        %v795 = vld [vmem:[%s323 + $0xbf0] sm:$0xff]
        %v796 = vld [vmem:[%s323 + $0xbf8] sm:$0xff]
        %v797 = vld [vmem:[%s323 + $0xc00] sm:$0xff]
        %v798 = vld [vmem:[%s323 + $0xc08] sm:$0xff]
        %v799 = vld [vmem:[%s323 + $0xc10] sm:$0xff]
        %v800 = vld [vmem:[%s323 + $0xc18] sm:$0xff]
        %v801 = vld [vmem:[%s323 + $0xc20] sm:$0xff]
        %v802 = vld [vmem:[%s323 + $0xc28] sm:$0xff]
        %v803 = vld [vmem:[%s323 + $0xc30] sm:$0xff]
        %v804 = vld [vmem:[%s323 + $0xc38] sm:$0xff]
        %v805 = vld [vmem:[%s323 + $0xc40] sm:$0xff]
        %v806 = vld [vmem:[%s323 + $0xc48] sm:$0xff]
        %v807 = vld [vmem:[%s323 + $0xc50] sm:$0xff]
        %v808 = vld [vmem:[%s323 + $0xc58] sm:$0xff]
        %v809 = vld [vmem:[%s323 + $0xc60] sm:$0xff]
        %v810 = vld [vmem:[%s323 + $0xc68] sm:$0xff]
        %v811 = vld [vmem:[%s323 + $0xc70] sm:$0xff]
        %v812 = vld [vmem:[%s323 + $0xc78] sm:$0xff]
        %v813 = vld [vmem:[%s323 + $0xc80] sm:$0xff]
        %v814 = vld [vmem:[%s323 + $0xc88] sm:$0xff]
        %v815 = vld [vmem:[%s323 + $0xc90] sm:$0xff]
        %v816 = vld [vmem:[%s323 + $0xc98] sm:$0xff]
        %v817 = vld [vmem:[%s323 + $0xca0] sm:$0xff]
        %v818 = vld [vmem:[%s323 + $0xca8] sm:$0xff]
        %v819 = vld [vmem:[%s323 + $0xcb0] sm:$0xff]
        %v820 = vld [vmem:[%s323 + $0xcb8] sm:$0xff]
        %v821 = vld [vmem:[%s323 + $0xcc0] sm:$0xff]
        %v822 = vld [vmem:[%s323 + $0xcc8] sm:$0xff]
        %v823 = vld [vmem:[%s323 + $0xcd0] sm:$0xff]
        %v824 = vld [vmem:[%s323 + $0xcd8] sm:$0xff]
        %v825 = vld [vmem:[%s323 + $0xce0] sm:$0xff]
        %v826 = vld [vmem:[%s323 + $0xce8] sm:$0xff]
        %v827 = vld [vmem:[%s323 + $0xcf0] sm:$0xff]
        %v828 = vld [vmem:[%s323 + $0xcf8] sm:$0xff]
        %v829 = vld [vmem:[%s323 + $0xd00] sm:$0xff]
        %v830 = vld [vmem:[%s323 + $0xd08] sm:$0xff]
        %v831 = vld [vmem:[%s323 + $0xd10] sm:$0xff]
        %v832 = vld [vmem:[%s323 + $0xd18] sm:$0xff]
        %v833 = vld [vmem:[%s323 + $0xd20] sm:$0xff]
        %v834 = vld [vmem:[%s323 + $0xd28] sm:$0xff]
        %v835 = vld [vmem:[%s323 + $0xd30] sm:$0xff]
        %v836 = vld [vmem:[%s323 + $0xd38] sm:$0xff]
        %v837 = vld [vmem:[%s323 + $0xd40] sm:$0xff]
        %v838 = vld [vmem:[%s323 + $0xd48] sm:$0xff]
        %v839 = vld [vmem:[%s323 + $0xd50] sm:$0xff]
        %v840 = vld [vmem:[%s323 + $0xd58] sm:$0xff]
        %v841 = vld [vmem:[%s323 + $0xd60] sm:$0xff]
        %v842 = vld [vmem:[%s323 + $0xd68] sm:$0xff]
        %v843 = vld [vmem:[%s323 + $0xd70] sm:$0xff]
        %v844 = vld [vmem:[%s323 + $0xd78] sm:$0xff]
        %v845 = vld [vmem:[%s323 + $0xd80] sm:$0xff]
        %v846 = vld [vmem:[%s323 + $0xd88] sm:$0xff]
        %v847 = vld [vmem:[%s323 + $0xd90] sm:$0xff]
        %v848 = vld [vmem:[%s323 + $0xd98] sm:$0xff]
        %v849 = vld [vmem:[%s323 + $0xda0] sm:$0xff]
        %v850 = vld [vmem:[%s323 + $0xda8] sm:$0xff]
        %v851 = vld [vmem:[%s323 + $0xdb0] sm:$0xff]
        %v852 = vld [vmem:[%s323 + $0xdb8] sm:$0xff]
        %v853 = vld [vmem:[%s323 + $0xdc0] sm:$0xff]
        %v854 = vld [vmem:[%s323 + $0xdc8] sm:$0xff]
        %v855 = vld [vmem:[%s323 + $0xdd0] sm:$0xff]
        %v856 = vld [vmem:[%s323 + $0xdd8] sm:$0xff]
        %v857 = vld [vmem:[%s323 + $0xde0] sm:$0xff]
        %v858 = vld [vmem:[%s323 + $0xde8] sm:$0xff]
        %v859 = vld [vmem:[%s323 + $0xdf0] sm:$0xff]
        %v860 = vld [vmem:[%s323 + $0xdf8] sm:$0xff]
        %v861 = vld [vmem:[%s323 + $0xe00] sm:$0xff]
        %v862 = vld [vmem:[%s323 + $0xe08] sm:$0xff]
        %v863 = vld [vmem:[%s323 + $0xe10] sm:$0xff]
        %v864 = vld [vmem:[%s323 + $0xe18] sm:$0xff]
        %v865 = vld [vmem:[%s323 + $0xe20] sm:$0xff]
        %v866 = vld [vmem:[%s323 + $0xe28] sm:$0xff]
        %v867 = vld [vmem:[%s323 + $0xe30] sm:$0xff]
        %v868 = vld [vmem:[%s323 + $0xe38] sm:$0xff]
        %v869 = vld [vmem:[%s323 + $0xe40] sm:$0xff]
        %v870 = vld [vmem:[%s323 + $0xe48] sm:$0xff]
        %v871 = vld [vmem:[%s323 + $0xe50] sm:$0xff]
        %v872 = vld [vmem:[%s323 + $0xe58] sm:$0xff]
        %v873 = vld [vmem:[%s323 + $0xe60] sm:$0xff]
        %v874 = vld [vmem:[%s323 + $0xe68] sm:$0xff]
        %v875 = vld [vmem:[%s323 + $0xe70] sm:$0xff]
        %v876 = vld [vmem:[%s323 + $0xe78] sm:$0xff]
        %v877 = vld [vmem:[%s323 + $0xe80] sm:$0xff]
        %v878 = vld [vmem:[%s323 + $0xe88] sm:$0xff]
        %v879 = vld [vmem:[%s323 + $0xe90] sm:$0xff]
        %v880 = vld [vmem:[%s323 + $0xe98] sm:$0xff]
        %v881 = vld [vmem:[%s323 + $0xea0] sm:$0xff]
        %v882 = vld [vmem:[%s323 + $0xea8] sm:$0xff]
        %v883 = vld [vmem:[%s323 + $0xeb0] sm:$0xff]
        %v884 = vld [vmem:[%s323 + $0xeb8] sm:$0xff]
        %v885 = vld [vmem:[%s323 + $0xec0] sm:$0xff]
        %v886 = vld [vmem:[%s323 + $0xec8] sm:$0xff]
        %v887 = vld [vmem:[%s323 + $0xed0] sm:$0xff]
        %v888 = vld [vmem:[%s323 + $0xed8] sm:$0xff]
        %v889 = vld [vmem:[%s323 + $0xee0] sm:$0xff]
        %v890 = vld [vmem:[%s323 + $0xee8] sm:$0xff]
        %v891 = vld [vmem:[%s323 + $0xef0] sm:$0xff]
        %v892 = vld [vmem:[%s323 + $0xef8] sm:$0xff]
        %v893 = vld [vmem:[%s323 + $0xf00] sm:$0xff]
        %v894 = vld [vmem:[%s323 + $0xf08] sm:$0xff]
        %v895 = vld [vmem:[%s323 + $0xf10] sm:$0xff]
        %v896 = vld [vmem:[%s323 + $0xf18] sm:$0xff]
        %v897 = vld [vmem:[%s323 + $0xf20] sm:$0xff]
        %v898 = vld [vmem:[%s323 + $0xf28] sm:$0xff]
        %v899 = vld [vmem:[%s323 + $0xf30] sm:$0xff]
        %v900 = vld [vmem:[%s323 + $0xf38] sm:$0xff]
        %v901 = vld [vmem:[%s323 + $0xf40] sm:$0xff]
        %v902 = vld [vmem:[%s323 + $0xf48] sm:$0xff]
        %v903 = vld [vmem:[%s323 + $0xf50] sm:$0xff]
        %v904 = vld [vmem:[%s323 + $0xf58] sm:$0xff]
        %v905 = vld [vmem:[%s323 + $0xf60] sm:$0xff]
        %v906 = vld [vmem:[%s323 + $0xf68] sm:$0xff]
        %v907 = vld [vmem:[%s323 + $0xf70] sm:$0xff]
        %v908 = vld [vmem:[%s323 + $0xf78] sm:$0xff]
        %v909 = vld [vmem:[%s323 + $0xf80] sm:$0xff]
        %v910 = vld [vmem:[%s323 + $0xf88] sm:$0xff]
        %v911 = vld [vmem:[%s323 + $0xf90] sm:$0xff]
        %v912 = vld [vmem:[%s323 + $0xf98] sm:$0xff]
        %v913 = vld [vmem:[%s323 + $0xfa0] sm:$0xff]
        %v914 = vld [vmem:[%s323 + $0xfa8] sm:$0xff]
        %v915 = vld [vmem:[%s323 + $0xfb0] sm:$0xff]
        %v916 = vld [vmem:[%s323 + $0xfb8] sm:$0xff]
        %v917 = vld [vmem:[%s323 + $0xfc0] sm:$0xff]
        %v918 = vld [vmem:[%s323 + $0xfc8] sm:$0xff]
        %v919 = vld [vmem:[%s323 + $0xfd0] sm:$0xff]
        %v920 = vld [vmem:[%s323 + $0xfd8] sm:$0xff]
        %v921 = vld [vmem:[%s323 + $0xfe0] sm:$0xff]
        %v922 = vld [vmem:[%s323 + $0xfe8] sm:$0xff]
        %v923 = vld [vmem:[%s323 + $0xff0] sm:$0xff]
        %v924 = vld [vmem:[%s323 + $0xff8] sm:$0xff]
        %v925 = vld [vmem:[%s323 + $0x1000] sm:$0xff]
        %v926 = vld [vmem:[%s323 + $0x1008] sm:$0xff]
        %v927 = vld [vmem:[%s323 + $0x1010] sm:$0xff]
        %v928 = vld [vmem:[%s323 + $0x1018] sm:$0xff]
        %v929 = vld [vmem:[%s323 + $0x1020] sm:$0xff]
        %v930 = vld [vmem:[%s323 + $0x1028] sm:$0xff]
        %v931 = vld [vmem:[%s323 + $0x1030] sm:$0xff]
        %v932 = vld [vmem:[%s323 + $0x1038] sm:$0xff]
        %v933 = vld [vmem:[%s323 + $0x1040] sm:$0xff]
        %v934 = vld [vmem:[%s323 + $0x1048] sm:$0xff]
        %v935 = vld [vmem:[%s323 + $0x1050] sm:$0xff]
        %v936 = vld [vmem:[%s323 + $0x1058] sm:$0xff]
        %v937 = vld [vmem:[%s323 + $0x1060] sm:$0xff]
        %v938 = vld [vmem:[%s323 + $0x1068] sm:$0xff]
        %v939 = vld [vmem:[%s323 + $0x1070] sm:$0xff]
        %v940 = vld [vmem:[%s323 + $0x1078] sm:$0xff]
        %v941 = vld [vmem:[%s323 + $0x1080] sm:$0xff]
        %v942 = vld [vmem:[%s323 + $0x1088] sm:$0xff]
        %v943 = vld [vmem:[%s323 + $0x1090] sm:$0xff]
        %v944 = vld [vmem:[%s323 + $0x1098] sm:$0xff]
        %v945 = vld [vmem:[%s323 + $0x10a0] sm:$0xff]
        %v946 = vld [vmem:[%s323 + $0x10a8] sm:$0xff]
        %v947 = vld [vmem:[%s323 + $0x10b0] sm:$0xff]
        %v948 = vld [vmem:[%s323 + $0x10b8] sm:$0xff]
        %v949 = vld [vmem:[%s323 + $0x10c0] sm:$0xff]
        %v950 = vld [vmem:[%s323 + $0x10c8] sm:$0xff]
        %v951 = vld [vmem:[%s323 + $0x10d0] sm:$0xff]
        %v952 = vld [vmem:[%s323 + $0x10d8] sm:$0xff]
        %v953 = vld [vmem:[%s323 + $0x10e0] sm:$0xff]
        %v954 = vld [vmem:[%s323 + $0x10e8] sm:$0xff]
        %v955 = vld [vmem:[%s323 + $0x10f0] sm:$0xff]
        %v956 = vld [vmem:[%s323 + $0x10f8] sm:$0xff]
        %v957 = vld [vmem:[%s323 + $0x1100] sm:$0xff]
        %v958 = vld [vmem:[%s323 + $0x1108] sm:$0xff]
        %v959 = vld [vmem:[%s323 + $0x1110] sm:$0xff]
        %v960 = vld [vmem:[%s323 + $0x1118] sm:$0xff]
        %v961 = vld [vmem:[%s323 + $0x1120] sm:$0xff]
        %v962 = vld [vmem:[%s323 + $0x1128] sm:$0xff]
        %v963 = vld [vmem:[%s323 + $0x1130] sm:$0xff]
        %v964 = vld [vmem:[%s323 + $0x1138] sm:$0xff]
        %v965 = vld [vmem:[%s323 + $0x1140] sm:$0xff]
        %v966 = vld [vmem:[%s323 + $0x1148] sm:$0xff]
        %v967 = vld [vmem:[%s323 + $0x1150] sm:$0xff]
        %v968 = vld [vmem:[%s323 + $0x1158] sm:$0xff]
        %v969 = vld [vmem:[%s323 + $0x1160] sm:$0xff]
        %v970 = vld [vmem:[%s323 + $0x1168] sm:$0xff]
        %v971 = vld [vmem:[%s323 + $0x1170] sm:$0xff]
        %v972 = vld [vmem:[%s323 + $0x1178] sm:$0xff]
        %v973 = vld [vmem:[%s323 + $0x1180] sm:$0xff]
        %v974 = vld [vmem:[%s323 + $0x1188] sm:$0xff]
        %v975 = vld [vmem:[%s323 + $0x1190] sm:$0xff]
        %v976 = vld [vmem:[%s323 + $0x1198] sm:$0xff]
        %v977 = vld [vmem:[%s323 + $0x11a0] sm:$0xff]
        %v978 = vld [vmem:[%s323 + $0x11a8] sm:$0xff]
        %v979 = vld [vmem:[%s323 + $0x11b0] sm:$0xff]
        %v980 = vld [vmem:[%s323 + $0x11b8] sm:$0xff]
        %v981 = vld [vmem:[%s323 + $0x11c0] sm:$0xff]
        %v982 = vld [vmem:[%s323 + $0x11c8] sm:$0xff]
        %v983 = vld [vmem:[%s323 + $0x11d0] sm:$0xff]
        %v984 = vld [vmem:[%s323 + $0x11d8] sm:$0xff]
        %v985 = vld [vmem:[%s323 + $0x11e0] sm:$0xff]
        %v986 = vld [vmem:[%s323 + $0x11e8] sm:$0xff]
        %v987 = vld [vmem:[%s323 + $0x11f0] sm:$0xff]
        %v988 = vld [vmem:[%s323 + $0x11f8] sm:$0xff]
        %v989 = vld [vmem:[%s323 + $0x1200] sm:$0xff]
        %v990 = vld [vmem:[%s323 + $0x1208] sm:$0xff]
        %v991 = vld [vmem:[%s323 + $0x1210] sm:$0xff]
        %v992 = vld [vmem:[%s323 + $0x1218] sm:$0xff]
        %v993 = vld [vmem:[%s323 + $0x1220] sm:$0xff]
        %v994 = vld [vmem:[%s323 + $0x1228] sm:$0xff]
        %v995 = vld [vmem:[%s323 + $0x1230] sm:$0xff]
        %v996 = vld [vmem:[%s323 + $0x1238] sm:$0xff]
        %v997 = vld [vmem:[%s323 + $0x1240] sm:$0xff]
        %v998 = vld [vmem:[%s323 + $0x1248] sm:$0xff]
        %v999 = vld [vmem:[%s323 + $0x1250] sm:$0xff]
        %v1000 = vld [vmem:[%s323 + $0x1258] sm:$0xff]
        %v1001 = vld [vmem:[%s323 + $0x1260] sm:$0xff]
        %v1002 = vld [vmem:[%s323 + $0x1268] sm:$0xff]
        %v1003 = vld [vmem:[%s323 + $0x1270] sm:$0xff]
        %v1004 = vld [vmem:[%s323 + $0x1278] sm:$0xff]
        %v1005 = vld [vmem:[%s323 + $0x1280] sm:$0xff]
        %v1006 = vld [vmem:[%s323 + $0x1288] sm:$0xff]
        %v1007 = vld [vmem:[%s323 + $0x1290] sm:$0xff]
        %v1008 = vld [vmem:[%s323 + $0x1298] sm:$0xff]
        %v1009 = vld [vmem:[%s323 + $0x12a0] sm:$0xff]
        %v1010 = vld [vmem:[%s323 + $0x12a8] sm:$0xff]
        %v1011 = vld [vmem:[%s323 + $0x12b0] sm:$0xff]
        %v1012 = vld [vmem:[%s323 + $0x12b8] sm:$0xff]
        %v1013 = vld [vmem:[%s323 + $0x12c0] sm:$0xff]
        %v1014 = vld [vmem:[%s323 + $0x12c8] sm:$0xff]
        %v1015 = vld [vmem:[%s323 + $0x12d0] sm:$0xff]
        %v1016 = vld [vmem:[%s323 + $0x12d8] sm:$0xff]
        %v1017 = vld [vmem:[%s323 + $0x12e0] sm:$0xff]
        %v1018 = vld [vmem:[%s323 + $0x12e8] sm:$0xff]
        %v1019 = vld [vmem:[%s323 + $0x12f0] sm:$0xff]
        %v1020 = vld [vmem:[%s323 + $0x12f8] sm:$0xff]
        %v1021 = vld [vmem:[%s323 + $0x1300] sm:$0xff]
        %v1022 = vld [vmem:[%s323 + $0x1308] sm:$0xff]
        %v1023 = vld [vmem:[%s323 + $0x1310] sm:$0xff]
        %v1024 = vld [vmem:[%s323 + $0x1318] sm:$0xff]
        %v1025 = vld [vmem:[%s323 + $0x1320] sm:$0xff]
        %v1026 = vld [vmem:[%s323 + $0x1328] sm:$0xff]
        %v1027 = vld [vmem:[%s323 + $0x1330] sm:$0xff]
        %v1028 = vld [vmem:[%s323 + $0x1338] sm:$0xff]
        %v1029 = vld [vmem:[%s323 + $0x1340] sm:$0xff]
        %v1030 = vld [vmem:[%s323 + $0x1348] sm:$0xff]
        %v1031 = vld [vmem:[%s323 + $0x1350] sm:$0xff]
        %v1032 = vld [vmem:[%s323 + $0x1358] sm:$0xff]
        %v1033 = vld [vmem:[%s323 + $0x1360] sm:$0xff]
        %v1034 = vld [vmem:[%s323 + $0x1368] sm:$0xff]
        %v1035 = vld [vmem:[%s323 + $0x1370] sm:$0xff]
        %v1036 = vld [vmem:[%s323 + $0x1378] sm:$0xff]
        %v1037 = vld [vmem:[%s323 + $0x1380] sm:$0xff]
        %v1038 = vld [vmem:[%s323 + $0x1388] sm:$0xff]
        %v1039 = vld [vmem:[%s323 + $0x1390] sm:$0xff]
        %v1040 = vld [vmem:[%s323 + $0x1398] sm:$0xff]
        %v1041 = vld [vmem:[%s323 + $0x13a0] sm:$0xff]
        %v1042 = vld [vmem:[%s323 + $0x13a8] sm:$0xff]
        %v1043 = vld [vmem:[%s323 + $0x13b0] sm:$0xff]
        %v1044 = vld [vmem:[%s323 + $0x13b8] sm:$0xff]
        %v1045 = vld [vmem:[%s323 + $0x13c0] sm:$0xff]
        %v1046 = vld [vmem:[%s323 + $0x13c8] sm:$0xff]
        %v1047 = vld [vmem:[%s323 + $0x13d0] sm:$0xff]
        %v1048 = vld [vmem:[%s323 + $0x13d8] sm:$0xff]
        %v1049 = vld [vmem:[%s323 + $0x13e0] sm:$0xff]
        %v1050 = vld [vmem:[%s323 + $0x13e8] sm:$0xff]
        %v1051 = vld [vmem:[%s323 + $0x13f0] sm:$0xff]
        %v1052 = vld [vmem:[%s323 + $0x13f8] sm:$0xff]
        %v1053 = vld [vmem:[%s323 + $0x1400] sm:$0xff]
        %v1054 = vld [vmem:[%s323 + $0x1408] sm:$0xff]
        %v1055 = vld [vmem:[%s323 + $0x1410] sm:$0xff]
        %v1056 = vld [vmem:[%s323 + $0x1418] sm:$0xff]
        %v1057 = vld [vmem:[%s323 + $0x1420] sm:$0xff]
        %v1058 = vld [vmem:[%s323 + $0x1428] sm:$0xff]
        %v1059 = vld [vmem:[%s323 + $0x1430] sm:$0xff]
        %v1060 = vld [vmem:[%s323 + $0x1438] sm:$0xff]
        %v1061 = vld [vmem:[%s323 + $0x1440] sm:$0xff]
        %v1062 = vld [vmem:[%s323 + $0x1448] sm:$0xff]
        %v1063 = vld [vmem:[%s323 + $0x1450] sm:$0xff]
        %v1064 = vld [vmem:[%s323 + $0x1458] sm:$0xff]
        %v1065 = vld [vmem:[%s323 + $0x1460] sm:$0xff]
        %v1066 = vld [vmem:[%s323 + $0x1468] sm:$0xff]
        %v1067 = vld [vmem:[%s323 + $0x1470] sm:$0xff]
        %v1068 = vld [vmem:[%s323 + $0x1478] sm:$0xff]
        %v1069 = vld [vmem:[%s323 + $0x1480] sm:$0xff]
        %v1070 = vld [vmem:[%s323 + $0x1488] sm:$0xff]
        %v1071 = vld [vmem:[%s323 + $0x1490] sm:$0xff]
        %v1072 = vld [vmem:[%s323 + $0x1498] sm:$0xff]
        %v1073 = vld [vmem:[%s323 + $0x14a0] sm:$0xff]
        %v1074 = vld [vmem:[%s323 + $0x14a8] sm:$0xff]
        %v1075 = vld [vmem:[%s323 + $0x14b0] sm:$0xff]
        %v1076 = vld [vmem:[%s323 + $0x14b8] sm:$0xff]
        %v1077 = vld [vmem:[%s323 + $0x14c0] sm:$0xff]
        %v1078 = vld [vmem:[%s323 + $0x14c8] sm:$0xff]
        %v1079 = vld [vmem:[%s323 + $0x14d0] sm:$0xff]
        %v1080 = vld [vmem:[%s323 + $0x14d8] sm:$0xff]
        %v1081 = vld [vmem:[%s323 + $0x14e0] sm:$0xff]
        %v1082 = vld [vmem:[%s323 + $0x14e8] sm:$0xff]
        %v1083 = vld [vmem:[%s323 + $0x14f0] sm:$0xff]
        %v1084 = vld [vmem:[%s323 + $0x14f8] sm:$0xff]
        %v1085 = vld [vmem:[%s323 + $0x1500] sm:$0xff]
        %v1086 = vld [vmem:[%s323 + $0x1508] sm:$0xff]
        %v1087 = vld [vmem:[%s323 + $0x1510] sm:$0xff]
        %v1088 = vld [vmem:[%s323 + $0x1518] sm:$0xff]
        %v1089 = vld [vmem:[%s323 + $0x1520] sm:$0xff]
        %v1090 = vld [vmem:[%s323 + $0x1528] sm:$0xff]
        %v1091 = vld [vmem:[%s323 + $0x1530] sm:$0xff]
        %v1092 = vld [vmem:[%s323 + $0x1538] sm:$0xff]
        %v1093 = vld [vmem:[%s323 + $0x1540] sm:$0xff]
        %v1094 = vld [vmem:[%s323 + $0x1548] sm:$0xff]
        %v1095 = vld [vmem:[%s323 + $0x1550] sm:$0xff]
        %v1096 = vld [vmem:[%s323 + $0x1558] sm:$0xff]
        %v1097 = vld [vmem:[%s323 + $0x1560] sm:$0xff]
        %v1098 = vld [vmem:[%s323 + $0x1568] sm:$0xff]
        %v1099 = vld [vmem:[%s323 + $0x1570] sm:$0xff]
        %v1100 = vld [vmem:[%s323 + $0x1578] sm:$0xff]
        %v1101 = vld [vmem:[%s323 + $0x1580] sm:$0xff]
        %v1102 = vld [vmem:[%s323 + $0x1588] sm:$0xff]
        %v1103 = vld [vmem:[%s323 + $0x1590] sm:$0xff]
        %v1104 = vld [vmem:[%s323 + $0x1598] sm:$0xff]
        %v1105 = vld [vmem:[%s323 + $0x15a0] sm:$0xff]
        %v1106 = vld [vmem:[%s323 + $0x15a8] sm:$0xff]
        %v1107 = vld [vmem:[%s323 + $0x15b0] sm:$0xff]
        %v1108 = vld [vmem:[%s323 + $0x15b8] sm:$0xff]
        %v1109 = vld [vmem:[%s323 + $0x15c0] sm:$0xff]
        %v1110 = vld [vmem:[%s323 + $0x15c8] sm:$0xff]
        %v1111 = vld [vmem:[%s323 + $0x15d0] sm:$0xff]
        %v1112 = vld [vmem:[%s323 + $0x15d8] sm:$0xff]
        %v1113 = vld [vmem:[%s323 + $0x15e0] sm:$0xff]
        %v1114 = vld [vmem:[%s323 + $0x15e8] sm:$0xff]
        %v1115 = vld [vmem:[%s323 + $0x15f0] sm:$0xff]
        %v1116 = vld [vmem:[%s323 + $0x15f8] sm:$0xff]
        %v1117 = vld [vmem:[%s323 + $0x1600] sm:$0xff]
        %v1118 = vld [vmem:[%s323 + $0x1608] sm:$0xff]
        %v1119 = vld [vmem:[%s323 + $0x1610] sm:$0xff]
        %v1120 = vld [vmem:[%s323 + $0x1618] sm:$0xff]
        %v1121 = vld [vmem:[%s323 + $0x1620] sm:$0xff]
        %v1122 = vld [vmem:[%s323 + $0x1628] sm:$0xff]
        %v1123 = vld [vmem:[%s323 + $0x1630] sm:$0xff]
        %v1124 = vld [vmem:[%s323 + $0x1638] sm:$0xff]
        %v1125 = vld [vmem:[%s323 + $0x1640] sm:$0xff]
        %v1126 = vld [vmem:[%s323 + $0x1648] sm:$0xff]
        %v1127 = vld [vmem:[%s323 + $0x1650] sm:$0xff]
        %v1128 = vld [vmem:[%s323 + $0x1658] sm:$0xff]
        %v1129 = vld [vmem:[%s323 + $0x1660] sm:$0xff]
        %v1130 = vld [vmem:[%s323 + $0x1668] sm:$0xff]
        %v1131 = vld [vmem:[%s323 + $0x1670] sm:$0xff]
        %v1132 = vld [vmem:[%s323 + $0x1678] sm:$0xff]
        %v1133 = vld [vmem:[%s323 + $0x1680] sm:$0xff]
        %v1134 = vld [vmem:[%s323 + $0x1688] sm:$0xff]
        %v1135 = vld [vmem:[%s323 + $0x1690] sm:$0xff]
        %v1136 = vld [vmem:[%s323 + $0x1698] sm:$0xff]
        %v1137 = vld [vmem:[%s323 + $0x16a0] sm:$0xff]
        %v1138 = vld [vmem:[%s323 + $0x16a8] sm:$0xff]
        %v1139 = vld [vmem:[%s323 + $0x16b0] sm:$0xff]
        %v1140 = vld [vmem:[%s323 + $0x16b8] sm:$0xff]
        %v1141 = vld [vmem:[%s323 + $0x16c0] sm:$0xff]
        %v1142 = vld [vmem:[%s323 + $0x16c8] sm:$0xff]
        %v1143 = vld [vmem:[%s323 + $0x16d0] sm:$0xff]
        %v1144 = vld [vmem:[%s323 + $0x16d8] sm:$0xff]
        %v1145 = vld [vmem:[%s323 + $0x16e0] sm:$0xff]
        %v1146 = vld [vmem:[%s323 + $0x16e8] sm:$0xff]
        %v1147 = vld [vmem:[%s323 + $0x16f0] sm:$0xff]
        %v1148 = vld [vmem:[%s323 + $0x16f8] sm:$0xff]
        %v1149 = vld [vmem:[%s323 + $0x1700] sm:$0xff]
        %v1150 = vld [vmem:[%s323 + $0x1708] sm:$0xff]
        %v1151 = vld [vmem:[%s323 + $0x1710] sm:$0xff]
        %v1152 = vld [vmem:[%s323 + $0x1718] sm:$0xff]
        %v1153 = vld [vmem:[%s323 + $0x1720] sm:$0xff]
        %v1154 = vld [vmem:[%s323 + $0x1728] sm:$0xff]
        %v1155 = vld [vmem:[%s323 + $0x1730] sm:$0xff]
        %v1156 = vld [vmem:[%s323 + $0x1738] sm:$0xff]
        %v1157 = vld [vmem:[%s323 + $0x1740] sm:$0xff]
        %v1158 = vld [vmem:[%s323 + $0x1748] sm:$0xff]
        %v1159 = vld [vmem:[%s323 + $0x1750] sm:$0xff]
        %v1160 = vld [vmem:[%s323 + $0x1758] sm:$0xff]
        %v1161 = vld [vmem:[%s323 + $0x1760] sm:$0xff]
        %v1162 = vld [vmem:[%s323 + $0x1768] sm:$0xff]
        %v1163 = vld [vmem:[%s323 + $0x1770] sm:$0xff]
        %v1164 = vld [vmem:[%s323 + $0x1778] sm:$0xff]
        %v1165 = vld [vmem:[%s323 + $0x1780] sm:$0xff]
        %v1166 = vld [vmem:[%s323 + $0x1788] sm:$0xff]
        %v1167 = vld [vmem:[%s323 + $0x1790] sm:$0xff]
        %v1168 = vld [vmem:[%s323 + $0x1798] sm:$0xff]
        %v1169 = vld [vmem:[%s323 + $0x17a0] sm:$0xff]
        %v1170 = vld [vmem:[%s323 + $0x17a8] sm:$0xff]
        %v1171 = vld [vmem:[%s323 + $0x17b0] sm:$0xff]
        %v1172 = vld [vmem:[%s323 + $0x17b8] sm:$0xff]
        %v1173 = vld [vmem:[%s323 + $0x17c0] sm:$0xff]
        %v1174 = vld [vmem:[%s323 + $0x17c8] sm:$0xff]
        %v1175 = vld [vmem:[%s323 + $0x17d0] sm:$0xff]
        %v1176 = vld [vmem:[%s323 + $0x17d8] sm:$0xff]
        %v1177 = vld [vmem:[%s323 + $0x17e0] sm:$0xff]
        %v1178 = vld [vmem:[%s323 + $0x17e8] sm:$0xff]
        %v1179 = vld [vmem:[%s323 + $0x17f0] sm:$0xff]
        %v1180 = vld [vmem:[%s323 + $0x17f8] sm:$0xff]
        %v1181 = vld [vmem:[%s323 + $0x1800] sm:$0xff]
        %v1182 = vld [vmem:[%s323 + $0x1808] sm:$0xff]
        %v1183 = vld [vmem:[%s323 + $0x1810] sm:$0xff]
        %v1184 = vld [vmem:[%s323 + $0x1818] sm:$0xff]
        %v1185 = vld [vmem:[%s323 + $0x1820] sm:$0xff]
        %v1186 = vld [vmem:[%s323 + $0x1828] sm:$0xff]
        %v1187 = vld [vmem:[%s323 + $0x1830] sm:$0xff]
        %v1188 = vld [vmem:[%s323 + $0x1838] sm:$0xff]
        %v1189 = vld [vmem:[%s323 + $0x1840] sm:$0xff]
        %v1190 = vld [vmem:[%s323 + $0x1848] sm:$0xff]
        %v1191 = vld [vmem:[%s323 + $0x1850] sm:$0xff]
        %v1192 = vld [vmem:[%s323 + $0x1858] sm:$0xff]
        %v1193 = vld [vmem:[%s323 + $0x1860] sm:$0xff]
        %v1194 = vld [vmem:[%s323 + $0x1868] sm:$0xff]
        %v1195 = vld [vmem:[%s323 + $0x1870] sm:$0xff]
        %v1196 = vld [vmem:[%s323 + $0x1878] sm:$0xff]
        %v1197 = vld [vmem:[%s323 + $0x1880] sm:$0xff]
        %v1198 = vld [vmem:[%s323 + $0x1888] sm:$0xff]
        %v1199 = vld [vmem:[%s323 + $0x1890] sm:$0xff]
        %v1200 = vld [vmem:[%s323 + $0x1898] sm:$0xff]
        %v1201 = vld [vmem:[%s323 + $0x18a0] sm:$0xff]
        %v1202 = vld [vmem:[%s323 + $0x18a8] sm:$0xff]
        %v1203 = vld [vmem:[%s323 + $0x18b0] sm:$0xff]
        %v1204 = vld [vmem:[%s323 + $0x18b8] sm:$0xff]
        %v1205 = vld [vmem:[%s323 + $0x18c0] sm:$0xff]
        %v1206 = vld [vmem:[%s323 + $0x18c8] sm:$0xff]
        %v1207 = vld [vmem:[%s323 + $0x18d0] sm:$0xff]
        %v1208 = vld [vmem:[%s323 + $0x18d8] sm:$0xff]
        %v1209 = vld [vmem:[%s323 + $0x18e0] sm:$0xff]
        %v1210 = vld [vmem:[%s323 + $0x18e8] sm:$0xff]
        %v1211 = vld [vmem:[%s323 + $0x18f0] sm:$0xff]
        %v1212 = vld [vmem:[%s323 + $0x18f8] sm:$0xff]
        %v1213 = vld [vmem:[%s323 + $0x1900] sm:$0xff]
        %v1214 = vld [vmem:[%s323 + $0x1908] sm:$0xff]
        %v1215 = vld [vmem:[%s323 + $0x1910] sm:$0xff]
        %v1216 = vld [vmem:[%s323 + $0x1918] sm:$0xff]
        %v1217 = vld [vmem:[%s323 + $0x1920] sm:$0xff]
        %v1218 = vld [vmem:[%s323 + $0x1928] sm:$0xff]
        %v1219 = vld [vmem:[%s323 + $0x1930] sm:$0xff]
        %v1220 = vld [vmem:[%s323 + $0x1938] sm:$0xff]
        %v1221 = vld [vmem:[%s323 + $0x1940] sm:$0xff]
        %v1222 = vld [vmem:[%s323 + $0x1948] sm:$0xff]
        %v1223 = vld [vmem:[%s323 + $0x1950] sm:$0xff]
        %v1224 = vld [vmem:[%s323 + $0x1958] sm:$0xff]
        %v1225 = vld [vmem:[%s323 + $0x1960] sm:$0xff]
        %v1226 = vld [vmem:[%s323 + $0x1968] sm:$0xff]
        %v1227 = vld [vmem:[%s323 + $0x1970] sm:$0xff]
        %v1228 = vld [vmem:[%s323 + $0x1978] sm:$0xff]
        %v1229 = vld [vmem:[%s323 + $0x1980] sm:$0xff]
        %v1230 = vld [vmem:[%s323 + $0x1988] sm:$0xff]
        %v1231 = vld [vmem:[%s323 + $0x1990] sm:$0xff]
        %v1232 = vld [vmem:[%s323 + $0x1998] sm:$0xff]
        %v1233 = vld [vmem:[%s323 + $0x19a0] sm:$0xff]
        %v1234 = vld [vmem:[%s323 + $0x19a8] sm:$0xff]
        %v1235 = vld [vmem:[%s323 + $0x19b0] sm:$0xff]
        %v1236 = vld [vmem:[%s323 + $0x19b8] sm:$0xff]
        %v1237 = vld [vmem:[%s323 + $0x19c0] sm:$0xff]
        %v1238 = vld [vmem:[%s323 + $0x19c8] sm:$0xff]
        %v1239 = vld [vmem:[%s323 + $0x19d0] sm:$0xff]
        %v1240 = vld [vmem:[%s323 + $0x19d8] sm:$0xff]
        %v1241 = vld [vmem:[%s323 + $0x19e0] sm:$0xff]
        %v1242 = vld [vmem:[%s323 + $0x19e8] sm:$0xff]
        %v1243 = vld [vmem:[%s323 + $0x19f0] sm:$0xff]
        %v1244 = vld [vmem:[%s323 + $0x19f8] sm:$0xff]
        %v1245 = vld [vmem:[%s323 + $0x1a00] sm:$0xff]
        %v1246 = vld [vmem:[%s323 + $0x1a08] sm:$0xff]
        %v1247 = vld [vmem:[%s323 + $0x1a10] sm:$0xff]
        %v1248 = vld [vmem:[%s323 + $0x1a18] sm:$0xff]
        %v1249 = vld [vmem:[%s323 + $0x1a20] sm:$0xff]
        %v1250 = vld [vmem:[%s323 + $0x1a28] sm:$0xff]
        %v1251 = vld [vmem:[%s323 + $0x1a30] sm:$0xff]
        %v1252 = vld [vmem:[%s323 + $0x1a38] sm:$0xff]
        %v1253 = vld [vmem:[%s323 + $0x1a40] sm:$0xff]
        %v1254 = vld [vmem:[%s323 + $0x1a48] sm:$0xff]
        %v1255 = vld [vmem:[%s323 + $0x1a50] sm:$0xff]
        %v1256 = vld [vmem:[%s323 + $0x1a58] sm:$0xff]
        %v1257 = vld [vmem:[%s323 + $0x1a60] sm:$0xff]
        %v1258 = vld [vmem:[%s323 + $0x1a68] sm:$0xff]
        %v1259 = vld [vmem:[%s323 + $0x1a70] sm:$0xff]
        %v1260 = vld [vmem:[%s323 + $0x1a78] sm:$0xff]
        %v1261 = vld [vmem:[%s323 + $0x1a80] sm:$0xff]
        %v1262 = vld [vmem:[%s323 + $0x1a88] sm:$0xff]
        %v1263 = vld [vmem:[%s323 + $0x1a90] sm:$0xff]
        %v1264 = vld [vmem:[%s323 + $0x1a98] sm:$0xff]
        %v1265 = vld [vmem:[%s323 + $0x1aa0] sm:$0xff]
        %v1266 = vld [vmem:[%s323 + $0x1aa8] sm:$0xff]
        %v1267 = vld [vmem:[%s323 + $0x1ab0] sm:$0xff]
        %v1268 = vld [vmem:[%s323 + $0x1ab8] sm:$0xff]
        %v1269 = vld [vmem:[%s323 + $0x1ac0] sm:$0xff]
        %v1270 = vld [vmem:[%s323 + $0x1ac8] sm:$0xff]
        %v1271 = vld [vmem:[%s323 + $0x1ad0] sm:$0xff]
        %v1272 = vld [vmem:[%s323 + $0x1ad8] sm:$0xff]
        %v1273 = vld [vmem:[%s323 + $0x1ae0] sm:$0xff]
        %v1274 = vld [vmem:[%s323 + $0x1ae8] sm:$0xff]
        %v1275 = vld [vmem:[%s323 + $0x1af0] sm:$0xff]
        %v1276 = vld [vmem:[%s323 + $0x1af8] sm:$0xff]
        %v1277 = vld [vmem:[%s323 + $0x1b00] sm:$0xff]
        %v1278 = vld [vmem:[%s323 + $0x1b08] sm:$0xff]
        %v1279 = vld [vmem:[%s323 + $0x1b10] sm:$0xff]
        %v1280 = vld [vmem:[%s323 + $0x1b18] sm:$0xff]
        %v1281 = vld [vmem:[%s323 + $0x1b20] sm:$0xff]
        %v1282 = vld [vmem:[%s323 + $0x1b28] sm:$0xff]
        %v1283 = vld [vmem:[%s323 + $0x1b30] sm:$0xff]
        %v1284 = vld [vmem:[%s323 + $0x1b38] sm:$0xff]
        %v1285 = vld [vmem:[%s323 + $0x1b40] sm:$0xff]
        %v1286 = vld [vmem:[%s323 + $0x1b48] sm:$0xff]
        %v1287 = vld [vmem:[%s323 + $0x1b50] sm:$0xff]
        %v1288 = vld [vmem:[%s323 + $0x1b58] sm:$0xff]
        %v1289 = vld [vmem:[%s323 + $0x1b60] sm:$0xff]
        %v1290 = vld [vmem:[%s323 + $0x1b68] sm:$0xff]
        %v1291 = vld [vmem:[%s323 + $0x1b70] sm:$0xff]
        %v1292 = vld [vmem:[%s323 + $0x1b78] sm:$0xff]
        %v1293 = vld [vmem:[%s323 + $0x1b80] sm:$0xff]
        %v1294 = vld [vmem:[%s323 + $0x1b88] sm:$0xff]
        %v1295 = vld [vmem:[%s323 + $0x1b90] sm:$0xff]
        %v1296 = vld [vmem:[%s323 + $0x1b98] sm:$0xff]
        %v1297 = vld [vmem:[%s323 + $0x1ba0] sm:$0xff]
        %v1298 = vld [vmem:[%s323 + $0x1ba8] sm:$0xff]
        %v1299 = vld [vmem:[%s323 + $0x1bb0] sm:$0xff]
        %v1300 = vld [vmem:[%s323 + $0x1bb8] sm:$0xff]
        %v1301 = vld [vmem:[%s323 + $0x1bc0] sm:$0xff]
        %v1302 = vld [vmem:[%s323 + $0x1bc8] sm:$0xff]
        %v1303 = vld [vmem:[%s323 + $0x1bd0] sm:$0xff]
        %v1304 = vld [vmem:[%s323 + $0x1bd8] sm:$0xff]
        %v1305 = vld [vmem:[%s323 + $0x1be0] sm:$0xff]
        %v1306 = vld [vmem:[%s323 + $0x1be8] sm:$0xff]
        %v1307 = vld [vmem:[%s323 + $0x1bf0] sm:$0xff]
        %v1308 = vld [vmem:[%s323 + $0x1bf8] sm:$0xff]
        %v1309 = vld [vmem:[%s323 + $0x1c00] sm:$0xff]
        %v1310 = vld [vmem:[%s323 + $0x1c08] sm:$0xff]
        %v1311 = vld [vmem:[%s323 + $0x1c10] sm:$0xff]
        %v1312 = vld [vmem:[%s323 + $0x1c18] sm:$0xff]
        %v1313 = vld [vmem:[%s323 + $0x1c20] sm:$0xff]
        %v1314 = vld [vmem:[%s323 + $0x1c28] sm:$0xff]
        %v1315 = vld [vmem:[%s323 + $0x1c30] sm:$0xff]
        %v1316 = vld [vmem:[%s323 + $0x1c38] sm:$0xff]
        %v1317 = vld [vmem:[%s323 + $0x1c40] sm:$0xff]
        %v1318 = vld [vmem:[%s323 + $0x1c48] sm:$0xff]
        %v1319 = vld [vmem:[%s323 + $0x1c50] sm:$0xff]
        %v1320 = vld [vmem:[%s323 + $0x1c58] sm:$0xff]
        %v1321 = vld [vmem:[%s323 + $0x1c60] sm:$0xff]
        %v1322 = vld [vmem:[%s323 + $0x1c68] sm:$0xff]
        %v1323 = vld [vmem:[%s323 + $0x1c70] sm:$0xff]
        %v1324 = vld [vmem:[%s323 + $0x1c78] sm:$0xff]
        %v1325 = vld [vmem:[%s323 + $0x1c80] sm:$0xff]
        %v1326 = vld [vmem:[%s323 + $0x1c88] sm:$0xff]
        %v1327 = vld [vmem:[%s323 + $0x1c90] sm:$0xff]
        %v1328 = vld [vmem:[%s323 + $0x1c98] sm:$0xff]
        %v1329 = vld [vmem:[%s323 + $0x1ca0] sm:$0xff]
        %v1330 = vld [vmem:[%s323 + $0x1ca8] sm:$0xff]
        %v1331 = vld [vmem:[%s323 + $0x1cb0] sm:$0xff]
        %v1332 = vld [vmem:[%s323 + $0x1cb8] sm:$0xff]
        %v1333 = vld [vmem:[%s323 + $0x1cc0] sm:$0xff]
        %v1334 = vld [vmem:[%s323 + $0x1cc8] sm:$0xff]
        %v1335 = vld [vmem:[%s323 + $0x1cd0] sm:$0xff]
        %v1336 = vld [vmem:[%s323 + $0x1cd8] sm:$0xff]
        %v1337 = vld [vmem:[%s323 + $0x1ce0] sm:$0xff]
        %v1338 = vld [vmem:[%s323 + $0x1ce8] sm:$0xff]
        %v1339 = vld [vmem:[%s323 + $0x1cf0] sm:$0xff]
        %v1340 = vld [vmem:[%s323 + $0x1cf8] sm:$0xff]
        %v1341 = vld [vmem:[%s323 + $0x1d00] sm:$0xff]
        %v1342 = vld [vmem:[%s323 + $0x1d08] sm:$0xff]
        %v1343 = vld [vmem:[%s323 + $0x1d10] sm:$0xff]
        %v1344 = vld [vmem:[%s323 + $0x1d18] sm:$0xff]
        %v1345 = vld [vmem:[%s323 + $0x1d20] sm:$0xff]
        %v1346 = vld [vmem:[%s323 + $0x1d28] sm:$0xff]
        %v1347 = vld [vmem:[%s323 + $0x1d30] sm:$0xff]
        %v1348 = vld [vmem:[%s323 + $0x1d38] sm:$0xff]
        %v1349 = vld [vmem:[%s323 + $0x1d40] sm:$0xff]
        %v1350 = vld [vmem:[%s323 + $0x1d48] sm:$0xff]
        %v1351 = vld [vmem:[%s323 + $0x1d50] sm:$0xff]
        %v1352 = vld [vmem:[%s323 + $0x1d58] sm:$0xff]
        %v1353 = vld [vmem:[%s323 + $0x1d60] sm:$0xff]
        %v1354 = vld [vmem:[%s323 + $0x1d68] sm:$0xff]
        %v1355 = vld [vmem:[%s323 + $0x1d70] sm:$0xff]
        %v1356 = vld [vmem:[%s323 + $0x1d78] sm:$0xff]
        %v1357 = vld [vmem:[%s323 + $0x1d80] sm:$0xff]
        %v1358 = vld [vmem:[%s323 + $0x1d88] sm:$0xff]
        %v1359 = vld [vmem:[%s323 + $0x1d90] sm:$0xff]
        %v1360 = vld [vmem:[%s323 + $0x1d98] sm:$0xff]
        %v1361 = vld [vmem:[%s323 + $0x1da0] sm:$0xff]
        %v1362 = vld [vmem:[%s323 + $0x1da8] sm:$0xff]
        %v1363 = vld [vmem:[%s323 + $0x1db0] sm:$0xff]
        %v1364 = vld [vmem:[%s323 + $0x1db8] sm:$0xff]
        %v1365 = vld [vmem:[%s323 + $0x1dc0] sm:$0xff]
        %v1366 = vld [vmem:[%s323 + $0x1dc8] sm:$0xff]
        %v1367 = vld [vmem:[%s323 + $0x1dd0] sm:$0xff]
        %v1368 = vld [vmem:[%s323 + $0x1dd8] sm:$0xff]
        %v1369 = vld [vmem:[%s323 + $0x1de0] sm:$0xff]
        %v1370 = vld [vmem:[%s323 + $0x1de8] sm:$0xff]
        %v1371 = vld [vmem:[%s323 + $0x1df0] sm:$0xff]
        %v1372 = vld [vmem:[%s323 + $0x1df8] sm:$0xff]
        %v1373 = vld [vmem:[%s323 + $0x1e00] sm:$0xff]
        %v1374 = vld [vmem:[%s323 + $0x1e08] sm:$0xff]
        %v1375 = vld [vmem:[%s323 + $0x1e10] sm:$0xff]
        %v1376 = vld [vmem:[%s323 + $0x1e18] sm:$0xff]
        %v1377 = vld [vmem:[%s323 + $0x1e20] sm:$0xff]
        %v1378 = vld [vmem:[%s323 + $0x1e28] sm:$0xff]
        %v1379 = vld [vmem:[%s323 + $0x1e30] sm:$0xff]
        %v1380 = vld [vmem:[%s323 + $0x1e38] sm:$0xff]
        %v1381 = vld [vmem:[%s323 + $0x1e40] sm:$0xff]
        %v1382 = vld [vmem:[%s323 + $0x1e48] sm:$0xff]
        %v1383 = vld [vmem:[%s323 + $0x1e50] sm:$0xff]
        %v1384 = vld [vmem:[%s323 + $0x1e58] sm:$0xff]
        %v1385 = vld [vmem:[%s323 + $0x1e60] sm:$0xff]
        %v1386 = vld [vmem:[%s323 + $0x1e68] sm:$0xff]
        %v1387 = vld [vmem:[%s323 + $0x1e70] sm:$0xff]
        %v1388 = vld [vmem:[%s323 + $0x1e78] sm:$0xff]
        %v1389 = vld [vmem:[%s323 + $0x1e80] sm:$0xff]
        %v1390 = vld [vmem:[%s323 + $0x1e88] sm:$0xff]
        %v1391 = vld [vmem:[%s323 + $0x1e90] sm:$0xff]
        %v1392 = vld [vmem:[%s323 + $0x1e98] sm:$0xff]
        %v1393 = vld [vmem:[%s323 + $0x1ea0] sm:$0xff]
        %v1394 = vld [vmem:[%s323 + $0x1ea8] sm:$0xff]
        %v1395 = vld [vmem:[%s323 + $0x1eb0] sm:$0xff]
        %v1396 = vld [vmem:[%s323 + $0x1eb8] sm:$0xff]
        %v1397 = vld [vmem:[%s323 + $0x1ec0] sm:$0xff]
        %v1398 = vld [vmem:[%s323 + $0x1ec8] sm:$0xff]
        %v1399 = vld [vmem:[%s323 + $0x1ed0] sm:$0xff]
        %v1400 = vld [vmem:[%s323 + $0x1ed8] sm:$0xff]
        %v1401 = vld [vmem:[%s323 + $0x1ee0] sm:$0xff]
        %v1402 = vld [vmem:[%s323 + $0x1ee8] sm:$0xff]
        %v1403 = vld [vmem:[%s323 + $0x1ef0] sm:$0xff]
        %v1404 = vld [vmem:[%s323 + $0x1ef8] sm:$0xff]
        %v1405 = vld [vmem:[%s323 + $0x1f00] sm:$0xff]
        %v1406 = vld [vmem:[%s323 + $0x1f08] sm:$0xff]
        %v1407 = vld [vmem:[%s323 + $0x1f10] sm:$0xff]
        %v1408 = vld [vmem:[%s323 + $0x1f18] sm:$0xff]
        %v1409 = vld [vmem:[%s323 + $0x1f20] sm:$0xff]
        %v1410 = vld [vmem:[%s323 + $0x1f28] sm:$0xff]
        %v1411 = vld [vmem:[%s323 + $0x1f30] sm:$0xff]
        %v1412 = vld [vmem:[%s323 + $0x1f38] sm:$0xff]
        %v1413 = vld [vmem:[%s323 + $0x1f40] sm:$0xff]
        %v1414 = vld [vmem:[%s323 + $0x1f48] sm:$0xff]
        %v1415 = vld [vmem:[%s323 + $0x1f50] sm:$0xff]
        %v1416 = vld [vmem:[%s323 + $0x1f58] sm:$0xff]
        %v1417 = vld [vmem:[%s323 + $0x1f60] sm:$0xff]
        %v1418 = vld [vmem:[%s323 + $0x1f68] sm:$0xff]
        %v1419 = vld [vmem:[%s323 + $0x1f70] sm:$0xff]
        %v1420 = vld [vmem:[%s323 + $0x1f78] sm:$0xff]
        %v1421 = vld [vmem:[%s323 + $0x1f80] sm:$0xff]
        %v1422 = vld [vmem:[%s323 + $0x1f88] sm:$0xff]
        %v1423 = vld [vmem:[%s323 + $0x1f90] sm:$0xff]
        %v1424 = vld [vmem:[%s323 + $0x1f98] sm:$0xff]
        %v1425 = vld [vmem:[%s323 + $0x1fa0] sm:$0xff]
        %v1426 = vld [vmem:[%s323 + $0x1fa8] sm:$0xff]
        %v1427 = vld [vmem:[%s323 + $0x1fb0] sm:$0xff]
        %v1428 = vld [vmem:[%s323 + $0x1fb8] sm:$0xff]
        %v1429 = vld [vmem:[%s323 + $0x1fc0] sm:$0xff]
        %v1430 = vld [vmem:[%s323 + $0x1fc8] sm:$0xff]
        %v1431 = vld [vmem:[%s323 + $0x1fd0] sm:$0xff]
        %v1432 = vld [vmem:[%s323 + $0x1fd8] sm:$0xff]
        %v1433 = vld [vmem:[%s323 + $0x1fe0] sm:$0xff]
        %v1434 = vld [vmem:[%s323 + $0x1fe8] sm:$0xff]
        %v1435 = vld [vmem:[%s323 + $0x1ff0] sm:$0xff]
        %v1436 = vld [vmem:[%s323 + $0x1ff8] sm:$0xff]
        %v1437 = vld [vmem:[%s323 + $0x2000] sm:$0xff]
        %v1438 = vld [vmem:[%s323 + $0x2008] sm:$0xff]
        %v1439 = vld [vmem:[%s323 + $0x2010] sm:$0xff]
        %v1440 = vld [vmem:[%s323 + $0x2018] sm:$0xff]
        %v1441 = vld [vmem:[%s323 + $0x2020] sm:$0xff]
        %v1442 = vld [vmem:[%s323 + $0x2028] sm:$0xff]
        %v1443 = vld [vmem:[%s323 + $0x2030] sm:$0xff]
        %v1444 = vld [vmem:[%s323 + $0x2038] sm:$0xff]
        %v1445 = vld [vmem:[%s323 + $0x2040] sm:$0xff]
        %v1446 = vld [vmem:[%s323 + $0x2048] sm:$0xff]
        %v1447 = vld [vmem:[%s323 + $0x2050] sm:$0xff]
        %v1448 = vld [vmem:[%s323 + $0x2058] sm:$0xff]
        %v1449 = vld [vmem:[%s323 + $0x2060] sm:$0xff]
        %v1450 = vld [vmem:[%s323 + $0x2068] sm:$0xff]
        %v1451 = vld [vmem:[%s323 + $0x2070] sm:$0xff]
        %v1452 = vld [vmem:[%s323 + $0x2078] sm:$0xff]
        %v1453 = vld [vmem:[%s323 + $0x2080] sm:$0xff]
        %v1454 = vld [vmem:[%s323 + $0x2088] sm:$0xff]
        %v1455 = vld [vmem:[%s323 + $0x2090] sm:$0xff]
        %v1456 = vld [vmem:[%s323 + $0x2098] sm:$0xff]
        %v1457 = vld [vmem:[%s323 + $0x20a0] sm:$0xff]
        %v1458 = vld [vmem:[%s323 + $0x20a8] sm:$0xff]
        %v1459 = vld [vmem:[%s323 + $0x20b0] sm:$0xff]
        %v1460 = vld [vmem:[%s323 + $0x20b8] sm:$0xff]
        %v1461 = vld [vmem:[%s323 + $0x20c0] sm:$0xff]
        %v1462 = vld [vmem:[%s323 + $0x20c8] sm:$0xff]
        %v1463 = vld [vmem:[%s323 + $0x20d0] sm:$0xff]
        %v1464 = vld [vmem:[%s323 + $0x20d8] sm:$0xff]
        %v1465 = vld [vmem:[%s323 + $0x20e0] sm:$0xff]
        %v1466 = vld [vmem:[%s323 + $0x20e8] sm:$0xff]
        %v1467 = vld [vmem:[%s323 + $0x20f0] sm:$0xff]
        %v1468 = vld [vmem:[%s323 + $0x20f8] sm:$0xff]
        %v1469 = vld [vmem:[%s323 + $0x2100] sm:$0xff]
        %v1470 = vld [vmem:[%s323 + $0x2108] sm:$0xff]
        %v1471 = vld [vmem:[%s323 + $0x2110] sm:$0xff]
        %v1472 = vld [vmem:[%s323 + $0x2118] sm:$0xff]
        %v1473 = vld [vmem:[%s323 + $0x2120] sm:$0xff]
        %v1474 = vld [vmem:[%s323 + $0x2128] sm:$0xff]
        %v1475 = vld [vmem:[%s323 + $0x2130] sm:$0xff]
        %v1476 = vld [vmem:[%s323 + $0x2138] sm:$0xff]
        %v1477 = vld [vmem:[%s323 + $0x2140] sm:$0xff]
        %v1478 = vld [vmem:[%s323 + $0x2148] sm:$0xff]
        %v1479 = vld [vmem:[%s323 + $0x2150] sm:$0xff]
        %v1480 = vld [vmem:[%s323 + $0x2158] sm:$0xff]
        %v1481 = vld [vmem:[%s323 + $0x2160] sm:$0xff]
        %v1482 = vld [vmem:[%s323 + $0x2168] sm:$0xff]
        %v1483 = vld [vmem:[%s323 + $0x2170] sm:$0xff]
        %v1484 = vld [vmem:[%s323 + $0x2178] sm:$0xff]
        %v1485 = vld [vmem:[%s323 + $0x2180] sm:$0xff]
        %v1486 = vld [vmem:[%s323 + $0x2188] sm:$0xff]
        %v1487 = vld [vmem:[%s323 + $0x2190] sm:$0xff]
        %v1488 = vld [vmem:[%s323 + $0x2198] sm:$0xff]
        %v1489 = vld [vmem:[%s323 + $0x21a0] sm:$0xff]
        %v1490 = vld [vmem:[%s323 + $0x21a8] sm:$0xff]
        %v1491 = vld [vmem:[%s323 + $0x21b0] sm:$0xff]
        %v1492 = vld [vmem:[%s323 + $0x21b8] sm:$0xff]
        %v1493 = vld [vmem:[%s323 + $0x21c0] sm:$0xff]
        %v1494 = vld [vmem:[%s323 + $0x21c8] sm:$0xff]
        %v1495 = vld [vmem:[%s323 + $0x21d0] sm:$0xff]
        %v1496 = vld [vmem:[%s323 + $0x21d8] sm:$0xff]
        %v1497 = vld [vmem:[%s323 + $0x21e0] sm:$0xff]
        %v1498 = vld [vmem:[%s323 + $0x21e8] sm:$0xff]
        %v1499 = vld [vmem:[%s323 + $0x21f0] sm:$0xff]
        %v1500 = vld [vmem:[%s323 + $0x21f8] sm:$0xff]
        %v1501 = vld [vmem:[%s323 + $0x2200] sm:$0xff]
        %v1502 = vld [vmem:[%s323 + $0x2208] sm:$0xff]
        %v1503 = vld [vmem:[%s323 + $0x2210] sm:$0xff]
        %v1504 = vld [vmem:[%s323 + $0x2218] sm:$0xff]
        %v1505 = vld [vmem:[%s323 + $0x2220] sm:$0xff]
        %v1506 = vld [vmem:[%s323 + $0x2228] sm:$0xff]
        %v1507 = vld [vmem:[%s323 + $0x2230] sm:$0xff]
        %v1508 = vld [vmem:[%s323 + $0x2238] sm:$0xff]
        %v1509 = vld [vmem:[%s323 + $0x2240] sm:$0xff]
        %v1510 = vld [vmem:[%s323 + $0x2248] sm:$0xff]
        %v1511 = vld [vmem:[%s323 + $0x2250] sm:$0xff]
        %v1512 = vld [vmem:[%s323 + $0x2258] sm:$0xff]
        %v1513 = vld [vmem:[%s323 + $0x2260] sm:$0xff]
        %v1514 = vld [vmem:[%s323 + $0x2268] sm:$0xff]
        %v1515 = vld [vmem:[%s323 + $0x2270] sm:$0xff]
        %v1516 = vld [vmem:[%s323 + $0x2278] sm:$0xff]
        %v1517 = vld [vmem:[%s323 + $0x2280] sm:$0xff]
        %v1518 = vld [vmem:[%s323 + $0x2288] sm:$0xff]
        %v1519 = vld [vmem:[%s323 + $0x2290] sm:$0xff]
        %v1520 = vld [vmem:[%s323 + $0x2298] sm:$0xff]
        %v1521 = vld [vmem:[%s323 + $0x22a0] sm:$0xff]
        %v1522 = vld [vmem:[%s323 + $0x22a8] sm:$0xff]
        %v1523 = vld [vmem:[%s323 + $0x22b0] sm:$0xff]
        %v1524 = vld [vmem:[%s323 + $0x22b8] sm:$0xff]
        %v1525 = vld [vmem:[%s323 + $0x22c0] sm:$0xff]
        %v1526 = vld [vmem:[%s323 + $0x22c8] sm:$0xff]
        %v1527 = vld [vmem:[%s323 + $0x22d0] sm:$0xff]
        %v1528 = vld [vmem:[%s323 + $0x22d8] sm:$0xff]
        %v1529 = vld [vmem:[%s323 + $0x22e0] sm:$0xff]
        %v1530 = vld [vmem:[%s323 + $0x22e8] sm:$0xff]
        %v1531 = vld [vmem:[%s323 + $0x22f0] sm:$0xff]
        %v1532 = vld [vmem:[%s323 + $0x22f8] sm:$0xff]
        %v1533 = vld [vmem:[%s323 + $0x2300] sm:$0xff]
        %v1534 = vld [vmem:[%s323 + $0x2308] sm:$0xff]
        %v1535 = vld [vmem:[%s323 + $0x2310] sm:$0xff]
        %v1536 = vld [vmem:[%s323 + $0x2318] sm:$0xff]
        %v1537 = vld [vmem:[%s323 + $0x2320] sm:$0xff]
        %v1538 = vld [vmem:[%s323 + $0x2328] sm:$0xff]
        %v1539 = vld [vmem:[%s323 + $0x2330] sm:$0xff]
        %v1540 = vld [vmem:[%s323 + $0x2338] sm:$0xff]
        %v1541 = vld [vmem:[%s323 + $0x2340] sm:$0xff]
        %v1542 = vld [vmem:[%s323 + $0x2348] sm:$0xff]
        %v1543 = vld [vmem:[%s323 + $0x2350] sm:$0xff]
        %v1544 = vld [vmem:[%s323 + $0x2358] sm:$0xff]
        %v1545 = vld [vmem:[%s323 + $0x2360] sm:$0xff]
        %v1546 = vld [vmem:[%s323 + $0x2368] sm:$0xff]
        %v1547 = vld [vmem:[%s323 + $0x2370] sm:$0xff]
        %v1548 = vld [vmem:[%s323 + $0x2378] sm:$0xff]
        %v1549 = vld [vmem:[%s323 + $0x2380] sm:$0xff]
        %v1550 = vld [vmem:[%s323 + $0x2388] sm:$0xff]
        %v1551 = vld [vmem:[%s323 + $0x2390] sm:$0xff]
        %v1552 = vld [vmem:[%s323 + $0x2398] sm:$0xff]
        %v1553 = vld [vmem:[%s323 + $0x23a0] sm:$0xff]
        %v1554 = vld [vmem:[%s323 + $0x23a8] sm:$0xff]
        %v1555 = vld [vmem:[%s323 + $0x23b0] sm:$0xff]
        %v1556 = vld [vmem:[%s323 + $0x23b8] sm:$0xff]
        %v1557 = vld [vmem:[%s323 + $0x23c0] sm:$0xff]
        %v1558 = vld [vmem:[%s323 + $0x23c8] sm:$0xff]
        %v1559 = vld [vmem:[%s323 + $0x23d0] sm:$0xff]
        %v1560 = vld [vmem:[%s323 + $0x23d8] sm:$0xff]
        %v1561 = vld [vmem:[%s323 + $0x23e0] sm:$0xff]
        %v1562 = vld [vmem:[%s323 + $0x23e8] sm:$0xff]
        %v1563 = vld [vmem:[%s323 + $0x23f0] sm:$0xff]
        %v1564 = vld [vmem:[%s323 + $0x23f8] sm:$0xff]
        %v1565 = vld [vmem:[%s323 + $0x2400] sm:$0xff]
        %v1566 = vld [vmem:[%s323 + $0x2408] sm:$0xff]
        %v1567 = vld [vmem:[%s323 + $0x2410] sm:$0xff]
        %v1568 = vld [vmem:[%s323 + $0x2418] sm:$0xff]
        %v1569 = vld [vmem:[%s323 + $0x2420] sm:$0xff]
        %v1570 = vld [vmem:[%s323 + $0x2428] sm:$0xff]
        %v1571 = vld [vmem:[%s323 + $0x2430] sm:$0xff]
        %v1572 = vld [vmem:[%s323 + $0x2438] sm:$0xff]
        %v1573 = vld [vmem:[%s323 + $0x2440] sm:$0xff]
        %v1574 = vld [vmem:[%s323 + $0x2448] sm:$0xff]
        %v1575 = vld [vmem:[%s323 + $0x2450] sm:$0xff]
        %v1576 = vld [vmem:[%s323 + $0x2458] sm:$0xff]
        %v1577 = vld [vmem:[%s323 + $0x2460] sm:$0xff]
        %v1578 = vld [vmem:[%s323 + $0x2468] sm:$0xff]
        %v1579 = vld [vmem:[%s323 + $0x2470] sm:$0xff]
        %v1580 = vld [vmem:[%s323 + $0x2478] sm:$0xff]
        %v1581 = vld [vmem:[%s323 + $0x2480] sm:$0xff]
        %v1582 = vld [vmem:[%s323 + $0x2488] sm:$0xff]
        %v1583 = vld [vmem:[%s323 + $0x2490] sm:$0xff]
        %v1584 = vld [vmem:[%s323 + $0x2498] sm:$0xff]
        %v1585 = vld [vmem:[%s323 + $0x24a0] sm:$0xff]
        %v1586 = vld [vmem:[%s323 + $0x24a8] sm:$0xff]
        %v1587 = vld [vmem:[%s323 + $0x24b0] sm:$0xff]
        %v1588 = vld [vmem:[%s323 + $0x24b8] sm:$0xff]
        %v1589 = vld [vmem:[%s323 + $0x24c0] sm:$0xff]
        %v1590 = vld [vmem:[%s323 + $0x24c8] sm:$0xff]
        %v1591 = vld [vmem:[%s323 + $0x24d0] sm:$0xff]
        %v1592 = vld [vmem:[%s323 + $0x24d8] sm:$0xff]
        %v1593 = vld [vmem:[%s323 + $0x24e0] sm:$0xff]
        %v1594 = vld [vmem:[%s323 + $0x24e8] sm:$0xff]
        %v1595 = vld [vmem:[%s323 + $0x24f0] sm:$0xff]
        %v1596 = vld [vmem:[%s323 + $0x24f8] sm:$0xff]
        %v1597 = vld [vmem:[%s323 + $0x2500] sm:$0xff]
        %v1598 = vld [vmem:[%s323 + $0x2508] sm:$0xff]
        %v1599 = vld [vmem:[%s323 + $0x2510] sm:$0xff]
        %v1600 = vld [vmem:[%s323 + $0x2518] sm:$0xff]
        %v1601 = vld [vmem:[%s323 + $0x2520] sm:$0xff]
        %v1602 = vld [vmem:[%s323 + $0x2528] sm:$0xff]
        %v1603 = vld [vmem:[%s323 + $0x2530] sm:$0xff]
        %v1604 = vld [vmem:[%s323 + $0x2538] sm:$0xff]
        %v1605 = vld [vmem:[%s323 + $0x2540] sm:$0xff]
        %v1606 = vld [vmem:[%s323 + $0x2548] sm:$0xff]
        %v1607 = vld [vmem:[%s323 + $0x2550] sm:$0xff]
        %v1608 = vld [vmem:[%s323 + $0x2558] sm:$0xff]
        %v1609 = vld [vmem:[%s323 + $0x2560] sm:$0xff]
        %v1610 = vld [vmem:[%s323 + $0x2568] sm:$0xff]
        %v1611 = vld [vmem:[%s323 + $0x2570] sm:$0xff]
        %v1612 = vld [vmem:[%s323 + $0x2578] sm:$0xff]
        %v1613 = vld [vmem:[%s323 + $0x2580] sm:$0xff]
        %v1614 = vld [vmem:[%s323 + $0x2588] sm:$0xff]
        %v1615 = vld [vmem:[%s323 + $0x2590] sm:$0xff]
        %v1616 = vld [vmem:[%s323 + $0x2598] sm:$0xff]
        %v1617 = vld [vmem:[%s323 + $0x25a0] sm:$0xff]
        %v1618 = vld [vmem:[%s323 + $0x25a8] sm:$0xff]
        %v1619 = vld [vmem:[%s323 + $0x25b0] sm:$0xff]
        %v1620 = vld [vmem:[%s323 + $0x25b8] sm:$0xff]
        %v1621 = vld [vmem:[%s323 + $0x25c0] sm:$0xff]
        %v1622 = vld [vmem:[%s323 + $0x25c8] sm:$0xff]
        %v1623 = vld [vmem:[%s323 + $0x25d0] sm:$0xff]
        %v1624 = vld [vmem:[%s323 + $0x25d8] sm:$0xff]
        %v1625 = vld [vmem:[%s323 + $0x25e0] sm:$0xff]
        %v1626 = vld [vmem:[%s323 + $0x25e8] sm:$0xff]
        %v1627 = vld [vmem:[%s323 + $0x25f0] sm:$0xff]
        %v1628 = vld [vmem:[%s323 + $0x25f8] sm:$0xff]
        %v1629 = vld [vmem:[%s323 + $0x2600] sm:$0xff]
        %v1630 = vld [vmem:[%s323 + $0x2608] sm:$0xff]
        %v1631 = vld [vmem:[%s323 + $0x2610] sm:$0xff]
        %v1632 = vld [vmem:[%s323 + $0x2618] sm:$0xff]
        %v1633 = vld [vmem:[%s323 + $0x2620] sm:$0xff]
        %v1634 = vld [vmem:[%s323 + $0x2628] sm:$0xff]
        %v1635 = vld [vmem:[%s323 + $0x2630] sm:$0xff]
        %v1636 = vld [vmem:[%s323 + $0x2638] sm:$0xff]
        %v1637 = vld [vmem:[%s323 + $0x2640] sm:$0xff]
        %v1638 = vld [vmem:[%s323 + $0x2648] sm:$0xff]
        %v1639 = vld [vmem:[%s323 + $0x2650] sm:$0xff]
        %v1640 = vld [vmem:[%s323 + $0x2658] sm:$0xff]
        %v1641 = vld [vmem:[%s323 + $0x2660] sm:$0xff]
        %v1642 = vld [vmem:[%s323 + $0x2668] sm:$0xff]
        %v1643 = vld [vmem:[%s323 + $0x2670] sm:$0xff]
        %v1644 = vld [vmem:[%s323 + $0x2678] sm:$0xff]
        %v1645 = vld [vmem:[%s323 + $0x2680] sm:$0xff]
        %v1646 = vld [vmem:[%s323 + $0x2688] sm:$0xff]
        %v1647 = vld [vmem:[%s323 + $0x2690] sm:$0xff]
        %v1648 = vld [vmem:[%s323 + $0x2698] sm:$0xff]
        %v1649 = vld [vmem:[%s323 + $0x26a0] sm:$0xff]
        %v1650 = vld [vmem:[%s323 + $0x26a8] sm:$0xff]
        %v1651 = vld [vmem:[%s323 + $0x26b0] sm:$0xff]
        %v1652 = vld [vmem:[%s323 + $0x26b8] sm:$0xff]
        %v1653 = vld [vmem:[%s323 + $0x26c0] sm:$0xff]
        %v1654 = vld [vmem:[%s323 + $0x26c8] sm:$0xff]
        %v1655 = vld [vmem:[%s323 + $0x26d0] sm:$0xff]
        %v1656 = vld [vmem:[%s323 + $0x26d8] sm:$0xff]
        %v1657 = vld [vmem:[%s323 + $0x26e0] sm:$0xff]
        %v1658 = vld [vmem:[%s323 + $0x26e8] sm:$0xff]
        %v1659 = vld [vmem:[%s323 + $0x26f0] sm:$0xff]
        %v1660 = vld [vmem:[%s323 + $0x26f8] sm:$0xff]
        %v1661 = vld [vmem:[%s323 + $0x2700] sm:$0xff]
        %v1662 = vld [vmem:[%s323 + $0x2708] sm:$0xff]
        %v1663 = vld [vmem:[%s323 + $0x2710] sm:$0xff]
        %v1664 = vld [vmem:[%s323 + $0x2718] sm:$0xff]
        %v1665 = vld [vmem:[%s323 + $0x2720] sm:$0xff]
        %v1666 = vld [vmem:[%s323 + $0x2728] sm:$0xff]
        %v1667 = vld [vmem:[%s323 + $0x2730] sm:$0xff]
        %v1668 = vld [vmem:[%s323 + $0x2738] sm:$0xff]
        %v1669 = vld [vmem:[%s323 + $0x2740] sm:$0xff]
        %v1670 = vld [vmem:[%s323 + $0x2748] sm:$0xff]
        %v1671 = vld [vmem:[%s323 + $0x2750] sm:$0xff]
        %v1672 = vld [vmem:[%s323 + $0x2758] sm:$0xff]
        %v1673 = vld [vmem:[%s323 + $0x2760] sm:$0xff]
        %v1674 = vld [vmem:[%s323 + $0x2768] sm:$0xff]
        %v1675 = vld [vmem:[%s323 + $0x2770] sm:$0xff]
        %v1676 = vld [vmem:[%s323 + $0x2778] sm:$0xff]
        %v1677 = vld [vmem:[%s323 + $0x2780] sm:$0xff]
        %v1678 = vld [vmem:[%s323 + $0x2788] sm:$0xff]
        %v1679 = vld [vmem:[%s323 + $0x2790] sm:$0xff]
        %v1680 = vld [vmem:[%s323 + $0x2798] sm:$0xff]
        %v1681 = vld [vmem:[%s323 + $0x27a0] sm:$0xff]
        %v1682 = vld [vmem:[%s323 + $0x27a8] sm:$0xff]
        %v1683 = vld [vmem:[%s323 + $0x27b0] sm:$0xff]
        %v1684 = vld [vmem:[%s323 + $0x27b8] sm:$0xff]
        %v1685 = vld [vmem:[%s323 + $0x27c0] sm:$0xff]
        %v1686 = vld [vmem:[%s323 + $0x27c8] sm:$0xff]
        %v1687 = vld [vmem:[%s323 + $0x27d0] sm:$0xff]
        %v1688 = vld [vmem:[%s323 + $0x27d8] sm:$0xff]
        %v1689 = vld [vmem:[%s323 + $0x27e0] sm:$0xff]
        %v1690 = vld [vmem:[%s323 + $0x27e8] sm:$0xff]
        %v1691 = vld [vmem:[%s323 + $0x27f0] sm:$0xff]
        %v1692 = vld [vmem:[%s323 + $0x27f8] sm:$0xff]
        %v1693 = vld [vmem:[%s323 + $0x2800] sm:$0xff]
        %v1694 = vld [vmem:[%s323 + $0x2808] sm:$0xff]
        %v1695 = vld [vmem:[%s323 + $0x2810] sm:$0xff]
        %v1696 = vld [vmem:[%s323 + $0x2818] sm:$0xff]
        %v1697 = vld [vmem:[%s323 + $0x2820] sm:$0xff]
        %v1698 = vld [vmem:[%s323 + $0x2828] sm:$0xff]
        %v1699 = vld [vmem:[%s323 + $0x2830] sm:$0xff]
        %v1700 = vld [vmem:[%s323 + $0x2838] sm:$0xff]
        %v1701 = vld [vmem:[%s323 + $0x2840] sm:$0xff]
        %v1702 = vld [vmem:[%s323 + $0x2848] sm:$0xff]
        %v1703 = vld [vmem:[%s323 + $0x2850] sm:$0xff]
        %v1704 = vld [vmem:[%s323 + $0x2858] sm:$0xff]
        %v1705 = vld [vmem:[%s323 + $0x2860] sm:$0xff]
        %v1706 = vld [vmem:[%s323 + $0x2868] sm:$0xff]
        %v1707 = vld [vmem:[%s323 + $0x2870] sm:$0xff]
        %v1708 = vld [vmem:[%s323 + $0x2878] sm:$0xff]
        %v1709 = vld [vmem:[%s323 + $0x2880] sm:$0xff]
        %v1710 = vld [vmem:[%s323 + $0x2888] sm:$0xff]
        %v1711 = vld [vmem:[%s323 + $0x2890] sm:$0xff]
        %v1712 = vld [vmem:[%s323 + $0x2898] sm:$0xff]
        %v1713 = vld [vmem:[%s323 + $0x28a0] sm:$0xff]
        %v1714 = vld [vmem:[%s323 + $0x28a8] sm:$0xff]
        %v1715 = vld [vmem:[%s323 + $0x28b0] sm:$0xff]
        %v1716 = vld [vmem:[%s323 + $0x28b8] sm:$0xff]
        %v1717 = vld [vmem:[%s323 + $0x28c0] sm:$0xff]
        %v1718 = vld [vmem:[%s323 + $0x28c8] sm:$0xff]
        %v1719 = vld [vmem:[%s323 + $0x28d0] sm:$0xff]
        %v1720 = vld [vmem:[%s323 + $0x28d8] sm:$0xff]
        %v1721 = vld [vmem:[%s323 + $0x28e0] sm:$0xff]
        %v1722 = vld [vmem:[%s323 + $0x28e8] sm:$0xff]
        %v1723 = vld [vmem:[%s323 + $0x28f0] sm:$0xff]
        %v1724 = vld [vmem:[%s323 + $0x28f8] sm:$0xff]
        %v1725 = vld [vmem:[%s323 + $0x2900] sm:$0xff]
        %v1726 = vld [vmem:[%s323 + $0x2908] sm:$0xff]
        %v1727 = vld [vmem:[%s323 + $0x2910] sm:$0xff]
        %v1728 = vld [vmem:[%s323 + $0x2918] sm:$0xff]
        %v1729 = vld [vmem:[%s323 + $0x2920] sm:$0xff]
        %v1730 = vld [vmem:[%s323 + $0x2928] sm:$0xff]
        %v1731 = vld [vmem:[%s323 + $0x2930] sm:$0xff]
        %v1732 = vld [vmem:[%s323 + $0x2938] sm:$0xff]
        %v1733 = vld [vmem:[%s323 + $0x2940] sm:$0xff]
        %v1734 = vld [vmem:[%s323 + $0x2948] sm:$0xff]
        %v1735 = vld [vmem:[%s323 + $0x2950] sm:$0xff]
        %v1736 = vld [vmem:[%s323 + $0x2958] sm:$0xff]
        %v1737 = vld [vmem:[%s323 + $0x2960] sm:$0xff]
        %v1738 = vld [vmem:[%s323 + $0x2968] sm:$0xff]
        %v1739 = vld [vmem:[%s323 + $0x2970] sm:$0xff]
        %v1740 = vld [vmem:[%s323 + $0x2978] sm:$0xff]
        %v1741 = vld [vmem:[%s323 + $0x2980] sm:$0xff]
        %v1742 = vld [vmem:[%s323 + $0x2988] sm:$0xff]
        %v1743 = vld [vmem:[%s323 + $0x2990] sm:$0xff]
        %v1744 = vld [vmem:[%s323 + $0x2998] sm:$0xff]
        %v1745 = vld [vmem:[%s323 + $0x29a0] sm:$0xff]
        %v1746 = vld [vmem:[%s323 + $0x29a8] sm:$0xff]
        %v1747 = vld [vmem:[%s323 + $0x29b0] sm:$0xff]
        %v1748 = vld [vmem:[%s323 + $0x29b8] sm:$0xff]
        %v1749 = vld [vmem:[%s323 + $0x29c0] sm:$0xff]
        %v1750 = vld [vmem:[%s323 + $0x29c8] sm:$0xff]
        %v1751 = vld [vmem:[%s323 + $0x29d0] sm:$0xff]
        %v1752 = vld [vmem:[%s323 + $0x29d8] sm:$0xff]
        %v1753 = vld [vmem:[%s323 + $0x29e0] sm:$0xff]
        %v1754 = vld [vmem:[%s323 + $0x29e8] sm:$0xff]
        %v1755 = vld [vmem:[%s323 + $0x29f0] sm:$0xff]
        %v1756 = vld [vmem:[%s323 + $0x29f8] sm:$0xff]
        %v1757 = vld [vmem:[%s323 + $0x2a00] sm:$0xff]
        %v1758 = vld [vmem:[%s323 + $0x2a08] sm:$0xff]
        %v1759 = vld [vmem:[%s323 + $0x2a10] sm:$0xff]
        %v1760 = vld [vmem:[%s323 + $0x2a18] sm:$0xff]
        %v1761 = vld [vmem:[%s323 + $0x2a20] sm:$0xff]
        %v1762 = vld [vmem:[%s323 + $0x2a28] sm:$0xff]
        %v1763 = vld [vmem:[%s323 + $0x2a30] sm:$0xff]
        %v1764 = vld [vmem:[%s323 + $0x2a38] sm:$0xff]
        %v1765 = vld [vmem:[%s323 + $0x2a40] sm:$0xff]
        %v1766 = vld [vmem:[%s323 + $0x2a48] sm:$0xff]
        %v1767 = vld [vmem:[%s323 + $0x2a50] sm:$0xff]
        %v1768 = vld [vmem:[%s323 + $0x2a58] sm:$0xff]
        %v1769 = vld [vmem:[%s323 + $0x2a60] sm:$0xff]
        %v1770 = vld [vmem:[%s323 + $0x2a68] sm:$0xff]
        %v1771 = vld [vmem:[%s323 + $0x2a70] sm:$0xff]
        %v1772 = vld [vmem:[%s323 + $0x2a78] sm:$0xff]
        %v1773 = vld [vmem:[%s323 + $0x2a80] sm:$0xff]
        %v1774 = vld [vmem:[%s323 + $0x2a88] sm:$0xff]
        %v1775 = vld [vmem:[%s323 + $0x2a90] sm:$0xff]
        %v1776 = vld [vmem:[%s323 + $0x2a98] sm:$0xff]
        %v1777 = vld [vmem:[%s323 + $0x2aa0] sm:$0xff]
        %v1778 = vld [vmem:[%s323 + $0x2aa8] sm:$0xff]
        %v1779 = vld [vmem:[%s323 + $0x2ab0] sm:$0xff]
        %v1780 = vld [vmem:[%s323 + $0x2ab8] sm:$0xff]
        %v1781 = vld [vmem:[%s323 + $0x2ac0] sm:$0xff]
        %v1782 = vld [vmem:[%s323 + $0x2ac8] sm:$0xff]
        %v1783 = vld [vmem:[%s323 + $0x2ad0] sm:$0xff]
        %v1784 = vld [vmem:[%s323 + $0x2ad8] sm:$0xff]
        %v1785 = vld [vmem:[%s323 + $0x2ae0] sm:$0xff]
        %v1786 = vld [vmem:[%s323 + $0x2ae8] sm:$0xff]
        %v1787 = vld [vmem:[%s323 + $0x2af0] sm:$0xff]
        %v1788 = vld [vmem:[%s323 + $0x2af8] sm:$0xff]
        %v1789 = vld [vmem:[%s323 + $0x2b00] sm:$0xff]
        %v1790 = vld [vmem:[%s323 + $0x2b08] sm:$0xff]
        %v1791 = vld [vmem:[%s323 + $0x2b10] sm:$0xff]
        %v1792 = vld [vmem:[%s323 + $0x2b18] sm:$0xff]
        %v1793 = vld [vmem:[%s323 + $0x2b20] sm:$0xff]
        %v1794 = vld [vmem:[%s323 + $0x2b28] sm:$0xff]
        %v1795 = vld [vmem:[%s323 + $0x2b30] sm:$0xff]
        %v1796 = vld [vmem:[%s323 + $0x2b38] sm:$0xff]
        %v1797 = vld [vmem:[%s323 + $0x2b40] sm:$0xff]
        %v1798 = vld [vmem:[%s323 + $0x2b48] sm:$0xff]
        %v1799 = vld [vmem:[%s323 + $0x2b50] sm:$0xff]
        %v1800 = vld [vmem:[%s323 + $0x2b58] sm:$0xff]
        %v1801 = vld [vmem:[%s323 + $0x2b60] sm:$0xff]
        %v1802 = vld [vmem:[%s323 + $0x2b68] sm:$0xff]
        %v1803 = vld [vmem:[%s323 + $0x2b70] sm:$0xff]
        %v1804 = vld [vmem:[%s323 + $0x2b78] sm:$0xff]
        %v1805 = vld [vmem:[%s323 + $0x2b80] sm:$0xff]
        %v1806 = vld [vmem:[%s323 + $0x2b88] sm:$0xff]
        %v1807 = vld [vmem:[%s323 + $0x2b90] sm:$0xff]
        %v1808 = vld [vmem:[%s323 + $0x2b98] sm:$0xff]
        %v1809 = vld [vmem:[%s323 + $0x2ba0] sm:$0xff]
        %v1810 = vld [vmem:[%s323 + $0x2ba8] sm:$0xff]
        %v1811 = vld [vmem:[%s323 + $0x2bb0] sm:$0xff]
        %v1812 = vld [vmem:[%s323 + $0x2bb8] sm:$0xff]
        %v1813 = vld [vmem:[%s323 + $0x2bc0] sm:$0xff]
        %v1814 = vld [vmem:[%s323 + $0x2bc8] sm:$0xff]
        %v1815 = vld [vmem:[%s323 + $0x2bd0] sm:$0xff]
        %v1816 = vld [vmem:[%s323 + $0x2bd8] sm:$0xff]
        %v1817 = vld [vmem:[%s323 + $0x2be0] sm:$0xff]
        %v1818 = vld [vmem:[%s323 + $0x2be8] sm:$0xff]
        %v1819 = vld [vmem:[%s323 + $0x2bf0] sm:$0xff]
        %v1820 = vld [vmem:[%s323 + $0x2bf8] sm:$0xff]
        %v1821 = vld [vmem:[%s323 + $0x2c00] sm:$0xff]
        %v1822 = vld [vmem:[%s323 + $0x2c08] sm:$0xff]
        %v1823 = vld [vmem:[%s323 + $0x2c10] sm:$0xff]
        %v1824 = vld [vmem:[%s323 + $0x2c18] sm:$0xff]
        %v1825 = vld [vmem:[%s323 + $0x2c20] sm:$0xff]
        %v1826 = vld [vmem:[%s323 + $0x2c28] sm:$0xff]
        %v1827 = vld [vmem:[%s323 + $0x2c30] sm:$0xff]
        %v1828 = vld [vmem:[%s323 + $0x2c38] sm:$0xff]
        %v1829 = vld [vmem:[%s323 + $0x2c40] sm:$0xff]
        %v1830 = vld [vmem:[%s323 + $0x2c48] sm:$0xff]
        %v1831 = vld [vmem:[%s323 + $0x2c50] sm:$0xff]
        %v1832 = vld [vmem:[%s323 + $0x2c58] sm:$0xff]
        %v1833 = vld [vmem:[%s323 + $0x2c60] sm:$0xff]
        %v1834 = vld [vmem:[%s323 + $0x2c68] sm:$0xff]
        %v1835 = vld [vmem:[%s323 + $0x2c70] sm:$0xff]
        %v1836 = vld [vmem:[%s323 + $0x2c78] sm:$0xff]
        %v1837 = vld [vmem:[%s323 + $0x2c80] sm:$0xff]
        %v1838 = vld [vmem:[%s323 + $0x2c88] sm:$0xff]
        %v1839 = vld [vmem:[%s323 + $0x2c90] sm:$0xff]
        %v1840 = vld [vmem:[%s323 + $0x2c98] sm:$0xff]
        %v1841 = vld [vmem:[%s323 + $0x2ca0] sm:$0xff]
        %v1842 = vld [vmem:[%s323 + $0x2ca8] sm:$0xff]
        %v1843 = vld [vmem:[%s323 + $0x2cb0] sm:$0xff]
        %v1844 = vld [vmem:[%s323 + $0x2cb8] sm:$0xff]
        %v1845 = vld [vmem:[%s323 + $0x2cc0] sm:$0xff]
        %v1846 = vld [vmem:[%s323 + $0x2cc8] sm:$0xff]
        %v1847 = vld [vmem:[%s323 + $0x2cd0] sm:$0xff]
        %v1848 = vld [vmem:[%s323 + $0x2cd8] sm:$0xff]
        %v1849 = vld [vmem:[%s323 + $0x2ce0] sm:$0xff]
        %v1850 = vld [vmem:[%s323 + $0x2ce8] sm:$0xff]
        %v1851 = vld [vmem:[%s323 + $0x2cf0] sm:$0xff]
        %v1852 = vld [vmem:[%s323 + $0x2cf8] sm:$0xff]
        %v1853 = vld [vmem:[%s323 + $0x2d00] sm:$0xff]
        %v1854 = vld [vmem:[%s323 + $0x2d08] sm:$0xff]
        %v1855 = vld [vmem:[%s323 + $0x2d10] sm:$0xff]
        %v1856 = vld [vmem:[%s323 + $0x2d18] sm:$0xff]
        %v1857 = vld [vmem:[%s323 + $0x2d20] sm:$0xff]
        %v1858 = vld [vmem:[%s323 + $0x2d28] sm:$0xff]
        %v1859 = vld [vmem:[%s323 + $0x2d30] sm:$0xff]
        %v1860 = vld [vmem:[%s323 + $0x2d38] sm:$0xff]
        %v1861 = vld [vmem:[%s323 + $0x2d40] sm:$0xff]
        %v1862 = vld [vmem:[%s323 + $0x2d48] sm:$0xff]
        %v1863 = vld [vmem:[%s323 + $0x2d50] sm:$0xff]
        %v1864 = vld [vmem:[%s323 + $0x2d58] sm:$0xff]
        %v1865 = vld [vmem:[%s323 + $0x2d60] sm:$0xff]
        %v1866 = vld [vmem:[%s323 + $0x2d68] sm:$0xff]
        %v1867 = vld [vmem:[%s323 + $0x2d70] sm:$0xff]
        %v1868 = vld [vmem:[%s323 + $0x2d78] sm:$0xff]
        %v1869 = vld [vmem:[%s323 + $0x2d80] sm:$0xff]
        %v1870 = vld [vmem:[%s323 + $0x2d88] sm:$0xff]
        %v1871 = vld [vmem:[%s323 + $0x2d90] sm:$0xff]
        %v1872 = vld [vmem:[%s323 + $0x2d98] sm:$0xff]
        %v1873 = vld [vmem:[%s323 + $0x2da0] sm:$0xff]
        %v1874 = vld [vmem:[%s323 + $0x2da8] sm:$0xff]
        %v1875 = vld [vmem:[%s323 + $0x2db0] sm:$0xff]
        %v1876 = vld [vmem:[%s323 + $0x2db8] sm:$0xff]
        %v1877 = vld [vmem:[%s323 + $0x2dc0] sm:$0xff]
        %v1878 = vld [vmem:[%s323 + $0x2dc8] sm:$0xff]
        %v1879 = vld [vmem:[%s323 + $0x2dd0] sm:$0xff]
        %v1880 = vld [vmem:[%s323 + $0x2dd8] sm:$0xff]
        %v1881 = vld [vmem:[%s323 + $0x2de0] sm:$0xff]
        %v1882 = vld [vmem:[%s323 + $0x2de8] sm:$0xff]
        %v1883 = vld [vmem:[%s323 + $0x2df0] sm:$0xff]
        %v1884 = vld [vmem:[%s323 + $0x2df8] sm:$0xff]
        %v1885 = vld [vmem:[%s323 + $0x2e00] sm:$0xff]
        %v1886 = vld [vmem:[%s323 + $0x2e08] sm:$0xff]
        %v1887 = vld [vmem:[%s323 + $0x2e10] sm:$0xff]
        %v1888 = vld [vmem:[%s323 + $0x2e18] sm:$0xff]
        %v1889 = vld [vmem:[%s323 + $0x2e20] sm:$0xff]
        %v1890 = vld [vmem:[%s323 + $0x2e28] sm:$0xff]
        %v1891 = vld [vmem:[%s323 + $0x2e30] sm:$0xff]
        %v1892 = vld [vmem:[%s323 + $0x2e38] sm:$0xff]
        %v1893 = vld [vmem:[%s323 + $0x2e40] sm:$0xff]
        %v1894 = vld [vmem:[%s323 + $0x2e48] sm:$0xff]
        %v1895 = vld [vmem:[%s323 + $0x2e50] sm:$0xff]
        %v1896 = vld [vmem:[%s323 + $0x2e58] sm:$0xff]
        %v1897 = vld [vmem:[%s323 + $0x2e60] sm:$0xff]
        %v1898 = vld [vmem:[%s323 + $0x2e68] sm:$0xff]
        %v1899 = vld [vmem:[%s323 + $0x2e70] sm:$0xff]
        %v1900 = vld [vmem:[%s323 + $0x2e78] sm:$0xff]
        %v1901 = vld [vmem:[%s323 + $0x2e80] sm:$0xff]
        %v1902 = vld [vmem:[%s323 + $0x2e88] sm:$0xff]
        %v1903 = vld [vmem:[%s323 + $0x2e90] sm:$0xff]
        %v1904 = vld [vmem:[%s323 + $0x2e98] sm:$0xff]
        %v1905 = vld [vmem:[%s323 + $0x2ea0] sm:$0xff]
        %v1906 = vld [vmem:[%s323 + $0x2ea8] sm:$0xff]
        %v1907 = vld [vmem:[%s323 + $0x2eb0] sm:$0xff]
        %v1908 = vld [vmem:[%s323 + $0x2eb8] sm:$0xff]
        %v1909 = vld [vmem:[%s323 + $0x2ec0] sm:$0xff]
        %v1910 = vld [vmem:[%s323 + $0x2ec8] sm:$0xff]
        %v1911 = vld [vmem:[%s323 + $0x2ed0] sm:$0xff]
        %v1912 = vld [vmem:[%s323 + $0x2ed8] sm:$0xff]
        %v1913 = vld [vmem:[%s323 + $0x2ee0] sm:$0xff]
        %v1914 = vld [vmem:[%s323 + $0x2ee8] sm:$0xff]
        %v1915 = vld [vmem:[%s323 + $0x2ef0] sm:$0xff]
        %v1916 = vld [vmem:[%s323 + $0x2ef8] sm:$0xff]
        %v1917 = vld [vmem:[%s323 + $0x2f00] sm:$0xff]
        %v1918 = vld [vmem:[%s323 + $0x2f08] sm:$0xff]
        %v1919 = vld [vmem:[%s323 + $0x2f10] sm:$0xff]
        %v1920 = vld [vmem:[%s323 + $0x2f18] sm:$0xff]
        %v1921 = vld [vmem:[%s323 + $0x2f20] sm:$0xff]
        %v1922 = vld [vmem:[%s323 + $0x2f28] sm:$0xff]
        %v1923 = vld [vmem:[%s323 + $0x2f30] sm:$0xff]
        %v1924 = vld [vmem:[%s323 + $0x2f38] sm:$0xff]
        %v1925 = vld [vmem:[%s323 + $0x2f40] sm:$0xff]
        %v1926 = vld [vmem:[%s323 + $0x2f48] sm:$0xff]
        %v1927 = vld [vmem:[%s323 + $0x2f50] sm:$0xff]
        %v1928 = vld [vmem:[%s323 + $0x2f58] sm:$0xff]
        %v1929 = vld [vmem:[%s323 + $0x2f60] sm:$0xff]
        %v1930 = vld [vmem:[%s323 + $0x2f68] sm:$0xff]
        %v1931 = vld [vmem:[%s323 + $0x2f70] sm:$0xff]
        %v1932 = vld [vmem:[%s323 + $0x2f78] sm:$0xff]
        %v1933 = vld [vmem:[%s323 + $0x2f80] sm:$0xff]
        %v1934 = vld [vmem:[%s323 + $0x2f88] sm:$0xff]
        %v1935 = vld [vmem:[%s323 + $0x2f90] sm:$0xff]
        %v1936 = vld [vmem:[%s323 + $0x2f98] sm:$0xff]
        %v1937 = vld [vmem:[%s323 + $0x2fa0] sm:$0xff]
        %v1938 = vld [vmem:[%s323 + $0x2fa8] sm:$0xff]
        %v1939 = vld [vmem:[%s323 + $0x2fb0] sm:$0xff]
        %v1940 = vld [vmem:[%s323 + $0x2fb8] sm:$0xff]
        %v1941 = vld [vmem:[%s323 + $0x2fc0] sm:$0xff]
        %v1942 = vld [vmem:[%s323 + $0x2fc8] sm:$0xff]
        %v1943 = vld [vmem:[%s323 + $0x2fd0] sm:$0xff]
        %v1944 = vld [vmem:[%s323 + $0x2fd8] sm:$0xff]
        %v1945 = vld [vmem:[%s323 + $0x2fe0] sm:$0xff]
        %v1946 = vld [vmem:[%s323 + $0x2fe8] sm:$0xff]
        %v1947 = vld [vmem:[%s323 + $0x2ff0] sm:$0xff]
        %v1948 = vld [vmem:[%s323 + $0x2ff8] sm:$0xff]
        %v1949 = vld [vmem:[%s323 + $0x3000] sm:$0xff]
        %v1950 = vld [vmem:[%s323 + $0x3008] sm:$0xff]
        %v1951 = vld [vmem:[%s323 + $0x3010] sm:$0xff]
        %v1952 = vld [vmem:[%s323 + $0x3018] sm:$0xff]
        %v1953 = vld [vmem:[%s323 + $0x3020] sm:$0xff]
        %v1954 = vld [vmem:[%s323 + $0x3028] sm:$0xff]
        %v1955 = vld [vmem:[%s323 + $0x3030] sm:$0xff]
        %v1956 = vld [vmem:[%s323 + $0x3038] sm:$0xff]
        %v1957 = vld [vmem:[%s323 + $0x3040] sm:$0xff]
        %v1958 = vld [vmem:[%s323 + $0x3048] sm:$0xff]
        %v1959 = vld [vmem:[%s323 + $0x3050] sm:$0xff]
        %v1960 = vld [vmem:[%s323 + $0x3058] sm:$0xff]
        %v1961 = vld [vmem:[%s323 + $0x3060] sm:$0xff]
        %v1962 = vld [vmem:[%s323 + $0x3068] sm:$0xff]
        %v1963 = vld [vmem:[%s323 + $0x3070] sm:$0xff]
        %v1964 = vld [vmem:[%s323 + $0x3078] sm:$0xff]
        %v1965 = vld [vmem:[%s323 + $0x3080] sm:$0xff]
        %v1966 = vld [vmem:[%s323 + $0x3088] sm:$0xff]
        %v1967 = vld [vmem:[%s323 + $0x3090] sm:$0xff]
        %v1968 = vld [vmem:[%s323 + $0x3098] sm:$0xff]
        %v1969 = vld [vmem:[%s323 + $0x30a0] sm:$0xff]
        %v1970 = vld [vmem:[%s323 + $0x30a8] sm:$0xff]
        %v1971 = vld [vmem:[%s323 + $0x30b0] sm:$0xff]
        %v1972 = vld [vmem:[%s323 + $0x30b8] sm:$0xff]
        %v1973 = vld [vmem:[%s323 + $0x30c0] sm:$0xff]
        %v1974 = vld [vmem:[%s323 + $0x30c8] sm:$0xff]
        %v1975 = vld [vmem:[%s323 + $0x30d0] sm:$0xff]
        %v1976 = vld [vmem:[%s323 + $0x30d8] sm:$0xff]
        %v1977 = vld [vmem:[%s323 + $0x30e0] sm:$0xff]
        %v1978 = vld [vmem:[%s323 + $0x30e8] sm:$0xff]
        %v1979 = vld [vmem:[%s323 + $0x30f0] sm:$0xff]
        %v1980 = vld [vmem:[%s323 + $0x30f8] sm:$0xff]
        %v1981 = vld [vmem:[%s323 + $0x3100] sm:$0xff]
        %v1982 = vld [vmem:[%s323 + $0x3108] sm:$0xff]
        %v1983 = vld [vmem:[%s323 + $0x3110] sm:$0xff]
        %v1984 = vld [vmem:[%s323 + $0x3118] sm:$0xff]
        %v1985 = vld [vmem:[%s323 + $0x3120] sm:$0xff]
        %v1986 = vld [vmem:[%s323 + $0x3128] sm:$0xff]
        %v1987 = vld [vmem:[%s323 + $0x3130] sm:$0xff]
        %v1988 = vld [vmem:[%s323 + $0x3138] sm:$0xff]
        %v1989 = vld [vmem:[%s323 + $0x3140] sm:$0xff]
        %v1990 = vld [vmem:[%s323 + $0x3148] sm:$0xff]
        %v1991 = vld [vmem:[%s323 + $0x3150] sm:$0xff]
        %v1992 = vld [vmem:[%s323 + $0x3158] sm:$0xff]
        %v1993 = vld [vmem:[%s323 + $0x3160] sm:$0xff]
        %v1994 = vld [vmem:[%s323 + $0x3168] sm:$0xff]
        %v1995 = vld [vmem:[%s323 + $0x3170] sm:$0xff]
        %v1996 = vld [vmem:[%s323 + $0x3178] sm:$0xff]
        %v1997 = vld [vmem:[%s323 + $0x3180] sm:$0xff]
        %v1998 = vld [vmem:[%s323 + $0x3188] sm:$0xff]
        %v1999 = vld [vmem:[%s323 + $0x3190] sm:$0xff]
        %v2000 = vld [vmem:[%s323 + $0x3198] sm:$0xff]
        %v2001 = vld [vmem:[%s323 + $0x31a0] sm:$0xff]
        %v2002 = vld [vmem:[%s323 + $0x31a8] sm:$0xff]
        %v2003 = vld [vmem:[%s323 + $0x31b0] sm:$0xff]
        %v2004 = vld [vmem:[%s323 + $0x31b8] sm:$0xff]
        %v2005 = vld [vmem:[%s323 + $0x31c0] sm:$0xff]
        %v2006 = vld [vmem:[%s323 + $0x31c8] sm:$0xff]
        %v2007 = vld [vmem:[%s323 + $0x31d0] sm:$0xff]
        %v2008 = vld [vmem:[%s323 + $0x31d8] sm:$0xff]
        %v2009 = vld [vmem:[%s323 + $0x31e0] sm:$0xff]
        %v2010 = vld [vmem:[%s323 + $0x31e8] sm:$0xff]
        %v2011 = vld [vmem:[%s323 + $0x31f0] sm:$0xff]
        %v2012 = vld [vmem:[%s323 + $0x31f8] sm:$0xff]
        %v2013 = vld [vmem:[%s323 + $0x3200] sm:$0xff]
        %v2014 = vld [vmem:[%s323 + $0x3208] sm:$0xff]
        %v2015 = vld [vmem:[%s323 + $0x3210] sm:$0xff]
        %v2016 = vld [vmem:[%s323 + $0x3218] sm:$0xff]
        %v2017 = vld [vmem:[%s323 + $0x3220] sm:$0xff]
        %v2018 = vld [vmem:[%s323 + $0x3228] sm:$0xff]
        %v2019 = vld [vmem:[%s323 + $0x3230] sm:$0xff]
        %v2020 = vld [vmem:[%s323 + $0x3238] sm:$0xff]
        %v2021 = vld [vmem:[%s323 + $0x3240] sm:$0xff]
        %v2022 = vld [vmem:[%s323 + $0x3248] sm:$0xff]
        %v2023 = vld [vmem:[%s323 + $0x3250] sm:$0xff]
        %v2024 = vld [vmem:[%s323 + $0x3258] sm:$0xff]
        %v2025 = vld [vmem:[%s323 + $0x3260] sm:$0xff]
        %v2026 = vld [vmem:[%s323 + $0x3268] sm:$0xff]
        %v2027 = vld [vmem:[%s323 + $0x3270] sm:$0xff]
        %v2028 = vld [vmem:[%s323 + $0x3278] sm:$0xff]
        %v2029 = vld [vmem:[%s323 + $0x3280] sm:$0xff]
        %v2030 = vld [vmem:[%s323 + $0x3288] sm:$0xff]
        %v2031 = vld [vmem:[%s323 + $0x3290] sm:$0xff]
        %v2032 = vld [vmem:[%s323 + $0x3298] sm:$0xff]
        %v2033 = vld [vmem:[%s323 + $0x32a0] sm:$0xff]
        %v2034 = vld [vmem:[%s323 + $0x32a8] sm:$0xff]
        %v2035 = vld [vmem:[%s323 + $0x32b0] sm:$0xff]
        %v2036 = vld [vmem:[%s323 + $0x32b8] sm:$0xff]
        %v2037 = vld [vmem:[%s323 + $0x32c0] sm:$0xff]
        %v2038 = vld [vmem:[%s323 + $0x32c8] sm:$0xff]
        %v2039 = vld [vmem:[%s323 + $0x32d0] sm:$0xff]
        %v2040 = vld [vmem:[%s323 + $0x32d8] sm:$0xff]
        %v2041 = vld [vmem:[%s323 + $0x32e0] sm:$0xff]
        %v2042 = vld [vmem:[%s323 + $0x32e8] sm:$0xff]
        %v2043 = vld [vmem:[%s323 + $0x32f0] sm:$0xff]
        %v2044 = vld [vmem:[%s323 + $0x32f8] sm:$0xff]
        %v2045 = vld [vmem:[%s323 + $0x3300] sm:$0xff]
        %v2046 = vld [vmem:[%s323 + $0x3308] sm:$0xff]
        %v2047 = vld [vmem:[%s323 + $0x3310] sm:$0xff]
        %v2048 = vld [vmem:[%s323 + $0x3318] sm:$0xff]
        %v2049 = vld [vmem:[%s323 + $0x3320] sm:$0xff]
        %v2050 = vld [vmem:[%s323 + $0x3328] sm:$0xff]
        %v2051 = vld [vmem:[%s323 + $0x3330] sm:$0xff]
        %v2052 = vld [vmem:[%s323 + $0x3338] sm:$0xff]
        %v2053 = vld [vmem:[%s323 + $0x3340] sm:$0xff]
        %v2054 = vld [vmem:[%s323 + $0x3348] sm:$0xff]
        %v2055 = vld [vmem:[%s323 + $0x3350] sm:$0xff]
        %v2056 = vld [vmem:[%s323 + $0x3358] sm:$0xff]
        %v2057 = vld [vmem:[%s323 + $0x3360] sm:$0xff]
        %v2058 = vld [vmem:[%s323 + $0x3368] sm:$0xff]
        %v2059 = vld [vmem:[%s323 + $0x3370] sm:$0xff]
        %v2060 = vld [vmem:[%s323 + $0x3378] sm:$0xff]
        %v2061 = vld [vmem:[%s323 + $0x3380] sm:$0xff]
        %v2062 = vld [vmem:[%s323 + $0x3388] sm:$0xff]
        %v2063 = vld [vmem:[%s323 + $0x3390] sm:$0xff]
        %v2064 = vld [vmem:[%s323 + $0x3398] sm:$0xff]
        %v2065 = vld [vmem:[%s323 + $0x33a0] sm:$0xff]
        %v2066 = vld [vmem:[%s323 + $0x33a8] sm:$0xff]
        %v2067 = vld [vmem:[%s323 + $0x33b0] sm:$0xff]
        %v2068 = vld [vmem:[%s323 + $0x33b8] sm:$0xff]
        %v2069 = vld [vmem:[%s323 + $0x33c0] sm:$0xff]
        %v2070 = vld [vmem:[%s323 + $0x33c8] sm:$0xff]
        %v2071 = vld [vmem:[%s323 + $0x33d0] sm:$0xff]
        %v2072 = vld [vmem:[%s323 + $0x33d8] sm:$0xff]
        %v2073 = vld [vmem:[%s323 + $0x33e0] sm:$0xff]
        %v2074 = vld [vmem:[%s323 + $0x33e8] sm:$0xff]
        %v2075 = vld [vmem:[%s323 + $0x33f0] sm:$0xff]
        %v2076 = vld [vmem:[%s323 + $0x33f8] sm:$0xff]
        %v2077 = vld [vmem:[%s323 + $0x3400] sm:$0xff]
        %v2078 = vld [vmem:[%s323 + $0x3408] sm:$0xff]
        %v2079 = vld [vmem:[%s323 + $0x3410] sm:$0xff]
        %v2080 = vld [vmem:[%s323 + $0x3418] sm:$0xff]
        %v2081 = vld [vmem:[%s323 + $0x3420] sm:$0xff]
        %v2082 = vld [vmem:[%s323 + $0x3428] sm:$0xff]
        %v2083 = vld [vmem:[%s323 + $0x3430] sm:$0xff]
        %v2084 = vld [vmem:[%s323 + $0x3438] sm:$0xff]
        %v2085 = vld [vmem:[%s323 + $0x3440] sm:$0xff]
        %v2086 = vld [vmem:[%s323 + $0x3448] sm:$0xff]
        %v2087 = vld [vmem:[%s323 + $0x3450] sm:$0xff]
        %v2088 = vld [vmem:[%s323 + $0x3458] sm:$0xff]
        %v2089 = vld [vmem:[%s323 + $0x3460] sm:$0xff]
        %v2090 = vld [vmem:[%s323 + $0x3468] sm:$0xff]
        %v2091 = vld [vmem:[%s323 + $0x3470] sm:$0xff]
        %v2092 = vld [vmem:[%s323 + $0x3478] sm:$0xff]
        %v2093 = vld [vmem:[%s323 + $0x3480] sm:$0xff]
        %v2094 = vld [vmem:[%s323 + $0x3488] sm:$0xff]
        %v2095 = vld [vmem:[%s323 + $0x3490] sm:$0xff]
        %v2096 = vld [vmem:[%s323 + $0x3498] sm:$0xff]
        %v2097 = vld [vmem:[%s323 + $0x34a0] sm:$0xff]
        %v2098 = vld [vmem:[%s323 + $0x34a8] sm:$0xff]
        %v2099 = vld [vmem:[%s323 + $0x34b0] sm:$0xff]
        %v2100 = vld [vmem:[%s323 + $0x34b8] sm:$0xff]
        %v2101 = vld [vmem:[%s323 + $0x34c0] sm:$0xff]
        %v2102 = vld [vmem:[%s323 + $0x34c8] sm:$0xff]
        %v2103 = vld [vmem:[%s323 + $0x34d0] sm:$0xff]
        %v2104 = vld [vmem:[%s323 + $0x34d8] sm:$0xff]
        %v2105 = vld [vmem:[%s323 + $0x34e0] sm:$0xff]
        %v2106 = vld [vmem:[%s323 + $0x34e8] sm:$0xff]
        %v2107 = vld [vmem:[%s323 + $0x34f0] sm:$0xff]
        %v2108 = vld [vmem:[%s323 + $0x34f8] sm:$0xff]
        %v2109 = vld [vmem:[%s323 + $0x3500] sm:$0xff]
        %v2110 = vld [vmem:[%s323 + $0x3508] sm:$0xff]
        %v2111 = vld [vmem:[%s323 + $0x3510] sm:$0xff]
        %v2112 = vld [vmem:[%s323 + $0x3518] sm:$0xff]
        %v2113 = vld [vmem:[%s323 + $0x3520] sm:$0xff]
        %v2114 = vld [vmem:[%s323 + $0x3528] sm:$0xff]
        %v2115 = vld [vmem:[%s323 + $0x3530] sm:$0xff]
        %v2116 = vld [vmem:[%s323 + $0x3538] sm:$0xff]
        %v2117 = vld [vmem:[%s323 + $0x3540] sm:$0xff]
        %v2118 = vld [vmem:[%s323 + $0x3548] sm:$0xff]
        %v2119 = vld [vmem:[%s323 + $0x3550] sm:$0xff]
        %v2120 = vld [vmem:[%s323 + $0x3558] sm:$0xff]
        %v2121 = vld [vmem:[%s323 + $0x3560] sm:$0xff]
        %v2122 = vld [vmem:[%s323 + $0x3568] sm:$0xff]
        %v2123 = vld [vmem:[%s323 + $0x3570] sm:$0xff]
        %v2124 = vld [vmem:[%s323 + $0x3578] sm:$0xff]
        %v2125 = vld [vmem:[%s323 + $0x3580] sm:$0xff]
        %v2126 = vld [vmem:[%s323 + $0x3588] sm:$0xff]
        %v2127 = vld [vmem:[%s323 + $0x3590] sm:$0xff]
        %v2128 = vld [vmem:[%s323 + $0x3598] sm:$0xff]
        %v2129 = vld [vmem:[%s323 + $0x35a0] sm:$0xff]
        %v2130 = vld [vmem:[%s323 + $0x35a8] sm:$0xff]
        %v2131 = vld [vmem:[%s323 + $0x35b0] sm:$0xff]
        %v2132 = vld [vmem:[%s323 + $0x35b8] sm:$0xff]
        %v2133 = vld [vmem:[%s323 + $0x35c0] sm:$0xff]
        %v2134 = vld [vmem:[%s323 + $0x35c8] sm:$0xff]
        %v2135 = vld [vmem:[%s323 + $0x35d0] sm:$0xff]
        %v2136 = vld [vmem:[%s323 + $0x35d8] sm:$0xff]
        %v2137 = vld [vmem:[%s323 + $0x35e0] sm:$0xff]
        %v2138 = vld [vmem:[%s323 + $0x35e8] sm:$0xff]
        %v2139 = vld [vmem:[%s323 + $0x35f0] sm:$0xff]
        %v2140 = vld [vmem:[%s323 + $0x35f8] sm:$0xff]
        %v2141 = vld [vmem:[%s323 + $0x3600] sm:$0xff]
        %v2142 = vld [vmem:[%s323 + $0x3608] sm:$0xff]
        %v2143 = vld [vmem:[%s323 + $0x3610] sm:$0xff]
        %v2144 = vld [vmem:[%s323 + $0x3618] sm:$0xff]
        %v2145 = vld [vmem:[%s323 + $0x3620] sm:$0xff]
        %v2146 = vld [vmem:[%s323 + $0x3628] sm:$0xff]
        %v2147 = vld [vmem:[%s323 + $0x3630] sm:$0xff]
        %v2148 = vld [vmem:[%s323 + $0x3638] sm:$0xff]
        %v2149 = vld [vmem:[%s323 + $0x3640] sm:$0xff]
        %v2150 = vld [vmem:[%s323 + $0x3648] sm:$0xff]
        %v2151 = vld [vmem:[%s323 + $0x3650] sm:$0xff]
        %v2152 = vld [vmem:[%s323 + $0x3658] sm:$0xff]
        %v2153 = vld [vmem:[%s323 + $0x3660] sm:$0xff]
        %v2154 = vld [vmem:[%s323 + $0x3668] sm:$0xff]
        %v2155 = vld [vmem:[%s323 + $0x3670] sm:$0xff]
        %v2156 = vld [vmem:[%s323 + $0x3678] sm:$0xff]
        %v2157 = vld [vmem:[%s323 + $0x3680] sm:$0xff]
        %v2158 = vld [vmem:[%s323 + $0x3688] sm:$0xff]
        %v2159 = vld [vmem:[%s323 + $0x3690] sm:$0xff]
        %v2160 = vld [vmem:[%s323 + $0x3698] sm:$0xff]
        %v2161 = vld [vmem:[%s323 + $0x36a0] sm:$0xff]
        %v2162 = vld [vmem:[%s323 + $0x36a8] sm:$0xff]
        %v2163 = vld [vmem:[%s323 + $0x36b0] sm:$0xff]
        %v2164 = vld [vmem:[%s323 + $0x36b8] sm:$0xff]
        %v2165 = vld [vmem:[%s323 + $0x36c0] sm:$0xff]
        %v2166 = vld [vmem:[%s323 + $0x36c8] sm:$0xff]
        %v2167 = vld [vmem:[%s323 + $0x36d0] sm:$0xff]
        %v2168 = vld [vmem:[%s323 + $0x36d8] sm:$0xff]
        %v2169 = vld [vmem:[%s323 + $0x36e0] sm:$0xff]
        %v2170 = vld [vmem:[%s323 + $0x36e8] sm:$0xff]
        %v2171 = vld [vmem:[%s323 + $0x36f0] sm:$0xff]
        %v2172 = vld [vmem:[%s323 + $0x36f8] sm:$0xff]
        %v2173 = vld [vmem:[%s323 + $0x3700] sm:$0xff]
        %v2174 = vld [vmem:[%s323 + $0x3708] sm:$0xff]
        %v2175 = vld [vmem:[%s323 + $0x3710] sm:$0xff]
        %v2176 = vld [vmem:[%s323 + $0x3718] sm:$0xff]
        %v2177 = vld [vmem:[%s323 + $0x3720] sm:$0xff]
        %v2178 = vld [vmem:[%s323 + $0x3728] sm:$0xff]
        %v2179 = vld [vmem:[%s323 + $0x3730] sm:$0xff]
        %v2180 = vld [vmem:[%s323 + $0x3738] sm:$0xff]
        %v2181 = vld [vmem:[%s323 + $0x3740] sm:$0xff]
        %v2182 = vld [vmem:[%s323 + $0x3748] sm:$0xff]
        %v2183 = vld [vmem:[%s323 + $0x3750] sm:$0xff]
        %v2184 = vld [vmem:[%s323 + $0x3758] sm:$0xff]
        %v2185 = vld [vmem:[%s323 + $0x3760] sm:$0xff]
        %v2186 = vld [vmem:[%s323 + $0x3768] sm:$0xff]
        %v2187 = vld [vmem:[%s323 + $0x3770] sm:$0xff]
        %v2188 = vld [vmem:[%s323 + $0x3778] sm:$0xff]
        %v2189 = vld [vmem:[%s323 + $0x3780] sm:$0xff]
        %v2190 = vld [vmem:[%s323 + $0x3788] sm:$0xff]
        %v2191 = vld [vmem:[%s323 + $0x3790] sm:$0xff]
        %v2192 = vld [vmem:[%s323 + $0x3798] sm:$0xff]
        %v2193 = vld [vmem:[%s323 + $0x37a0] sm:$0xff]
        %v2194 = vld [vmem:[%s323 + $0x37a8] sm:$0xff]
        %v2195 = vld [vmem:[%s323 + $0x37b0] sm:$0xff]
        %v2196 = vld [vmem:[%s323 + $0x37b8] sm:$0xff]
        %v2197 = vld [vmem:[%s323 + $0x37c0] sm:$0xff]
        %v2198 = vld [vmem:[%s323 + $0x37c8] sm:$0xff]
        %v2199 = vld [vmem:[%s323 + $0x37d0] sm:$0xff]
        %v2200 = vld [vmem:[%s323 + $0x37d8] sm:$0xff]
        %v2201 = vld [vmem:[%s323 + $0x37e0] sm:$0xff]
        %v2202 = vld [vmem:[%s323 + $0x37e8] sm:$0xff]
        %v2203 = vld [vmem:[%s323 + $0x37f0] sm:$0xff]
        %v2204 = vld [vmem:[%s323 + $0x37f8] sm:$0xff]
        %v2205 = vld [vmem:[%s323 + $0x3800] sm:$0xff]
        %v2206 = vld [vmem:[%s323 + $0x3808] sm:$0xff]
        %v2207 = vld [vmem:[%s323 + $0x3810] sm:$0xff]
        %v2208 = vld [vmem:[%s323 + $0x3818] sm:$0xff]
        %v2209 = vld [vmem:[%s323 + $0x3820] sm:$0xff]
        %v2210 = vld [vmem:[%s323 + $0x3828] sm:$0xff]
        %v2211 = vld [vmem:[%s323 + $0x3830] sm:$0xff]
        %v2212 = vld [vmem:[%s323 + $0x3838] sm:$0xff]
        %v2213 = vld [vmem:[%s323 + $0x3840] sm:$0xff]
        %v2214 = vld [vmem:[%s323 + $0x3848] sm:$0xff]
        %v2215 = vld [vmem:[%s323 + $0x3850] sm:$0xff]
        %v2216 = vld [vmem:[%s323 + $0x3858] sm:$0xff]
        %v2217 = vld [vmem:[%s323 + $0x3860] sm:$0xff]
        %v2218 = vld [vmem:[%s323 + $0x3868] sm:$0xff]
        %v2219 = vld [vmem:[%s323 + $0x3870] sm:$0xff]
        %v2220 = vld [vmem:[%s323 + $0x3878] sm:$0xff]
        %v2221 = vld [vmem:[%s323 + $0x3880] sm:$0xff]
        %v2222 = vld [vmem:[%s323 + $0x3888] sm:$0xff]
        %v2223 = vld [vmem:[%s323 + $0x3890] sm:$0xff]
        %v2224 = vld [vmem:[%s323 + $0x3898] sm:$0xff]
        %v2225 = vld [vmem:[%s323 + $0x38a0] sm:$0xff]
        %v2226 = vld [vmem:[%s323 + $0x38a8] sm:$0xff]
        %v2227 = vld [vmem:[%s323 + $0x38b0] sm:$0xff]
        %v2228 = vld [vmem:[%s323 + $0x38b8] sm:$0xff]
        %v2229 = vld [vmem:[%s323 + $0x38c0] sm:$0xff]
        %v2230 = vld [vmem:[%s323 + $0x38c8] sm:$0xff]
        %v2231 = vld [vmem:[%s323 + $0x38d0] sm:$0xff]
        %v2232 = vld [vmem:[%s323 + $0x38d8] sm:$0xff]
        %v2233 = vld [vmem:[%s323 + $0x38e0] sm:$0xff]
        %v2234 = vld [vmem:[%s323 + $0x38e8] sm:$0xff]
        %v2235 = vld [vmem:[%s323 + $0x38f0] sm:$0xff]
        %v2236 = vld [vmem:[%s323 + $0x38f8] sm:$0xff]
        %v2237 = vld [vmem:[%s323 + $0x3900] sm:$0xff]
        %v2238 = vld [vmem:[%s323 + $0x3908] sm:$0xff]
        %v2239 = vld [vmem:[%s323 + $0x3910] sm:$0xff]
        %v2240 = vld [vmem:[%s323 + $0x3918] sm:$0xff]
        %v2241 = vld [vmem:[%s323 + $0x3920] sm:$0xff]
        %v2242 = vld [vmem:[%s323 + $0x3928] sm:$0xff]
        %v2243 = vld [vmem:[%s323 + $0x3930] sm:$0xff]
        %v2244 = vld [vmem:[%s323 + $0x3938] sm:$0xff]
        %v2245 = vld [vmem:[%s323 + $0x3940] sm:$0xff]
        %v2246 = vld [vmem:[%s323 + $0x3948] sm:$0xff]
        %v2247 = vld [vmem:[%s323 + $0x3950] sm:$0xff]
        %v2248 = vld [vmem:[%s323 + $0x3958] sm:$0xff]
        %v2249 = vld [vmem:[%s323 + $0x3960] sm:$0xff]
        %v2250 = vld [vmem:[%s323 + $0x3968] sm:$0xff]
        %v2251 = vld [vmem:[%s323 + $0x3970] sm:$0xff]
        %v2252 = vld [vmem:[%s323 + $0x3978] sm:$0xff]
        %v2253 = vld [vmem:[%s323 + $0x3980] sm:$0xff]
        %v2254 = vld [vmem:[%s323 + $0x3988] sm:$0xff]
        %v2255 = vld [vmem:[%s323 + $0x3990] sm:$0xff]
        %v2256 = vld [vmem:[%s323 + $0x3998] sm:$0xff]
        %v2257 = vld [vmem:[%s323 + $0x39a0] sm:$0xff]
        %v2258 = vld [vmem:[%s323 + $0x39a8] sm:$0xff]
        %v2259 = vld [vmem:[%s323 + $0x39b0] sm:$0xff]
        %v2260 = vld [vmem:[%s323 + $0x39b8] sm:$0xff]
        %v2261 = vld [vmem:[%s323 + $0x39c0] sm:$0xff]
        %v2262 = vld [vmem:[%s323 + $0x39c8] sm:$0xff]
        %v2263 = vld [vmem:[%s323 + $0x39d0] sm:$0xff]
        %v2264 = vld [vmem:[%s323 + $0x39d8] sm:$0xff]
        %v2265 = vld [vmem:[%s323 + $0x39e0] sm:$0xff]
        %v2266 = vld [vmem:[%s323 + $0x39e8] sm:$0xff]
        %v2267 = vld [vmem:[%s323 + $0x39f0] sm:$0xff]
        %v2268 = vld [vmem:[%s323 + $0x39f8] sm:$0xff]
        %v2269 = vld [vmem:[%s323 + $0x3a00] sm:$0xff]
        %v2270 = vld [vmem:[%s323 + $0x3a08] sm:$0xff]
        %v2271 = vld [vmem:[%s323 + $0x3a10] sm:$0xff]
        %v2272 = vld [vmem:[%s323 + $0x3a18] sm:$0xff]
        %v2273 = vld [vmem:[%s323 + $0x3a20] sm:$0xff]
        %v2274 = vld [vmem:[%s323 + $0x3a28] sm:$0xff]
        %v2275 = vld [vmem:[%s323 + $0x3a30] sm:$0xff]
        %v2276 = vld [vmem:[%s323 + $0x3a38] sm:$0xff]
        %v2277 = vld [vmem:[%s323 + $0x3a40] sm:$0xff]
        %v2278 = vld [vmem:[%s323 + $0x3a48] sm:$0xff]
        %v2279 = vld [vmem:[%s323 + $0x3a50] sm:$0xff]
        %v2280 = vld [vmem:[%s323 + $0x3a58] sm:$0xff]
        %v2281 = vld [vmem:[%s323 + $0x3a60] sm:$0xff]
        %v2282 = vld [vmem:[%s323 + $0x3a68] sm:$0xff]
        %v2283 = vld [vmem:[%s323 + $0x3a70] sm:$0xff]
        %v2284 = vld [vmem:[%s323 + $0x3a78] sm:$0xff]
        %v2285 = vld [vmem:[%s323 + $0x3a80] sm:$0xff]
        %v2286 = vld [vmem:[%s323 + $0x3a88] sm:$0xff]
        %v2287 = vld [vmem:[%s323 + $0x3a90] sm:$0xff]
        %v2288 = vld [vmem:[%s323 + $0x3a98] sm:$0xff]
        %v2289 = vld [vmem:[%s323 + $0x3aa0] sm:$0xff]
        %v2290 = vld [vmem:[%s323 + $0x3aa8] sm:$0xff]
        %v2291 = vld [vmem:[%s323 + $0x3ab0] sm:$0xff]
        %v2292 = vld [vmem:[%s323 + $0x3ab8] sm:$0xff]
        %v2293 = vld [vmem:[%s323 + $0x3ac0] sm:$0xff]
        %v2294 = vld [vmem:[%s323 + $0x3ac8] sm:$0xff]
        %v2295 = vld [vmem:[%s323 + $0x3ad0] sm:$0xff]
        %v2296 = vld [vmem:[%s323 + $0x3ad8] sm:$0xff]
        %v2297 = vld [vmem:[%s323 + $0x3ae0] sm:$0xff]
        %v2298 = vld [vmem:[%s323 + $0x3ae8] sm:$0xff]
        %v2299 = vld [vmem:[%s323 + $0x3af0] sm:$0xff]
        %v2300 = vld [vmem:[%s323 + $0x3af8] sm:$0xff]
        %v2301 = vld [vmem:[%s323 + $0x3b00] sm:$0xff]
        %v2302 = vld [vmem:[%s323 + $0x3b08] sm:$0xff]
        %v2303 = vld [vmem:[%s323 + $0x3b10] sm:$0xff]
        %v2304 = vld [vmem:[%s323 + $0x3b18] sm:$0xff]
        %v2305 = vld [vmem:[%s323 + $0x3b20] sm:$0xff]
        %v2306 = vld [vmem:[%s323 + $0x3b28] sm:$0xff]
        %v2307 = vld [vmem:[%s323 + $0x3b30] sm:$0xff]
        %v2308 = vld [vmem:[%s323 + $0x3b38] sm:$0xff]
        %v2309 = vld [vmem:[%s323 + $0x3b40] sm:$0xff]
        %v2310 = vld [vmem:[%s323 + $0x3b48] sm:$0xff]
        %v2311 = vld [vmem:[%s323 + $0x3b50] sm:$0xff]
        %v2312 = vld [vmem:[%s323 + $0x3b58] sm:$0xff]
        %v2313 = vld [vmem:[%s323 + $0x3b60] sm:$0xff]
        %v2314 = vld [vmem:[%s323 + $0x3b68] sm:$0xff]
        %v2315 = vld [vmem:[%s323 + $0x3b70] sm:$0xff]
        %v2316 = vld [vmem:[%s323 + $0x3b78] sm:$0xff]
        %v2317 = vld [vmem:[%s323 + $0x3b80] sm:$0xff]
        %v2318 = vld [vmem:[%s323 + $0x3b88] sm:$0xff]
        %v2319 = vld [vmem:[%s323 + $0x3b90] sm:$0xff]
        %v2320 = vld [vmem:[%s323 + $0x3b98] sm:$0xff]
        %v2321 = vld [vmem:[%s323 + $0x3ba0] sm:$0xff]
        %v2322 = vld [vmem:[%s323 + $0x3ba8] sm:$0xff]
        %v2323 = vld [vmem:[%s323 + $0x3bb0] sm:$0xff]
        %v2324 = vld [vmem:[%s323 + $0x3bb8] sm:$0xff]
        %v2325 = vld [vmem:[%s323 + $0x3bc0] sm:$0xff]
        %v2326 = vld [vmem:[%s323 + $0x3bc8] sm:$0xff]
        %v2327 = vld [vmem:[%s323 + $0x3bd0] sm:$0xff]
        %v2328 = vld [vmem:[%s323 + $0x3bd8] sm:$0xff]
        %v2329 = vld [vmem:[%s323 + $0x3be0] sm:$0xff]
        %v2330 = vld [vmem:[%s323 + $0x3be8] sm:$0xff]
        %v2331 = vld [vmem:[%s323 + $0x3bf0] sm:$0xff]
        %v2332 = vld [vmem:[%s323 + $0x3bf8] sm:$0xff]
        %v2333 = vld [vmem:[%s323 + $0x3c00] sm:$0xff]
        %v2334 = vld [vmem:[%s323 + $0x3c08] sm:$0xff]
        %v2335 = vld [vmem:[%s323 + $0x3c10] sm:$0xff]
        %v2336 = vld [vmem:[%s323 + $0x3c18] sm:$0xff]
        %v2337 = vld [vmem:[%s323 + $0x3c20] sm:$0xff]
        %v2338 = vld [vmem:[%s323 + $0x3c28] sm:$0xff]
        %v2339 = vld [vmem:[%s323 + $0x3c30] sm:$0xff]
        %v2340 = vld [vmem:[%s323 + $0x3c38] sm:$0xff]
        %v2341 = vld [vmem:[%s323 + $0x3c40] sm:$0xff]
        %v2342 = vld [vmem:[%s323 + $0x3c48] sm:$0xff]
        %v2343 = vld [vmem:[%s323 + $0x3c50] sm:$0xff]
        %v2344 = vld [vmem:[%s323 + $0x3c58] sm:$0xff]
        %v2345 = vld [vmem:[%s323 + $0x3c60] sm:$0xff]
        %v2346 = vld [vmem:[%s323 + $0x3c68] sm:$0xff]
        %v2347 = vld [vmem:[%s323 + $0x3c70] sm:$0xff]
        %v2348 = vld [vmem:[%s323 + $0x3c78] sm:$0xff]
        %v2349 = vld [vmem:[%s323 + $0x3c80] sm:$0xff]
        %v2350 = vld [vmem:[%s323 + $0x3c88] sm:$0xff]
        %v2351 = vld [vmem:[%s323 + $0x3c90] sm:$0xff]
        %v2352 = vld [vmem:[%s323 + $0x3c98] sm:$0xff]
        %v2353 = vld [vmem:[%s323 + $0x3ca0] sm:$0xff]
        %v2354 = vld [vmem:[%s323 + $0x3ca8] sm:$0xff]
        %v2355 = vld [vmem:[%s323 + $0x3cb0] sm:$0xff]
        %v2356 = vld [vmem:[%s323 + $0x3cb8] sm:$0xff]
        %v2357 = vld [vmem:[%s323 + $0x3cc0] sm:$0xff]
        %v2358 = vld [vmem:[%s323 + $0x3cc8] sm:$0xff]
        %v2359 = vld [vmem:[%s323 + $0x3cd0] sm:$0xff]
        %v2360 = vld [vmem:[%s323 + $0x3cd8] sm:$0xff]
        %v2361 = vld [vmem:[%s323 + $0x3ce0] sm:$0xff]
        %v2362 = vld [vmem:[%s323 + $0x3ce8] sm:$0xff]
        %v2363 = vld [vmem:[%s323 + $0x3cf0] sm:$0xff]
        %v2364 = vld [vmem:[%s323 + $0x3cf8] sm:$0xff]
        %v2365 = vld [vmem:[%s323 + $0x3d00] sm:$0xff]
        %v2366 = vld [vmem:[%s323 + $0x3d08] sm:$0xff]
        %v2367 = vld [vmem:[%s323 + $0x3d10] sm:$0xff]
        %v2368 = vld [vmem:[%s323 + $0x3d18] sm:$0xff]
        %v2369 = vld [vmem:[%s323 + $0x3d20] sm:$0xff]
        %v2370 = vld [vmem:[%s323 + $0x3d28] sm:$0xff]
        %v2371 = vld [vmem:[%s323 + $0x3d30] sm:$0xff]
        %v2372 = vld [vmem:[%s323 + $0x3d38] sm:$0xff]
        %v2373 = vld [vmem:[%s323 + $0x3d40] sm:$0xff]
        %v2374 = vld [vmem:[%s323 + $0x3d48] sm:$0xff]
        %v2375 = vld [vmem:[%s323 + $0x3d50] sm:$0xff]
        %v2376 = vld [vmem:[%s323 + $0x3d58] sm:$0xff]
        %v2377 = vld [vmem:[%s323 + $0x3d60] sm:$0xff]
        %v2378 = vld [vmem:[%s323 + $0x3d68] sm:$0xff]
        %v2379 = vld [vmem:[%s323 + $0x3d70] sm:$0xff]
        %v2380 = vld [vmem:[%s323 + $0x3d78] sm:$0xff]
        %v2381 = vld [vmem:[%s323 + $0x3d80] sm:$0xff]
        %v2382 = vld [vmem:[%s323 + $0x3d88] sm:$0xff]
        %v2383 = vld [vmem:[%s323 + $0x3d90] sm:$0xff]
        %v2384 = vld [vmem:[%s323 + $0x3d98] sm:$0xff]
        %v2385 = vld [vmem:[%s323 + $0x3da0] sm:$0xff]
        %v2386 = vld [vmem:[%s323 + $0x3da8] sm:$0xff]
        %v2387 = vld [vmem:[%s323 + $0x3db0] sm:$0xff]
        %v2388 = vld [vmem:[%s323 + $0x3db8] sm:$0xff]
        %v2389 = vld [vmem:[%s323 + $0x3dc0] sm:$0xff]
        %v2390 = vld [vmem:[%s323 + $0x3dc8] sm:$0xff]
        %v2391 = vld [vmem:[%s323 + $0x3dd0] sm:$0xff]
        %v2392 = vld [vmem:[%s323 + $0x3dd8] sm:$0xff]
        %v2393 = vld [vmem:[%s323 + $0x3de0] sm:$0xff]
        %v2394 = vld [vmem:[%s323 + $0x3de8] sm:$0xff]
        %v2395 = vld [vmem:[%s323 + $0x3df0] sm:$0xff]
        %v2396 = vld [vmem:[%s323 + $0x3df8] sm:$0xff]
        %v2397 = vld [vmem:[%s323 + $0x3e00] sm:$0xff]
        %v2398 = vld [vmem:[%s323 + $0x3e08] sm:$0xff]
        %v2399 = vld [vmem:[%s323 + $0x3e10] sm:$0xff]
        %v2400 = vld [vmem:[%s323 + $0x3e18] sm:$0xff]
        %v2401 = vld [vmem:[%s323 + $0x3e20] sm:$0xff]
        %v2402 = vld [vmem:[%s323 + $0x3e28] sm:$0xff]
        %v2403 = vld [vmem:[%s323 + $0x3e30] sm:$0xff]
        %v2404 = vld [vmem:[%s323 + $0x3e38] sm:$0xff]
        %v2405 = vld [vmem:[%s323 + $0x3e40] sm:$0xff]
        %v2406 = vld [vmem:[%s323 + $0x3e48] sm:$0xff]
        %v2407 = vld [vmem:[%s323 + $0x3e50] sm:$0xff]
        %v2408 = vld [vmem:[%s323 + $0x3e58] sm:$0xff]
        %v2409 = vld [vmem:[%s323 + $0x3e60] sm:$0xff]
        %v2410 = vld [vmem:[%s323 + $0x3e68] sm:$0xff]
        %v2411 = vld [vmem:[%s323 + $0x3e70] sm:$0xff]
        %v2412 = vld [vmem:[%s323 + $0x3e78] sm:$0xff]
        %v2413 = vld [vmem:[%s323 + $0x3e80] sm:$0xff]
        %v2414 = vld [vmem:[%s323 + $0x3e88] sm:$0xff]
        %v2415 = vld [vmem:[%s323 + $0x3e90] sm:$0xff]
        %v2416 = vld [vmem:[%s323 + $0x3e98] sm:$0xff]
        %v2417 = vld [vmem:[%s323 + $0x3ea0] sm:$0xff]
        %v2418 = vld [vmem:[%s323 + $0x3ea8] sm:$0xff]
        %v2419 = vld [vmem:[%s323 + $0x3eb0] sm:$0xff]
        %v2420 = vld [vmem:[%s323 + $0x3eb8] sm:$0xff]
        %v2421 = vld [vmem:[%s323 + $0x3ec0] sm:$0xff]
        %v2422 = vld [vmem:[%s323 + $0x3ec8] sm:$0xff]
        %v2423 = vld [vmem:[%s323 + $0x3ed0] sm:$0xff]
        %v2424 = vld [vmem:[%s323 + $0x3ed8] sm:$0xff]
        %v2425 = vld [vmem:[%s323 + $0x3ee0] sm:$0xff]
        %v2426 = vld [vmem:[%s323 + $0x3ee8] sm:$0xff]
        %v2427 = vld [vmem:[%s323 + $0x3ef0] sm:$0xff]
        %v2428 = vld [vmem:[%s323 + $0x3ef8] sm:$0xff]
        %v2429 = vld [vmem:[%s323 + $0x3f00] sm:$0xff]
        %v2430 = vld [vmem:[%s323 + $0x3f08] sm:$0xff]
        %v2431 = vld [vmem:[%s323 + $0x3f10] sm:$0xff]
        %v2432 = vld [vmem:[%s323 + $0x3f18] sm:$0xff]
        %v2433 = vld [vmem:[%s323 + $0x3f20] sm:$0xff]
        %v2434 = vld [vmem:[%s323 + $0x3f28] sm:$0xff]
        %v2435 = vld [vmem:[%s323 + $0x3f30] sm:$0xff]
        %v2436 = vld [vmem:[%s323 + $0x3f38] sm:$0xff]
        %v2437 = vld [vmem:[%s323 + $0x3f40] sm:$0xff]
        %v2438 = vld [vmem:[%s323 + $0x3f48] sm:$0xff]
        %v2439 = vld [vmem:[%s323 + $0x3f50] sm:$0xff]
        %v2440 = vld [vmem:[%s323 + $0x3f58] sm:$0xff]
        %v2441 = vld [vmem:[%s323 + $0x3f60] sm:$0xff]
        %v2442 = vld [vmem:[%s323 + $0x3f68] sm:$0xff]
        %v2443 = vld [vmem:[%s323 + $0x3f70] sm:$0xff]
        %v2444 = vld [vmem:[%s323 + $0x3f78] sm:$0xff]
        %v2445 = vld [vmem:[%s323 + $0x3f80] sm:$0xff]
        %v2446 = vld [vmem:[%s323 + $0x3f88] sm:$0xff]
        %v2447 = vld [vmem:[%s323 + $0x3f90] sm:$0xff]
        %v2448 = vld [vmem:[%s323 + $0x3f98] sm:$0xff]
        %v2449 = vld [vmem:[%s323 + $0x3fa0] sm:$0xff]
        %v2450 = vld [vmem:[%s323 + $0x3fa8] sm:$0xff]
        %v2451 = vld [vmem:[%s323 + $0x3fb0] sm:$0xff]
        %v2452 = vld [vmem:[%s323 + $0x3fb8] sm:$0xff]
        %v2453 = vld [vmem:[%s323 + $0x3fc0] sm:$0xff]
        %v2454 = vld [vmem:[%s323 + $0x3fc8] sm:$0xff]
        %v2455 = vld [vmem:[%s323 + $0x3fd0] sm:$0xff]
        %v2456 = vld [vmem:[%s323 + $0x3fd8] sm:$0xff]
        %v2457 = vld [vmem:[%s323 + $0x3fe0] sm:$0xff]
        %v2458 = vld [vmem:[%s323 + $0x3fe8] sm:$0xff]
        %v2459 = vld [vmem:[%s323 + $0x3ff0] sm:$0xff]
        %v2460 = vld [vmem:[%s323 + $0x3ff8] sm:$0xff]
        %v2461 = vld [vmem:[%s323 + $0x4000] sm:$0xff]
        %v2462 = vld [vmem:[%s323 + $0x4008] sm:$0xff]
        %v2463 = vld [vmem:[%s323 + $0x4010] sm:$0xff]
        %v2464 = vld [vmem:[%s323 + $0x4018] sm:$0xff]
        %v2465 = vld [vmem:[%s323 + $0x4020] sm:$0xff]
        %v2466 = vld [vmem:[%s323 + $0x4028] sm:$0xff]
        %v2467 = vld [vmem:[%s323 + $0x4030] sm:$0xff]
        %v2468 = vld [vmem:[%s323 + $0x4038] sm:$0xff]
        %v2469 = vld [vmem:[%s323 + $0x4040] sm:$0xff]
        %v2470 = vld [vmem:[%s323 + $0x4048] sm:$0xff]
        %v2471 = vld [vmem:[%s323 + $0x4050] sm:$0xff]
        %v2472 = vld [vmem:[%s323 + $0x4058] sm:$0xff]
        %v2473 = vld [vmem:[%s323 + $0x4060] sm:$0xff]
        %v2474 = vld [vmem:[%s323 + $0x4068] sm:$0xff]
        %v2475 = vld [vmem:[%s323 + $0x4070] sm:$0xff]
        %v2476 = vld [vmem:[%s323 + $0x4078] sm:$0xff]
        %v2477 = vld [vmem:[%s323 + $0x4080] sm:$0xff]
        %v2478 = vld [vmem:[%s323 + $0x4088] sm:$0xff]
        %v2479 = vld [vmem:[%s323 + $0x4090] sm:$0xff]
        %v2480 = vld [vmem:[%s323 + $0x4098] sm:$0xff]
        %v2481 = vld [vmem:[%s323 + $0x40a0] sm:$0xff]
        %v2482 = vld [vmem:[%s323 + $0x40a8] sm:$0xff]
        %v2483 = vld [vmem:[%s323 + $0x40b0] sm:$0xff]
        %v2484 = vld [vmem:[%s323 + $0x40b8] sm:$0xff]
        %v2485 = vld [vmem:[%s323 + $0x40c0] sm:$0xff]
        %v2486 = vld [vmem:[%s323 + $0x40c8] sm:$0xff]
        %v2487 = vld [vmem:[%s323 + $0x40d0] sm:$0xff]
        %v2488 = vld [vmem:[%s323 + $0x40d8] sm:$0xff]
        %v2489 = vld [vmem:[%s323 + $0x40e0] sm:$0xff]
        %v2490 = vld [vmem:[%s323 + $0x40e8] sm:$0xff]
        %v2491 = vld [vmem:[%s323 + $0x40f0] sm:$0xff]
        %v2492 = vld [vmem:[%s323 + $0x40f8] sm:$0xff]
        %v2493 = vld [vmem:[%s323 + $0x4100] sm:$0xff]
        %v2494 = vld [vmem:[%s323 + $0x4108] sm:$0xff]
        %v2495 = vld [vmem:[%s323 + $0x4110] sm:$0xff]
        %v2496 = vld [vmem:[%s323 + $0x4118] sm:$0xff]
        %v2497 = vld [vmem:[%s323 + $0x4120] sm:$0xff]
        %v2498 = vld [vmem:[%s323 + $0x4128] sm:$0xff]
        %v2499 = vld [vmem:[%s323 + $0x4130] sm:$0xff]
        %v2500 = vld [vmem:[%s323 + $0x4138] sm:$0xff]
        %v2501 = vld [vmem:[%s323 + $0x4140] sm:$0xff]
        %v2502 = vld [vmem:[%s323 + $0x4148] sm:$0xff]
        %v2503 = vld [vmem:[%s323 + $0x4150] sm:$0xff]
        %v2504 = vld [vmem:[%s323 + $0x4158] sm:$0xff]
        %v2505 = vld [vmem:[%s323 + $0x4160] sm:$0xff]
        %v2506 = vld [vmem:[%s323 + $0x4168] sm:$0xff]
        %v2507 = vld [vmem:[%s323 + $0x4170] sm:$0xff]
        %v2508 = vld [vmem:[%s323 + $0x4178] sm:$0xff]
        %v2509 = vld [vmem:[%s323 + $0x4180] sm:$0xff]
        %v2510 = vld [vmem:[%s323 + $0x4188] sm:$0xff]
        %v2511 = vld [vmem:[%s323 + $0x4190] sm:$0xff]
        %v2512 = vld [vmem:[%s323 + $0x4198] sm:$0xff]
        %v2513 = vld [vmem:[%s323 + $0x41a0] sm:$0xff]
        %v2514 = vld [vmem:[%s323 + $0x41a8] sm:$0xff]
        %v2515 = vld [vmem:[%s323 + $0x41b0] sm:$0xff]
        %v2516 = vld [vmem:[%s323 + $0x41b8] sm:$0xff]
        %v2517 = vld [vmem:[%s323 + $0x41c0] sm:$0xff]
        %v2518 = vld [vmem:[%s323 + $0x41c8] sm:$0xff]
        %v2519 = vld [vmem:[%s323 + $0x41d0] sm:$0xff]
        %v2520 = vld [vmem:[%s323 + $0x41d8] sm:$0xff]
        %v2521 = vld [vmem:[%s323 + $0x41e0] sm:$0xff]
        %v2522 = vld [vmem:[%s323 + $0x41e8] sm:$0xff]
        %v2523 = vld [vmem:[%s323 + $0x41f0] sm:$0xff]
        %v2524 = vld [vmem:[%s323 + $0x41f8] sm:$0xff]
        %v2525 = vld [vmem:[%s323 + $0x4200] sm:$0xff]
        %v2526 = vld [vmem:[%s323 + $0x4208] sm:$0xff]
        %v2527 = vld [vmem:[%s323 + $0x4210] sm:$0xff]
        %v2528 = vld [vmem:[%s323 + $0x4218] sm:$0xff]
        %v2529 = vld [vmem:[%s323 + $0x4220] sm:$0xff]
        %v2530 = vld [vmem:[%s323 + $0x4228] sm:$0xff]
        %v2531 = vld [vmem:[%s323 + $0x4230] sm:$0xff]
        %v2532 = vld [vmem:[%s323 + $0x4238] sm:$0xff]
        %v2533 = vld [vmem:[%s323 + $0x4240] sm:$0xff]
        %v2534 = vld [vmem:[%s323 + $0x4248] sm:$0xff]
        %v2535 = vld [vmem:[%s323 + $0x4250] sm:$0xff]
        %v2536 = vld [vmem:[%s323 + $0x4258] sm:$0xff]
        %v2537 = vld [vmem:[%s323 + $0x4260] sm:$0xff]
        %v2538 = vld [vmem:[%s323 + $0x4268] sm:$0xff]
        %v2539 = vld [vmem:[%s323 + $0x4270] sm:$0xff]
        %v2540 = vld [vmem:[%s323 + $0x4278] sm:$0xff]
        %v2541 = vld [vmem:[%s323 + $0x4280] sm:$0xff]
        %v2542 = vld [vmem:[%s323 + $0x4288] sm:$0xff]
        %v2543 = vld [vmem:[%s323 + $0x4290] sm:$0xff]
        %v2544 = vld [vmem:[%s323 + $0x4298] sm:$0xff]
        %v2545 = vld [vmem:[%s323 + $0x42a0] sm:$0xff]
        %v2546 = vld [vmem:[%s323 + $0x42a8] sm:$0xff]
        %v2547 = vld [vmem:[%s323 + $0x42b0] sm:$0xff]
        %v2548 = vld [vmem:[%s323 + $0x42b8] sm:$0xff]
        %v2549 = vld [vmem:[%s323 + $0x42c0] sm:$0xff]
        %v2550 = vld [vmem:[%s323 + $0x42c8] sm:$0xff]
        %v2551 = vld [vmem:[%s323 + $0x42d0] sm:$0xff]
        %v2552 = vld [vmem:[%s323 + $0x42d8] sm:$0xff]
        %v2553 = vld [vmem:[%s323 + $0x42e0] sm:$0xff]
        %v2554 = vld [vmem:[%s323 + $0x42e8] sm:$0xff]
        %v2555 = vld [vmem:[%s323 + $0x42f0] sm:$0xff]
        %v2556 = vld [vmem:[%s323 + $0x42f8] sm:$0xff]
        %v2557 = vld [vmem:[%s323 + $0x4300] sm:$0xff]
        %v2558 = vld [vmem:[%s323 + $0x4308] sm:$0xff]
        %v2559 = vld [vmem:[%s323 + $0x4310] sm:$0xff]
        %v2560 = vld [vmem:[%s323 + $0x4318] sm:$0xff]
        %v2561 = vld [vmem:[%s323 + $0x4320] sm:$0xff]
        %v2562 = vld [vmem:[%s323 + $0x4328] sm:$0xff]
        %v2563 = vld [vmem:[%s323 + $0x4330] sm:$0xff]
        %v2564 = vld [vmem:[%s323 + $0x4338] sm:$0xff]
        %v2565 = vld [vmem:[%s323 + $0x4340] sm:$0xff]
        %v2566 = vld [vmem:[%s323 + $0x4348] sm:$0xff]
        %v2567 = vld [vmem:[%s323 + $0x4350] sm:$0xff]
        %v2568 = vld [vmem:[%s323 + $0x4358] sm:$0xff]
        %v2569 = vld [vmem:[%s323 + $0x4360] sm:$0xff]
        %v2570 = vld [vmem:[%s323 + $0x4368] sm:$0xff]
        %v2571 = vld [vmem:[%s323 + $0x4370] sm:$0xff]
        %v2572 = vld [vmem:[%s323 + $0x4378] sm:$0xff]
        %v2573 = vld [vmem:[%s323 + $0x4380] sm:$0xff]
        %v2574 = vld [vmem:[%s323 + $0x4388] sm:$0xff]
        %v2575 = vld [vmem:[%s323 + $0x4390] sm:$0xff]
        %v2576 = vld [vmem:[%s323 + $0x4398] sm:$0xff]
        %v2577 = vld [vmem:[%s323 + $0x43a0] sm:$0xff]
        %v2578 = vld [vmem:[%s323 + $0x43a8] sm:$0xff]
        %v2579 = vld [vmem:[%s323 + $0x43b0] sm:$0xff]
        %v2580 = vld [vmem:[%s323 + $0x43b8] sm:$0xff]
        %v2581 = vld [vmem:[%s323 + $0x43c0] sm:$0xff]
        %v2582 = vld [vmem:[%s323 + $0x43c8] sm:$0xff]
        %v2583 = vld [vmem:[%s323 + $0x43d0] sm:$0xff]
        %v2584 = vld [vmem:[%s323 + $0x43d8] sm:$0xff]
        %v2585 = vld [vmem:[%s323 + $0x43e0] sm:$0xff]
        %v2586 = vld [vmem:[%s323 + $0x43e8] sm:$0xff]
        %v2587 = vld [vmem:[%s323 + $0x43f0] sm:$0xff]
        %v2588 = vld [vmem:[%s323 + $0x43f8] sm:$0xff]
        %v2589 = vld [vmem:[%s323 + $0x4400] sm:$0xff]
        %v2590 = vld [vmem:[%s323 + $0x4408] sm:$0xff]
        %v2591 = vld [vmem:[%s323 + $0x4410] sm:$0xff]
        %v2592 = vld [vmem:[%s323 + $0x4418] sm:$0xff]
        %v2593 = vld [vmem:[%s323 + $0x4420] sm:$0xff]
        %v2594 = vld [vmem:[%s323 + $0x4428] sm:$0xff]
        %v2595 = vld [vmem:[%s323 + $0x4430] sm:$0xff]
        %v2596 = vld [vmem:[%s323 + $0x4438] sm:$0xff]
        %v2597 = vld [vmem:[%s323 + $0x4440] sm:$0xff]
        %v2598 = vld [vmem:[%s323 + $0x4448] sm:$0xff]
        %v2599 = vld [vmem:[%s323 + $0x4450] sm:$0xff]
        %v2600 = vld [vmem:[%s323 + $0x4458] sm:$0xff]
        %v2601 = vld [vmem:[%s323 + $0x4460] sm:$0xff]
        %v2602 = vld [vmem:[%s323 + $0x4468] sm:$0xff]
        %v2603 = vld [vmem:[%s323 + $0x4470] sm:$0xff]
        %v2604 = vld [vmem:[%s323 + $0x4478] sm:$0xff]
        %v2605 = vld [vmem:[%s323 + $0x4480] sm:$0xff]
        %v2606 = vld [vmem:[%s323 + $0x4488] sm:$0xff]
        %v2607 = vld [vmem:[%s323 + $0x4490] sm:$0xff]
        %v2608 = vld [vmem:[%s323 + $0x4498] sm:$0xff]
        %v2609 = vld [vmem:[%s323 + $0x44a0] sm:$0xff]
        %v2610 = vld [vmem:[%s323 + $0x44a8] sm:$0xff]
        %v2611 = vld [vmem:[%s323 + $0x44b0] sm:$0xff]
        %v2612 = vld [vmem:[%s323 + $0x44b8] sm:$0xff]
        %v2613 = vld [vmem:[%s323 + $0x44c0] sm:$0xff]
        %v2614 = vld [vmem:[%s323 + $0x44c8] sm:$0xff]
        %v2615 = vld [vmem:[%s323 + $0x44d0] sm:$0xff]
        %v2616 = vld [vmem:[%s323 + $0x44d8] sm:$0xff]
        %v2617 = vld [vmem:[%s323 + $0x44e0] sm:$0xff]
        %v2618 = vld [vmem:[%s323 + $0x44e8] sm:$0xff]
        %v2619 = vld [vmem:[%s323 + $0x44f0] sm:$0xff]
        %v2620 = vld [vmem:[%s323 + $0x44f8] sm:$0xff]
        %v2621 = vld [vmem:[%s323 + $0x4500] sm:$0xff]
        %v2622 = vld [vmem:[%s323 + $0x4508] sm:$0xff]
        %v2623 = vld [vmem:[%s323 + $0x4510] sm:$0xff]
        %v2624 = vld [vmem:[%s323 + $0x4518] sm:$0xff]
        %v2625 = vld [vmem:[%s323 + $0x4520] sm:$0xff]
        %v2626 = vld [vmem:[%s323 + $0x4528] sm:$0xff]
        %v2627 = vld [vmem:[%s323 + $0x4530] sm:$0xff]
        %v2628 = vld [vmem:[%s323 + $0x4538] sm:$0xff]
        %v2629 = vld [vmem:[%s323 + $0x4540] sm:$0xff]
        %v2630 = vld [vmem:[%s323 + $0x4548] sm:$0xff]
        %v2631 = vld [vmem:[%s323 + $0x4550] sm:$0xff]
        %v2632 = vld [vmem:[%s323 + $0x4558] sm:$0xff]
        %v2633 = vld [vmem:[%s323 + $0x4560] sm:$0xff]
        %v2634 = vld [vmem:[%s323 + $0x4568] sm:$0xff]
        %v2635 = vld [vmem:[%s323 + $0x4570] sm:$0xff]
        %v2636 = vld [vmem:[%s323 + $0x4578] sm:$0xff]
        %v2637 = vld [vmem:[%s323 + $0x4580] sm:$0xff]
        %v2638 = vld [vmem:[%s323 + $0x4588] sm:$0xff]
        %v2639 = vld [vmem:[%s323 + $0x4590] sm:$0xff]
        %v2640 = vld [vmem:[%s323 + $0x4598] sm:$0xff]
        %v2641 = vld [vmem:[%s323 + $0x45a0] sm:$0xff]
        %v2642 = vld [vmem:[%s323 + $0x45a8] sm:$0xff]
        %v2643 = vld [vmem:[%s323 + $0x45b0] sm:$0xff]
        %v2644 = vld [vmem:[%s323 + $0x45b8] sm:$0xff]
        %v2645 = vld [vmem:[%s323 + $0x45c0] sm:$0xff]
        %v2646 = vld [vmem:[%s323 + $0x45c8] sm:$0xff]
        %v2647 = vld [vmem:[%s323 + $0x45d0] sm:$0xff]
        %v2648 = vld [vmem:[%s323 + $0x45d8] sm:$0xff]
        %v2649 = vld [vmem:[%s323 + $0x45e0] sm:$0xff]
        %v2650 = vld [vmem:[%s323 + $0x45e8] sm:$0xff]
        %v2651 = vld [vmem:[%s323 + $0x45f0] sm:$0xff]
        %v2652 = vld [vmem:[%s323 + $0x45f8] sm:$0xff]
        %v2653 = vld [vmem:[%s323 + $0x4600] sm:$0xff]
        %v2654 = vld [vmem:[%s323 + $0x4608] sm:$0xff]
        %v2655 = vld [vmem:[%s323 + $0x4610] sm:$0xff]
        %v2656 = vld [vmem:[%s323 + $0x4618] sm:$0xff]
        %v2657 = vld [vmem:[%s323 + $0x4620] sm:$0xff]
        %v2658 = vld [vmem:[%s323 + $0x4628] sm:$0xff]
        %v2659 = vld [vmem:[%s323 + $0x4630] sm:$0xff]
        %v2660 = vld [vmem:[%s323 + $0x4638] sm:$0xff]
        %v2661 = vld [vmem:[%s323 + $0x4640] sm:$0xff]
        %v2662 = vld [vmem:[%s323 + $0x4648] sm:$0xff]
        %v2663 = vld [vmem:[%s323 + $0x4650] sm:$0xff]
        %v2664 = vld [vmem:[%s323 + $0x4658] sm:$0xff]
        %v2665 = vld [vmem:[%s323 + $0x4660] sm:$0xff]
        %v2666 = vld [vmem:[%s323 + $0x4668] sm:$0xff]
        %v2667 = vld [vmem:[%s323 + $0x4670] sm:$0xff]
        %v2668 = vld [vmem:[%s323 + $0x4678] sm:$0xff]
        %v2669 = vld [vmem:[%s323 + $0x4680] sm:$0xff]
        %v2670 = vld [vmem:[%s323 + $0x4688] sm:$0xff]
        %v2671 = vld [vmem:[%s323 + $0x4690] sm:$0xff]
        %v2672 = vld [vmem:[%s323 + $0x4698] sm:$0xff]
        %v2673 = vld [vmem:[%s323 + $0x46a0] sm:$0xff]
        %v2674 = vld [vmem:[%s323 + $0x46a8] sm:$0xff]
        %v2675 = vld [vmem:[%s323 + $0x46b0] sm:$0xff]
        %v2676 = vld [vmem:[%s323 + $0x46b8] sm:$0xff]
        %v2677 = vld [vmem:[%s323 + $0x46c0] sm:$0xff]
        %v2678 = vld [vmem:[%s323 + $0x46c8] sm:$0xff]
        %v2679 = vld [vmem:[%s323 + $0x46d0] sm:$0xff]
        %v2680 = vld [vmem:[%s323 + $0x46d8] sm:$0xff]
        %v2681 = vld [vmem:[%s323 + $0x46e0] sm:$0xff]
        %v2682 = vld [vmem:[%s323 + $0x46e8] sm:$0xff]
        %v2683 = vld [vmem:[%s323 + $0x46f0] sm:$0xff]
        %v2684 = vld [vmem:[%s323 + $0x46f8] sm:$0xff]
        %v2685 = vld [vmem:[%s323 + $0x4700] sm:$0xff]
        %v2686 = vld [vmem:[%s323 + $0x4708] sm:$0xff]
        %v2687 = vld [vmem:[%s323 + $0x4710] sm:$0xff]
        %v2688 = vld [vmem:[%s323 + $0x4718] sm:$0xff]
        %v2689 = vld [vmem:[%s323 + $0x4720] sm:$0xff]
        %v2690 = vld [vmem:[%s323 + $0x4728] sm:$0xff]
        %v2691 = vld [vmem:[%s323 + $0x4730] sm:$0xff]
        %v2692 = vld [vmem:[%s323 + $0x4738] sm:$0xff]
        %v2693 = vld [vmem:[%s323 + $0x4740] sm:$0xff]
        %v2694 = vld [vmem:[%s323 + $0x4748] sm:$0xff]
        %v2695 = vld [vmem:[%s323 + $0x4750] sm:$0xff]
        %v2696 = vld [vmem:[%s323 + $0x4758] sm:$0xff]
        %v2697 = vld [vmem:[%s323 + $0x4760] sm:$0xff]
        %v2698 = vld [vmem:[%s323 + $0x4768] sm:$0xff]
        %v2699 = vld [vmem:[%s323 + $0x4770] sm:$0xff]
        %v2700 = vld [vmem:[%s323 + $0x4778] sm:$0xff]
        %v2701 = vld [vmem:[%s323 + $0x4780] sm:$0xff]
        %v2702 = vld [vmem:[%s323 + $0x4788] sm:$0xff]
        %v2703 = vld [vmem:[%s323 + $0x4790] sm:$0xff]
        %v2704 = vld [vmem:[%s323 + $0x4798] sm:$0xff]
        %v2705 = vld [vmem:[%s323 + $0x47a0] sm:$0xff]
        %v2706 = vld [vmem:[%s323 + $0x47a8] sm:$0xff]
        %v2707 = vld [vmem:[%s323 + $0x47b0] sm:$0xff]
        %v2708 = vld [vmem:[%s323 + $0x47b8] sm:$0xff]
        %v2709 = vld [vmem:[%s323 + $0x47c0] sm:$0xff]
        %v2710 = vld [vmem:[%s323 + $0x47c8] sm:$0xff]
        %v2711 = vld [vmem:[%s323 + $0x47d0] sm:$0xff]
        %v2712 = vld [vmem:[%s323 + $0x47d8] sm:$0xff]
        %v2713 = vld [vmem:[%s323 + $0x47e0] sm:$0xff]
        %v2714 = vld [vmem:[%s323 + $0x47e8] sm:$0xff]
        %v2715 = vld [vmem:[%s323 + $0x47f0] sm:$0xff]
        %v2716 = vld [vmem:[%s323 + $0x47f8] sm:$0xff]
        %2726 = vst [vmem:[#allocation1] ss:$4 sm:$0xff] %v403
        %s2727 = scalar_lea.vmem [#allocation1], 32
        %2728 = vst [vmem:[%s2727] ss:$4 sm:$0xff] %v404
        %v2729 = vld.sshfl [vmem:[#allocation1] sm:$0xff pattern:$0x73625140]
        %v2730 = vld.sshfl [vmem:[#allocation1 + $0x8] sm:$0xff pattern:$0x73625140]
        %v2731 = vld.sshfl [vmem:[#allocation1 + $0x10] sm:$0xff pattern:$0x73625140]
        %v2732 = vld.sshfl [vmem:[#allocation1 + $0x18] sm:$0xff pattern:$0x73625140]
        %v2733 = vld.sshfl [vmem:[#allocation1 + $0x20] sm:$0xff pattern:$0x73625140]
        %v2734 = vld.sshfl [vmem:[#allocation1 + $0x28] sm:$0xff pattern:$0x73625140]
        %v2735 = vld.sshfl [vmem:[#allocation1 + $0x30] sm:$0xff pattern:$0x73625140]
        %v2736 = vld.sshfl [vmem:[#allocation1 + $0x38] sm:$0xff pattern:$0x73625140]
        %2737 = vst [vmem:[#allocation1] ss:$4 sm:$0xff] %v405
        %2738 = vst [vmem:[%s2727] ss:$4 sm:$0xff] %v406
        %v2739 = vld.sshfl [vmem:[#allocation1] sm:$0xff pattern:$0x73625140]
        %v2740 = vld.sshfl [vmem:[#allocation1 + $0x8] sm:$0xff pattern:$0x73625140]
        %v2741 = vld.sshfl [vmem:[#allocation1 + $0x10] sm:$0xff pattern:$0x73625140]
        %v2742 = vld.sshfl [vmem:[#allocation1 + $0x18] sm:$0xff pattern:$0x73625140]
        %v2743 = vld.sshfl [vmem:[#allocation1 + $0x20] sm:$0xff pattern:$0x73625140]
        %v2744 = vld.sshfl [vmem:[#allocation1 + $0x28] sm:$0xff pattern:$0x73625140]
        %v2745 = vld.sshfl [vmem:[#allocation1 + $0x30] sm:$0xff pattern:$0x73625140]
        %v2746 = vld.sshfl [vmem:[#allocation1 + $0x38] sm:$0xff pattern:$0x73625140]
        %2747 = vst [vmem:[#allocation1] ss:$4 sm:$0xff] %v407
        %2748 = vst [vmem:[%s2727] ss:$4 sm:$0xff] %v408
        %v2749 = vld.sshfl [vmem:[#allocation1] sm:$0xff pattern:$0x73625140]
        %v2750 = vld.sshfl [vmem:[#allocation1 + $0x8] sm:$0xff pattern:$0x73625140]
        %v2751 = vld.sshfl [vmem:[#allocation1 + $0x10] sm:$0xff pattern:$0x73625140]
        %v2752 = vld.sshfl [vmem:[#allocation1 + $0x18] sm:$0xff pattern:$0x73625140]
        %v2753 = vld.sshfl [vmem:[#allocation1 + $0x20] sm:$0xff pattern:$0x73625140]
        %v2754 = vld.sshfl [vmem:[#allocation1 + $0x28] sm:$0xff pattern:$0x73625140]
        %v2755 = vld.sshfl [vmem:[#allocation1 + $0x30] sm:$0xff pattern:$0x73625140]
        %v2756 = vld.sshfl [vmem:[#allocation1 + $0x38] sm:$0xff pattern:$0x73625140]
        %2757 = vst [vmem:[#allocation1] ss:$4 sm:$0xff] %v409
        %2758 = vst [vmem:[%s2727] ss:$4 sm:$0xff] %v410
        %v2759 = vld.sshfl [vmem:[#allocation1] sm:$0xff pattern:$0x73625140]
        %v2760 = vld.sshfl [vmem:[#allocation1 + $0x8] sm:$0xff pattern:$0x73625140]
        %v2761 = vld.sshfl [vmem:[#allocation1 + $0x10] sm:$0xff pattern:$0x73625140]
        %v2762 = vld.sshfl [vmem:[#allocation1 + $0x18] sm:$0xff pattern:$0x73625140]
        %v2763 = vld.sshfl [vmem:[#allocation1 + $0x20] sm:$0xff pattern:$0x73625140]
        %v2764 = vld.sshfl [vmem:[#allocation1 + $0x28] sm:$0xff pattern:$0x73625140]
        %v2765 = vld.sshfl [vmem:[#allocation1 + $0x30] sm:$0xff pattern:$0x73625140]
        %v2766 = vld.sshfl [vmem:[#allocation1 + $0x38] sm:$0xff pattern:$0x73625140]
        %2767 = vst [vmem:[#allocation1] ss:$4 sm:$0xff] %v411
        %v2768 = vld.sshfl [vmem:[#allocation1] sm:$0xff pattern:$0x73625140]
        %v2769 = vld.sshfl [vmem:[#allocation1 + $0x8] sm:$0xff pattern:$0x73625140]
        %v2770 = vld.sshfl [vmem:[#allocation1 + $0x10] sm:$0xff pattern:$0x73625140]
        %v2771 = vld.sshfl [vmem:[#allocation1 + $0x18] sm:$0xff pattern:$0x73625140]
        %2808 = vmatpush.msra.mxu0 %v473
        %2809 = vmatpush.msra.mxu0 %v469
        %2810 = vmatpush.msra.mxu0 %v465
        %2811 = vmatpush.msra.mxu0 %v461
        %2812 = vmatpush.msra.mxu0 %v457
        %2813 = vmatpush.msra.mxu0 %v453
        %2814 = vmatpush.msra.mxu0 %v449
        %2815 = vmatpush.msra.mxu0 %v445
        %2816 = vmatpush.msra.mxu0 %v441
        %2817 = vmatpush.msra.mxu0 %v437
        %2818 = vmatpush.msra.mxu0 %v433
        %2819 = vmatpush.msra.mxu0 %v429
        %2820 = vmatpush.msra.mxu0 %v425
        %2821 = vmatpush.msra.mxu0 %v421
        %2822 = vmatpush.msra.mxu0 %v417
        %2823 = vmatpush.msra.mxu0 %v413
        %2824 = vmatmul.f32.gmra.mxu0 %v2729
        %v2825 = vpop.f32.mrf.mxu0
        %v2826 = vadd.f32 0.0, %v2825
        %2827 = vdwg.mxu0
        %2828 = vmatpush.msra.mxu0 %v537
        %2829 = vmatpush.msra.mxu0 %v533
        %2830 = vmatpush.msra.mxu0 %v529
        %2831 = vmatpush.msra.mxu0 %v525
        %2832 = vmatpush.msra.mxu0 %v521
        %2833 = vmatpush.msra.mxu0 %v517
        %2834 = vmatpush.msra.mxu0 %v513
        %2835 = vmatpush.msra.mxu0 %v509
        %2836 = vmatpush.msra.mxu0 %v505
        %2837 = vmatpush.msra.mxu0 %v501
        %2838 = vmatpush.msra.mxu0 %v497
        %2839 = vmatpush.msra.mxu0 %v493
        %2840 = vmatpush.msra.mxu0 %v489
        %2841 = vmatpush.msra.mxu0 %v485
        %2842 = vmatpush.msra.mxu0 %v481
        %2843 = vmatpush.msra.mxu0 %v477
        %2844 = vmatmul.f32.gmra.mxu0 %v2730
        %v2845 = vpop.f32.mrf.mxu0
        %v2846 = vadd.f32 %v2826, %v2845
        %2847 = vdwg.mxu0
        %2848 = vmatpush.msra.mxu0 %v601
        %2849 = vmatpush.msra.mxu0 %v597
        %2850 = vmatpush.msra.mxu0 %v593
        %2851 = vmatpush.msra.mxu0 %v589
        %2852 = vmatpush.msra.mxu0 %v585
        %2853 = vmatpush.msra.mxu0 %v581
        %2854 = vmatpush.msra.mxu0 %v577
        %2855 = vmatpush.msra.mxu0 %v573
        %2856 = vmatpush.msra.mxu0 %v569
        %2857 = vmatpush.msra.mxu0 %v565
        %2858 = vmatpush.msra.mxu0 %v561
        %2859 = vmatpush.msra.mxu0 %v557
        %2860 = vmatpush.msra.mxu0 %v553
        %2861 = vmatpush.msra.mxu0 %v549
        %2862 = vmatpush.msra.mxu0 %v545
        %2863 = vmatpush.msra.mxu0 %v541
        %2864 = vmatmul.f32.gmra.mxu0 %v2731
        %v2865 = vpop.f32.mrf.mxu0
        %v2866 = vadd.f32 %v2846, %v2865
        %2867 = vdwg.mxu0
        %2868 = vmatpush.msra.mxu0 %v665
        %2869 = vmatpush.msra.mxu0 %v661
        %2870 = vmatpush.msra.mxu0 %v657
        %2871 = vmatpush.msra.mxu0 %v653
        %2872 = vmatpush.msra.mxu0 %v649
        %2873 = vmatpush.msra.mxu0 %v645
        %2874 = vmatpush.msra.mxu0 %v641
        %2875 = vmatpush.msra.mxu0 %v637
        %2876 = vmatpush.msra.mxu0 %v633
        %2877 = vmatpush.msra.mxu0 %v629
        %2878 = vmatpush.msra.mxu0 %v625
        %2879 = vmatpush.msra.mxu0 %v621
        %2880 = vmatpush.msra.mxu0 %v617
        %2881 = vmatpush.msra.mxu0 %v613
        %2882 = vmatpush.msra.mxu0 %v609
        %2883 = vmatpush.msra.mxu0 %v605
        %2884 = vmatmul.f32.gmra.mxu0 %v2732
        %v2885 = vpop.f32.mrf.mxu0
        %v2886 = vadd.f32 %v2866, %v2885
        %2887 = vdwg.mxu0
        %2888 = vmatpush.msra.mxu0 %v729
        %2889 = vmatpush.msra.mxu0 %v725
        %2890 = vmatpush.msra.mxu0 %v721
        %2891 = vmatpush.msra.mxu0 %v717
        %2892 = vmatpush.msra.mxu0 %v713
        %2893 = vmatpush.msra.mxu0 %v709
        %2894 = vmatpush.msra.mxu0 %v705
        %2895 = vmatpush.msra.mxu0 %v701
        %2896 = vmatpush.msra.mxu0 %v697
        %2897 = vmatpush.msra.mxu0 %v693
        %2898 = vmatpush.msra.mxu0 %v689
        %2899 = vmatpush.msra.mxu0 %v685
        %2900 = vmatpush.msra.mxu0 %v681
        %2901 = vmatpush.msra.mxu0 %v677
        %2902 = vmatpush.msra.mxu0 %v673
        %2903 = vmatpush.msra.mxu0 %v669
        %2904 = vmatmul.f32.gmra.mxu0 %v2733
        %v2905 = vpop.f32.mrf.mxu0
        %v2906 = vadd.f32 %v2886, %v2905
        %2907 = vdwg.mxu0
        %2908 = vmatpush.msra.mxu0 %v793
        %2909 = vmatpush.msra.mxu0 %v789
        %2910 = vmatpush.msra.mxu0 %v785
        %2911 = vmatpush.msra.mxu0 %v781
        %2912 = vmatpush.msra.mxu0 %v777
        %2913 = vmatpush.msra.mxu0 %v773
        %2914 = vmatpush.msra.mxu0 %v769
        %2915 = vmatpush.msra.mxu0 %v765
        %2916 = vmatpush.msra.mxu0 %v761
        %2917 = vmatpush.msra.mxu0 %v757
        %2918 = vmatpush.msra.mxu0 %v753
        %2919 = vmatpush.msra.mxu0 %v749
        %2920 = vmatpush.msra.mxu0 %v745
        %2921 = vmatpush.msra.mxu0 %v741
        %2922 = vmatpush.msra.mxu0 %v737
        %2923 = vmatpush.msra.mxu0 %v733
        %2924 = vmatmul.f32.gmra.mxu0 %v2734
        %v2925 = vpop.f32.mrf.mxu0
        %v2926 = vadd.f32 %v2906, %v2925
        %2927 = vdwg.mxu0
        %2928 = vmatpush.msra.mxu0 %v857
        %2929 = vmatpush.msra.mxu0 %v853
        %2930 = vmatpush.msra.mxu0 %v849
        %2931 = vmatpush.msra.mxu0 %v845
        %2932 = vmatpush.msra.mxu0 %v841
        %2933 = vmatpush.msra.mxu0 %v837
        %2934 = vmatpush.msra.mxu0 %v833
        %2935 = vmatpush.msra.mxu0 %v829
        %2936 = vmatpush.msra.mxu0 %v825
        %2937 = vmatpush.msra.mxu0 %v821
        %2938 = vmatpush.msra.mxu0 %v817
        %2939 = vmatpush.msra.mxu0 %v813
        %2940 = vmatpush.msra.mxu0 %v809
        %2941 = vmatpush.msra.mxu0 %v805
        %2942 = vmatpush.msra.mxu0 %v801
        %2943 = vmatpush.msra.mxu0 %v797
        %2944 = vmatmul.f32.gmra.mxu0 %v2735
        %v2945 = vpop.f32.mrf.mxu0
        %v2946 = vadd.f32 %v2926, %v2945
        %2947 = vdwg.mxu0
        %2948 = vmatpush.msra.mxu0 %v921
        %2949 = vmatpush.msra.mxu0 %v917
        %2950 = vmatpush.msra.mxu0 %v913
        %2951 = vmatpush.msra.mxu0 %v909
        %2952 = vmatpush.msra.mxu0 %v905
        %2953 = vmatpush.msra.mxu0 %v901
        %2954 = vmatpush.msra.mxu0 %v897
        %2955 = vmatpush.msra.mxu0 %v893
        %2956 = vmatpush.msra.mxu0 %v889
        %2957 = vmatpush.msra.mxu0 %v885
        %2958 = vmatpush.msra.mxu0 %v881
        %2959 = vmatpush.msra.mxu0 %v877
        %2960 = vmatpush.msra.mxu0 %v873
        %2961 = vmatpush.msra.mxu0 %v869
        %2962 = vmatpush.msra.mxu0 %v865
        %2963 = vmatpush.msra.mxu0 %v861
        %2964 = vmatmul.f32.gmra.mxu0 %v2736
        %v2965 = vpop.f32.mrf.mxu0
        %v2966 = vadd.f32 %v2946, %v2965
        %2967 = vdwg.mxu0
        %2968 = vmatpush.msra.mxu0 %v985
        %2969 = vmatpush.msra.mxu0 %v981
        %2970 = vmatpush.msra.mxu0 %v977
        %2971 = vmatpush.msra.mxu0 %v973
        %2972 = vmatpush.msra.mxu0 %v969
        %2973 = vmatpush.msra.mxu0 %v965
        %2974 = vmatpush.msra.mxu0 %v961
        %2975 = vmatpush.msra.mxu0 %v957
        %2976 = vmatpush.msra.mxu0 %v953
        %2977 = vmatpush.msra.mxu0 %v949
        %2978 = vmatpush.msra.mxu0 %v945
        %2979 = vmatpush.msra.mxu0 %v941
        %2980 = vmatpush.msra.mxu0 %v937
        %2981 = vmatpush.msra.mxu0 %v933
        %2982 = vmatpush.msra.mxu0 %v929
        %2983 = vmatpush.msra.mxu0 %v925
        %2984 = vmatmul.f32.gmra.mxu0 %v2739
        %v2985 = vpop.f32.mrf.mxu0
        %v2986 = vadd.f32 %v2966, %v2985
        %2987 = vdwg.mxu0
        %2988 = vmatpush.msra.mxu0 %v1049
        %2989 = vmatpush.msra.mxu0 %v1045
        %2990 = vmatpush.msra.mxu0 %v1041
        %2991 = vmatpush.msra.mxu0 %v1037
        %2992 = vmatpush.msra.mxu0 %v1033
        %2993 = vmatpush.msra.mxu0 %v1029
        %2994 = vmatpush.msra.mxu0 %v1025
        %2995 = vmatpush.msra.mxu0 %v1021
        %2996 = vmatpush.msra.mxu0 %v1017
        %2997 = vmatpush.msra.mxu0 %v1013
        %2998 = vmatpush.msra.mxu0 %v1009
        %2999 = vmatpush.msra.mxu0 %v1005
        %3000 = vmatpush.msra.mxu0 %v1001
        %3001 = vmatpush.msra.mxu0 %v997
        %3002 = vmatpush.msra.mxu0 %v993
        %3003 = vmatpush.msra.mxu0 %v989
        %3004 = vmatmul.f32.gmra.mxu0 %v2740
        %v3005 = vpop.f32.mrf.mxu0
        %v3006 = vadd.f32 %v2986, %v3005
        %3007 = vdwg.mxu0
        %3008 = vmatpush.msra.mxu0 %v1113
        %3009 = vmatpush.msra.mxu0 %v1109
        %3010 = vmatpush.msra.mxu0 %v1105
        %3011 = vmatpush.msra.mxu0 %v1101
        %3012 = vmatpush.msra.mxu0 %v1097
        %3013 = vmatpush.msra.mxu0 %v1093
        %3014 = vmatpush.msra.mxu0 %v1089
        %3015 = vmatpush.msra.mxu0 %v1085
        %3016 = vmatpush.msra.mxu0 %v1081
        %3017 = vmatpush.msra.mxu0 %v1077
        %3018 = vmatpush.msra.mxu0 %v1073
        %3019 = vmatpush.msra.mxu0 %v1069
        %3020 = vmatpush.msra.mxu0 %v1065
        %3021 = vmatpush.msra.mxu0 %v1061
        %3022 = vmatpush.msra.mxu0 %v1057
        %3023 = vmatpush.msra.mxu0 %v1053
        %3024 = vmatmul.f32.gmra.mxu0 %v2741
        %v3025 = vpop.f32.mrf.mxu0
        %v3026 = vadd.f32 %v3006, %v3025
        %3027 = vdwg.mxu0
        %3028 = vmatpush.msra.mxu0 %v1177
        %3029 = vmatpush.msra.mxu0 %v1173
        %3030 = vmatpush.msra.mxu0 %v1169
        %3031 = vmatpush.msra.mxu0 %v1165
        %3032 = vmatpush.msra.mxu0 %v1161
        %3033 = vmatpush.msra.mxu0 %v1157
        %3034 = vmatpush.msra.mxu0 %v1153
        %3035 = vmatpush.msra.mxu0 %v1149
        %3036 = vmatpush.msra.mxu0 %v1145
        %3037 = vmatpush.msra.mxu0 %v1141
        %3038 = vmatpush.msra.mxu0 %v1137
        %3039 = vmatpush.msra.mxu0 %v1133
        %3040 = vmatpush.msra.mxu0 %v1129
        %3041 = vmatpush.msra.mxu0 %v1125
        %3042 = vmatpush.msra.mxu0 %v1121
        %3043 = vmatpush.msra.mxu0 %v1117
        %3044 = vmatmul.f32.gmra.mxu0 %v2742
        %v3045 = vpop.f32.mrf.mxu0
        %v3046 = vadd.f32 %v3026, %v3045
        %3047 = vdwg.mxu0
        %3048 = vmatpush.msra.mxu0 %v1241
        %3049 = vmatpush.msra.mxu0 %v1237
        %3050 = vmatpush.msra.mxu0 %v1233
        %3051 = vmatpush.msra.mxu0 %v1229
        %3052 = vmatpush.msra.mxu0 %v1225
        %3053 = vmatpush.msra.mxu0 %v1221
        %3054 = vmatpush.msra.mxu0 %v1217
        %3055 = vmatpush.msra.mxu0 %v1213
        %3056 = vmatpush.msra.mxu0 %v1209
        %3057 = vmatpush.msra.mxu0 %v1205
        %3058 = vmatpush.msra.mxu0 %v1201
        %3059 = vmatpush.msra.mxu0 %v1197
        %3060 = vmatpush.msra.mxu0 %v1193
        %3061 = vmatpush.msra.mxu0 %v1189
        %3062 = vmatpush.msra.mxu0 %v1185
        %3063 = vmatpush.msra.mxu0 %v1181
        %3064 = vmatmul.f32.gmra.mxu0 %v2743
        %v3065 = vpop.f32.mrf.mxu0
        %v3066 = vadd.f32 %v3046, %v3065
        %3067 = vdwg.mxu0
        %3068 = vmatpush.msra.mxu0 %v1305
        %3069 = vmatpush.msra.mxu0 %v1301
        %3070 = vmatpush.msra.mxu0 %v1297
        %3071 = vmatpush.msra.mxu0 %v1293
        %3072 = vmatpush.msra.mxu0 %v1289
        %3073 = vmatpush.msra.mxu0 %v1285
        %3074 = vmatpush.msra.mxu0 %v1281
        %3075 = vmatpush.msra.mxu0 %v1277
        %3076 = vmatpush.msra.mxu0 %v1273
        %3077 = vmatpush.msra.mxu0 %v1269
        %3078 = vmatpush.msra.mxu0 %v1265
        %3079 = vmatpush.msra.mxu0 %v1261
        %3080 = vmatpush.msra.mxu0 %v1257
        %3081 = vmatpush.msra.mxu0 %v1253
        %3082 = vmatpush.msra.mxu0 %v1249
        %3083 = vmatpush.msra.mxu0 %v1245
        %3084 = vmatmul.f32.gmra.mxu0 %v2744
        %v3085 = vpop.f32.mrf.mxu0
        %v3086 = vadd.f32 %v3066, %v3085
        %3087 = vdwg.mxu0
        %3088 = vmatpush.msra.mxu0 %v1369
        %3089 = vmatpush.msra.mxu0 %v1365
        %3090 = vmatpush.msra.mxu0 %v1361
        %3091 = vmatpush.msra.mxu0 %v1357
        %3092 = vmatpush.msra.mxu0 %v1353
        %3093 = vmatpush.msra.mxu0 %v1349
        %3094 = vmatpush.msra.mxu0 %v1345
        %3095 = vmatpush.msra.mxu0 %v1341
        %3096 = vmatpush.msra.mxu0 %v1337
        %3097 = vmatpush.msra.mxu0 %v1333
        %3098 = vmatpush.msra.mxu0 %v1329
        %3099 = vmatpush.msra.mxu0 %v1325
        %3100 = vmatpush.msra.mxu0 %v1321
        %3101 = vmatpush.msra.mxu0 %v1317
        %3102 = vmatpush.msra.mxu0 %v1313
        %3103 = vmatpush.msra.mxu0 %v1309
        %3104 = vmatmul.f32.gmra.mxu0 %v2745
        %v3105 = vpop.f32.mrf.mxu0
        %v3106 = vadd.f32 %v3086, %v3105
        %3107 = vdwg.mxu0
        %3108 = vmatpush.msra.mxu0 %v1433
        %3109 = vmatpush.msra.mxu0 %v1429
        %3110 = vmatpush.msra.mxu0 %v1425
        %3111 = vmatpush.msra.mxu0 %v1421
        %3112 = vmatpush.msra.mxu0 %v1417
        %3113 = vmatpush.msra.mxu0 %v1413
        %3114 = vmatpush.msra.mxu0 %v1409
        %3115 = vmatpush.msra.mxu0 %v1405
        %3116 = vmatpush.msra.mxu0 %v1401
        %3117 = vmatpush.msra.mxu0 %v1397
        %3118 = vmatpush.msra.mxu0 %v1393
        %3119 = vmatpush.msra.mxu0 %v1389
        %3120 = vmatpush.msra.mxu0 %v1385
        %3121 = vmatpush.msra.mxu0 %v1381
        %3122 = vmatpush.msra.mxu0 %v1377
        %3123 = vmatpush.msra.mxu0 %v1373
        %3124 = vmatmul.f32.gmra.mxu0 %v2746
        %v3125 = vpop.f32.mrf.mxu0
        %v3126 = vadd.f32 %v3106, %v3125
        %3127 = vdwg.mxu0
        %3128 = vmatpush.msra.mxu0 %v1497
        %3129 = vmatpush.msra.mxu0 %v1493
        %3130 = vmatpush.msra.mxu0 %v1489
        %3131 = vmatpush.msra.mxu0 %v1485
        %3132 = vmatpush.msra.mxu0 %v1481
        %3133 = vmatpush.msra.mxu0 %v1477
        %3134 = vmatpush.msra.mxu0 %v1473
        %3135 = vmatpush.msra.mxu0 %v1469
        %3136 = vmatpush.msra.mxu0 %v1465
        %3137 = vmatpush.msra.mxu0 %v1461
        %3138 = vmatpush.msra.mxu0 %v1457
        %3139 = vmatpush.msra.mxu0 %v1453
        %3140 = vmatpush.msra.mxu0 %v1449
        %3141 = vmatpush.msra.mxu0 %v1445
        %3142 = vmatpush.msra.mxu0 %v1441
        %3143 = vmatpush.msra.mxu0 %v1437
        %3144 = vmatmul.f32.gmra.mxu0 %v2749
        %v3145 = vpop.f32.mrf.mxu0
        %v3146 = vadd.f32 %v3126, %v3145
        %3147 = vdwg.mxu0
        %3148 = vmatpush.msra.mxu0 %v1561
        %3149 = vmatpush.msra.mxu0 %v1557
        %3150 = vmatpush.msra.mxu0 %v1553
        %3151 = vmatpush.msra.mxu0 %v1549
        %3152 = vmatpush.msra.mxu0 %v1545
        %3153 = vmatpush.msra.mxu0 %v1541
        %3154 = vmatpush.msra.mxu0 %v1537
        %3155 = vmatpush.msra.mxu0 %v1533
        %3156 = vmatpush.msra.mxu0 %v1529
        %3157 = vmatpush.msra.mxu0 %v1525
        %3158 = vmatpush.msra.mxu0 %v1521
        %3159 = vmatpush.msra.mxu0 %v1517
        %3160 = vmatpush.msra.mxu0 %v1513
        %3161 = vmatpush.msra.mxu0 %v1509
        %3162 = vmatpush.msra.mxu0 %v1505
        %3163 = vmatpush.msra.mxu0 %v1501
        %3164 = vmatmul.f32.gmra.mxu0 %v2750
        %v3165 = vpop.f32.mrf.mxu0
        %v3166 = vadd.f32 %v3146, %v3165
        %3167 = vdwg.mxu0
        %3168 = vmatpush.msra.mxu0 %v1625
        %3169 = vmatpush.msra.mxu0 %v1621
        %3170 = vmatpush.msra.mxu0 %v1617
        %3171 = vmatpush.msra.mxu0 %v1613
        %3172 = vmatpush.msra.mxu0 %v1609
        %3173 = vmatpush.msra.mxu0 %v1605
        %3174 = vmatpush.msra.mxu0 %v1601
        %3175 = vmatpush.msra.mxu0 %v1597
        %3176 = vmatpush.msra.mxu0 %v1593
        %3177 = vmatpush.msra.mxu0 %v1589
        %3178 = vmatpush.msra.mxu0 %v1585
        %3179 = vmatpush.msra.mxu0 %v1581
        %3180 = vmatpush.msra.mxu0 %v1577
        %3181 = vmatpush.msra.mxu0 %v1573
        %3182 = vmatpush.msra.mxu0 %v1569
        %3183 = vmatpush.msra.mxu0 %v1565
        %3184 = vmatmul.f32.gmra.mxu0 %v2751
        %v3185 = vpop.f32.mrf.mxu0
        %v3186 = vadd.f32 %v3166, %v3185
        %3187 = vdwg.mxu0
        %3188 = vmatpush.msra.mxu0 %v1689
        %3189 = vmatpush.msra.mxu0 %v1685
        %3190 = vmatpush.msra.mxu0 %v1681
        %3191 = vmatpush.msra.mxu0 %v1677
        %3192 = vmatpush.msra.mxu0 %v1673
        %3193 = vmatpush.msra.mxu0 %v1669
        %3194 = vmatpush.msra.mxu0 %v1665
        %3195 = vmatpush.msra.mxu0 %v1661
        %3196 = vmatpush.msra.mxu0 %v1657
        %3197 = vmatpush.msra.mxu0 %v1653
        %3198 = vmatpush.msra.mxu0 %v1649
        %3199 = vmatpush.msra.mxu0 %v1645
        %3200 = vmatpush.msra.mxu0 %v1641
        %3201 = vmatpush.msra.mxu0 %v1637
        %3202 = vmatpush.msra.mxu0 %v1633
        %3203 = vmatpush.msra.mxu0 %v1629
        %3204 = vmatmul.f32.gmra.mxu0 %v2752
        %v3205 = vpop.f32.mrf.mxu0
        %v3206 = vadd.f32 %v3186, %v3205
        %3207 = vdwg.mxu0
        %3208 = vmatpush.msra.mxu0 %v1753
        %3209 = vmatpush.msra.mxu0 %v1749
        %3210 = vmatpush.msra.mxu0 %v1745
        %3211 = vmatpush.msra.mxu0 %v1741
        %3212 = vmatpush.msra.mxu0 %v1737
        %3213 = vmatpush.msra.mxu0 %v1733
        %3214 = vmatpush.msra.mxu0 %v1729
        %3215 = vmatpush.msra.mxu0 %v1725
        %3216 = vmatpush.msra.mxu0 %v1721
        %3217 = vmatpush.msra.mxu0 %v1717
        %3218 = vmatpush.msra.mxu0 %v1713
        %3219 = vmatpush.msra.mxu0 %v1709
        %3220 = vmatpush.msra.mxu0 %v1705
        %3221 = vmatpush.msra.mxu0 %v1701
        %3222 = vmatpush.msra.mxu0 %v1697
        %3223 = vmatpush.msra.mxu0 %v1693
        %3224 = vmatmul.f32.gmra.mxu0 %v2753
        %v3225 = vpop.f32.mrf.mxu0
        %v3226 = vadd.f32 %v3206, %v3225
        %3227 = vdwg.mxu0
        %3228 = vmatpush.msra.mxu0 %v1817
        %3229 = vmatpush.msra.mxu0 %v1813
        %3230 = vmatpush.msra.mxu0 %v1809
        %3231 = vmatpush.msra.mxu0 %v1805
        %3232 = vmatpush.msra.mxu0 %v1801
        %3233 = vmatpush.msra.mxu0 %v1797
        %3234 = vmatpush.msra.mxu0 %v1793
        %3235 = vmatpush.msra.mxu0 %v1789
        %3236 = vmatpush.msra.mxu0 %v1785
        %3237 = vmatpush.msra.mxu0 %v1781
        %3238 = vmatpush.msra.mxu0 %v1777
        %3239 = vmatpush.msra.mxu0 %v1773
        %3240 = vmatpush.msra.mxu0 %v1769
        %3241 = vmatpush.msra.mxu0 %v1765
        %3242 = vmatpush.msra.mxu0 %v1761
        %3243 = vmatpush.msra.mxu0 %v1757
        %3244 = vmatmul.f32.gmra.mxu0 %v2754
        %v3245 = vpop.f32.mrf.mxu0
        %v3246 = vadd.f32 %v3226, %v3245
        %3247 = vdwg.mxu0
        %3248 = vmatpush.msra.mxu0 %v1881
        %3249 = vmatpush.msra.mxu0 %v1877
        %3250 = vmatpush.msra.mxu0 %v1873
        %3251 = vmatpush.msra.mxu0 %v1869
        %3252 = vmatpush.msra.mxu0 %v1865
        %3253 = vmatpush.msra.mxu0 %v1861
        %3254 = vmatpush.msra.mxu0 %v1857
        %3255 = vmatpush.msra.mxu0 %v1853
        %3256 = vmatpush.msra.mxu0 %v1849
        %3257 = vmatpush.msra.mxu0 %v1845
        %3258 = vmatpush.msra.mxu0 %v1841
        %3259 = vmatpush.msra.mxu0 %v1837
        %3260 = vmatpush.msra.mxu0 %v1833
        %3261 = vmatpush.msra.mxu0 %v1829
        %3262 = vmatpush.msra.mxu0 %v1825
        %3263 = vmatpush.msra.mxu0 %v1821
        %3264 = vmatmul.f32.gmra.mxu0 %v2755
        %v3265 = vpop.f32.mrf.mxu0
        %v3266 = vadd.f32 %v3246, %v3265
        %3267 = vdwg.mxu0
        %3268 = vmatpush.msra.mxu0 %v1945
        %3269 = vmatpush.msra.mxu0 %v1941
        %3270 = vmatpush.msra.mxu0 %v1937
        %3271 = vmatpush.msra.mxu0 %v1933
        %3272 = vmatpush.msra.mxu0 %v1929
        %3273 = vmatpush.msra.mxu0 %v1925
        %3274 = vmatpush.msra.mxu0 %v1921
        %3275 = vmatpush.msra.mxu0 %v1917
        %3276 = vmatpush.msra.mxu0 %v1913
        %3277 = vmatpush.msra.mxu0 %v1909
        %3278 = vmatpush.msra.mxu0 %v1905
        %3279 = vmatpush.msra.mxu0 %v1901
        %3280 = vmatpush.msra.mxu0 %v1897
        %3281 = vmatpush.msra.mxu0 %v1893
        %3282 = vmatpush.msra.mxu0 %v1889
        %3283 = vmatpush.msra.mxu0 %v1885
        %3284 = vmatmul.f32.gmra.mxu0 %v2756
        %v3285 = vpop.f32.mrf.mxu0
        %v3286 = vadd.f32 %v3266, %v3285
        %3287 = vdwg.mxu0
        %3288 = vmatpush.msra.mxu0 %v2009
        %3289 = vmatpush.msra.mxu0 %v2005
        %3290 = vmatpush.msra.mxu0 %v2001
        %3291 = vmatpush.msra.mxu0 %v1997
        %3292 = vmatpush.msra.mxu0 %v1993
        %3293 = vmatpush.msra.mxu0 %v1989
        %3294 = vmatpush.msra.mxu0 %v1985
        %3295 = vmatpush.msra.mxu0 %v1981
        %3296 = vmatpush.msra.mxu0 %v1977
        %3297 = vmatpush.msra.mxu0 %v1973
        %3298 = vmatpush.msra.mxu0 %v1969
        %3299 = vmatpush.msra.mxu0 %v1965
        %3300 = vmatpush.msra.mxu0 %v1961
        %3301 = vmatpush.msra.mxu0 %v1957
        %3302 = vmatpush.msra.mxu0 %v1953
        %3303 = vmatpush.msra.mxu0 %v1949
        %3304 = vmatmul.f32.gmra.mxu0 %v2759
        %v3305 = vpop.f32.mrf.mxu0
        %v3306 = vadd.f32 %v3286, %v3305
        %3307 = vdwg.mxu0
        %3308 = vmatpush.msra.mxu0 %v2073
        %3309 = vmatpush.msra.mxu0 %v2069
        %3310 = vmatpush.msra.mxu0 %v2065
        %3311 = vmatpush.msra.mxu0 %v2061
        %3312 = vmatpush.msra.mxu0 %v2057
        %3313 = vmatpush.msra.mxu0 %v2053
        %3314 = vmatpush.msra.mxu0 %v2049
        %3315 = vmatpush.msra.mxu0 %v2045
        %3316 = vmatpush.msra.mxu0 %v2041
        %3317 = vmatpush.msra.mxu0 %v2037
        %3318 = vmatpush.msra.mxu0 %v2033
        %3319 = vmatpush.msra.mxu0 %v2029
        %3320 = vmatpush.msra.mxu0 %v2025
        %3321 = vmatpush.msra.mxu0 %v2021
        %3322 = vmatpush.msra.mxu0 %v2017
        %3323 = vmatpush.msra.mxu0 %v2013
        %3324 = vmatmul.f32.gmra.mxu0 %v2760
        %v3325 = vpop.f32.mrf.mxu0
        %v3326 = vadd.f32 %v3306, %v3325
        %3327 = vdwg.mxu0
        %3328 = vmatpush.msra.mxu0 %v2137
        %3329 = vmatpush.msra.mxu0 %v2133
        %3330 = vmatpush.msra.mxu0 %v2129
        %3331 = vmatpush.msra.mxu0 %v2125
        %3332 = vmatpush.msra.mxu0 %v2121
        %3333 = vmatpush.msra.mxu0 %v2117
        %3334 = vmatpush.msra.mxu0 %v2113
        %3335 = vmatpush.msra.mxu0 %v2109
        %3336 = vmatpush.msra.mxu0 %v2105
        %3337 = vmatpush.msra.mxu0 %v2101
        %3338 = vmatpush.msra.mxu0 %v2097
        %3339 = vmatpush.msra.mxu0 %v2093
        %3340 = vmatpush.msra.mxu0 %v2089
        %3341 = vmatpush.msra.mxu0 %v2085
        %3342 = vmatpush.msra.mxu0 %v2081
        %3343 = vmatpush.msra.mxu0 %v2077
        %3344 = vmatmul.f32.gmra.mxu0 %v2761
        %v3345 = vpop.f32.mrf.mxu0
        %v3346 = vadd.f32 %v3326, %v3345
        %3347 = vdwg.mxu0
        %3348 = vmatpush.msra.mxu0 %v2201
        %3349 = vmatpush.msra.mxu0 %v2197
        %3350 = vmatpush.msra.mxu0 %v2193
        %3351 = vmatpush.msra.mxu0 %v2189
        %3352 = vmatpush.msra.mxu0 %v2185
        %3353 = vmatpush.msra.mxu0 %v2181
        %3354 = vmatpush.msra.mxu0 %v2177
        %3355 = vmatpush.msra.mxu0 %v2173
        %3356 = vmatpush.msra.mxu0 %v2169
        %3357 = vmatpush.msra.mxu0 %v2165
        %3358 = vmatpush.msra.mxu0 %v2161
        %3359 = vmatpush.msra.mxu0 %v2157
        %3360 = vmatpush.msra.mxu0 %v2153
        %3361 = vmatpush.msra.mxu0 %v2149
        %3362 = vmatpush.msra.mxu0 %v2145
        %3363 = vmatpush.msra.mxu0 %v2141
        %3364 = vmatmul.f32.gmra.mxu0 %v2762
        %v3365 = vpop.f32.mrf.mxu0
        %v3366 = vadd.f32 %v3346, %v3365
        %3367 = vdwg.mxu0
        %3368 = vmatpush.msra.mxu0 %v2265
        %3369 = vmatpush.msra.mxu0 %v2261
        %3370 = vmatpush.msra.mxu0 %v2257
        %3371 = vmatpush.msra.mxu0 %v2253
        %3372 = vmatpush.msra.mxu0 %v2249
        %3373 = vmatpush.msra.mxu0 %v2245
        %3374 = vmatpush.msra.mxu0 %v2241
        %3375 = vmatpush.msra.mxu0 %v2237
        %3376 = vmatpush.msra.mxu0 %v2233
        %3377 = vmatpush.msra.mxu0 %v2229
        %3378 = vmatpush.msra.mxu0 %v2225
        %3379 = vmatpush.msra.mxu0 %v2221
        %3380 = vmatpush.msra.mxu0 %v2217
        %3381 = vmatpush.msra.mxu0 %v2213
        %3382 = vmatpush.msra.mxu0 %v2209
        %3383 = vmatpush.msra.mxu0 %v2205
        %3384 = vmatmul.f32.gmra.mxu0 %v2763
        %v3385 = vpop.f32.mrf.mxu0
        %v3386 = vadd.f32 %v3366, %v3385
        %3387 = vdwg.mxu0
        %3388 = vmatpush.msra.mxu0 %v2329
        %3389 = vmatpush.msra.mxu0 %v2325
        %3390 = vmatpush.msra.mxu0 %v2321
        %3391 = vmatpush.msra.mxu0 %v2317
        %3392 = vmatpush.msra.mxu0 %v2313
        %3393 = vmatpush.msra.mxu0 %v2309
        %3394 = vmatpush.msra.mxu0 %v2305
        %3395 = vmatpush.msra.mxu0 %v2301
        %3396 = vmatpush.msra.mxu0 %v2297
        %3397 = vmatpush.msra.mxu0 %v2293
        %3398 = vmatpush.msra.mxu0 %v2289
        %3399 = vmatpush.msra.mxu0 %v2285
        %3400 = vmatpush.msra.mxu0 %v2281
        %3401 = vmatpush.msra.mxu0 %v2277
        %3402 = vmatpush.msra.mxu0 %v2273
        %3403 = vmatpush.msra.mxu0 %v2269
        %3404 = vmatmul.f32.gmra.mxu0 %v2764
        %v3405 = vpop.f32.mrf.mxu0
        %v3406 = vadd.f32 %v3386, %v3405
        %3407 = vdwg.mxu0
        %3408 = vmatpush.msra.mxu0 %v2393
        %3409 = vmatpush.msra.mxu0 %v2389
        %3410 = vmatpush.msra.mxu0 %v2385
        %3411 = vmatpush.msra.mxu0 %v2381
        %3412 = vmatpush.msra.mxu0 %v2377
        %3413 = vmatpush.msra.mxu0 %v2373
        %3414 = vmatpush.msra.mxu0 %v2369
        %3415 = vmatpush.msra.mxu0 %v2365
        %3416 = vmatpush.msra.mxu0 %v2361
        %3417 = vmatpush.msra.mxu0 %v2357
        %3418 = vmatpush.msra.mxu0 %v2353
        %3419 = vmatpush.msra.mxu0 %v2349
        %3420 = vmatpush.msra.mxu0 %v2345
        %3421 = vmatpush.msra.mxu0 %v2341
        %3422 = vmatpush.msra.mxu0 %v2337
        %3423 = vmatpush.msra.mxu0 %v2333
        %3424 = vmatmul.f32.gmra.mxu0 %v2765
        %v3425 = vpop.f32.mrf.mxu0
        %v3426 = vadd.f32 %v3406, %v3425
        %3427 = vdwg.mxu0
        %3428 = vmatpush.msra.mxu0 %v2457
        %3429 = vmatpush.msra.mxu0 %v2453
        %3430 = vmatpush.msra.mxu0 %v2449
        %3431 = vmatpush.msra.mxu0 %v2445
        %3432 = vmatpush.msra.mxu0 %v2441
        %3433 = vmatpush.msra.mxu0 %v2437
        %3434 = vmatpush.msra.mxu0 %v2433
        %3435 = vmatpush.msra.mxu0 %v2429
        %3436 = vmatpush.msra.mxu0 %v2425
        %3437 = vmatpush.msra.mxu0 %v2421
        %3438 = vmatpush.msra.mxu0 %v2417
        %3439 = vmatpush.msra.mxu0 %v2413
        %3440 = vmatpush.msra.mxu0 %v2409
        %3441 = vmatpush.msra.mxu0 %v2405
        %3442 = vmatpush.msra.mxu0 %v2401
        %3443 = vmatpush.msra.mxu0 %v2397
        %3444 = vmatmul.f32.gmra.mxu0 %v2766
        %v3445 = vpop.f32.mrf.mxu0
        %v3446 = vadd.f32 %v3426, %v3445
        %3447 = vdwg.mxu0
        %3448 = vmatpush.msra.mxu0 %v2521
        %3449 = vmatpush.msra.mxu0 %v2517
        %3450 = vmatpush.msra.mxu0 %v2513
        %3451 = vmatpush.msra.mxu0 %v2509
        %3452 = vmatpush.msra.mxu0 %v2505
        %3453 = vmatpush.msra.mxu0 %v2501
        %3454 = vmatpush.msra.mxu0 %v2497
        %3455 = vmatpush.msra.mxu0 %v2493
        %3456 = vmatpush.msra.mxu0 %v2489
        %3457 = vmatpush.msra.mxu0 %v2485
        %3458 = vmatpush.msra.mxu0 %v2481
        %3459 = vmatpush.msra.mxu0 %v2477
        %3460 = vmatpush.msra.mxu0 %v2473
        %3461 = vmatpush.msra.mxu0 %v2469
        %3462 = vmatpush.msra.mxu0 %v2465
        %3463 = vmatpush.msra.mxu0 %v2461
        %3464 = vmatmul.f32.gmra.mxu0 %v2768
        %v3465 = vpop.f32.mrf.mxu0
        %v3466 = vadd.f32 %v3446, %v3465
        %3467 = vdwg.mxu0
        %3468 = vmatpush.msra.mxu0 %v2585
        %3469 = vmatpush.msra.mxu0 %v2581
        %3470 = vmatpush.msra.mxu0 %v2577
        %3471 = vmatpush.msra.mxu0 %v2573
        %3472 = vmatpush.msra.mxu0 %v2569
        %3473 = vmatpush.msra.mxu0 %v2565
        %3474 = vmatpush.msra.mxu0 %v2561
        %3475 = vmatpush.msra.mxu0 %v2557
        %3476 = vmatpush.msra.mxu0 %v2553
        %3477 = vmatpush.msra.mxu0 %v2549
        %3478 = vmatpush.msra.mxu0 %v2545
        %3479 = vmatpush.msra.mxu0 %v2541
        %3480 = vmatpush.msra.mxu0 %v2537
        %3481 = vmatpush.msra.mxu0 %v2533
        %3482 = vmatpush.msra.mxu0 %v2529
        %3483 = vmatpush.msra.mxu0 %v2525
        %3484 = vmatmul.f32.gmra.mxu0 %v2769
        %v3485 = vpop.f32.mrf.mxu0
        %v3486 = vadd.f32 %v3466, %v3485
        %3487 = vdwg.mxu0
        %3488 = vmatpush.msra.mxu0 %v2649
        %3489 = vmatpush.msra.mxu0 %v2645
        %3490 = vmatpush.msra.mxu0 %v2641
        %3491 = vmatpush.msra.mxu0 %v2637
        %3492 = vmatpush.msra.mxu0 %v2633
        %3493 = vmatpush.msra.mxu0 %v2629
        %3494 = vmatpush.msra.mxu0 %v2625
        %3495 = vmatpush.msra.mxu0 %v2621
        %3496 = vmatpush.msra.mxu0 %v2617
        %3497 = vmatpush.msra.mxu0 %v2613
        %3498 = vmatpush.msra.mxu0 %v2609
        %3499 = vmatpush.msra.mxu0 %v2605
        %3500 = vmatpush.msra.mxu0 %v2601
        %3501 = vmatpush.msra.mxu0 %v2597
        %3502 = vmatpush.msra.mxu0 %v2593
        %3503 = vmatpush.msra.mxu0 %v2589
        %3504 = vmatmul.f32.gmra.mxu0 %v2770
        %v3505 = vpop.f32.mrf.mxu0
        %v3506 = vadd.f32 %v3486, %v3505
        %3507 = vdwg.mxu0
        %3508 = vmatpush.msra.mxu0 %v2713
        %3509 = vmatpush.msra.mxu0 %v2709
        %3510 = vmatpush.msra.mxu0 %v2705
        %3511 = vmatpush.msra.mxu0 %v2701
        %3512 = vmatpush.msra.mxu0 %v2697
        %3513 = vmatpush.msra.mxu0 %v2693
        %3514 = vmatpush.msra.mxu0 %v2689
        %3515 = vmatpush.msra.mxu0 %v2685
        %3516 = vmatpush.msra.mxu0 %v2681
        %3517 = vmatpush.msra.mxu0 %v2677
        %3518 = vmatpush.msra.mxu0 %v2673
        %3519 = vmatpush.msra.mxu0 %v2669
        %3520 = vmatpush.msra.mxu0 %v2665
        %3521 = vmatpush.msra.mxu0 %v2661
        %3522 = vmatpush.msra.mxu0 %v2657
        %3523 = vmatpush.msra.mxu0 %v2653
        %3524 = vmatmul.f32.gmra.mxu0 %v2771
        %v3525 = vpop.f32.mrf.mxu0
        %v3526 = vadd.f32 %v3506, %v3525
        %3527 = vdwg.mxu0
        %3528 = vmatpush.msra.mxu0 %v474
        %3529 = vmatpush.msra.mxu0 %v470
        %3530 = vmatpush.msra.mxu0 %v466
        %3531 = vmatpush.msra.mxu0 %v462
        %3532 = vmatpush.msra.mxu0 %v458
        %3533 = vmatpush.msra.mxu0 %v454
        %3534 = vmatpush.msra.mxu0 %v450
        %3535 = vmatpush.msra.mxu0 %v446
        %3536 = vmatpush.msra.mxu0 %v442
        %3537 = vmatpush.msra.mxu0 %v438
        %3538 = vmatpush.msra.mxu0 %v434
        %3539 = vmatpush.msra.mxu0 %v430
        %3540 = vmatpush.msra.mxu0 %v426
        %3541 = vmatpush.msra.mxu0 %v422
        %3542 = vmatpush.msra.mxu0 %v418
        %3543 = vmatpush.msra.mxu0 %v414
        %3544 = vmatmul.f32.gmra.mxu0 %v2729
        %v3545 = vpop.f32.mrf.mxu0
        %v3546 = vadd.f32 0.0, %v3545
        %3547 = vdwg.mxu0
        %3548 = vmatpush.msra.mxu0 %v538
        %3549 = vmatpush.msra.mxu0 %v534
        %3550 = vmatpush.msra.mxu0 %v530
        %3551 = vmatpush.msra.mxu0 %v526
        %3552 = vmatpush.msra.mxu0 %v522
        %3553 = vmatpush.msra.mxu0 %v518
        %3554 = vmatpush.msra.mxu0 %v514
        %3555 = vmatpush.msra.mxu0 %v510
        %3556 = vmatpush.msra.mxu0 %v506
        %3557 = vmatpush.msra.mxu0 %v502
        %3558 = vmatpush.msra.mxu0 %v498
        %3559 = vmatpush.msra.mxu0 %v494
        %3560 = vmatpush.msra.mxu0 %v490
        %3561 = vmatpush.msra.mxu0 %v486
        %3562 = vmatpush.msra.mxu0 %v482
        %3563 = vmatpush.msra.mxu0 %v478
        %3564 = vmatmul.f32.gmra.mxu0 %v2730
        %v3565 = vpop.f32.mrf.mxu0
        %v3566 = vadd.f32 %v3546, %v3565
        %3567 = vdwg.mxu0
        %3568 = vmatpush.msra.mxu0 %v602
        %3569 = vmatpush.msra.mxu0 %v598
        %3570 = vmatpush.msra.mxu0 %v594
        %3571 = vmatpush.msra.mxu0 %v590
        %3572 = vmatpush.msra.mxu0 %v586
        %3573 = vmatpush.msra.mxu0 %v582
        %3574 = vmatpush.msra.mxu0 %v578
        %3575 = vmatpush.msra.mxu0 %v574
        %3576 = vmatpush.msra.mxu0 %v570
        %3577 = vmatpush.msra.mxu0 %v566
        %3578 = vmatpush.msra.mxu0 %v562
        %3579 = vmatpush.msra.mxu0 %v558
        %3580 = vmatpush.msra.mxu0 %v554
        %3581 = vmatpush.msra.mxu0 %v550
        %3582 = vmatpush.msra.mxu0 %v546
        %3583 = vmatpush.msra.mxu0 %v542
        %3584 = vmatmul.f32.gmra.mxu0 %v2731
        %v3585 = vpop.f32.mrf.mxu0
        %v3586 = vadd.f32 %v3566, %v3585
        %3587 = vdwg.mxu0
        %3588 = vmatpush.msra.mxu0 %v666
        %3589 = vmatpush.msra.mxu0 %v662
        %3590 = vmatpush.msra.mxu0 %v658
        %3591 = vmatpush.msra.mxu0 %v654
        %3592 = vmatpush.msra.mxu0 %v650
        %3593 = vmatpush.msra.mxu0 %v646
        %3594 = vmatpush.msra.mxu0 %v642
        %3595 = vmatpush.msra.mxu0 %v638
        %3596 = vmatpush.msra.mxu0 %v634
        %3597 = vmatpush.msra.mxu0 %v630
        %3598 = vmatpush.msra.mxu0 %v626
        %3599 = vmatpush.msra.mxu0 %v622
        %3600 = vmatpush.msra.mxu0 %v618
        %3601 = vmatpush.msra.mxu0 %v614
        %3602 = vmatpush.msra.mxu0 %v610
        %3603 = vmatpush.msra.mxu0 %v606
        %3604 = vmatmul.f32.gmra.mxu0 %v2732
        %v3605 = vpop.f32.mrf.mxu0
        %v3606 = vadd.f32 %v3586, %v3605
        %3607 = vdwg.mxu0
        %3608 = vmatpush.msra.mxu0 %v730
        %3609 = vmatpush.msra.mxu0 %v726
        %3610 = vmatpush.msra.mxu0 %v722
        %3611 = vmatpush.msra.mxu0 %v718
        %3612 = vmatpush.msra.mxu0 %v714
        %3613 = vmatpush.msra.mxu0 %v710
        %3614 = vmatpush.msra.mxu0 %v706
        %3615 = vmatpush.msra.mxu0 %v702
        %3616 = vmatpush.msra.mxu0 %v698
        %3617 = vmatpush.msra.mxu0 %v694
        %3618 = vmatpush.msra.mxu0 %v690
        %3619 = vmatpush.msra.mxu0 %v686
        %3620 = vmatpush.msra.mxu0 %v682
        %3621 = vmatpush.msra.mxu0 %v678
        %3622 = vmatpush.msra.mxu0 %v674
        %3623 = vmatpush.msra.mxu0 %v670
        %3624 = vmatmul.f32.gmra.mxu0 %v2733
        %v3625 = vpop.f32.mrf.mxu0
        %v3626 = vadd.f32 %v3606, %v3625
        %3627 = vdwg.mxu0
        %3628 = vmatpush.msra.mxu0 %v794
        %3629 = vmatpush.msra.mxu0 %v790
        %3630 = vmatpush.msra.mxu0 %v786
        %3631 = vmatpush.msra.mxu0 %v782
        %3632 = vmatpush.msra.mxu0 %v778
        %3633 = vmatpush.msra.mxu0 %v774
        %3634 = vmatpush.msra.mxu0 %v770
        %3635 = vmatpush.msra.mxu0 %v766
        %3636 = vmatpush.msra.mxu0 %v762
        %3637 = vmatpush.msra.mxu0 %v758
        %3638 = vmatpush.msra.mxu0 %v754
        %3639 = vmatpush.msra.mxu0 %v750
        %3640 = vmatpush.msra.mxu0 %v746
        %3641 = vmatpush.msra.mxu0 %v742
        %3642 = vmatpush.msra.mxu0 %v738
        %3643 = vmatpush.msra.mxu0 %v734
        %3644 = vmatmul.f32.gmra.mxu0 %v2734
        %v3645 = vpop.f32.mrf.mxu0
        %v3646 = vadd.f32 %v3626, %v3645
        %3647 = vdwg.mxu0
        %3648 = vmatpush.msra.mxu0 %v858
        %3649 = vmatpush.msra.mxu0 %v854
        %3650 = vmatpush.msra.mxu0 %v850
        %3651 = vmatpush.msra.mxu0 %v846
        %3652 = vmatpush.msra.mxu0 %v842
        %3653 = vmatpush.msra.mxu0 %v838
        %3654 = vmatpush.msra.mxu0 %v834
        %3655 = vmatpush.msra.mxu0 %v830
        %3656 = vmatpush.msra.mxu0 %v826
        %3657 = vmatpush.msra.mxu0 %v822
        %3658 = vmatpush.msra.mxu0 %v818
        %3659 = vmatpush.msra.mxu0 %v814
        %3660 = vmatpush.msra.mxu0 %v810
        %3661 = vmatpush.msra.mxu0 %v806
        %3662 = vmatpush.msra.mxu0 %v802
        %3663 = vmatpush.msra.mxu0 %v798
        %3664 = vmatmul.f32.gmra.mxu0 %v2735
        %v3665 = vpop.f32.mrf.mxu0
        %v3666 = vadd.f32 %v3646, %v3665
        %3667 = vdwg.mxu0
        %3668 = vmatpush.msra.mxu0 %v922
        %3669 = vmatpush.msra.mxu0 %v918
        %3670 = vmatpush.msra.mxu0 %v914
        %3671 = vmatpush.msra.mxu0 %v910
        %3672 = vmatpush.msra.mxu0 %v906
        %3673 = vmatpush.msra.mxu0 %v902
        %3674 = vmatpush.msra.mxu0 %v898
        %3675 = vmatpush.msra.mxu0 %v894
        %3676 = vmatpush.msra.mxu0 %v890
        %3677 = vmatpush.msra.mxu0 %v886
        %3678 = vmatpush.msra.mxu0 %v882
        %3679 = vmatpush.msra.mxu0 %v878
        %3680 = vmatpush.msra.mxu0 %v874
        %3681 = vmatpush.msra.mxu0 %v870
        %3682 = vmatpush.msra.mxu0 %v866
        %3683 = vmatpush.msra.mxu0 %v862
        %3684 = vmatmul.f32.gmra.mxu0 %v2736
        %v3685 = vpop.f32.mrf.mxu0
        %v3686 = vadd.f32 %v3666, %v3685
        %3687 = vdwg.mxu0
        %3688 = vmatpush.msra.mxu0 %v986
        %3689 = vmatpush.msra.mxu0 %v982
        %3690 = vmatpush.msra.mxu0 %v978
        %3691 = vmatpush.msra.mxu0 %v974
        %3692 = vmatpush.msra.mxu0 %v970
        %3693 = vmatpush.msra.mxu0 %v966
        %3694 = vmatpush.msra.mxu0 %v962
        %3695 = vmatpush.msra.mxu0 %v958
        %3696 = vmatpush.msra.mxu0 %v954
        %3697 = vmatpush.msra.mxu0 %v950
        %3698 = vmatpush.msra.mxu0 %v946
        %3699 = vmatpush.msra.mxu0 %v942
        %3700 = vmatpush.msra.mxu0 %v938
        %3701 = vmatpush.msra.mxu0 %v934
        %3702 = vmatpush.msra.mxu0 %v930
        %3703 = vmatpush.msra.mxu0 %v926
        %3704 = vmatmul.f32.gmra.mxu0 %v2739
        %v3705 = vpop.f32.mrf.mxu0
        %v3706 = vadd.f32 %v3686, %v3705
        %3707 = vdwg.mxu0
        %3708 = vmatpush.msra.mxu0 %v1050
        %3709 = vmatpush.msra.mxu0 %v1046
        %3710 = vmatpush.msra.mxu0 %v1042
        %3711 = vmatpush.msra.mxu0 %v1038
        %3712 = vmatpush.msra.mxu0 %v1034
        %3713 = vmatpush.msra.mxu0 %v1030
        %3714 = vmatpush.msra.mxu0 %v1026
        %3715 = vmatpush.msra.mxu0 %v1022
        %3716 = vmatpush.msra.mxu0 %v1018
        %3717 = vmatpush.msra.mxu0 %v1014
        %3718 = vmatpush.msra.mxu0 %v1010
        %3719 = vmatpush.msra.mxu0 %v1006
        %3720 = vmatpush.msra.mxu0 %v1002
        %3721 = vmatpush.msra.mxu0 %v998
        %3722 = vmatpush.msra.mxu0 %v994
        %3723 = vmatpush.msra.mxu0 %v990
        %3724 = vmatmul.f32.gmra.mxu0 %v2740
        %v3725 = vpop.f32.mrf.mxu0
        %v3726 = vadd.f32 %v3706, %v3725
        %3727 = vdwg.mxu0
        %3728 = vmatpush.msra.mxu0 %v1114
        %3729 = vmatpush.msra.mxu0 %v1110
        %3730 = vmatpush.msra.mxu0 %v1106
        %3731 = vmatpush.msra.mxu0 %v1102
        %3732 = vmatpush.msra.mxu0 %v1098
        %3733 = vmatpush.msra.mxu0 %v1094
        %3734 = vmatpush.msra.mxu0 %v1090
        %3735 = vmatpush.msra.mxu0 %v1086
        %3736 = vmatpush.msra.mxu0 %v1082
        %3737 = vmatpush.msra.mxu0 %v1078
        %3738 = vmatpush.msra.mxu0 %v1074
        %3739 = vmatpush.msra.mxu0 %v1070
        %3740 = vmatpush.msra.mxu0 %v1066
        %3741 = vmatpush.msra.mxu0 %v1062
        %3742 = vmatpush.msra.mxu0 %v1058
        %3743 = vmatpush.msra.mxu0 %v1054
        %3744 = vmatmul.f32.gmra.mxu0 %v2741
        %v3745 = vpop.f32.mrf.mxu0
        %v3746 = vadd.f32 %v3726, %v3745
        %3747 = vdwg.mxu0
        %3748 = vmatpush.msra.mxu0 %v1178
        %3749 = vmatpush.msra.mxu0 %v1174
        %3750 = vmatpush.msra.mxu0 %v1170
        %3751 = vmatpush.msra.mxu0 %v1166
        %3752 = vmatpush.msra.mxu0 %v1162
        %3753 = vmatpush.msra.mxu0 %v1158
        %3754 = vmatpush.msra.mxu0 %v1154
        %3755 = vmatpush.msra.mxu0 %v1150
        %3756 = vmatpush.msra.mxu0 %v1146
        %3757 = vmatpush.msra.mxu0 %v1142
        %3758 = vmatpush.msra.mxu0 %v1138
        %3759 = vmatpush.msra.mxu0 %v1134
        %3760 = vmatpush.msra.mxu0 %v1130
        %3761 = vmatpush.msra.mxu0 %v1126
        %3762 = vmatpush.msra.mxu0 %v1122
        %3763 = vmatpush.msra.mxu0 %v1118
        %3764 = vmatmul.f32.gmra.mxu0 %v2742
        %v3765 = vpop.f32.mrf.mxu0
        %v3766 = vadd.f32 %v3746, %v3765
        %3767 = vdwg.mxu0
        %3768 = vmatpush.msra.mxu0 %v1242
        %3769 = vmatpush.msra.mxu0 %v1238
        %3770 = vmatpush.msra.mxu0 %v1234
        %3771 = vmatpush.msra.mxu0 %v1230
        %3772 = vmatpush.msra.mxu0 %v1226
        %3773 = vmatpush.msra.mxu0 %v1222
        %3774 = vmatpush.msra.mxu0 %v1218
        %3775 = vmatpush.msra.mxu0 %v1214
        %3776 = vmatpush.msra.mxu0 %v1210
        %3777 = vmatpush.msra.mxu0 %v1206
        %3778 = vmatpush.msra.mxu0 %v1202
        %3779 = vmatpush.msra.mxu0 %v1198
        %3780 = vmatpush.msra.mxu0 %v1194
        %3781 = vmatpush.msra.mxu0 %v1190
        %3782 = vmatpush.msra.mxu0 %v1186
        %3783 = vmatpush.msra.mxu0 %v1182
        %3784 = vmatmul.f32.gmra.mxu0 %v2743
        %v3785 = vpop.f32.mrf.mxu0
        %v3786 = vadd.f32 %v3766, %v3785
        %3787 = vdwg.mxu0
        %3788 = vmatpush.msra.mxu0 %v1306
        %3789 = vmatpush.msra.mxu0 %v1302
        %3790 = vmatpush.msra.mxu0 %v1298
        %3791 = vmatpush.msra.mxu0 %v1294
        %3792 = vmatpush.msra.mxu0 %v1290
        %3793 = vmatpush.msra.mxu0 %v1286
        %3794 = vmatpush.msra.mxu0 %v1282
        %3795 = vmatpush.msra.mxu0 %v1278
        %3796 = vmatpush.msra.mxu0 %v1274
        %3797 = vmatpush.msra.mxu0 %v1270
        %3798 = vmatpush.msra.mxu0 %v1266
        %3799 = vmatpush.msra.mxu0 %v1262
        %3800 = vmatpush.msra.mxu0 %v1258
        %3801 = vmatpush.msra.mxu0 %v1254
        %3802 = vmatpush.msra.mxu0 %v1250
        %3803 = vmatpush.msra.mxu0 %v1246
        %3804 = vmatmul.f32.gmra.mxu0 %v2744
        %v3805 = vpop.f32.mrf.mxu0
        %v3806 = vadd.f32 %v3786, %v3805
        %3807 = vdwg.mxu0
        %3808 = vmatpush.msra.mxu0 %v1370
        %3809 = vmatpush.msra.mxu0 %v1366
        %3810 = vmatpush.msra.mxu0 %v1362
        %3811 = vmatpush.msra.mxu0 %v1358
        %3812 = vmatpush.msra.mxu0 %v1354
        %3813 = vmatpush.msra.mxu0 %v1350
        %3814 = vmatpush.msra.mxu0 %v1346
        %3815 = vmatpush.msra.mxu0 %v1342
        %3816 = vmatpush.msra.mxu0 %v1338
        %3817 = vmatpush.msra.mxu0 %v1334
        %3818 = vmatpush.msra.mxu0 %v1330
        %3819 = vmatpush.msra.mxu0 %v1326
        %3820 = vmatpush.msra.mxu0 %v1322
        %3821 = vmatpush.msra.mxu0 %v1318
        %3822 = vmatpush.msra.mxu0 %v1314
        %3823 = vmatpush.msra.mxu0 %v1310
        %3824 = vmatmul.f32.gmra.mxu0 %v2745
        %v3825 = vpop.f32.mrf.mxu0
        %v3826 = vadd.f32 %v3806, %v3825
        %3827 = vdwg.mxu0
        %3828 = vmatpush.msra.mxu0 %v1434
        %3829 = vmatpush.msra.mxu0 %v1430
        %3830 = vmatpush.msra.mxu0 %v1426
        %3831 = vmatpush.msra.mxu0 %v1422
        %3832 = vmatpush.msra.mxu0 %v1418
        %3833 = vmatpush.msra.mxu0 %v1414
        %3834 = vmatpush.msra.mxu0 %v1410
        %3835 = vmatpush.msra.mxu0 %v1406
        %3836 = vmatpush.msra.mxu0 %v1402
        %3837 = vmatpush.msra.mxu0 %v1398
        %3838 = vmatpush.msra.mxu0 %v1394
        %3839 = vmatpush.msra.mxu0 %v1390
        %3840 = vmatpush.msra.mxu0 %v1386
        %3841 = vmatpush.msra.mxu0 %v1382
        %3842 = vmatpush.msra.mxu0 %v1378
        %3843 = vmatpush.msra.mxu0 %v1374
        %3844 = vmatmul.f32.gmra.mxu0 %v2746
        %v3845 = vpop.f32.mrf.mxu0
        %v3846 = vadd.f32 %v3826, %v3845
        %3847 = vdwg.mxu0
        %3848 = vmatpush.msra.mxu0 %v1498
        %3849 = vmatpush.msra.mxu0 %v1494
        %3850 = vmatpush.msra.mxu0 %v1490
        %3851 = vmatpush.msra.mxu0 %v1486
        %3852 = vmatpush.msra.mxu0 %v1482
        %3853 = vmatpush.msra.mxu0 %v1478
        %3854 = vmatpush.msra.mxu0 %v1474
        %3855 = vmatpush.msra.mxu0 %v1470
        %3856 = vmatpush.msra.mxu0 %v1466
        %3857 = vmatpush.msra.mxu0 %v1462
        %3858 = vmatpush.msra.mxu0 %v1458
        %3859 = vmatpush.msra.mxu0 %v1454
        %3860 = vmatpush.msra.mxu0 %v1450
        %3861 = vmatpush.msra.mxu0 %v1446
        %3862 = vmatpush.msra.mxu0 %v1442
        %3863 = vmatpush.msra.mxu0 %v1438
        %3864 = vmatmul.f32.gmra.mxu0 %v2749
        %v3865 = vpop.f32.mrf.mxu0
        %v3866 = vadd.f32 %v3846, %v3865
        %3867 = vdwg.mxu0
        %3868 = vmatpush.msra.mxu0 %v1562
        %3869 = vmatpush.msra.mxu0 %v1558
        %3870 = vmatpush.msra.mxu0 %v1554
        %3871 = vmatpush.msra.mxu0 %v1550
        %3872 = vmatpush.msra.mxu0 %v1546
        %3873 = vmatpush.msra.mxu0 %v1542
        %3874 = vmatpush.msra.mxu0 %v1538
        %3875 = vmatpush.msra.mxu0 %v1534
        %3876 = vmatpush.msra.mxu0 %v1530
        %3877 = vmatpush.msra.mxu0 %v1526
        %3878 = vmatpush.msra.mxu0 %v1522
        %3879 = vmatpush.msra.mxu0 %v1518
        %3880 = vmatpush.msra.mxu0 %v1514
        %3881 = vmatpush.msra.mxu0 %v1510
        %3882 = vmatpush.msra.mxu0 %v1506
        %3883 = vmatpush.msra.mxu0 %v1502
        %3884 = vmatmul.f32.gmra.mxu0 %v2750
        %v3885 = vpop.f32.mrf.mxu0
        %v3886 = vadd.f32 %v3866, %v3885
        %3887 = vdwg.mxu0
        %3888 = vmatpush.msra.mxu0 %v1626
        %3889 = vmatpush.msra.mxu0 %v1622
        %3890 = vmatpush.msra.mxu0 %v1618
        %3891 = vmatpush.msra.mxu0 %v1614
        %3892 = vmatpush.msra.mxu0 %v1610
        %3893 = vmatpush.msra.mxu0 %v1606
        %3894 = vmatpush.msra.mxu0 %v1602
        %3895 = vmatpush.msra.mxu0 %v1598
        %3896 = vmatpush.msra.mxu0 %v1594
        %3897 = vmatpush.msra.mxu0 %v1590
        %3898 = vmatpush.msra.mxu0 %v1586
        %3899 = vmatpush.msra.mxu0 %v1582
        %3900 = vmatpush.msra.mxu0 %v1578
        %3901 = vmatpush.msra.mxu0 %v1574
        %3902 = vmatpush.msra.mxu0 %v1570
        %3903 = vmatpush.msra.mxu0 %v1566
        %3904 = vmatmul.f32.gmra.mxu0 %v2751
        %v3905 = vpop.f32.mrf.mxu0
        %v3906 = vadd.f32 %v3886, %v3905
        %3907 = vdwg.mxu0
        %3908 = vmatpush.msra.mxu0 %v1690
        %3909 = vmatpush.msra.mxu0 %v1686
        %3910 = vmatpush.msra.mxu0 %v1682
        %3911 = vmatpush.msra.mxu0 %v1678
        %3912 = vmatpush.msra.mxu0 %v1674
        %3913 = vmatpush.msra.mxu0 %v1670
        %3914 = vmatpush.msra.mxu0 %v1666
        %3915 = vmatpush.msra.mxu0 %v1662
        %3916 = vmatpush.msra.mxu0 %v1658
        %3917 = vmatpush.msra.mxu0 %v1654
        %3918 = vmatpush.msra.mxu0 %v1650
        %3919 = vmatpush.msra.mxu0 %v1646
        %3920 = vmatpush.msra.mxu0 %v1642
        %3921 = vmatpush.msra.mxu0 %v1638
        %3922 = vmatpush.msra.mxu0 %v1634
        %3923 = vmatpush.msra.mxu0 %v1630
        %3924 = vmatmul.f32.gmra.mxu0 %v2752
        %v3925 = vpop.f32.mrf.mxu0
        %v3926 = vadd.f32 %v3906, %v3925
        %3927 = vdwg.mxu0
        %3928 = vmatpush.msra.mxu0 %v1754
        %3929 = vmatpush.msra.mxu0 %v1750
        %3930 = vmatpush.msra.mxu0 %v1746
        %3931 = vmatpush.msra.mxu0 %v1742
        %3932 = vmatpush.msra.mxu0 %v1738
        %3933 = vmatpush.msra.mxu0 %v1734
        %3934 = vmatpush.msra.mxu0 %v1730
        %3935 = vmatpush.msra.mxu0 %v1726
        %3936 = vmatpush.msra.mxu0 %v1722
        %3937 = vmatpush.msra.mxu0 %v1718
        %3938 = vmatpush.msra.mxu0 %v1714
        %3939 = vmatpush.msra.mxu0 %v1710
        %3940 = vmatpush.msra.mxu0 %v1706
        %3941 = vmatpush.msra.mxu0 %v1702
        %3942 = vmatpush.msra.mxu0 %v1698
        %3943 = vmatpush.msra.mxu0 %v1694
        %3944 = vmatmul.f32.gmra.mxu0 %v2753
        %v3945 = vpop.f32.mrf.mxu0
        %v3946 = vadd.f32 %v3926, %v3945
        %3947 = vdwg.mxu0
        %3948 = vmatpush.msra.mxu0 %v1818
        %3949 = vmatpush.msra.mxu0 %v1814
        %3950 = vmatpush.msra.mxu0 %v1810
        %3951 = vmatpush.msra.mxu0 %v1806
        %3952 = vmatpush.msra.mxu0 %v1802
        %3953 = vmatpush.msra.mxu0 %v1798
        %3954 = vmatpush.msra.mxu0 %v1794
        %3955 = vmatpush.msra.mxu0 %v1790
        %3956 = vmatpush.msra.mxu0 %v1786
        %3957 = vmatpush.msra.mxu0 %v1782
        %3958 = vmatpush.msra.mxu0 %v1778
        %3959 = vmatpush.msra.mxu0 %v1774
        %3960 = vmatpush.msra.mxu0 %v1770
        %3961 = vmatpush.msra.mxu0 %v1766
        %3962 = vmatpush.msra.mxu0 %v1762
        %3963 = vmatpush.msra.mxu0 %v1758
        %3964 = vmatmul.f32.gmra.mxu0 %v2754
        %v3965 = vpop.f32.mrf.mxu0
        %v3966 = vadd.f32 %v3946, %v3965
        %3967 = vdwg.mxu0
        %3968 = vmatpush.msra.mxu0 %v1882
        %3969 = vmatpush.msra.mxu0 %v1878
        %3970 = vmatpush.msra.mxu0 %v1874
        %3971 = vmatpush.msra.mxu0 %v1870
        %3972 = vmatpush.msra.mxu0 %v1866
        %3973 = vmatpush.msra.mxu0 %v1862
        %3974 = vmatpush.msra.mxu0 %v1858
        %3975 = vmatpush.msra.mxu0 %v1854
        %3976 = vmatpush.msra.mxu0 %v1850
        %3977 = vmatpush.msra.mxu0 %v1846
        %3978 = vmatpush.msra.mxu0 %v1842
        %3979 = vmatpush.msra.mxu0 %v1838
        %3980 = vmatpush.msra.mxu0 %v1834
        %3981 = vmatpush.msra.mxu0 %v1830
        %3982 = vmatpush.msra.mxu0 %v1826
        %3983 = vmatpush.msra.mxu0 %v1822
        %3984 = vmatmul.f32.gmra.mxu0 %v2755
        %v3985 = vpop.f32.mrf.mxu0
        %v3986 = vadd.f32 %v3966, %v3985
        %3987 = vdwg.mxu0
        %3988 = vmatpush.msra.mxu0 %v1946
        %3989 = vmatpush.msra.mxu0 %v1942
        %3990 = vmatpush.msra.mxu0 %v1938
        %3991 = vmatpush.msra.mxu0 %v1934
        %3992 = vmatpush.msra.mxu0 %v1930
        %3993 = vmatpush.msra.mxu0 %v1926
        %3994 = vmatpush.msra.mxu0 %v1922
        %3995 = vmatpush.msra.mxu0 %v1918
        %3996 = vmatpush.msra.mxu0 %v1914
        %3997 = vmatpush.msra.mxu0 %v1910
        %3998 = vmatpush.msra.mxu0 %v1906
        %3999 = vmatpush.msra.mxu0 %v1902
        %4000 = vmatpush.msra.mxu0 %v1898
        %4001 = vmatpush.msra.mxu0 %v1894
        %4002 = vmatpush.msra.mxu0 %v1890
        %4003 = vmatpush.msra.mxu0 %v1886
        %4004 = vmatmul.f32.gmra.mxu0 %v2756
        %v4005 = vpop.f32.mrf.mxu0
        %v4006 = vadd.f32 %v3986, %v4005
        %4007 = vdwg.mxu0
        %4008 = vmatpush.msra.mxu0 %v2010
        %4009 = vmatpush.msra.mxu0 %v2006
        %4010 = vmatpush.msra.mxu0 %v2002
        %4011 = vmatpush.msra.mxu0 %v1998
        %4012 = vmatpush.msra.mxu0 %v1994
        %4013 = vmatpush.msra.mxu0 %v1990
        %4014 = vmatpush.msra.mxu0 %v1986
        %4015 = vmatpush.msra.mxu0 %v1982
        %4016 = vmatpush.msra.mxu0 %v1978
        %4017 = vmatpush.msra.mxu0 %v1974
        %4018 = vmatpush.msra.mxu0 %v1970
        %4019 = vmatpush.msra.mxu0 %v1966
        %4020 = vmatpush.msra.mxu0 %v1962
        %4021 = vmatpush.msra.mxu0 %v1958
        %4022 = vmatpush.msra.mxu0 %v1954
        %4023 = vmatpush.msra.mxu0 %v1950
        %4024 = vmatmul.f32.gmra.mxu0 %v2759
        %v4025 = vpop.f32.mrf.mxu0
        %v4026 = vadd.f32 %v4006, %v4025
        %4027 = vdwg.mxu0
        %4028 = vmatpush.msra.mxu0 %v2074
        %4029 = vmatpush.msra.mxu0 %v2070
        %4030 = vmatpush.msra.mxu0 %v2066
        %4031 = vmatpush.msra.mxu0 %v2062
        %4032 = vmatpush.msra.mxu0 %v2058
        %4033 = vmatpush.msra.mxu0 %v2054
        %4034 = vmatpush.msra.mxu0 %v2050
        %4035 = vmatpush.msra.mxu0 %v2046
        %4036 = vmatpush.msra.mxu0 %v2042
        %4037 = vmatpush.msra.mxu0 %v2038
        %4038 = vmatpush.msra.mxu0 %v2034
        %4039 = vmatpush.msra.mxu0 %v2030
        %4040 = vmatpush.msra.mxu0 %v2026
        %4041 = vmatpush.msra.mxu0 %v2022
        %4042 = vmatpush.msra.mxu0 %v2018
        %4043 = vmatpush.msra.mxu0 %v2014
        %4044 = vmatmul.f32.gmra.mxu0 %v2760
        %v4045 = vpop.f32.mrf.mxu0
        %v4046 = vadd.f32 %v4026, %v4045
        %4047 = vdwg.mxu0
        %4048 = vmatpush.msra.mxu0 %v2138
        %4049 = vmatpush.msra.mxu0 %v2134
        %4050 = vmatpush.msra.mxu0 %v2130
        %4051 = vmatpush.msra.mxu0 %v2126
        %4052 = vmatpush.msra.mxu0 %v2122
        %4053 = vmatpush.msra.mxu0 %v2118
        %4054 = vmatpush.msra.mxu0 %v2114
        %4055 = vmatpush.msra.mxu0 %v2110
        %4056 = vmatpush.msra.mxu0 %v2106
        %4057 = vmatpush.msra.mxu0 %v2102
        %4058 = vmatpush.msra.mxu0 %v2098
        %4059 = vmatpush.msra.mxu0 %v2094
        %4060 = vmatpush.msra.mxu0 %v2090
        %4061 = vmatpush.msra.mxu0 %v2086
        %4062 = vmatpush.msra.mxu0 %v2082
        %4063 = vmatpush.msra.mxu0 %v2078
        %4064 = vmatmul.f32.gmra.mxu0 %v2761
        %v4065 = vpop.f32.mrf.mxu0
        %v4066 = vadd.f32 %v4046, %v4065
        %4067 = vdwg.mxu0
        %4068 = vmatpush.msra.mxu0 %v2202
        %4069 = vmatpush.msra.mxu0 %v2198
        %4070 = vmatpush.msra.mxu0 %v2194
        %4071 = vmatpush.msra.mxu0 %v2190
        %4072 = vmatpush.msra.mxu0 %v2186
        %4073 = vmatpush.msra.mxu0 %v2182
        %4074 = vmatpush.msra.mxu0 %v2178
        %4075 = vmatpush.msra.mxu0 %v2174
        %4076 = vmatpush.msra.mxu0 %v2170
        %4077 = vmatpush.msra.mxu0 %v2166
        %4078 = vmatpush.msra.mxu0 %v2162
        %4079 = vmatpush.msra.mxu0 %v2158
        %4080 = vmatpush.msra.mxu0 %v2154
        %4081 = vmatpush.msra.mxu0 %v2150
        %4082 = vmatpush.msra.mxu0 %v2146
        %4083 = vmatpush.msra.mxu0 %v2142
        %4084 = vmatmul.f32.gmra.mxu0 %v2762
        %v4085 = vpop.f32.mrf.mxu0
        %v4086 = vadd.f32 %v4066, %v4085
        %4087 = vdwg.mxu0
        %4088 = vmatpush.msra.mxu0 %v2266
        %4089 = vmatpush.msra.mxu0 %v2262
        %4090 = vmatpush.msra.mxu0 %v2258
        %4091 = vmatpush.msra.mxu0 %v2254
        %4092 = vmatpush.msra.mxu0 %v2250
        %4093 = vmatpush.msra.mxu0 %v2246
        %4094 = vmatpush.msra.mxu0 %v2242
        %4095 = vmatpush.msra.mxu0 %v2238
        %4096 = vmatpush.msra.mxu0 %v2234
        %4097 = vmatpush.msra.mxu0 %v2230
        %4098 = vmatpush.msra.mxu0 %v2226
        %4099 = vmatpush.msra.mxu0 %v2222
        %4100 = vmatpush.msra.mxu0 %v2218
        %4101 = vmatpush.msra.mxu0 %v2214
        %4102 = vmatpush.msra.mxu0 %v2210
        %4103 = vmatpush.msra.mxu0 %v2206
        %4104 = vmatmul.f32.gmra.mxu0 %v2763
        %v4105 = vpop.f32.mrf.mxu0
        %v4106 = vadd.f32 %v4086, %v4105
        %4107 = vdwg.mxu0
        %4108 = vmatpush.msra.mxu0 %v2330
        %4109 = vmatpush.msra.mxu0 %v2326
        %4110 = vmatpush.msra.mxu0 %v2322
        %4111 = vmatpush.msra.mxu0 %v2318
        %4112 = vmatpush.msra.mxu0 %v2314
        %4113 = vmatpush.msra.mxu0 %v2310
        %4114 = vmatpush.msra.mxu0 %v2306
        %4115 = vmatpush.msra.mxu0 %v2302
        %4116 = vmatpush.msra.mxu0 %v2298
        %4117 = vmatpush.msra.mxu0 %v2294
        %4118 = vmatpush.msra.mxu0 %v2290
        %4119 = vmatpush.msra.mxu0 %v2286
        %4120 = vmatpush.msra.mxu0 %v2282
        %4121 = vmatpush.msra.mxu0 %v2278
        %4122 = vmatpush.msra.mxu0 %v2274
        %4123 = vmatpush.msra.mxu0 %v2270
        %4124 = vmatmul.f32.gmra.mxu0 %v2764
        %v4125 = vpop.f32.mrf.mxu0
        %v4126 = vadd.f32 %v4106, %v4125
        %4127 = vdwg.mxu0
        %4128 = vmatpush.msra.mxu0 %v2394
        %4129 = vmatpush.msra.mxu0 %v2390
        %4130 = vmatpush.msra.mxu0 %v2386
        %4131 = vmatpush.msra.mxu0 %v2382
        %4132 = vmatpush.msra.mxu0 %v2378
        %4133 = vmatpush.msra.mxu0 %v2374
        %4134 = vmatpush.msra.mxu0 %v2370
        %4135 = vmatpush.msra.mxu0 %v2366
        %4136 = vmatpush.msra.mxu0 %v2362
        %4137 = vmatpush.msra.mxu0 %v2358
        %4138 = vmatpush.msra.mxu0 %v2354
        %4139 = vmatpush.msra.mxu0 %v2350
        %4140 = vmatpush.msra.mxu0 %v2346
        %4141 = vmatpush.msra.mxu0 %v2342
        %4142 = vmatpush.msra.mxu0 %v2338
        %4143 = vmatpush.msra.mxu0 %v2334
        %4144 = vmatmul.f32.gmra.mxu0 %v2765
        %v4145 = vpop.f32.mrf.mxu0
        %v4146 = vadd.f32 %v4126, %v4145
        %4147 = vdwg.mxu0
        %4148 = vmatpush.msra.mxu0 %v2458
        %4149 = vmatpush.msra.mxu0 %v2454
        %4150 = vmatpush.msra.mxu0 %v2450
        %4151 = vmatpush.msra.mxu0 %v2446
        %4152 = vmatpush.msra.mxu0 %v2442
        %4153 = vmatpush.msra.mxu0 %v2438
        %4154 = vmatpush.msra.mxu0 %v2434
        %4155 = vmatpush.msra.mxu0 %v2430
        %4156 = vmatpush.msra.mxu0 %v2426
        %4157 = vmatpush.msra.mxu0 %v2422
        %4158 = vmatpush.msra.mxu0 %v2418
        %4159 = vmatpush.msra.mxu0 %v2414
        %4160 = vmatpush.msra.mxu0 %v2410
        %4161 = vmatpush.msra.mxu0 %v2406
        %4162 = vmatpush.msra.mxu0 %v2402
        %4163 = vmatpush.msra.mxu0 %v2398
        %4164 = vmatmul.f32.gmra.mxu0 %v2766
        %v4165 = vpop.f32.mrf.mxu0
        %v4166 = vadd.f32 %v4146, %v4165
        %4167 = vdwg.mxu0
        %4168 = vmatpush.msra.mxu0 %v2522
        %4169 = vmatpush.msra.mxu0 %v2518
        %4170 = vmatpush.msra.mxu0 %v2514
        %4171 = vmatpush.msra.mxu0 %v2510
        %4172 = vmatpush.msra.mxu0 %v2506
        %4173 = vmatpush.msra.mxu0 %v2502
        %4174 = vmatpush.msra.mxu0 %v2498
        %4175 = vmatpush.msra.mxu0 %v2494
        %4176 = vmatpush.msra.mxu0 %v2490
        %4177 = vmatpush.msra.mxu0 %v2486
        %4178 = vmatpush.msra.mxu0 %v2482
        %4179 = vmatpush.msra.mxu0 %v2478
        %4180 = vmatpush.msra.mxu0 %v2474
        %4181 = vmatpush.msra.mxu0 %v2470
        %4182 = vmatpush.msra.mxu0 %v2466
        %4183 = vmatpush.msra.mxu0 %v2462
        %4184 = vmatmul.f32.gmra.mxu0 %v2768
        %v4185 = vpop.f32.mrf.mxu0
        %v4186 = vadd.f32 %v4166, %v4185
        %4187 = vdwg.mxu0
        %4188 = vmatpush.msra.mxu0 %v2586
        %4189 = vmatpush.msra.mxu0 %v2582
        %4190 = vmatpush.msra.mxu0 %v2578
        %4191 = vmatpush.msra.mxu0 %v2574
        %4192 = vmatpush.msra.mxu0 %v2570
        %4193 = vmatpush.msra.mxu0 %v2566
        %4194 = vmatpush.msra.mxu0 %v2562
        %4195 = vmatpush.msra.mxu0 %v2558
        %4196 = vmatpush.msra.mxu0 %v2554
        %4197 = vmatpush.msra.mxu0 %v2550
        %4198 = vmatpush.msra.mxu0 %v2546
        %4199 = vmatpush.msra.mxu0 %v2542
        %4200 = vmatpush.msra.mxu0 %v2538
        %4201 = vmatpush.msra.mxu0 %v2534
        %4202 = vmatpush.msra.mxu0 %v2530
        %4203 = vmatpush.msra.mxu0 %v2526
        %4204 = vmatmul.f32.gmra.mxu0 %v2769
        %v4205 = vpop.f32.mrf.mxu0
        %v4206 = vadd.f32 %v4186, %v4205
        %4207 = vdwg.mxu0
        %4208 = vmatpush.msra.mxu0 %v2650
        %4209 = vmatpush.msra.mxu0 %v2646
        %4210 = vmatpush.msra.mxu0 %v2642
        %4211 = vmatpush.msra.mxu0 %v2638
        %4212 = vmatpush.msra.mxu0 %v2634
        %4213 = vmatpush.msra.mxu0 %v2630
        %4214 = vmatpush.msra.mxu0 %v2626
        %4215 = vmatpush.msra.mxu0 %v2622
        %4216 = vmatpush.msra.mxu0 %v2618
        %4217 = vmatpush.msra.mxu0 %v2614
        %4218 = vmatpush.msra.mxu0 %v2610
        %4219 = vmatpush.msra.mxu0 %v2606
        %4220 = vmatpush.msra.mxu0 %v2602
        %4221 = vmatpush.msra.mxu0 %v2598
        %4222 = vmatpush.msra.mxu0 %v2594
        %4223 = vmatpush.msra.mxu0 %v2590
        %4224 = vmatmul.f32.gmra.mxu0 %v2770
        %v4225 = vpop.f32.mrf.mxu0
        %v4226 = vadd.f32 %v4206, %v4225
        %4227 = vdwg.mxu0
        %4228 = vmatpush.msra.mxu0 %v2714
        %4229 = vmatpush.msra.mxu0 %v2710
        %4230 = vmatpush.msra.mxu0 %v2706
        %4231 = vmatpush.msra.mxu0 %v2702
        %4232 = vmatpush.msra.mxu0 %v2698
        %4233 = vmatpush.msra.mxu0 %v2694
        %4234 = vmatpush.msra.mxu0 %v2690
        %4235 = vmatpush.msra.mxu0 %v2686
        %4236 = vmatpush.msra.mxu0 %v2682
        %4237 = vmatpush.msra.mxu0 %v2678
        %4238 = vmatpush.msra.mxu0 %v2674
        %4239 = vmatpush.msra.mxu0 %v2670
        %4240 = vmatpush.msra.mxu0 %v2666
        %4241 = vmatpush.msra.mxu0 %v2662
        %4242 = vmatpush.msra.mxu0 %v2658
        %4243 = vmatpush.msra.mxu0 %v2654
        %4244 = vmatmul.f32.gmra.mxu0 %v2771
        %v4245 = vpop.f32.mrf.mxu0
        %v4246 = vadd.f32 %v4226, %v4245
        %4247 = vdwg.mxu0
        %4248 = vmatpush.msra.mxu0 %v475
        %4249 = vmatpush.msra.mxu0 %v471
        %4250 = vmatpush.msra.mxu0 %v467
        %4251 = vmatpush.msra.mxu0 %v463
        %4252 = vmatpush.msra.mxu0 %v459
        %4253 = vmatpush.msra.mxu0 %v455
        %4254 = vmatpush.msra.mxu0 %v451
        %4255 = vmatpush.msra.mxu0 %v447
        %4256 = vmatpush.msra.mxu0 %v443
        %4257 = vmatpush.msra.mxu0 %v439
        %4258 = vmatpush.msra.mxu0 %v435
        %4259 = vmatpush.msra.mxu0 %v431
        %4260 = vmatpush.msra.mxu0 %v427
        %4261 = vmatpush.msra.mxu0 %v423
        %4262 = vmatpush.msra.mxu0 %v419
        %4263 = vmatpush.msra.mxu0 %v415
        %4264 = vmatmul.f32.gmra.mxu0 %v2729
        %v4265 = vpop.f32.mrf.mxu0
        %v4266 = vadd.f32 0.0, %v4265
        %4267 = vdwg.mxu0
        %4268 = vmatpush.msra.mxu0 %v539
        %4269 = vmatpush.msra.mxu0 %v535
        %4270 = vmatpush.msra.mxu0 %v531
        %4271 = vmatpush.msra.mxu0 %v527
        %4272 = vmatpush.msra.mxu0 %v523
        %4273 = vmatpush.msra.mxu0 %v519
        %4274 = vmatpush.msra.mxu0 %v515
        %4275 = vmatpush.msra.mxu0 %v511
        %4276 = vmatpush.msra.mxu0 %v507
        %4277 = vmatpush.msra.mxu0 %v503
        %4278 = vmatpush.msra.mxu0 %v499
        %4279 = vmatpush.msra.mxu0 %v495
        %4280 = vmatpush.msra.mxu0 %v491
        %4281 = vmatpush.msra.mxu0 %v487
        %4282 = vmatpush.msra.mxu0 %v483
        %4283 = vmatpush.msra.mxu0 %v479
        %4284 = vmatmul.f32.gmra.mxu0 %v2730
        %v4285 = vpop.f32.mrf.mxu0
        %v4286 = vadd.f32 %v4266, %v4285
        %4287 = vdwg.mxu0
        %4288 = vmatpush.msra.mxu0 %v603
        %4289 = vmatpush.msra.mxu0 %v599
        %4290 = vmatpush.msra.mxu0 %v595
        %4291 = vmatpush.msra.mxu0 %v591
        %4292 = vmatpush.msra.mxu0 %v587
        %4293 = vmatpush.msra.mxu0 %v583
        %4294 = vmatpush.msra.mxu0 %v579
        %4295 = vmatpush.msra.mxu0 %v575
        %4296 = vmatpush.msra.mxu0 %v571
        %4297 = vmatpush.msra.mxu0 %v567
        %4298 = vmatpush.msra.mxu0 %v563
        %4299 = vmatpush.msra.mxu0 %v559
        %4300 = vmatpush.msra.mxu0 %v555
        %4301 = vmatpush.msra.mxu0 %v551
        %4302 = vmatpush.msra.mxu0 %v547
        %4303 = vmatpush.msra.mxu0 %v543
        %4304 = vmatmul.f32.gmra.mxu0 %v2731
        %v4305 = vpop.f32.mrf.mxu0
        %v4306 = vadd.f32 %v4286, %v4305
        %4307 = vdwg.mxu0
        %4308 = vmatpush.msra.mxu0 %v667
        %4309 = vmatpush.msra.mxu0 %v663
        %4310 = vmatpush.msra.mxu0 %v659
        %4311 = vmatpush.msra.mxu0 %v655
        %4312 = vmatpush.msra.mxu0 %v651
        %4313 = vmatpush.msra.mxu0 %v647
        %4314 = vmatpush.msra.mxu0 %v643
        %4315 = vmatpush.msra.mxu0 %v639
        %4316 = vmatpush.msra.mxu0 %v635
        %4317 = vmatpush.msra.mxu0 %v631
        %4318 = vmatpush.msra.mxu0 %v627
        %4319 = vmatpush.msra.mxu0 %v623
        %4320 = vmatpush.msra.mxu0 %v619
        %4321 = vmatpush.msra.mxu0 %v615
        %4322 = vmatpush.msra.mxu0 %v611
        %4323 = vmatpush.msra.mxu0 %v607
        %4324 = vmatmul.f32.gmra.mxu0 %v2732
        %v4325 = vpop.f32.mrf.mxu0
        %v4326 = vadd.f32 %v4306, %v4325
        %4327 = vdwg.mxu0
        %4328 = vmatpush.msra.mxu0 %v731
        %4329 = vmatpush.msra.mxu0 %v727
        %4330 = vmatpush.msra.mxu0 %v723
        %4331 = vmatpush.msra.mxu0 %v719
        %4332 = vmatpush.msra.mxu0 %v715
        %4333 = vmatpush.msra.mxu0 %v711
        %4334 = vmatpush.msra.mxu0 %v707
        %4335 = vmatpush.msra.mxu0 %v703
        %4336 = vmatpush.msra.mxu0 %v699
        %4337 = vmatpush.msra.mxu0 %v695
        %4338 = vmatpush.msra.mxu0 %v691
        %4339 = vmatpush.msra.mxu0 %v687
        %4340 = vmatpush.msra.mxu0 %v683
        %4341 = vmatpush.msra.mxu0 %v679
        %4342 = vmatpush.msra.mxu0 %v675
        %4343 = vmatpush.msra.mxu0 %v671
        %4344 = vmatmul.f32.gmra.mxu0 %v2733
        %v4345 = vpop.f32.mrf.mxu0
        %v4346 = vadd.f32 %v4326, %v4345
        %4347 = vdwg.mxu0
        %4348 = vmatpush.msra.mxu0 %v795
        %4349 = vmatpush.msra.mxu0 %v791
        %4350 = vmatpush.msra.mxu0 %v787
        %4351 = vmatpush.msra.mxu0 %v783
        %4352 = vmatpush.msra.mxu0 %v779
        %4353 = vmatpush.msra.mxu0 %v775
        %4354 = vmatpush.msra.mxu0 %v771
        %4355 = vmatpush.msra.mxu0 %v767
        %4356 = vmatpush.msra.mxu0 %v763
        %4357 = vmatpush.msra.mxu0 %v759
        %4358 = vmatpush.msra.mxu0 %v755
        %4359 = vmatpush.msra.mxu0 %v751
        %4360 = vmatpush.msra.mxu0 %v747
        %4361 = vmatpush.msra.mxu0 %v743
        %4362 = vmatpush.msra.mxu0 %v739
        %4363 = vmatpush.msra.mxu0 %v735
        %4364 = vmatmul.f32.gmra.mxu0 %v2734
        %v4365 = vpop.f32.mrf.mxu0
        %v4366 = vadd.f32 %v4346, %v4365
        %4367 = vdwg.mxu0
        %4368 = vmatpush.msra.mxu0 %v859
        %4369 = vmatpush.msra.mxu0 %v855
        %4370 = vmatpush.msra.mxu0 %v851
        %4371 = vmatpush.msra.mxu0 %v847
        %4372 = vmatpush.msra.mxu0 %v843
        %4373 = vmatpush.msra.mxu0 %v839
        %4374 = vmatpush.msra.mxu0 %v835
        %4375 = vmatpush.msra.mxu0 %v831
        %4376 = vmatpush.msra.mxu0 %v827
        %4377 = vmatpush.msra.mxu0 %v823
        %4378 = vmatpush.msra.mxu0 %v819
        %4379 = vmatpush.msra.mxu0 %v815
        %4380 = vmatpush.msra.mxu0 %v811
        %4381 = vmatpush.msra.mxu0 %v807
        %4382 = vmatpush.msra.mxu0 %v803
        %4383 = vmatpush.msra.mxu0 %v799
        %4384 = vmatmul.f32.gmra.mxu0 %v2735
        %v4385 = vpop.f32.mrf.mxu0
        %v4386 = vadd.f32 %v4366, %v4385
        %4387 = vdwg.mxu0
        %4388 = vmatpush.msra.mxu0 %v923
        %4389 = vmatpush.msra.mxu0 %v919
        %4390 = vmatpush.msra.mxu0 %v915
        %4391 = vmatpush.msra.mxu0 %v911
        %4392 = vmatpush.msra.mxu0 %v907
        %4393 = vmatpush.msra.mxu0 %v903
        %4394 = vmatpush.msra.mxu0 %v899
        %4395 = vmatpush.msra.mxu0 %v895
        %4396 = vmatpush.msra.mxu0 %v891
        %4397 = vmatpush.msra.mxu0 %v887
        %4398 = vmatpush.msra.mxu0 %v883
        %4399 = vmatpush.msra.mxu0 %v879
        %4400 = vmatpush.msra.mxu0 %v875
        %4401 = vmatpush.msra.mxu0 %v871
        %4402 = vmatpush.msra.mxu0 %v867
        %4403 = vmatpush.msra.mxu0 %v863
        %4404 = vmatmul.f32.gmra.mxu0 %v2736
        %v4405 = vpop.f32.mrf.mxu0
        %v4406 = vadd.f32 %v4386, %v4405
        %4407 = vdwg.mxu0
        %4408 = vmatpush.msra.mxu0 %v987
        %4409 = vmatpush.msra.mxu0 %v983
        %4410 = vmatpush.msra.mxu0 %v979
        %4411 = vmatpush.msra.mxu0 %v975
        %4412 = vmatpush.msra.mxu0 %v971
        %4413 = vmatpush.msra.mxu0 %v967
        %4414 = vmatpush.msra.mxu0 %v963
        %4415 = vmatpush.msra.mxu0 %v959
        %4416 = vmatpush.msra.mxu0 %v955
        %4417 = vmatpush.msra.mxu0 %v951
        %4418 = vmatpush.msra.mxu0 %v947
        %4419 = vmatpush.msra.mxu0 %v943
        %4420 = vmatpush.msra.mxu0 %v939
        %4421 = vmatpush.msra.mxu0 %v935
        %4422 = vmatpush.msra.mxu0 %v931
        %4423 = vmatpush.msra.mxu0 %v927
        %4424 = vmatmul.f32.gmra.mxu0 %v2739
        %v4425 = vpop.f32.mrf.mxu0
        %v4426 = vadd.f32 %v4406, %v4425
        %4427 = vdwg.mxu0
        %4428 = vmatpush.msra.mxu0 %v1051
        %4429 = vmatpush.msra.mxu0 %v1047
        %4430 = vmatpush.msra.mxu0 %v1043
        %4431 = vmatpush.msra.mxu0 %v1039
        %4432 = vmatpush.msra.mxu0 %v1035
        %4433 = vmatpush.msra.mxu0 %v1031
        %4434 = vmatpush.msra.mxu0 %v1027
        %4435 = vmatpush.msra.mxu0 %v1023
        %4436 = vmatpush.msra.mxu0 %v1019
        %4437 = vmatpush.msra.mxu0 %v1015
        %4438 = vmatpush.msra.mxu0 %v1011
        %4439 = vmatpush.msra.mxu0 %v1007
        %4440 = vmatpush.msra.mxu0 %v1003
        %4441 = vmatpush.msra.mxu0 %v999
        %4442 = vmatpush.msra.mxu0 %v995
        %4443 = vmatpush.msra.mxu0 %v991
        %4444 = vmatmul.f32.gmra.mxu0 %v2740
        %v4445 = vpop.f32.mrf.mxu0
        %v4446 = vadd.f32 %v4426, %v4445
        %4447 = vdwg.mxu0
        %4448 = vmatpush.msra.mxu0 %v1115
        %4449 = vmatpush.msra.mxu0 %v1111
        %4450 = vmatpush.msra.mxu0 %v1107
        %4451 = vmatpush.msra.mxu0 %v1103
        %4452 = vmatpush.msra.mxu0 %v1099
        %4453 = vmatpush.msra.mxu0 %v1095
        %4454 = vmatpush.msra.mxu0 %v1091
        %4455 = vmatpush.msra.mxu0 %v1087
        %4456 = vmatpush.msra.mxu0 %v1083
        %4457 = vmatpush.msra.mxu0 %v1079
        %4458 = vmatpush.msra.mxu0 %v1075
        %4459 = vmatpush.msra.mxu0 %v1071
        %4460 = vmatpush.msra.mxu0 %v1067
        %4461 = vmatpush.msra.mxu0 %v1063
        %4462 = vmatpush.msra.mxu0 %v1059
        %4463 = vmatpush.msra.mxu0 %v1055
        %4464 = vmatmul.f32.gmra.mxu0 %v2741
        %v4465 = vpop.f32.mrf.mxu0
        %v4466 = vadd.f32 %v4446, %v4465
        %4467 = vdwg.mxu0
        %4468 = vmatpush.msra.mxu0 %v1179
        %4469 = vmatpush.msra.mxu0 %v1175
        %4470 = vmatpush.msra.mxu0 %v1171
        %4471 = vmatpush.msra.mxu0 %v1167
        %4472 = vmatpush.msra.mxu0 %v1163
        %4473 = vmatpush.msra.mxu0 %v1159
        %4474 = vmatpush.msra.mxu0 %v1155
        %4475 = vmatpush.msra.mxu0 %v1151
        %4476 = vmatpush.msra.mxu0 %v1147
        %4477 = vmatpush.msra.mxu0 %v1143
        %4478 = vmatpush.msra.mxu0 %v1139
        %4479 = vmatpush.msra.mxu0 %v1135
        %4480 = vmatpush.msra.mxu0 %v1131
        %4481 = vmatpush.msra.mxu0 %v1127
        %4482 = vmatpush.msra.mxu0 %v1123
        %4483 = vmatpush.msra.mxu0 %v1119
        %4484 = vmatmul.f32.gmra.mxu0 %v2742
        %v4485 = vpop.f32.mrf.mxu0
        %v4486 = vadd.f32 %v4466, %v4485
        %4487 = vdwg.mxu0
        %4488 = vmatpush.msra.mxu0 %v1243
        %4489 = vmatpush.msra.mxu0 %v1239
        %4490 = vmatpush.msra.mxu0 %v1235
        %4491 = vmatpush.msra.mxu0 %v1231
        %4492 = vmatpush.msra.mxu0 %v1227
        %4493 = vmatpush.msra.mxu0 %v1223
        %4494 = vmatpush.msra.mxu0 %v1219
        %4495 = vmatpush.msra.mxu0 %v1215
        %4496 = vmatpush.msra.mxu0 %v1211
        %4497 = vmatpush.msra.mxu0 %v1207
        %4498 = vmatpush.msra.mxu0 %v1203
        %4499 = vmatpush.msra.mxu0 %v1199
        %4500 = vmatpush.msra.mxu0 %v1195
        %4501 = vmatpush.msra.mxu0 %v1191
        %4502 = vmatpush.msra.mxu0 %v1187
        %4503 = vmatpush.msra.mxu0 %v1183
        %4504 = vmatmul.f32.gmra.mxu0 %v2743
        %v4505 = vpop.f32.mrf.mxu0
        %v4506 = vadd.f32 %v4486, %v4505
        %4507 = vdwg.mxu0
        %4508 = vmatpush.msra.mxu0 %v1307
        %4509 = vmatpush.msra.mxu0 %v1303
        %4510 = vmatpush.msra.mxu0 %v1299
        %4511 = vmatpush.msra.mxu0 %v1295
        %4512 = vmatpush.msra.mxu0 %v1291
        %4513 = vmatpush.msra.mxu0 %v1287
        %4514 = vmatpush.msra.mxu0 %v1283
        %4515 = vmatpush.msra.mxu0 %v1279
        %4516 = vmatpush.msra.mxu0 %v1275
        %4517 = vmatpush.msra.mxu0 %v1271
        %4518 = vmatpush.msra.mxu0 %v1267
        %4519 = vmatpush.msra.mxu0 %v1263
        %4520 = vmatpush.msra.mxu0 %v1259
        %4521 = vmatpush.msra.mxu0 %v1255
        %4522 = vmatpush.msra.mxu0 %v1251
        %4523 = vmatpush.msra.mxu0 %v1247
        %4524 = vmatmul.f32.gmra.mxu0 %v2744
        %v4525 = vpop.f32.mrf.mxu0
        %v4526 = vadd.f32 %v4506, %v4525
        %4527 = vdwg.mxu0
        %4528 = vmatpush.msra.mxu0 %v1371
        %4529 = vmatpush.msra.mxu0 %v1367
        %4530 = vmatpush.msra.mxu0 %v1363
        %4531 = vmatpush.msra.mxu0 %v1359
        %4532 = vmatpush.msra.mxu0 %v1355
        %4533 = vmatpush.msra.mxu0 %v1351
        %4534 = vmatpush.msra.mxu0 %v1347
        %4535 = vmatpush.msra.mxu0 %v1343
        %4536 = vmatpush.msra.mxu0 %v1339
        %4537 = vmatpush.msra.mxu0 %v1335
        %4538 = vmatpush.msra.mxu0 %v1331
        %4539 = vmatpush.msra.mxu0 %v1327
        %4540 = vmatpush.msra.mxu0 %v1323
        %4541 = vmatpush.msra.mxu0 %v1319
        %4542 = vmatpush.msra.mxu0 %v1315
        %4543 = vmatpush.msra.mxu0 %v1311
        %4544 = vmatmul.f32.gmra.mxu0 %v2745
        %v4545 = vpop.f32.mrf.mxu0
        %v4546 = vadd.f32 %v4526, %v4545
        %4547 = vdwg.mxu0
        %4548 = vmatpush.msra.mxu0 %v1435
        %4549 = vmatpush.msra.mxu0 %v1431
        %4550 = vmatpush.msra.mxu0 %v1427
        %4551 = vmatpush.msra.mxu0 %v1423
        %4552 = vmatpush.msra.mxu0 %v1419
        %4553 = vmatpush.msra.mxu0 %v1415
        %4554 = vmatpush.msra.mxu0 %v1411
        %4555 = vmatpush.msra.mxu0 %v1407
        %4556 = vmatpush.msra.mxu0 %v1403
        %4557 = vmatpush.msra.mxu0 %v1399
        %4558 = vmatpush.msra.mxu0 %v1395
        %4559 = vmatpush.msra.mxu0 %v1391
        %4560 = vmatpush.msra.mxu0 %v1387
        %4561 = vmatpush.msra.mxu0 %v1383
        %4562 = vmatpush.msra.mxu0 %v1379
        %4563 = vmatpush.msra.mxu0 %v1375
        %4564 = vmatmul.f32.gmra.mxu0 %v2746
        %v4565 = vpop.f32.mrf.mxu0
        %v4566 = vadd.f32 %v4546, %v4565
        %4567 = vdwg.mxu0
        %4568 = vmatpush.msra.mxu0 %v1499
        %4569 = vmatpush.msra.mxu0 %v1495
        %4570 = vmatpush.msra.mxu0 %v1491
        %4571 = vmatpush.msra.mxu0 %v1487
        %4572 = vmatpush.msra.mxu0 %v1483
        %4573 = vmatpush.msra.mxu0 %v1479
        %4574 = vmatpush.msra.mxu0 %v1475
        %4575 = vmatpush.msra.mxu0 %v1471
        %4576 = vmatpush.msra.mxu0 %v1467
        %4577 = vmatpush.msra.mxu0 %v1463
        %4578 = vmatpush.msra.mxu0 %v1459
        %4579 = vmatpush.msra.mxu0 %v1455
        %4580 = vmatpush.msra.mxu0 %v1451
        %4581 = vmatpush.msra.mxu0 %v1447
        %4582 = vmatpush.msra.mxu0 %v1443
        %4583 = vmatpush.msra.mxu0 %v1439
        %4584 = vmatmul.f32.gmra.mxu0 %v2749
        %v4585 = vpop.f32.mrf.mxu0
        %v4586 = vadd.f32 %v4566, %v4585
        %4587 = vdwg.mxu0
        %4588 = vmatpush.msra.mxu0 %v1563
        %4589 = vmatpush.msra.mxu0 %v1559
        %4590 = vmatpush.msra.mxu0 %v1555
        %4591 = vmatpush.msra.mxu0 %v1551
        %4592 = vmatpush.msra.mxu0 %v1547
        %4593 = vmatpush.msra.mxu0 %v1543
        %4594 = vmatpush.msra.mxu0 %v1539
        %4595 = vmatpush.msra.mxu0 %v1535
        %4596 = vmatpush.msra.mxu0 %v1531
        %4597 = vmatpush.msra.mxu0 %v1527
        %4598 = vmatpush.msra.mxu0 %v1523
        %4599 = vmatpush.msra.mxu0 %v1519
        %4600 = vmatpush.msra.mxu0 %v1515
        %4601 = vmatpush.msra.mxu0 %v1511
        %4602 = vmatpush.msra.mxu0 %v1507
        %4603 = vmatpush.msra.mxu0 %v1503
        %4604 = vmatmul.f32.gmra.mxu0 %v2750
        %v4605 = vpop.f32.mrf.mxu0
        %v4606 = vadd.f32 %v4586, %v4605
        %4607 = vdwg.mxu0
        %4608 = vmatpush.msra.mxu0 %v1627
        %4609 = vmatpush.msra.mxu0 %v1623
        %4610 = vmatpush.msra.mxu0 %v1619
        %4611 = vmatpush.msra.mxu0 %v1615
        %4612 = vmatpush.msra.mxu0 %v1611
        %4613 = vmatpush.msra.mxu0 %v1607
        %4614 = vmatpush.msra.mxu0 %v1603
        %4615 = vmatpush.msra.mxu0 %v1599
        %4616 = vmatpush.msra.mxu0 %v1595
        %4617 = vmatpush.msra.mxu0 %v1591
        %4618 = vmatpush.msra.mxu0 %v1587
        %4619 = vmatpush.msra.mxu0 %v1583
        %4620 = vmatpush.msra.mxu0 %v1579
        %4621 = vmatpush.msra.mxu0 %v1575
        %4622 = vmatpush.msra.mxu0 %v1571
        %4623 = vmatpush.msra.mxu0 %v1567
        %4624 = vmatmul.f32.gmra.mxu0 %v2751
        %v4625 = vpop.f32.mrf.mxu0
        %v4626 = vadd.f32 %v4606, %v4625
        %4627 = vdwg.mxu0
        %4628 = vmatpush.msra.mxu0 %v1691
        %4629 = vmatpush.msra.mxu0 %v1687
        %4630 = vmatpush.msra.mxu0 %v1683
        %4631 = vmatpush.msra.mxu0 %v1679
        %4632 = vmatpush.msra.mxu0 %v1675
        %4633 = vmatpush.msra.mxu0 %v1671
        %4634 = vmatpush.msra.mxu0 %v1667
        %4635 = vmatpush.msra.mxu0 %v1663
        %4636 = vmatpush.msra.mxu0 %v1659
        %4637 = vmatpush.msra.mxu0 %v1655
        %4638 = vmatpush.msra.mxu0 %v1651
        %4639 = vmatpush.msra.mxu0 %v1647
        %4640 = vmatpush.msra.mxu0 %v1643
        %4641 = vmatpush.msra.mxu0 %v1639
        %4642 = vmatpush.msra.mxu0 %v1635
        %4643 = vmatpush.msra.mxu0 %v1631
        %4644 = vmatmul.f32.gmra.mxu0 %v2752
        %v4645 = vpop.f32.mrf.mxu0
        %v4646 = vadd.f32 %v4626, %v4645
        %4647 = vdwg.mxu0
        %4648 = vmatpush.msra.mxu0 %v1755
        %4649 = vmatpush.msra.mxu0 %v1751
        %4650 = vmatpush.msra.mxu0 %v1747
        %4651 = vmatpush.msra.mxu0 %v1743
        %4652 = vmatpush.msra.mxu0 %v1739
        %4653 = vmatpush.msra.mxu0 %v1735
        %4654 = vmatpush.msra.mxu0 %v1731
        %4655 = vmatpush.msra.mxu0 %v1727
        %4656 = vmatpush.msra.mxu0 %v1723
        %4657 = vmatpush.msra.mxu0 %v1719
        %4658 = vmatpush.msra.mxu0 %v1715
        %4659 = vmatpush.msra.mxu0 %v1711
        %4660 = vmatpush.msra.mxu0 %v1707
        %4661 = vmatpush.msra.mxu0 %v1703
        %4662 = vmatpush.msra.mxu0 %v1699
        %4663 = vmatpush.msra.mxu0 %v1695
        %4664 = vmatmul.f32.gmra.mxu0 %v2753
        %v4665 = vpop.f32.mrf.mxu0
        %v4666 = vadd.f32 %v4646, %v4665
        %4667 = vdwg.mxu0
        %4668 = vmatpush.msra.mxu0 %v1819
        %4669 = vmatpush.msra.mxu0 %v1815
        %4670 = vmatpush.msra.mxu0 %v1811
        %4671 = vmatpush.msra.mxu0 %v1807
        %4672 = vmatpush.msra.mxu0 %v1803
        %4673 = vmatpush.msra.mxu0 %v1799
        %4674 = vmatpush.msra.mxu0 %v1795
        %4675 = vmatpush.msra.mxu0 %v1791
        %4676 = vmatpush.msra.mxu0 %v1787
        %4677 = vmatpush.msra.mxu0 %v1783
        %4678 = vmatpush.msra.mxu0 %v1779
        %4679 = vmatpush.msra.mxu0 %v1775
        %4680 = vmatpush.msra.mxu0 %v1771
        %4681 = vmatpush.msra.mxu0 %v1767
        %4682 = vmatpush.msra.mxu0 %v1763
        %4683 = vmatpush.msra.mxu0 %v1759
        %4684 = vmatmul.f32.gmra.mxu0 %v2754
        %v4685 = vpop.f32.mrf.mxu0
        %v4686 = vadd.f32 %v4666, %v4685
        %4687 = vdwg.mxu0
        %4688 = vmatpush.msra.mxu0 %v1883
        %4689 = vmatpush.msra.mxu0 %v1879
        %4690 = vmatpush.msra.mxu0 %v1875
        %4691 = vmatpush.msra.mxu0 %v1871
        %4692 = vmatpush.msra.mxu0 %v1867
        %4693 = vmatpush.msra.mxu0 %v1863
        %4694 = vmatpush.msra.mxu0 %v1859
        %4695 = vmatpush.msra.mxu0 %v1855
        %4696 = vmatpush.msra.mxu0 %v1851
        %4697 = vmatpush.msra.mxu0 %v1847
        %4698 = vmatpush.msra.mxu0 %v1843
        %4699 = vmatpush.msra.mxu0 %v1839
        %4700 = vmatpush.msra.mxu0 %v1835
        %4701 = vmatpush.msra.mxu0 %v1831
        %4702 = vmatpush.msra.mxu0 %v1827
        %4703 = vmatpush.msra.mxu0 %v1823
        %4704 = vmatmul.f32.gmra.mxu0 %v2755
        %v4705 = vpop.f32.mrf.mxu0
        %v4706 = vadd.f32 %v4686, %v4705
        %4707 = vdwg.mxu0
        %4708 = vmatpush.msra.mxu0 %v1947
        %4709 = vmatpush.msra.mxu0 %v1943
        %4710 = vmatpush.msra.mxu0 %v1939
        %4711 = vmatpush.msra.mxu0 %v1935
        %4712 = vmatpush.msra.mxu0 %v1931
        %4713 = vmatpush.msra.mxu0 %v1927
        %4714 = vmatpush.msra.mxu0 %v1923
        %4715 = vmatpush.msra.mxu0 %v1919
        %4716 = vmatpush.msra.mxu0 %v1915
        %4717 = vmatpush.msra.mxu0 %v1911
        %4718 = vmatpush.msra.mxu0 %v1907
        %4719 = vmatpush.msra.mxu0 %v1903
        %4720 = vmatpush.msra.mxu0 %v1899
        %4721 = vmatpush.msra.mxu0 %v1895
        %4722 = vmatpush.msra.mxu0 %v1891
        %4723 = vmatpush.msra.mxu0 %v1887
        %4724 = vmatmul.f32.gmra.mxu0 %v2756
        %v4725 = vpop.f32.mrf.mxu0
        %v4726 = vadd.f32 %v4706, %v4725
        %4727 = vdwg.mxu0
        %4728 = vmatpush.msra.mxu0 %v2011
        %4729 = vmatpush.msra.mxu0 %v2007
        %4730 = vmatpush.msra.mxu0 %v2003
        %4731 = vmatpush.msra.mxu0 %v1999
        %4732 = vmatpush.msra.mxu0 %v1995
        %4733 = vmatpush.msra.mxu0 %v1991
        %4734 = vmatpush.msra.mxu0 %v1987
        %4735 = vmatpush.msra.mxu0 %v1983
        %4736 = vmatpush.msra.mxu0 %v1979
        %4737 = vmatpush.msra.mxu0 %v1975
        %4738 = vmatpush.msra.mxu0 %v1971
        %4739 = vmatpush.msra.mxu0 %v1967
        %4740 = vmatpush.msra.mxu0 %v1963
        %4741 = vmatpush.msra.mxu0 %v1959
        %4742 = vmatpush.msra.mxu0 %v1955
        %4743 = vmatpush.msra.mxu0 %v1951
        %4744 = vmatmul.f32.gmra.mxu0 %v2759
        %v4745 = vpop.f32.mrf.mxu0
        %v4746 = vadd.f32 %v4726, %v4745
        %4747 = vdwg.mxu0
        %4748 = vmatpush.msra.mxu0 %v2075
        %4749 = vmatpush.msra.mxu0 %v2071
        %4750 = vmatpush.msra.mxu0 %v2067
        %4751 = vmatpush.msra.mxu0 %v2063
        %4752 = vmatpush.msra.mxu0 %v2059
        %4753 = vmatpush.msra.mxu0 %v2055
        %4754 = vmatpush.msra.mxu0 %v2051
        %4755 = vmatpush.msra.mxu0 %v2047
        %4756 = vmatpush.msra.mxu0 %v2043
        %4757 = vmatpush.msra.mxu0 %v2039
        %4758 = vmatpush.msra.mxu0 %v2035
        %4759 = vmatpush.msra.mxu0 %v2031
        %4760 = vmatpush.msra.mxu0 %v2027
        %4761 = vmatpush.msra.mxu0 %v2023
        %4762 = vmatpush.msra.mxu0 %v2019
        %4763 = vmatpush.msra.mxu0 %v2015
        %4764 = vmatmul.f32.gmra.mxu0 %v2760
        %v4765 = vpop.f32.mrf.mxu0
        %v4766 = vadd.f32 %v4746, %v4765
        %4767 = vdwg.mxu0
        %4768 = vmatpush.msra.mxu0 %v2139
        %4769 = vmatpush.msra.mxu0 %v2135
        %4770 = vmatpush.msra.mxu0 %v2131
        %4771 = vmatpush.msra.mxu0 %v2127
        %4772 = vmatpush.msra.mxu0 %v2123
        %4773 = vmatpush.msra.mxu0 %v2119
        %4774 = vmatpush.msra.mxu0 %v2115
        %4775 = vmatpush.msra.mxu0 %v2111
        %4776 = vmatpush.msra.mxu0 %v2107
        %4777 = vmatpush.msra.mxu0 %v2103
        %4778 = vmatpush.msra.mxu0 %v2099
        %4779 = vmatpush.msra.mxu0 %v2095
        %4780 = vmatpush.msra.mxu0 %v2091
        %4781 = vmatpush.msra.mxu0 %v2087
        %4782 = vmatpush.msra.mxu0 %v2083
        %4783 = vmatpush.msra.mxu0 %v2079
        %4784 = vmatmul.f32.gmra.mxu0 %v2761
        %v4785 = vpop.f32.mrf.mxu0
        %v4786 = vadd.f32 %v4766, %v4785
        %4787 = vdwg.mxu0
        %4788 = vmatpush.msra.mxu0 %v2203
        %4789 = vmatpush.msra.mxu0 %v2199
        %4790 = vmatpush.msra.mxu0 %v2195
        %4791 = vmatpush.msra.mxu0 %v2191
        %4792 = vmatpush.msra.mxu0 %v2187
        %4793 = vmatpush.msra.mxu0 %v2183
        %4794 = vmatpush.msra.mxu0 %v2179
        %4795 = vmatpush.msra.mxu0 %v2175
        %4796 = vmatpush.msra.mxu0 %v2171
        %4797 = vmatpush.msra.mxu0 %v2167
        %4798 = vmatpush.msra.mxu0 %v2163
        %4799 = vmatpush.msra.mxu0 %v2159
        %4800 = vmatpush.msra.mxu0 %v2155
        %4801 = vmatpush.msra.mxu0 %v2151
        %4802 = vmatpush.msra.mxu0 %v2147
        %4803 = vmatpush.msra.mxu0 %v2143
        %4804 = vmatmul.f32.gmra.mxu0 %v2762
        %v4805 = vpop.f32.mrf.mxu0
        %v4806 = vadd.f32 %v4786, %v4805
        %4807 = vdwg.mxu0
        %4808 = vmatpush.msra.mxu0 %v2267
        %4809 = vmatpush.msra.mxu0 %v2263
        %4810 = vmatpush.msra.mxu0 %v2259
        %4811 = vmatpush.msra.mxu0 %v2255
        %4812 = vmatpush.msra.mxu0 %v2251
        %4813 = vmatpush.msra.mxu0 %v2247
        %4814 = vmatpush.msra.mxu0 %v2243
        %4815 = vmatpush.msra.mxu0 %v2239
        %4816 = vmatpush.msra.mxu0 %v2235
        %4817 = vmatpush.msra.mxu0 %v2231
        %4818 = vmatpush.msra.mxu0 %v2227
        %4819 = vmatpush.msra.mxu0 %v2223
        %4820 = vmatpush.msra.mxu0 %v2219
        %4821 = vmatpush.msra.mxu0 %v2215
        %4822 = vmatpush.msra.mxu0 %v2211
        %4823 = vmatpush.msra.mxu0 %v2207
        %4824 = vmatmul.f32.gmra.mxu0 %v2763
        %v4825 = vpop.f32.mrf.mxu0
        %v4826 = vadd.f32 %v4806, %v4825
        %4827 = vdwg.mxu0
        %4828 = vmatpush.msra.mxu0 %v2331
        %4829 = vmatpush.msra.mxu0 %v2327
        %4830 = vmatpush.msra.mxu0 %v2323
        %4831 = vmatpush.msra.mxu0 %v2319
        %4832 = vmatpush.msra.mxu0 %v2315
        %4833 = vmatpush.msra.mxu0 %v2311
        %4834 = vmatpush.msra.mxu0 %v2307
        %4835 = vmatpush.msra.mxu0 %v2303
        %4836 = vmatpush.msra.mxu0 %v2299
        %4837 = vmatpush.msra.mxu0 %v2295
        %4838 = vmatpush.msra.mxu0 %v2291
        %4839 = vmatpush.msra.mxu0 %v2287
        %4840 = vmatpush.msra.mxu0 %v2283
        %4841 = vmatpush.msra.mxu0 %v2279
        %4842 = vmatpush.msra.mxu0 %v2275
        %4843 = vmatpush.msra.mxu0 %v2271
        %4844 = vmatmul.f32.gmra.mxu0 %v2764
        %v4845 = vpop.f32.mrf.mxu0
        %v4846 = vadd.f32 %v4826, %v4845
        %4847 = vdwg.mxu0
        %4848 = vmatpush.msra.mxu0 %v2395
        %4849 = vmatpush.msra.mxu0 %v2391
        %4850 = vmatpush.msra.mxu0 %v2387
        %4851 = vmatpush.msra.mxu0 %v2383
        %4852 = vmatpush.msra.mxu0 %v2379
        %4853 = vmatpush.msra.mxu0 %v2375
        %4854 = vmatpush.msra.mxu0 %v2371
        %4855 = vmatpush.msra.mxu0 %v2367
        %4856 = vmatpush.msra.mxu0 %v2363
        %4857 = vmatpush.msra.mxu0 %v2359
        %4858 = vmatpush.msra.mxu0 %v2355
        %4859 = vmatpush.msra.mxu0 %v2351
        %4860 = vmatpush.msra.mxu0 %v2347
        %4861 = vmatpush.msra.mxu0 %v2343
        %4862 = vmatpush.msra.mxu0 %v2339
        %4863 = vmatpush.msra.mxu0 %v2335
        %4864 = vmatmul.f32.gmra.mxu0 %v2765
        %v4865 = vpop.f32.mrf.mxu0
        %v4866 = vadd.f32 %v4846, %v4865
        %4867 = vdwg.mxu0
        %4868 = vmatpush.msra.mxu0 %v2459
        %4869 = vmatpush.msra.mxu0 %v2455
        %4870 = vmatpush.msra.mxu0 %v2451
        %4871 = vmatpush.msra.mxu0 %v2447
        %4872 = vmatpush.msra.mxu0 %v2443
        %4873 = vmatpush.msra.mxu0 %v2439
        %4874 = vmatpush.msra.mxu0 %v2435
        %4875 = vmatpush.msra.mxu0 %v2431
        %4876 = vmatpush.msra.mxu0 %v2427
        %4877 = vmatpush.msra.mxu0 %v2423
        %4878 = vmatpush.msra.mxu0 %v2419
        %4879 = vmatpush.msra.mxu0 %v2415
        %4880 = vmatpush.msra.mxu0 %v2411
        %4881 = vmatpush.msra.mxu0 %v2407
        %4882 = vmatpush.msra.mxu0 %v2403
        %4883 = vmatpush.msra.mxu0 %v2399
        %4884 = vmatmul.f32.gmra.mxu0 %v2766
        %v4885 = vpop.f32.mrf.mxu0
        %v4886 = vadd.f32 %v4866, %v4885
        %4887 = vdwg.mxu0
        %4888 = vmatpush.msra.mxu0 %v2523
        %4889 = vmatpush.msra.mxu0 %v2519
        %4890 = vmatpush.msra.mxu0 %v2515
        %4891 = vmatpush.msra.mxu0 %v2511
        %4892 = vmatpush.msra.mxu0 %v2507
        %4893 = vmatpush.msra.mxu0 %v2503
        %4894 = vmatpush.msra.mxu0 %v2499
        %4895 = vmatpush.msra.mxu0 %v2495
        %4896 = vmatpush.msra.mxu0 %v2491
        %4897 = vmatpush.msra.mxu0 %v2487
        %4898 = vmatpush.msra.mxu0 %v2483
        %4899 = vmatpush.msra.mxu0 %v2479
        %4900 = vmatpush.msra.mxu0 %v2475
        %4901 = vmatpush.msra.mxu0 %v2471
        %4902 = vmatpush.msra.mxu0 %v2467
        %4903 = vmatpush.msra.mxu0 %v2463
        %4904 = vmatmul.f32.gmra.mxu0 %v2768
        %v4905 = vpop.f32.mrf.mxu0
        %v4906 = vadd.f32 %v4886, %v4905
        %4907 = vdwg.mxu0
        %4908 = vmatpush.msra.mxu0 %v2587
        %4909 = vmatpush.msra.mxu0 %v2583
        %4910 = vmatpush.msra.mxu0 %v2579
        %4911 = vmatpush.msra.mxu0 %v2575
        %4912 = vmatpush.msra.mxu0 %v2571
        %4913 = vmatpush.msra.mxu0 %v2567
        %4914 = vmatpush.msra.mxu0 %v2563
        %4915 = vmatpush.msra.mxu0 %v2559
        %4916 = vmatpush.msra.mxu0 %v2555
        %4917 = vmatpush.msra.mxu0 %v2551
        %4918 = vmatpush.msra.mxu0 %v2547
        %4919 = vmatpush.msra.mxu0 %v2543
        %4920 = vmatpush.msra.mxu0 %v2539
        %4921 = vmatpush.msra.mxu0 %v2535
        %4922 = vmatpush.msra.mxu0 %v2531
        %4923 = vmatpush.msra.mxu0 %v2527
        %4924 = vmatmul.f32.gmra.mxu0 %v2769
        %v4925 = vpop.f32.mrf.mxu0
        %v4926 = vadd.f32 %v4906, %v4925
        %4927 = vdwg.mxu0
        %4928 = vmatpush.msra.mxu0 %v2651
        %4929 = vmatpush.msra.mxu0 %v2647
        %4930 = vmatpush.msra.mxu0 %v2643
        %4931 = vmatpush.msra.mxu0 %v2639
        %4932 = vmatpush.msra.mxu0 %v2635
        %4933 = vmatpush.msra.mxu0 %v2631
        %4934 = vmatpush.msra.mxu0 %v2627
        %4935 = vmatpush.msra.mxu0 %v2623
        %4936 = vmatpush.msra.mxu0 %v2619
        %4937 = vmatpush.msra.mxu0 %v2615
        %4938 = vmatpush.msra.mxu0 %v2611
        %4939 = vmatpush.msra.mxu0 %v2607
        %4940 = vmatpush.msra.mxu0 %v2603
        %4941 = vmatpush.msra.mxu0 %v2599
        %4942 = vmatpush.msra.mxu0 %v2595
        %4943 = vmatpush.msra.mxu0 %v2591
        %4944 = vmatmul.f32.gmra.mxu0 %v2770
        %v4945 = vpop.f32.mrf.mxu0
        %v4946 = vadd.f32 %v4926, %v4945
        %4947 = vdwg.mxu0
        %4948 = vmatpush.msra.mxu0 %v2715
        %4949 = vmatpush.msra.mxu0 %v2711
        %4950 = vmatpush.msra.mxu0 %v2707
        %4951 = vmatpush.msra.mxu0 %v2703
        %4952 = vmatpush.msra.mxu0 %v2699
        %4953 = vmatpush.msra.mxu0 %v2695
        %4954 = vmatpush.msra.mxu0 %v2691
        %4955 = vmatpush.msra.mxu0 %v2687
        %4956 = vmatpush.msra.mxu0 %v2683
        %4957 = vmatpush.msra.mxu0 %v2679
        %4958 = vmatpush.msra.mxu0 %v2675
        %4959 = vmatpush.msra.mxu0 %v2671
        %4960 = vmatpush.msra.mxu0 %v2667
        %4961 = vmatpush.msra.mxu0 %v2663
        %4962 = vmatpush.msra.mxu0 %v2659
        %4963 = vmatpush.msra.mxu0 %v2655
        %4964 = vmatmul.f32.gmra.mxu0 %v2771
        %v4965 = vpop.f32.mrf.mxu0
        %v4966 = vadd.f32 %v4946, %v4965
        %4967 = vdwg.mxu0
        %4968 = vmatpush.msra.mxu0 %v476
        %4969 = vmatpush.msra.mxu0 %v472
        %4970 = vmatpush.msra.mxu0 %v468
        %4971 = vmatpush.msra.mxu0 %v464
        %4972 = vmatpush.msra.mxu0 %v460
        %4973 = vmatpush.msra.mxu0 %v456
        %4974 = vmatpush.msra.mxu0 %v452
        %4975 = vmatpush.msra.mxu0 %v448
        %4976 = vmatpush.msra.mxu0 %v444
        %4977 = vmatpush.msra.mxu0 %v440
        %4978 = vmatpush.msra.mxu0 %v436
        %4979 = vmatpush.msra.mxu0 %v432
        %4980 = vmatpush.msra.mxu0 %v428
        %4981 = vmatpush.msra.mxu0 %v424
        %4982 = vmatpush.msra.mxu0 %v420
        %4983 = vmatpush.msra.mxu0 %v416
        %4984 = vmatmul.f32.gmra.mxu0 %v2729
        %v4985 = vpop.f32.mrf.mxu0
        %v4986 = vadd.f32 0.0, %v4985
        %4987 = vdwg.mxu0
        %4988 = vmatpush.msra.mxu0 %v540
        %4989 = vmatpush.msra.mxu0 %v536
        %4990 = vmatpush.msra.mxu0 %v532
        %4991 = vmatpush.msra.mxu0 %v528
        %4992 = vmatpush.msra.mxu0 %v524
        %4993 = vmatpush.msra.mxu0 %v520
        %4994 = vmatpush.msra.mxu0 %v516
        %4995 = vmatpush.msra.mxu0 %v512
        %4996 = vmatpush.msra.mxu0 %v508
        %4997 = vmatpush.msra.mxu0 %v504
        %4998 = vmatpush.msra.mxu0 %v500
        %4999 = vmatpush.msra.mxu0 %v496
        %5000 = vmatpush.msra.mxu0 %v492
        %5001 = vmatpush.msra.mxu0 %v488
        %5002 = vmatpush.msra.mxu0 %v484
        %5003 = vmatpush.msra.mxu0 %v480
        %5004 = vmatmul.f32.gmra.mxu0 %v2730
        %v5005 = vpop.f32.mrf.mxu0
        %v5006 = vadd.f32 %v4986, %v5005
        %5007 = vdwg.mxu0
        %5008 = vmatpush.msra.mxu0 %v604
        %5009 = vmatpush.msra.mxu0 %v600
        %5010 = vmatpush.msra.mxu0 %v596
        %5011 = vmatpush.msra.mxu0 %v592
        %5012 = vmatpush.msra.mxu0 %v588
        %5013 = vmatpush.msra.mxu0 %v584
        %5014 = vmatpush.msra.mxu0 %v580
        %5015 = vmatpush.msra.mxu0 %v576
        %5016 = vmatpush.msra.mxu0 %v572
        %5017 = vmatpush.msra.mxu0 %v568
        %5018 = vmatpush.msra.mxu0 %v564
        %5019 = vmatpush.msra.mxu0 %v560
        %5020 = vmatpush.msra.mxu0 %v556
        %5021 = vmatpush.msra.mxu0 %v552
        %5022 = vmatpush.msra.mxu0 %v548
        %5023 = vmatpush.msra.mxu0 %v544
        %5024 = vmatmul.f32.gmra.mxu0 %v2731
        %v5025 = vpop.f32.mrf.mxu0
        %v5026 = vadd.f32 %v5006, %v5025
        %5027 = vdwg.mxu0
        %5028 = vmatpush.msra.mxu0 %v668
        %5029 = vmatpush.msra.mxu0 %v664
        %5030 = vmatpush.msra.mxu0 %v660
        %5031 = vmatpush.msra.mxu0 %v656
        %5032 = vmatpush.msra.mxu0 %v652
        %5033 = vmatpush.msra.mxu0 %v648
        %5034 = vmatpush.msra.mxu0 %v644
        %5035 = vmatpush.msra.mxu0 %v640
        %5036 = vmatpush.msra.mxu0 %v636
        %5037 = vmatpush.msra.mxu0 %v632
        %5038 = vmatpush.msra.mxu0 %v628
        %5039 = vmatpush.msra.mxu0 %v624
        %5040 = vmatpush.msra.mxu0 %v620
        %5041 = vmatpush.msra.mxu0 %v616
        %5042 = vmatpush.msra.mxu0 %v612
        %5043 = vmatpush.msra.mxu0 %v608
        %5044 = vmatmul.f32.gmra.mxu0 %v2732
        %v5045 = vpop.f32.mrf.mxu0
        %v5046 = vadd.f32 %v5026, %v5045
        %5047 = vdwg.mxu0
        %5048 = vmatpush.msra.mxu0 %v732
        %5049 = vmatpush.msra.mxu0 %v728
        %5050 = vmatpush.msra.mxu0 %v724
        %5051 = vmatpush.msra.mxu0 %v720
        %5052 = vmatpush.msra.mxu0 %v716
        %5053 = vmatpush.msra.mxu0 %v712
        %5054 = vmatpush.msra.mxu0 %v708
        %5055 = vmatpush.msra.mxu0 %v704
        %5056 = vmatpush.msra.mxu0 %v700
        %5057 = vmatpush.msra.mxu0 %v696
        %5058 = vmatpush.msra.mxu0 %v692
        %5059 = vmatpush.msra.mxu0 %v688
        %5060 = vmatpush.msra.mxu0 %v684
        %5061 = vmatpush.msra.mxu0 %v680
        %5062 = vmatpush.msra.mxu0 %v676
        %5063 = vmatpush.msra.mxu0 %v672
        %5064 = vmatmul.f32.gmra.mxu0 %v2733
        %v5065 = vpop.f32.mrf.mxu0
        %v5066 = vadd.f32 %v5046, %v5065
        %5067 = vdwg.mxu0
        %5068 = vmatpush.msra.mxu0 %v796
        %5069 = vmatpush.msra.mxu0 %v792
        %5070 = vmatpush.msra.mxu0 %v788
        %5071 = vmatpush.msra.mxu0 %v784
        %5072 = vmatpush.msra.mxu0 %v780
        %5073 = vmatpush.msra.mxu0 %v776
        %5074 = vmatpush.msra.mxu0 %v772
        %5075 = vmatpush.msra.mxu0 %v768
        %5076 = vmatpush.msra.mxu0 %v764
        %5077 = vmatpush.msra.mxu0 %v760
        %5078 = vmatpush.msra.mxu0 %v756
        %5079 = vmatpush.msra.mxu0 %v752
        %5080 = vmatpush.msra.mxu0 %v748
        %5081 = vmatpush.msra.mxu0 %v744
        %5082 = vmatpush.msra.mxu0 %v740
        %5083 = vmatpush.msra.mxu0 %v736
        %5084 = vmatmul.f32.gmra.mxu0 %v2734
        %v5085 = vpop.f32.mrf.mxu0
        %v5086 = vadd.f32 %v5066, %v5085
        %5087 = vdwg.mxu0
        %5088 = vmatpush.msra.mxu0 %v860
        %5089 = vmatpush.msra.mxu0 %v856
        %5090 = vmatpush.msra.mxu0 %v852
        %5091 = vmatpush.msra.mxu0 %v848
        %5092 = vmatpush.msra.mxu0 %v844
        %5093 = vmatpush.msra.mxu0 %v840
        %5094 = vmatpush.msra.mxu0 %v836
        %5095 = vmatpush.msra.mxu0 %v832
        %5096 = vmatpush.msra.mxu0 %v828
        %5097 = vmatpush.msra.mxu0 %v824
        %5098 = vmatpush.msra.mxu0 %v820
        %5099 = vmatpush.msra.mxu0 %v816
        %5100 = vmatpush.msra.mxu0 %v812
        %5101 = vmatpush.msra.mxu0 %v808
        %5102 = vmatpush.msra.mxu0 %v804
        %5103 = vmatpush.msra.mxu0 %v800
        %5104 = vmatmul.f32.gmra.mxu0 %v2735
        %v5105 = vpop.f32.mrf.mxu0
        %v5106 = vadd.f32 %v5086, %v5105
        %5107 = vdwg.mxu0
        %5108 = vmatpush.msra.mxu0 %v924
        %5109 = vmatpush.msra.mxu0 %v920
        %5110 = vmatpush.msra.mxu0 %v916
        %5111 = vmatpush.msra.mxu0 %v912
        %5112 = vmatpush.msra.mxu0 %v908
        %5113 = vmatpush.msra.mxu0 %v904
        %5114 = vmatpush.msra.mxu0 %v900
        %5115 = vmatpush.msra.mxu0 %v896
        %5116 = vmatpush.msra.mxu0 %v892
        %5117 = vmatpush.msra.mxu0 %v888
        %5118 = vmatpush.msra.mxu0 %v884
        %5119 = vmatpush.msra.mxu0 %v880
        %5120 = vmatpush.msra.mxu0 %v876
        %5121 = vmatpush.msra.mxu0 %v872
        %5122 = vmatpush.msra.mxu0 %v868
        %5123 = vmatpush.msra.mxu0 %v864
        %5124 = vmatmul.f32.gmra.mxu0 %v2736
        %v5125 = vpop.f32.mrf.mxu0
        %v5126 = vadd.f32 %v5106, %v5125
        %5127 = vdwg.mxu0
        %5128 = vmatpush.msra.mxu0 %v988
        %5129 = vmatpush.msra.mxu0 %v984
        %5130 = vmatpush.msra.mxu0 %v980
        %5131 = vmatpush.msra.mxu0 %v976
        %5132 = vmatpush.msra.mxu0 %v972
        %5133 = vmatpush.msra.mxu0 %v968
        %5134 = vmatpush.msra.mxu0 %v964
        %5135 = vmatpush.msra.mxu0 %v960
        %5136 = vmatpush.msra.mxu0 %v956
        %5137 = vmatpush.msra.mxu0 %v952
        %5138 = vmatpush.msra.mxu0 %v948
        %5139 = vmatpush.msra.mxu0 %v944
        %5140 = vmatpush.msra.mxu0 %v940
        %5141 = vmatpush.msra.mxu0 %v936
        %5142 = vmatpush.msra.mxu0 %v932
        %5143 = vmatpush.msra.mxu0 %v928
        %5144 = vmatmul.f32.gmra.mxu0 %v2739
        %v5145 = vpop.f32.mrf.mxu0
        %v5146 = vadd.f32 %v5126, %v5145
        %5147 = vdwg.mxu0
        %5148 = vmatpush.msra.mxu0 %v1052
        %5149 = vmatpush.msra.mxu0 %v1048
        %5150 = vmatpush.msra.mxu0 %v1044
        %5151 = vmatpush.msra.mxu0 %v1040
        %5152 = vmatpush.msra.mxu0 %v1036
        %5153 = vmatpush.msra.mxu0 %v1032
        %5154 = vmatpush.msra.mxu0 %v1028
        %5155 = vmatpush.msra.mxu0 %v1024
        %5156 = vmatpush.msra.mxu0 %v1020
        %5157 = vmatpush.msra.mxu0 %v1016
        %5158 = vmatpush.msra.mxu0 %v1012
        %5159 = vmatpush.msra.mxu0 %v1008
        %5160 = vmatpush.msra.mxu0 %v1004
        %5161 = vmatpush.msra.mxu0 %v1000
        %5162 = vmatpush.msra.mxu0 %v996
        %5163 = vmatpush.msra.mxu0 %v992
        %5164 = vmatmul.f32.gmra.mxu0 %v2740
        %v5165 = vpop.f32.mrf.mxu0
        %v5166 = vadd.f32 %v5146, %v5165
        %5167 = vdwg.mxu0
        %5168 = vmatpush.msra.mxu0 %v1116
        %5169 = vmatpush.msra.mxu0 %v1112
        %5170 = vmatpush.msra.mxu0 %v1108
        %5171 = vmatpush.msra.mxu0 %v1104
        %5172 = vmatpush.msra.mxu0 %v1100
        %5173 = vmatpush.msra.mxu0 %v1096
        %5174 = vmatpush.msra.mxu0 %v1092
        %5175 = vmatpush.msra.mxu0 %v1088
        %5176 = vmatpush.msra.mxu0 %v1084
        %5177 = vmatpush.msra.mxu0 %v1080
        %5178 = vmatpush.msra.mxu0 %v1076
        %5179 = vmatpush.msra.mxu0 %v1072
        %5180 = vmatpush.msra.mxu0 %v1068
        %5181 = vmatpush.msra.mxu0 %v1064
        %5182 = vmatpush.msra.mxu0 %v1060
        %5183 = vmatpush.msra.mxu0 %v1056
        %5184 = vmatmul.f32.gmra.mxu0 %v2741
        %v5185 = vpop.f32.mrf.mxu0
        %v5186 = vadd.f32 %v5166, %v5185
        %5187 = vdwg.mxu0
        %5188 = vmatpush.msra.mxu0 %v1180
        %5189 = vmatpush.msra.mxu0 %v1176
        %5190 = vmatpush.msra.mxu0 %v1172
        %5191 = vmatpush.msra.mxu0 %v1168
        %5192 = vmatpush.msra.mxu0 %v1164
        %5193 = vmatpush.msra.mxu0 %v1160
        %5194 = vmatpush.msra.mxu0 %v1156
        %5195 = vmatpush.msra.mxu0 %v1152
        %5196 = vmatpush.msra.mxu0 %v1148
        %5197 = vmatpush.msra.mxu0 %v1144
        %5198 = vmatpush.msra.mxu0 %v1140
        %5199 = vmatpush.msra.mxu0 %v1136
        %5200 = vmatpush.msra.mxu0 %v1132
        %5201 = vmatpush.msra.mxu0 %v1128
        %5202 = vmatpush.msra.mxu0 %v1124
        %5203 = vmatpush.msra.mxu0 %v1120
        %5204 = vmatmul.f32.gmra.mxu0 %v2742
        %v5205 = vpop.f32.mrf.mxu0
        %v5206 = vadd.f32 %v5186, %v5205
        %5207 = vdwg.mxu0
        %5208 = vmatpush.msra.mxu0 %v1244
        %5209 = vmatpush.msra.mxu0 %v1240
        %5210 = vmatpush.msra.mxu0 %v1236
        %5211 = vmatpush.msra.mxu0 %v1232
        %5212 = vmatpush.msra.mxu0 %v1228
        %5213 = vmatpush.msra.mxu0 %v1224
        %5214 = vmatpush.msra.mxu0 %v1220
        %5215 = vmatpush.msra.mxu0 %v1216
        %5216 = vmatpush.msra.mxu0 %v1212
        %5217 = vmatpush.msra.mxu0 %v1208
        %5218 = vmatpush.msra.mxu0 %v1204
        %5219 = vmatpush.msra.mxu0 %v1200
        %5220 = vmatpush.msra.mxu0 %v1196
        %5221 = vmatpush.msra.mxu0 %v1192
        %5222 = vmatpush.msra.mxu0 %v1188
        %5223 = vmatpush.msra.mxu0 %v1184
        %5224 = vmatmul.f32.gmra.mxu0 %v2743
        %v5225 = vpop.f32.mrf.mxu0
        %v5226 = vadd.f32 %v5206, %v5225
        %5227 = vdwg.mxu0
        %5228 = vmatpush.msra.mxu0 %v1308
        %5229 = vmatpush.msra.mxu0 %v1304
        %5230 = vmatpush.msra.mxu0 %v1300
        %5231 = vmatpush.msra.mxu0 %v1296
        %5232 = vmatpush.msra.mxu0 %v1292
        %5233 = vmatpush.msra.mxu0 %v1288
        %5234 = vmatpush.msra.mxu0 %v1284
        %5235 = vmatpush.msra.mxu0 %v1280
        %5236 = vmatpush.msra.mxu0 %v1276
        %5237 = vmatpush.msra.mxu0 %v1272
        %5238 = vmatpush.msra.mxu0 %v1268
        %5239 = vmatpush.msra.mxu0 %v1264
        %5240 = vmatpush.msra.mxu0 %v1260
        %5241 = vmatpush.msra.mxu0 %v1256
        %5242 = vmatpush.msra.mxu0 %v1252
        %5243 = vmatpush.msra.mxu0 %v1248
        %5244 = vmatmul.f32.gmra.mxu0 %v2744
        %v5245 = vpop.f32.mrf.mxu0
        %v5246 = vadd.f32 %v5226, %v5245
        %5247 = vdwg.mxu0
        %5248 = vmatpush.msra.mxu0 %v1372
        %5249 = vmatpush.msra.mxu0 %v1368
        %5250 = vmatpush.msra.mxu0 %v1364
        %5251 = vmatpush.msra.mxu0 %v1360
        %5252 = vmatpush.msra.mxu0 %v1356
        %5253 = vmatpush.msra.mxu0 %v1352
        %5254 = vmatpush.msra.mxu0 %v1348
        %5255 = vmatpush.msra.mxu0 %v1344
        %5256 = vmatpush.msra.mxu0 %v1340
        %5257 = vmatpush.msra.mxu0 %v1336
        %5258 = vmatpush.msra.mxu0 %v1332
        %5259 = vmatpush.msra.mxu0 %v1328
        %5260 = vmatpush.msra.mxu0 %v1324
        %5261 = vmatpush.msra.mxu0 %v1320
        %5262 = vmatpush.msra.mxu0 %v1316
        %5263 = vmatpush.msra.mxu0 %v1312
        %5264 = vmatmul.f32.gmra.mxu0 %v2745
        %v5265 = vpop.f32.mrf.mxu0
        %v5266 = vadd.f32 %v5246, %v5265
        %5267 = vdwg.mxu0
        %5268 = vmatpush.msra.mxu0 %v1436
        %5269 = vmatpush.msra.mxu0 %v1432
        %5270 = vmatpush.msra.mxu0 %v1428
        %5271 = vmatpush.msra.mxu0 %v1424
        %5272 = vmatpush.msra.mxu0 %v1420
        %5273 = vmatpush.msra.mxu0 %v1416
        %5274 = vmatpush.msra.mxu0 %v1412
        %5275 = vmatpush.msra.mxu0 %v1408
        %5276 = vmatpush.msra.mxu0 %v1404
        %5277 = vmatpush.msra.mxu0 %v1400
        %5278 = vmatpush.msra.mxu0 %v1396
        %5279 = vmatpush.msra.mxu0 %v1392
        %5280 = vmatpush.msra.mxu0 %v1388
        %5281 = vmatpush.msra.mxu0 %v1384
        %5282 = vmatpush.msra.mxu0 %v1380
        %5283 = vmatpush.msra.mxu0 %v1376
        %5284 = vmatmul.f32.gmra.mxu0 %v2746
        %v5285 = vpop.f32.mrf.mxu0
        %v5286 = vadd.f32 %v5266, %v5285
        %5287 = vdwg.mxu0
        %5288 = vmatpush.msra.mxu0 %v1500
        %5289 = vmatpush.msra.mxu0 %v1496
        %5290 = vmatpush.msra.mxu0 %v1492
        %5291 = vmatpush.msra.mxu0 %v1488
        %5292 = vmatpush.msra.mxu0 %v1484
        %5293 = vmatpush.msra.mxu0 %v1480
        %5294 = vmatpush.msra.mxu0 %v1476
        %5295 = vmatpush.msra.mxu0 %v1472
        %5296 = vmatpush.msra.mxu0 %v1468
        %5297 = vmatpush.msra.mxu0 %v1464
        %5298 = vmatpush.msra.mxu0 %v1460
        %5299 = vmatpush.msra.mxu0 %v1456
        %5300 = vmatpush.msra.mxu0 %v1452
        %5301 = vmatpush.msra.mxu0 %v1448
        %5302 = vmatpush.msra.mxu0 %v1444
        %5303 = vmatpush.msra.mxu0 %v1440
        %5304 = vmatmul.f32.gmra.mxu0 %v2749
        %v5305 = vpop.f32.mrf.mxu0
        %v5306 = vadd.f32 %v5286, %v5305
        %5307 = vdwg.mxu0
        %5308 = vmatpush.msra.mxu0 %v1564
        %5309 = vmatpush.msra.mxu0 %v1560
        %5310 = vmatpush.msra.mxu0 %v1556
        %5311 = vmatpush.msra.mxu0 %v1552
        %5312 = vmatpush.msra.mxu0 %v1548
        %5313 = vmatpush.msra.mxu0 %v1544
        %5314 = vmatpush.msra.mxu0 %v1540
        %5315 = vmatpush.msra.mxu0 %v1536
        %5316 = vmatpush.msra.mxu0 %v1532
        %5317 = vmatpush.msra.mxu0 %v1528
        %5318 = vmatpush.msra.mxu0 %v1524
        %5319 = vmatpush.msra.mxu0 %v1520
        %5320 = vmatpush.msra.mxu0 %v1516
        %5321 = vmatpush.msra.mxu0 %v1512
        %5322 = vmatpush.msra.mxu0 %v1508
        %5323 = vmatpush.msra.mxu0 %v1504
        %5324 = vmatmul.f32.gmra.mxu0 %v2750
        %v5325 = vpop.f32.mrf.mxu0
        %v5326 = vadd.f32 %v5306, %v5325
        %5327 = vdwg.mxu0
        %5328 = vmatpush.msra.mxu0 %v1628
        %5329 = vmatpush.msra.mxu0 %v1624
        %5330 = vmatpush.msra.mxu0 %v1620
        %5331 = vmatpush.msra.mxu0 %v1616
        %5332 = vmatpush.msra.mxu0 %v1612
        %5333 = vmatpush.msra.mxu0 %v1608
        %5334 = vmatpush.msra.mxu0 %v1604
        %5335 = vmatpush.msra.mxu0 %v1600
        %5336 = vmatpush.msra.mxu0 %v1596
        %5337 = vmatpush.msra.mxu0 %v1592
        %5338 = vmatpush.msra.mxu0 %v1588
        %5339 = vmatpush.msra.mxu0 %v1584
        %5340 = vmatpush.msra.mxu0 %v1580
        %5341 = vmatpush.msra.mxu0 %v1576
        %5342 = vmatpush.msra.mxu0 %v1572
        %5343 = vmatpush.msra.mxu0 %v1568
        %5344 = vmatmul.f32.gmra.mxu0 %v2751
        %v5345 = vpop.f32.mrf.mxu0
        %v5346 = vadd.f32 %v5326, %v5345
        %5347 = vdwg.mxu0
        %5348 = vmatpush.msra.mxu0 %v1692
        %5349 = vmatpush.msra.mxu0 %v1688
        %5350 = vmatpush.msra.mxu0 %v1684
        %5351 = vmatpush.msra.mxu0 %v1680
        %5352 = vmatpush.msra.mxu0 %v1676
        %5353 = vmatpush.msra.mxu0 %v1672
        %5354 = vmatpush.msra.mxu0 %v1668
        %5355 = vmatpush.msra.mxu0 %v1664
        %5356 = vmatpush.msra.mxu0 %v1660
        %5357 = vmatpush.msra.mxu0 %v1656
        %5358 = vmatpush.msra.mxu0 %v1652
        %5359 = vmatpush.msra.mxu0 %v1648
        %5360 = vmatpush.msra.mxu0 %v1644
        %5361 = vmatpush.msra.mxu0 %v1640
        %5362 = vmatpush.msra.mxu0 %v1636
        %5363 = vmatpush.msra.mxu0 %v1632
        %5364 = vmatmul.f32.gmra.mxu0 %v2752
        %v5365 = vpop.f32.mrf.mxu0
        %v5366 = vadd.f32 %v5346, %v5365
        %5367 = vdwg.mxu0
        %5368 = vmatpush.msra.mxu0 %v1756
        %5369 = vmatpush.msra.mxu0 %v1752
        %5370 = vmatpush.msra.mxu0 %v1748
        %5371 = vmatpush.msra.mxu0 %v1744
        %5372 = vmatpush.msra.mxu0 %v1740
        %5373 = vmatpush.msra.mxu0 %v1736
        %5374 = vmatpush.msra.mxu0 %v1732
        %5375 = vmatpush.msra.mxu0 %v1728
        %5376 = vmatpush.msra.mxu0 %v1724
        %5377 = vmatpush.msra.mxu0 %v1720
        %5378 = vmatpush.msra.mxu0 %v1716
        %5379 = vmatpush.msra.mxu0 %v1712
        %5380 = vmatpush.msra.mxu0 %v1708
        %5381 = vmatpush.msra.mxu0 %v1704
        %5382 = vmatpush.msra.mxu0 %v1700
        %5383 = vmatpush.msra.mxu0 %v1696
        %5384 = vmatmul.f32.gmra.mxu0 %v2753
        %v5385 = vpop.f32.mrf.mxu0
        %v5386 = vadd.f32 %v5366, %v5385
        %5387 = vdwg.mxu0
        %5388 = vmatpush.msra.mxu0 %v1820
        %5389 = vmatpush.msra.mxu0 %v1816
        %5390 = vmatpush.msra.mxu0 %v1812
        %5391 = vmatpush.msra.mxu0 %v1808
        %5392 = vmatpush.msra.mxu0 %v1804
        %5393 = vmatpush.msra.mxu0 %v1800
        %5394 = vmatpush.msra.mxu0 %v1796
        %5395 = vmatpush.msra.mxu0 %v1792
        %5396 = vmatpush.msra.mxu0 %v1788
        %5397 = vmatpush.msra.mxu0 %v1784
        %5398 = vmatpush.msra.mxu0 %v1780
        %5399 = vmatpush.msra.mxu0 %v1776
        %5400 = vmatpush.msra.mxu0 %v1772
        %5401 = vmatpush.msra.mxu0 %v1768
        %5402 = vmatpush.msra.mxu0 %v1764
        %5403 = vmatpush.msra.mxu0 %v1760
        %5404 = vmatmul.f32.gmra.mxu0 %v2754
        %v5405 = vpop.f32.mrf.mxu0
        %v5406 = vadd.f32 %v5386, %v5405
        %5407 = vdwg.mxu0
        %5408 = vmatpush.msra.mxu0 %v1884
        %5409 = vmatpush.msra.mxu0 %v1880
        %5410 = vmatpush.msra.mxu0 %v1876
        %5411 = vmatpush.msra.mxu0 %v1872
        %5412 = vmatpush.msra.mxu0 %v1868
        %5413 = vmatpush.msra.mxu0 %v1864
        %5414 = vmatpush.msra.mxu0 %v1860
        %5415 = vmatpush.msra.mxu0 %v1856
        %5416 = vmatpush.msra.mxu0 %v1852
        %5417 = vmatpush.msra.mxu0 %v1848
        %5418 = vmatpush.msra.mxu0 %v1844
        %5419 = vmatpush.msra.mxu0 %v1840
        %5420 = vmatpush.msra.mxu0 %v1836
        %5421 = vmatpush.msra.mxu0 %v1832
        %5422 = vmatpush.msra.mxu0 %v1828
        %5423 = vmatpush.msra.mxu0 %v1824
        %5424 = vmatmul.f32.gmra.mxu0 %v2755
        %v5425 = vpop.f32.mrf.mxu0
        %v5426 = vadd.f32 %v5406, %v5425
        %5427 = vdwg.mxu0
        %5428 = vmatpush.msra.mxu0 %v1948
        %5429 = vmatpush.msra.mxu0 %v1944
        %5430 = vmatpush.msra.mxu0 %v1940
        %5431 = vmatpush.msra.mxu0 %v1936
        %5432 = vmatpush.msra.mxu0 %v1932
        %5433 = vmatpush.msra.mxu0 %v1928
        %5434 = vmatpush.msra.mxu0 %v1924
        %5435 = vmatpush.msra.mxu0 %v1920
        %5436 = vmatpush.msra.mxu0 %v1916
        %5437 = vmatpush.msra.mxu0 %v1912
        %5438 = vmatpush.msra.mxu0 %v1908
        %5439 = vmatpush.msra.mxu0 %v1904
        %5440 = vmatpush.msra.mxu0 %v1900
        %5441 = vmatpush.msra.mxu0 %v1896
        %5442 = vmatpush.msra.mxu0 %v1892
        %5443 = vmatpush.msra.mxu0 %v1888
        %5444 = vmatmul.f32.gmra.mxu0 %v2756
        %v5445 = vpop.f32.mrf.mxu0
        %v5446 = vadd.f32 %v5426, %v5445
        %5447 = vdwg.mxu0
        %5448 = vmatpush.msra.mxu0 %v2012
        %5449 = vmatpush.msra.mxu0 %v2008
        %5450 = vmatpush.msra.mxu0 %v2004
        %5451 = vmatpush.msra.mxu0 %v2000
        %5452 = vmatpush.msra.mxu0 %v1996
        %5453 = vmatpush.msra.mxu0 %v1992
        %5454 = vmatpush.msra.mxu0 %v1988
        %5455 = vmatpush.msra.mxu0 %v1984
        %5456 = vmatpush.msra.mxu0 %v1980
        %5457 = vmatpush.msra.mxu0 %v1976
        %5458 = vmatpush.msra.mxu0 %v1972
        %5459 = vmatpush.msra.mxu0 %v1968
        %5460 = vmatpush.msra.mxu0 %v1964
        %5461 = vmatpush.msra.mxu0 %v1960
        %5462 = vmatpush.msra.mxu0 %v1956
        %5463 = vmatpush.msra.mxu0 %v1952
        %5464 = vmatmul.f32.gmra.mxu0 %v2759
        %v5465 = vpop.f32.mrf.mxu0
        %v5466 = vadd.f32 %v5446, %v5465
        %5467 = vdwg.mxu0
        %5468 = vmatpush.msra.mxu0 %v2076
        %5469 = vmatpush.msra.mxu0 %v2072
        %5470 = vmatpush.msra.mxu0 %v2068
        %5471 = vmatpush.msra.mxu0 %v2064
        %5472 = vmatpush.msra.mxu0 %v2060
        %5473 = vmatpush.msra.mxu0 %v2056
        %5474 = vmatpush.msra.mxu0 %v2052
        %5475 = vmatpush.msra.mxu0 %v2048
        %5476 = vmatpush.msra.mxu0 %v2044
        %5477 = vmatpush.msra.mxu0 %v2040
        %5478 = vmatpush.msra.mxu0 %v2036
        %5479 = vmatpush.msra.mxu0 %v2032
        %5480 = vmatpush.msra.mxu0 %v2028
        %5481 = vmatpush.msra.mxu0 %v2024
        %5482 = vmatpush.msra.mxu0 %v2020
        %5483 = vmatpush.msra.mxu0 %v2016
        %5484 = vmatmul.f32.gmra.mxu0 %v2760
        %v5485 = vpop.f32.mrf.mxu0
        %v5486 = vadd.f32 %v5466, %v5485
        %5487 = vdwg.mxu0
        %5488 = vmatpush.msra.mxu0 %v2140
        %5489 = vmatpush.msra.mxu0 %v2136
        %5490 = vmatpush.msra.mxu0 %v2132
        %5491 = vmatpush.msra.mxu0 %v2128
        %5492 = vmatpush.msra.mxu0 %v2124
        %5493 = vmatpush.msra.mxu0 %v2120
        %5494 = vmatpush.msra.mxu0 %v2116
        %5495 = vmatpush.msra.mxu0 %v2112
        %5496 = vmatpush.msra.mxu0 %v2108
        %5497 = vmatpush.msra.mxu0 %v2104
        %5498 = vmatpush.msra.mxu0 %v2100
        %5499 = vmatpush.msra.mxu0 %v2096
        %5500 = vmatpush.msra.mxu0 %v2092
        %5501 = vmatpush.msra.mxu0 %v2088
        %5502 = vmatpush.msra.mxu0 %v2084
        %5503 = vmatpush.msra.mxu0 %v2080
        %5504 = vmatmul.f32.gmra.mxu0 %v2761
        %v5505 = vpop.f32.mrf.mxu0
        %v5506 = vadd.f32 %v5486, %v5505
        %5507 = vdwg.mxu0
        %5508 = vmatpush.msra.mxu0 %v2204
        %5509 = vmatpush.msra.mxu0 %v2200
        %5510 = vmatpush.msra.mxu0 %v2196
        %5511 = vmatpush.msra.mxu0 %v2192
        %5512 = vmatpush.msra.mxu0 %v2188
        %5513 = vmatpush.msra.mxu0 %v2184
        %5514 = vmatpush.msra.mxu0 %v2180
        %5515 = vmatpush.msra.mxu0 %v2176
        %5516 = vmatpush.msra.mxu0 %v2172
        %5517 = vmatpush.msra.mxu0 %v2168
        %5518 = vmatpush.msra.mxu0 %v2164
        %5519 = vmatpush.msra.mxu0 %v2160
        %5520 = vmatpush.msra.mxu0 %v2156
        %5521 = vmatpush.msra.mxu0 %v2152
        %5522 = vmatpush.msra.mxu0 %v2148
        %5523 = vmatpush.msra.mxu0 %v2144
        %5524 = vmatmul.f32.gmra.mxu0 %v2762
        %v5525 = vpop.f32.mrf.mxu0
        %v5526 = vadd.f32 %v5506, %v5525
        %5527 = vdwg.mxu0
        %5528 = vmatpush.msra.mxu0 %v2268
        %5529 = vmatpush.msra.mxu0 %v2264
        %5530 = vmatpush.msra.mxu0 %v2260
        %5531 = vmatpush.msra.mxu0 %v2256
        %5532 = vmatpush.msra.mxu0 %v2252
        %5533 = vmatpush.msra.mxu0 %v2248
        %5534 = vmatpush.msra.mxu0 %v2244
        %5535 = vmatpush.msra.mxu0 %v2240
        %5536 = vmatpush.msra.mxu0 %v2236
        %5537 = vmatpush.msra.mxu0 %v2232
        %5538 = vmatpush.msra.mxu0 %v2228
        %5539 = vmatpush.msra.mxu0 %v2224
        %5540 = vmatpush.msra.mxu0 %v2220
        %5541 = vmatpush.msra.mxu0 %v2216
        %5542 = vmatpush.msra.mxu0 %v2212
        %5543 = vmatpush.msra.mxu0 %v2208
        %5544 = vmatmul.f32.gmra.mxu0 %v2763
        %v5545 = vpop.f32.mrf.mxu0
        %v5546 = vadd.f32 %v5526, %v5545
        %5547 = vdwg.mxu0
        %5548 = vmatpush.msra.mxu0 %v2332
        %5549 = vmatpush.msra.mxu0 %v2328
        %5550 = vmatpush.msra.mxu0 %v2324
        %5551 = vmatpush.msra.mxu0 %v2320
        %5552 = vmatpush.msra.mxu0 %v2316
        %5553 = vmatpush.msra.mxu0 %v2312
        %5554 = vmatpush.msra.mxu0 %v2308
        %5555 = vmatpush.msra.mxu0 %v2304
        %5556 = vmatpush.msra.mxu0 %v2300
        %5557 = vmatpush.msra.mxu0 %v2296
        %5558 = vmatpush.msra.mxu0 %v2292
        %5559 = vmatpush.msra.mxu0 %v2288
        %5560 = vmatpush.msra.mxu0 %v2284
        %5561 = vmatpush.msra.mxu0 %v2280
        %5562 = vmatpush.msra.mxu0 %v2276
        %5563 = vmatpush.msra.mxu0 %v2272
        %5564 = vmatmul.f32.gmra.mxu0 %v2764
        %v5565 = vpop.f32.mrf.mxu0
        %v5566 = vadd.f32 %v5546, %v5565
        %5567 = vdwg.mxu0
        %5568 = vmatpush.msra.mxu0 %v2396
        %5569 = vmatpush.msra.mxu0 %v2392
        %5570 = vmatpush.msra.mxu0 %v2388
        %5571 = vmatpush.msra.mxu0 %v2384
        %5572 = vmatpush.msra.mxu0 %v2380
        %5573 = vmatpush.msra.mxu0 %v2376
        %5574 = vmatpush.msra.mxu0 %v2372
        %5575 = vmatpush.msra.mxu0 %v2368
        %5576 = vmatpush.msra.mxu0 %v2364
        %5577 = vmatpush.msra.mxu0 %v2360
        %5578 = vmatpush.msra.mxu0 %v2356
        %5579 = vmatpush.msra.mxu0 %v2352
        %5580 = vmatpush.msra.mxu0 %v2348
        %5581 = vmatpush.msra.mxu0 %v2344
        %5582 = vmatpush.msra.mxu0 %v2340
        %5583 = vmatpush.msra.mxu0 %v2336
        %5584 = vmatmul.f32.gmra.mxu0 %v2765
        %v5585 = vpop.f32.mrf.mxu0
        %v5586 = vadd.f32 %v5566, %v5585
        %5587 = vdwg.mxu0
        %5588 = vmatpush.msra.mxu0 %v2460
        %5589 = vmatpush.msra.mxu0 %v2456
        %5590 = vmatpush.msra.mxu0 %v2452
        %5591 = vmatpush.msra.mxu0 %v2448
        %5592 = vmatpush.msra.mxu0 %v2444
        %5593 = vmatpush.msra.mxu0 %v2440
        %5594 = vmatpush.msra.mxu0 %v2436
        %5595 = vmatpush.msra.mxu0 %v2432
        %5596 = vmatpush.msra.mxu0 %v2428
        %5597 = vmatpush.msra.mxu0 %v2424
        %5598 = vmatpush.msra.mxu0 %v2420
        %5599 = vmatpush.msra.mxu0 %v2416
        %5600 = vmatpush.msra.mxu0 %v2412
        %5601 = vmatpush.msra.mxu0 %v2408
        %5602 = vmatpush.msra.mxu0 %v2404
        %5603 = vmatpush.msra.mxu0 %v2400
        %5604 = vmatmul.f32.gmra.mxu0 %v2766
        %v5605 = vpop.f32.mrf.mxu0
        %v5606 = vadd.f32 %v5586, %v5605
        %5607 = vdwg.mxu0
        %5608 = vmatpush.msra.mxu0 %v2524
        %5609 = vmatpush.msra.mxu0 %v2520
        %5610 = vmatpush.msra.mxu0 %v2516
        %5611 = vmatpush.msra.mxu0 %v2512
        %5612 = vmatpush.msra.mxu0 %v2508
        %5613 = vmatpush.msra.mxu0 %v2504
        %5614 = vmatpush.msra.mxu0 %v2500
        %5615 = vmatpush.msra.mxu0 %v2496
        %5616 = vmatpush.msra.mxu0 %v2492
        %5617 = vmatpush.msra.mxu0 %v2488
        %5618 = vmatpush.msra.mxu0 %v2484
        %5619 = vmatpush.msra.mxu0 %v2480
        %5620 = vmatpush.msra.mxu0 %v2476
        %5621 = vmatpush.msra.mxu0 %v2472
        %5622 = vmatpush.msra.mxu0 %v2468
        %5623 = vmatpush.msra.mxu0 %v2464
        %5624 = vmatmul.f32.gmra.mxu0 %v2768
        %v5625 = vpop.f32.mrf.mxu0
        %v5626 = vadd.f32 %v5606, %v5625
        %5627 = vdwg.mxu0
        %5628 = vmatpush.msra.mxu0 %v2588
        %5629 = vmatpush.msra.mxu0 %v2584
        %5630 = vmatpush.msra.mxu0 %v2580
        %5631 = vmatpush.msra.mxu0 %v2576
        %5632 = vmatpush.msra.mxu0 %v2572
        %5633 = vmatpush.msra.mxu0 %v2568
        %5634 = vmatpush.msra.mxu0 %v2564
        %5635 = vmatpush.msra.mxu0 %v2560
        %5636 = vmatpush.msra.mxu0 %v2556
        %5637 = vmatpush.msra.mxu0 %v2552
        %5638 = vmatpush.msra.mxu0 %v2548
        %5639 = vmatpush.msra.mxu0 %v2544
        %5640 = vmatpush.msra.mxu0 %v2540
        %5641 = vmatpush.msra.mxu0 %v2536
        %5642 = vmatpush.msra.mxu0 %v2532
        %5643 = vmatpush.msra.mxu0 %v2528
        %5644 = vmatmul.f32.gmra.mxu0 %v2769
        %v5645 = vpop.f32.mrf.mxu0
        %v5646 = vadd.f32 %v5626, %v5645
        %5647 = vdwg.mxu0
        %5648 = vmatpush.msra.mxu0 %v2652
        %5649 = vmatpush.msra.mxu0 %v2648
        %5650 = vmatpush.msra.mxu0 %v2644
        %5651 = vmatpush.msra.mxu0 %v2640
        %5652 = vmatpush.msra.mxu0 %v2636
        %5653 = vmatpush.msra.mxu0 %v2632
        %5654 = vmatpush.msra.mxu0 %v2628
        %5655 = vmatpush.msra.mxu0 %v2624
        %5656 = vmatpush.msra.mxu0 %v2620
        %5657 = vmatpush.msra.mxu0 %v2616
        %5658 = vmatpush.msra.mxu0 %v2612
        %5659 = vmatpush.msra.mxu0 %v2608
        %5660 = vmatpush.msra.mxu0 %v2604
        %5661 = vmatpush.msra.mxu0 %v2600
        %5662 = vmatpush.msra.mxu0 %v2596
        %5663 = vmatpush.msra.mxu0 %v2592
        %5664 = vmatmul.f32.gmra.mxu0 %v2770
        %v5665 = vpop.f32.mrf.mxu0
        %v5666 = vadd.f32 %v5646, %v5665
        %5667 = vdwg.mxu0
        %5668 = vmatpush.msra.mxu0 %v2716
        %5669 = vmatpush.msra.mxu0 %v2712
        %5670 = vmatpush.msra.mxu0 %v2708
        %5671 = vmatpush.msra.mxu0 %v2704
        %5672 = vmatpush.msra.mxu0 %v2700
        %5673 = vmatpush.msra.mxu0 %v2696
        %5674 = vmatpush.msra.mxu0 %v2692
        %5675 = vmatpush.msra.mxu0 %v2688
        %5676 = vmatpush.msra.mxu0 %v2684
        %5677 = vmatpush.msra.mxu0 %v2680
        %5678 = vmatpush.msra.mxu0 %v2676
        %5679 = vmatpush.msra.mxu0 %v2672
        %5680 = vmatpush.msra.mxu0 %v2668
        %5681 = vmatpush.msra.mxu0 %v2664
        %5682 = vmatpush.msra.mxu0 %v2660
        %5683 = vmatpush.msra.mxu0 %v2656
        %5684 = vmatmul.f32.gmra.mxu0 %v2771
        %v5685 = vpop.f32.mrf.mxu0
        %v5686 = vadd.f32 %v5666, %v5685
        %5687 = vdwg.mxu0
        %v5692 = vrot.slane %v4246, 6
        %v5693 = vrot.slane %v4966, 4
        %v5694 = vrot.slane %v5686, 2
        %vm5695 = vcmask 1041408
        %v5696 = vsel %vm5695, %v3526, %v5692
        %vm5697 = vcmask 1045508
        %v5698 = vsel %vm5697, %v5693, %v5694
        %vm5699 = vcmask 1043456
        %v5700 = vsel %vm5699, %v5696, %v5698
        %v5702 = vadd.f32 %v412, %v5700
        %5703 = vst [vmem:[#allocation2] sm:$0xff] %v5702
        %p5704 = scmp.eq.s32.totalorder %s26, 3
        // Predicated region
        $region69: #{tpu_custom_call.1} parent=43 // pred_check
          %p5705 = pneg %p5704
        $region70: #{tpu_custom_call.1} parent=43 // pred_check_branch
          %5707 = sbr.rel (%p5705) target = $region72
        $region71: #{tpu_custom_call.1} parent=43 // pred_region
          %v5708 = vld [vmem:[#allocation2] sm:$0xff]
          %v5709 = vld [vmem:[#allocation9] sm:$0xf]
          %v5711 = vperm.slane %v5709, 0
          %v5712 = vperm.slane %v5709, 1
          %v5713 = vperm.slane %v5709, 2
          %v5714 = vperm.slane %v5709, 3
          %v5715 = vrot.slane %v5712, 6
          %v5716 = vrot.slane %v5713, 4
          %v5717 = vrot.slane %v5714, 2
          %v5718 = vsel %vm5695, %v5711, %v5715
          %v5719 = vsel %vm5697, %v5716, %v5717
          %v5720 = vsel %vm5699, %v5718, %v5719
          %v5722 = vadd.f32 %v5708, %v5720
          %v5723 = vld [vmem:[#allocation11] sm:$0xf]
          %v5725 = vperm.slane %v5723, 0
          %v5726 = vperm.slane %v5723, 1
          %v5727 = vperm.slane %v5723, 2
          %v5728 = vperm.slane %v5723, 3
          %v5729 = vrot.slane %v5726, 6
          %v5730 = vrot.slane %v5727, 4
          %v5731 = vrot.slane %v5728, 2
          %v5732 = vsel %vm5695, %v5725, %v5729
          %v5733 = vsel %vm5697, %v5730, %v5731
          %v5734 = vsel %vm5699, %v5732, %v5733
          %v5736 = vmul.f32 %v5722, %v5734
          %5738 = vst [vmem:[#allocation1] ss:$4 sm:$0xff] %v5736
          %v5739 = vld.sshfl [vmem:[#allocation1] sm:$0xff pattern:$0x73625140]
          %v5740 = vld.sshfl [vmem:[#allocation1 + $0x8] sm:$0xff pattern:$0x73625140]
          %v5741 = vld.sshfl [vmem:[#allocation1 + $0x10] sm:$0xff pattern:$0x73625140]
          %v5742 = vld.sshfl [vmem:[#allocation1 + $0x18] sm:$0xff pattern:$0x73625140]
          %v5747 = vsel %vm5695, %v5739, 0.0
          %v5748 = vsel %vm5695, %v5740, 0.0
          %v5749 = vadd.f32 %v5747, %v5748
          %v5750 = vsel %vm5695, %v5741, 0.0
          %v5751 = vadd.f32 %v5749, %v5750
          %v5752 = vsel %vm5695, %v5742, 0.0
          %v5753 = vadd.f32 %v5751, %v5752
          %5754 = vadd.xlane.f32.xlu0 %v5753
          %v5755 = vpop.xlane.xlu0 %5754
          %v5756 = vld [vmem:[#allocation3] sm:$0x1]
          %v5758 = vperm.slane %v5756, 0
          %v5760 = vadd.f32 %v5755, %v5758
          %vm5761 = vcmask 1024
          %5762 = vst.msk [vmem:[%s6] sm:$0x3] %vm5761, %v5760
        $region72: #{tpu_custom_call.1} parent=43 // pred_fallthru
          _
        // Predicated region
        $region73: #{tpu_custom_call.1} parent=43 // pred_check
          %p5763 = pneg %p180
        $region74: #{tpu_custom_call.1} parent=43 // pred_check_branch
          %5765 = sbr.rel (%p5763) target = $region76
        $region75: #{tpu_custom_call.1} parent=43 // pred_region
          _
        $region76: #{tpu_custom_call.1} parent=43 // pred_fallthru
          _
        // Predicated region
        $region77: #{tpu_custom_call.1} parent=43 // pred_check
          %p5766 = pneg %p180
        $region78: #{tpu_custom_call.1} parent=43 // pred_check_branch
          %5768 = sbr.rel (%p5766) target = $region80
        $region79: #{tpu_custom_call.1} parent=43 // pred_region
          _
        $region80: #{tpu_custom_call.1} parent=43 // pred_fallthru
          _
      $region44: #{tpu_custom_call.1} parent=5 // pred_fallthru
        _
      %p5769 = scmp.le.s32.totalorder 2, %s21
      // Predicated region
      $region81: #{tpu_custom_call.1} parent=5 // pred_check
        %p5770 = pneg %p5769
      $region82: #{tpu_custom_call.1} parent=5 // pred_check_branch
        %5772 = sbr.rel (%p5770) target = $region84
      $region83: #{tpu_custom_call.1} parent=5 // pred_region
        %s5773 = ssub.s32 %s21, 2
      $region84: #{tpu_custom_call.1} parent=5 // pred_fallthru
        _
    $region6: #{tpu_custom_call.1} parent=1 // loop_footer
      %s25 = sadd.s32 1, %s21
    $region7: #{tpu_custom_call.1} parent=1 // loop_footer_branch
      %20 = sbr.rel target = $region3
    $region8: #{tpu_custom_call.1} parent=1 // loop_exit
      _
    %5774 = vsyncpa [#allocation5], 1
    %s5775 = scalar_lea.sflag [#allocation5], 1
    %5776 = vsyncpa %s5775, 1
    %5777 = vsyncpa [#allocation7], 1
    %s5778 = scalar_lea.sflag [#allocation7], 1
    %5779 = vsyncpa %s5778, 1
    %5780 = vsyncpa [#allocation10], 1

</llo_original>
